<compile_context>
chip_gen: v7x
topology: tpu7x:2x2x1
jax: 0.10.0
libtpu: 0.0.40
codegen_flags: <defaults>
</compile_context>

<pallas_src>
import functools

import jax
import jax.numpy as jnp
from jax.experimental import pallas as pl
from jax.experimental.pallas import tpu as pltpu

NEG_SLOPE = 0.01   # nn.LeakyReLU default
BN_EPS = 1e-5      # nn.BatchNorm default eps


# ----------------------------------------------------------------------------
# Fused kernel
# ----------------------------------------------------------------------------
def _fused_net3d2d_kernel(x_ref, mask_ref,
                          w3_ref, b3_ref, t3_ref,
                          w0_ref, b0_ref, t0_ref,
                          w1_ref, b1_ref, t1_ref,
                          wf_ref, bf_ref,
                          o_ref,
                          canvas3, col, canvas2a, canvas2b,
                          *, H, W, dp, store_off):
    # x_ref:     (1, Cin, D, CV_in)  spatially-padded flattened input canvas (f32)
    # canvas3:   (Cin, Dp+2, CV_in)  pooled + depth-padded 3-D feature canvas (f32)
    # col:       (K_MAX, Dp*Lc)      shared bf16 im2col scratch
    # canvas2a:  (Cmid*Dp, CV2)      conv3d output in conv2d canvas layout (row = d*Cmid + c), bf16
    # canvas2b:  (2*Cmid, CV2)       conv2d#0 output canvas, bf16
    # o_ref:     (1, out_ch, L_out)  lane-padded output block (f32)
    Wp = W + 2
    Lc = H * Wp                     # lane extent of one sample's compute domain
    L_out = o_ref.shape[2]
    lpad = store_off - (Wp + 1)     # left pad so the interior store offset is lane-aligned
    Cin = x_ref.shape[1]
    D = x_ref.shape[2]
    Dp = D // dp
    Cmid = w3_ref.shape[0]
    K3 = w3_ref.shape[1]            # 27 * Cin
    C2a = w0_ref.shape[1] // 9      # Cmid * Dp
    C2b = w1_ref.shape[1] // 9      # 2 * Cmid
    CV2 = canvas2a.shape[1]
    c_dt = col.dtype                # bf16

    mask_w = mask_ref[...]          # (1, Dp*Lc) f32, 1 where w < W (periodic in Wp)
    mask1 = mask_w[:, :Lc]

    # ---- Per-step halo zeroing only (interiors are fully overwritten below) ----
    canvas3[:, 0, :] = jnp.zeros((Cin, canvas3.shape[2]), canvas3.dtype)
    canvas3[:, Dp + 1, :] = jnp.zeros((Cin, canvas3.shape[2]), canvas3.dtype)
    canvas2a[:, :store_off] = jnp.zeros((C2a, store_off), c_dt)
    canvas2a[:, store_off + Lc:] = jnp.zeros((C2a, CV2 - store_off - Lc), c_dt)
    canvas2b[:, :store_off] = jnp.zeros((canvas2b.shape[0], store_off), c_dt)
    canvas2b[:, store_off + Lc:] = jnp.zeros((canvas2b.shape[0], CV2 - store_off - Lc), c_dt)

    # ---- Stage 0: MaxPool3d([dp,1,1], stride [dp,1,1]) into the depth-padded 3-D canvas ----
    for dpo in range(Dp):
        m = x_ref[0, :, dpo * dp, :]
        for k in range(1, dp):
            m = jnp.maximum(m, x_ref[0, :, dpo * dp + k, :])
        canvas3[:, 1 + dpo, :] = m            # planes 0 and Dp+1 stay zero (depth halo)

    # ---- Stage 1: Conv3d(3x3x3, pad 1) + LeakyReLU + BN(shift) — ONE wide-N matmul ----
    # im2col for ALL Dp output depth planes side by side on lanes, then one MXU matmul.
    for d in range(Dp):
        for kd in range(3):
            for kh in range(3):
                for kw in range(3):
                    t = (kd * 3 + kh) * 3 + kw
                    s = kh * Wp + kw
                    col[t * Cin:(t + 1) * Cin, d * Lc:(d + 1) * Lc] = (
                        canvas3[:, d + kd, s:s + Lc].astype(c_dt))
    y = jnp.dot(w3_ref[...], col[:K3, :Dp * Lc], preferred_element_type=jnp.float32)
    y = y + b3_ref[...]                           # bias (BN scale already folded in)
    y = jnp.where(y >= 0, y, NEG_SLOPE * y)       # LeakyReLU
    y = (y + t3_ref[...]) * mask_w                # BN shift, zero the intra-row halo columns
    yb = y.astype(c_dt)
    for d in range(Dp):
        # Depth-major canvas row order d*Cmid + c; the conv2d#0 weight's input-channel axis was
        # permuted on the host to match (PyTorch view() order is c*Dp + d).
        canvas2a[d * Cmid:(d + 1) * Cmid, store_off:store_off + Lc] = yb[:, d * Lc:(d + 1) * Lc]

    # ---- Stage 2/3: Conv2d(3x3, pad 1) + LeakyReLU + BN(shift) ----
    def conv2d_stage(canvas_in, c_in, w_ref, b_ref, t_ref, m):
        for kh in range(3):
            for kw in range(3):
                t = kh * 3 + kw
                s = lpad + kh * Wp + kw          # centre tap (kh=kw=1) reads at lane offset 128
                col[t * c_in:(t + 1) * c_in, :Lc] = canvas_in[:, s:s + Lc]
        yy = jnp.dot(w_ref[...], col[:9 * c_in, :Lc], preferred_element_type=jnp.float32)
        yy = yy + b_ref[...]
        yy = jnp.where(yy >= 0, yy, NEG_SLOPE * yy)
        yy = yy + t_ref[...]
        if m is not None:
            yy = yy * m
        return yy

    y0 = conv2d_stage(canvas2a, C2a, w0_ref, b0_ref, t0_ref, mask1)      # (2*Cmid, Lc) f32
    canvas2b[:, store_off:store_off + Lc] = y0.astype(c_dt)
    # mask dropped here: no shifted reads after this layer, wrapper slices w >= W off.
    y1 = conv2d_stage(canvas2b, C2b, w1_ref, b1_ref, t1_ref, None)       # (4*Cmid, Lc) f32

    # ---- Stage 4: final 1x1 conv (no activation / BN) ----
    yf = jnp.dot(wf_ref[...], y1.astype(wf_ref.dtype),
                 preferred_element_type=jnp.float32) + bf_ref[...]
    o_ref[0, :, :Lc] = yf.astype(o_ref.dtype)
    o_ref[0, :, Lc:] = jnp.zeros((o_ref.shape[1], L_out - Lc), o_ref.dtype)


# ----------------------------------------------------------------------------
# Forward wrapper
# ----------------------------------------------------------------------------
def net3d2d_forward(kparams, feat_ncdhw, depth_pool):
    B, Cin, D, H, W = feat_ncdhw.shape
    assert D % depth_pool == 0, "MaxPool3d floor mode would drop trailing depth planes"
    Hp, Wp = H + 2, W + 2
    Lc = H * Wp                                   # compute-domain lane length per sample
    L_out = ((Lc + 127) // 128) * 128             # lane-padded output block (full-vreg stores)
    CV_in = Hp * Wp + 2                           # input canvas lane length
    store_off = ((Wp + 1 + 127) // 128) * 128     # lane-aligned interior offset of 2-D canvases
    lpad = store_off - (Wp + 1)
    CV2 = lpad + Hp * Wp + 2                      # 2-D canvas lane length
    Dp = D // depth_pool
    Cmid = kparams["w3"].shape[0]
    C2a = Cmid * Dp
    C0o = kparams["w0"].shape[0]
    C1o = kparams["w1"].shape[0]
    out_ch = kparams["wf"].shape[0]
    k_max = max(kparams["w3"].shape[1], kparams["w0"].shape[1], kparams["w1"].shape[1])
    n_max = max(Dp * Lc, Lc)

    # Host-side input prep: pad the H/W halo once and flatten spatial to the canvas layout.
    x = feat_ncdhw.astype(jnp.float32)
    xp = jnp.pad(x, ((0, 0), (0, 0), (0, 0), (1, 1), (1, 1)))
    xp = xp.reshape(B, Cin, D, Hp * Wp)
    xp = jnp.pad(xp, ((0, 0), (0, 0), (0, 0), (0, CV_in - Hp * Wp)))

    # Validity mask (lane i valid iff i % Wp < W); periodic in Wp, so one (1, Dp*Lc) row
    # serves both the merged conv3d epilogue and (sliced to Lc) the conv2d stages.
    lane = jnp.arange(Dp * Lc, dtype=jnp.int32)
    mask = ((lane % Wp) < W).astype(jnp.float32).reshape(1, Dp * Lc)

    kernel = functools.partial(_fused_net3d2d_kernel, H=H, W=W, dp=depth_pool,
                               store_off=store_off)

    def full2d(shape):
        return pl.BlockSpec(shape, lambda b: (0, 0))

    out = pl.pallas_call(
        kernel,
        out_shape=jax.ShapeDtypeStruct((B, out_ch, L_out), jnp.float32),
        grid=(B,),
        in_specs=[
            pl.BlockSpec((1, Cin, D, CV_in), lambda b: (b, 0, 0, 0)),
            full2d((1, Dp * Lc)),
            full2d(kparams["w3"].shape), full2d((Cmid, 1)), full2d((Cmid, 1)),
            full2d(kparams["w0"].shape), full2d((C0o, 1)), full2d((C0o, 1)),
            full2d(kparams["w1"].shape), full2d((C1o, 1)), full2d((C1o, 1)),
            full2d(kparams["wf"].shape), full2d((out_ch, 1)),
        ],
        out_specs=pl.BlockSpec((1, out_ch, L_out), lambda b: (b, 0, 0)),
        scratch_shapes=[
            # Pooled 3-D canvas kept f32: its tap reads select single planes along the packed
            # second-minor dim; f32 avoids packed-row extraction and it is only ~20 KiB.
            pltpu.VMEM((Cin, Dp + 2, CV_in), jnp.float32),
            pltpu.VMEM((k_max, n_max), jnp.bfloat16),     # shared bf16 im2col scratch
            pltpu.VMEM((C2a, CV2), jnp.bfloat16),         # conv2d#0 input canvas (bf16)
            pltpu.VMEM((C0o, CV2), jnp.bfloat16),         # conv2d#1 input canvas (bf16)
        ],
        compiler_params=pltpu.CompilerParams(
            dimension_semantics=("parallel",)),
    )(xp, mask,
      kparams["w3"], kparams["b3"], kparams["t3"],
      kparams["w0"], kparams["b0"], kparams["t0"],
      kparams["w1"], kparams["b1"], kparams["t1"],
      kparams["wf"], kparams["bf"])

    # (B, out_ch, L_out) lane-dense -> (B, out_ch, H, W)  (NCHW, matching PyTorch)
    return out[:, :, :Lc].reshape(B, out_ch, H, Wp)[:, :, :, :W]


# ----------------------------------------------------------------------------
# Parameters: PyTorch-layout synthetic init + host-side conversion to kernel form
# ----------------------------------------------------------------------------
def init_torch_params(key, in_chans, mid_chans, out_chans, depth, depth_pool):
    """Synthetic params in PyTorch layouts: Conv (Cout, Cin, k...), BN per-channel vectors."""
    Dp = depth // depth_pool
    c0_in, c0_out = mid_chans * Dp, mid_chans * 2
    c1_in, c1_out = mid_chans * 2, mid_chans * 4
    cf_in, cf_out = mid_chans * 4, out_chans

    ks = iter(jax.random.split(key, 32))

    def conv_w(shape, fan_in):
        bound = 1.0 / fan_in ** 0.5
        return jax.random.uniform(next(ks), shape, jnp.float32, -bound, bound)

    def bn(c):
        gamma = jax.random.uniform(next(ks), (c,), jnp.float32, 0.5, 1.5)
        beta = 0.1 * jax.random.normal(next(ks), (c,), jnp.float32)
        mean = 0.1 * jax.random.normal(next(ks), (c,), jnp.float32)
        var = jax.random.uniform(next(ks), (c,), jnp.float32, 0.5, 1.5)
        return gamma, beta, mean, var

    return {
        "conv3d.w": conv_w((mid_chans, in_chans, 3, 3, 3), in_chans * 27),
        "conv3d.b": conv_w((mid_chans,), in_chans * 27),
        "bn3d": bn(mid_chans),
        "conv2d0.w": conv_w((c0_out, c0_in, 3, 3), c0_in * 9),
        "conv2d0.b": conv_w((c0_out,), c0_in * 9),
        "bn2d0": bn(c0_out),
        "conv2d1.w": conv_w((c1_out, c1_in, 3, 3), c1_in * 9),
        "conv2d1.b": conv_w((c1_out,), c1_in * 9),
        "bn2d1": bn(c1_out),
        "final.w": conv_w((cf_out, cf_in, 1, 1), cf_in),
        "final.b": conv_w((cf_out,), cf_in),
    }


def prepare_kernel_params(p, mid_chans, depth, depth_pool):
    """Fold eval-mode BN into the convs (layer order is Conv -> LeakyReLU -> BN), permute the
    conv3d->conv2d channel flattening to the kernel's depth-major canvas order, flatten conv
    weights to (Cout, K) im2col form, and cast weights to bf16 (biases/shifts stay f32)."""
    Dp = depth // depth_pool

    def fold(w_flat, b, bn_params):
        gamma, beta, mean, var = bn_params
        scale = gamma / jnp.sqrt(var + BN_EPS)
        # LeakyReLU(s*x) == s*LeakyReLU(x) only for s > 0; guard the fold (eager, concrete).
        assert float(jnp.min(scale)) > 0.0, "BN fold through LeakyReLU needs positive scale"
        shift = beta - mean * scale
        return ((w_flat * scale[:, None]).astype(jnp.bfloat16),
                (b * scale)[:, None].astype(jnp.float32),
                shift[:, None].astype(jnp.float32))

    kp = {}
    # conv3d: (Cout, Cin, kd, kh, kw) -> (Cout, 27*Cin); col row = ((kd*3+kh)*3+kw)*Cin + ci
    w3 = jnp.transpose(p["conv3d.w"], (0, 2, 3, 4, 1))
    w3 = w3.reshape(w3.shape[0], -1)
    kp["w3"], kp["b3"], kp["t3"] = fold(w3, p["conv3d.b"], p["bn3d"])

    # conv2d#0: PyTorch flat input channel = c*Dp + d; kernel canvas row j = d*Cmid + c.
    w0 = p["conv2d0.w"]                                   # (Cout0, Cmid*Dp, 3, 3)
    j = jnp.arange(mid_chans * Dp)
    perm = (j % mid_chans) * Dp + (j // mid_chans)        # torch channel feeding kernel row j
    w0 = w0[:, perm, :, :]
    w0 = jnp.transpose(w0, (0, 2, 3, 1)).reshape(w0.shape[0], -1)
    kp["w0"], kp["b0"], kp["t0"] = fold(w0, p["conv2d0.b"], p["bn2d0"])

    # conv2d#1: (Cout1, Cin1, 3, 3) -> (Cout1, 9*Cin1)
    w1 = jnp.transpose(p["conv2d1.w"], (0, 2, 3, 1))
    w1 = w1.reshape(w1.shape[0], -1)
    kp["w1"], kp["b1"], kp["t1"] = fold(w1, p["conv2d1.b"], p["bn2d1"])

    # final 1x1: (Cout, Cin, 1, 1) -> (Cout, Cin)
    kp["wf"] = p["final.w"].reshape(p["final.w"].shape[0], -1).astype(jnp.bfloat16)
    kp["bf"] = p["final.b"][:, None].astype(jnp.float32)
    return kp


if __name__ == "__main__":
    B, in_chans, mid_chans, out_chans = 2, 4, 8, 4
    depth, depth_pool, H, W = 16, 8, 16, 16

    key = jax.random.PRNGKey(0)
    k_in, k_par = jax.random.split(key)
    feat = jax.random.normal(k_in, (B, in_chans, depth, H, W), jnp.float32)  # NCDHW
    torch_params = init_torch_params(k_par, in_chans, mid_chans, out_chans,
                                     depth, depth_pool)
    kparams = prepare_kernel_params(torch_params, mid_chans, depth, depth_pool)

    fwd = jax.jit(functools.partial(net3d2d_forward, depth_pool=depth_pool))
    out = jax.block_until_ready(fwd(kparams, feat))

    assert out.shape == (B, out_chans, H, W), out.shape
    assert out.dtype == jnp.float32
    assert bool(jnp.all(jnp.isfinite(out)))
    print("KERNEL_OK")
</pallas_src>

<mosaic_0001>
module attributes {stable_mosaic.version = 11 : i64} {
  func.func @_fused_net3d2d_kernel(%arg0: i32, %arg1: memref<1x4x16x326xf32, #tpu.memory_space<vmem>>, %arg2: memref<1x576xf32, #tpu.memory_space<vmem>>, %arg3: memref<8x108xbf16, #tpu.memory_space<vmem>>, %arg4: memref<8x1xf32, #tpu.memory_space<vmem>>, %arg5: memref<8x1xf32, #tpu.memory_space<vmem>>, %arg6: memref<16x144xbf16, #tpu.memory_space<vmem>>, %arg7: memref<16x1xf32, #tpu.memory_space<vmem>>, %arg8: memref<16x1xf32, #tpu.memory_space<vmem>>, %arg9: memref<32x144xbf16, #tpu.memory_space<vmem>>, %arg10: memref<32x1xf32, #tpu.memory_space<vmem>>, %arg11: memref<32x1xf32, #tpu.memory_space<vmem>>, %arg12: memref<4x32xbf16, #tpu.memory_space<vmem>>, %arg13: memref<4x1xf32, #tpu.memory_space<vmem>>, %arg14: memref<1x4x384xf32, #tpu.memory_space<vmem>>, %arg15: memref<4x4x326xf32, #tpu.memory_space<vmem>>, %arg16: memref<144x576xbf16, #tpu.memory_space<vmem>>, %arg17: memref<16x435xbf16, #tpu.memory_space<vmem>>, %arg18: memref<16x435xbf16, #tpu.memory_space<vmem>>) attributes {dimension_semantics = [#tpu.dimension_semantics<parallel>], iteration_bounds = array<i64: 2>, scalar_prefetch = 0 : i64, scratch_operands = 4 : i64, tpu.core_type = #tpu.core_type<tc>, window_params = [{transform_indices = @transform_0, window_bounds = array<i64: 1, 4, 16, 326>}, {pipeline_mode = #tpu.pipeline_mode<synchronous>, transform_indices = @transform_1, window_bounds = array<i64: 1, 576>}, {pipeline_mode = #tpu.pipeline_mode<synchronous>, transform_indices = @transform_2, window_bounds = array<i64: 8, 108>}, {pipeline_mode = #tpu.pipeline_mode<synchronous>, transform_indices = @transform_3, window_bounds = array<i64: 8, 1>}, {pipeline_mode = #tpu.pipeline_mode<synchronous>, transform_indices = @transform_4, window_bounds = array<i64: 8, 1>}, {pipeline_mode = #tpu.pipeline_mode<synchronous>, transform_indices = @transform_5, window_bounds = array<i64: 16, 144>}, {pipeline_mode = #tpu.pipeline_mode<synchronous>, transform_indices = @transform_6, window_bounds = array<i64: 16, 1>}, {pipeline_mode = #tpu.pipeline_mode<synchronous>, transform_indices = @transform_7, window_bounds = array<i64: 16, 1>}, {pipeline_mode = #tpu.pipeline_mode<synchronous>, transform_indices = @transform_8, window_bounds = array<i64: 32, 144>}, {pipeline_mode = #tpu.pipeline_mode<synchronous>, transform_indices = @transform_9, window_bounds = array<i64: 32, 1>}, {pipeline_mode = #tpu.pipeline_mode<synchronous>, transform_indices = @transform_10, window_bounds = array<i64: 32, 1>}, {pipeline_mode = #tpu.pipeline_mode<synchronous>, transform_indices = @transform_11, window_bounds = array<i64: 4, 32>}, {pipeline_mode = #tpu.pipeline_mode<synchronous>, transform_indices = @transform_12, window_bounds = array<i64: 4, 1>}, {transform_indices = @transform_13, window_bounds = array<i64: 1, 4, 384>}]} {
    %c0 = arith.constant 0 : index
    %c0_0 = arith.constant 0 : index
    %0 = vector.load %arg2[%c0, %c0_0] : memref<1x576xf32, #tpu.memory_space<vmem>>, vector<1x576xf32>
    %1 = vector.extract_strided_slice %0 {offsets = [0, 0], sizes = [1, 288], strides = [1, 1]} : vector<1x576xf32> to vector<1x288xf32>
    %cst = arith.constant 0.000000e+00 : f32
    %2 = vector.broadcast %cst : f32 to vector<4x326xf32>
    %c0_1 = arith.constant 0 : index
    %c0_2 = arith.constant 0 : index
    %c0_3 = arith.constant 0 : index
    %3 = vector.load %arg15[%c0_1, %c0_2, %c0_3] : memref<4x4x326xf32, #tpu.memory_space<vmem>>, vector<4x1x326xf32>
    %4 = vector.shape_cast %3 : vector<4x1x326xf32> to vector<4x326xf32>
    %5 = vector.shape_cast %2 : vector<4x326xf32> to vector<4x1x326xf32>
    tpu.vector_store %arg15[%c0_1, %c0_2, %c0_3], %5 {strides = array<i32>} : memref<4x4x326xf32, #tpu.memory_space<vmem>>, vector<4x1x326xf32>,
    %cst_4 = arith.constant 0.000000e+00 : f32
    %6 = vector.broadcast %cst_4 : f32 to vector<4x326xf32>
    %c0_5 = arith.constant 0 : index
    %c3 = arith.constant 3 : index
    %c0_6 = arith.constant 0 : index
    %7 = vector.load %arg15[%c0_5, %c3, %c0_6] : memref<4x4x326xf32, #tpu.memory_space<vmem>>, vector<4x1x326xf32>
    %8 = vector.shape_cast %7 : vector<4x1x326xf32> to vector<4x326xf32>
    %9 = vector.shape_cast %6 : vector<4x326xf32> to vector<4x1x326xf32>
    tpu.vector_store %arg15[%c0_5, %c3, %c0_6], %9 {strides = array<i32>} : memref<4x4x326xf32, #tpu.memory_space<vmem>>, vector<4x1x326xf32>,
    %cst_7 = arith.constant 0.000000e+00 : bf16
    %10 = vector.broadcast %cst_7 : bf16 to vector<16x128xbf16>
    %c0_8 = arith.constant 0 : index
    %c0_9 = arith.constant 0 : index
    %11 = vector.load %arg17[%c0_8, %c0_9] : memref<16x435xbf16, #tpu.memory_space<vmem>>, vector<16x128xbf16>
    tpu.vector_store %arg17[%c0_8, %c0_9], %10 {strides = array<i32>} : memref<16x435xbf16, #tpu.memory_space<vmem>>, vector<16x128xbf16>,
    %cst_10 = arith.constant 0.000000e+00 : bf16
    %12 = vector.broadcast %cst_10 : bf16 to vector<16x19xbf16>
    %c0_11 = arith.constant 0 : index
    %c416 = arith.constant 416 : index
    %13 = vector.load %arg17[%c0_11, %c416] : memref<16x435xbf16, #tpu.memory_space<vmem>>, vector<16x19xbf16>
    tpu.vector_store %arg17[%c0_11, %c416], %12 {strides = array<i32>} : memref<16x435xbf16, #tpu.memory_space<vmem>>, vector<16x19xbf16>,
    %cst_12 = arith.constant 0.000000e+00 : bf16
    %14 = vector.broadcast %cst_12 : bf16 to vector<16x128xbf16>
    %c0_13 = arith.constant 0 : index
    %c0_14 = arith.constant 0 : index
    %15 = vector.load %arg18[%c0_13, %c0_14] : memref<16x435xbf16, #tpu.memory_space<vmem>>, vector<16x128xbf16>
    tpu.vector_store %arg18[%c0_13, %c0_14], %14 {strides = array<i32>} : memref<16x435xbf16, #tpu.memory_space<vmem>>, vector<16x128xbf16>,
    %cst_15 = arith.constant 0.000000e+00 : bf16
    %16 = vector.broadcast %cst_15 : bf16 to vector<16x19xbf16>
    %c0_16 = arith.constant 0 : index
    %c416_17 = arith.constant 416 : index
    %17 = vector.load %arg18[%c0_16, %c416_17] : memref<16x435xbf16, #tpu.memory_space<vmem>>, vector<16x19xbf16>
    tpu.vector_store %arg18[%c0_16, %c416_17], %16 {strides = array<i32>} : memref<16x435xbf16, #tpu.memory_space<vmem>>, vector<16x19xbf16>,
    %c0_18 = arith.constant 0 : index
    %c0_19 = arith.constant 0 : index
    %c0_20 = arith.constant 0 : index
    %c0_21 = arith.constant 0 : index
    %18 = vector.load %arg1[%c0_18, %c0_19, %c0_20, %c0_21] : memref<1x4x16x326xf32, #tpu.memory_space<vmem>>, vector<1x4x1x326xf32>
    %19 = vector.shape_cast %18 : vector<1x4x1x326xf32> to vector<4x326xf32>
    %c0_22 = arith.constant 0 : index
    %c0_23 = arith.constant 0 : index
    %c1 = arith.constant 1 : index
    %c0_24 = arith.constant 0 : index
    %20 = vector.load %arg1[%c0_22, %c0_23, %c1, %c0_24] : memref<1x4x16x326xf32, #tpu.memory_space<vmem>>, vector<1x4x1x326xf32>
    %21 = vector.shape_cast %20 : vector<1x4x1x326xf32> to vector<4x326xf32>
    %22 = arith.maximumf %19, %21 : vector<4x326xf32>
    %c0_25 = arith.constant 0 : index
    %c0_26 = arith.constant 0 : index
    %c2 = arith.constant 2 : index
    %c0_27 = arith.constant 0 : index
    %23 = vector.load %arg1[%c0_25, %c0_26, %c2, %c0_27] : memref<1x4x16x326xf32, #tpu.memory_space<vmem>>, vector<1x4x1x326xf32>
    %24 = vector.shape_cast %23 : vector<1x4x1x326xf32> to vector<4x326xf32>
    %25 = arith.maximumf %22, %24 : vector<4x326xf32>
    %c0_28 = arith.constant 0 : index
    %c0_29 = arith.constant 0 : index
    %c3_30 = arith.constant 3 : index
    %c0_31 = arith.constant 0 : index
    %26 = vector.load %arg1[%c0_28, %c0_29, %c3_30, %c0_31] : memref<1x4x16x326xf32, #tpu.memory_space<vmem>>, vector<1x4x1x326xf32>
    %27 = vector.shape_cast %26 : vector<1x4x1x326xf32> to vector<4x326xf32>
    %28 = arith.maximumf %25, %27 : vector<4x326xf32>
    %c0_32 = arith.constant 0 : index
    %c0_33 = arith.constant 0 : index
    %c4 = arith.constant 4 : index
    %c0_34 = arith.constant 0 : index
    %29 = vector.load %arg1[%c0_32, %c0_33, %c4, %c0_34] : memref<1x4x16x326xf32, #tpu.memory_space<vmem>>, vector<1x4x1x326xf32>
    %30 = vector.shape_cast %29 : vector<1x4x1x326xf32> to vector<4x326xf32>
    %31 = arith.maximumf %28, %30 : vector<4x326xf32>
    %c0_35 = arith.constant 0 : index
    %c0_36 = arith.constant 0 : index
    %c5 = arith.constant 5 : index
    %c0_37 = arith.constant 0 : index
    %32 = vector.load %arg1[%c0_35, %c0_36, %c5, %c0_37] : memref<1x4x16x326xf32, #tpu.memory_space<vmem>>, vector<1x4x1x326xf32>
    %33 = vector.shape_cast %32 : vector<1x4x1x326xf32> to vector<4x326xf32>
    %34 = arith.maximumf %31, %33 : vector<4x326xf32>
    %c0_38 = arith.constant 0 : index
    %c0_39 = arith.constant 0 : index
    %c6 = arith.constant 6 : index
    %c0_40 = arith.constant 0 : index
    %35 = vector.load %arg1[%c0_38, %c0_39, %c6, %c0_40] : memref<1x4x16x326xf32, #tpu.memory_space<vmem>>, vector<1x4x1x326xf32>
    %36 = vector.shape_cast %35 : vector<1x4x1x326xf32> to vector<4x326xf32>
    %37 = arith.maximumf %34, %36 : vector<4x326xf32>
    %c0_41 = arith.constant 0 : index
    %c0_42 = arith.constant 0 : index
    %c7 = arith.constant 7 : index
    %c0_43 = arith.constant 0 : index
    %38 = vector.load %arg1[%c0_41, %c0_42, %c7, %c0_43] : memref<1x4x16x326xf32, #tpu.memory_space<vmem>>, vector<1x4x1x326xf32>
    %39 = vector.shape_cast %38 : vector<1x4x1x326xf32> to vector<4x326xf32>
    %40 = arith.maximumf %37, %39 : vector<4x326xf32>
    %c0_44 = arith.constant 0 : index
    %c1_45 = arith.constant 1 : index
    %c0_46 = arith.constant 0 : index
    %41 = vector.load %arg15[%c0_44, %c1_45, %c0_46] : memref<4x4x326xf32, #tpu.memory_space<vmem>>, vector<4x1x326xf32>
    %42 = vector.shape_cast %41 : vector<4x1x326xf32> to vector<4x326xf32>
    %43 = vector.shape_cast %40 : vector<4x326xf32> to vector<4x1x326xf32>
    tpu.vector_store %arg15[%c0_44, %c1_45, %c0_46], %43 {strides = array<i32>} : memref<4x4x326xf32, #tpu.memory_space<vmem>>, vector<4x1x326xf32>,
    %c0_47 = arith.constant 0 : index
    %c0_48 = arith.constant 0 : index
    %c8 = arith.constant 8 : index
    %c0_49 = arith.constant 0 : index
    %44 = vector.load %arg1[%c0_47, %c0_48, %c8, %c0_49] : memref<1x4x16x326xf32, #tpu.memory_space<vmem>>, vector<1x4x1x326xf32>
    %45 = vector.shape_cast %44 : vector<1x4x1x326xf32> to vector<4x326xf32>
    %c0_50 = arith.constant 0 : index
    %c0_51 = arith.constant 0 : index
    %c9 = arith.constant 9 : index
    %c0_52 = arith.constant 0 : index
    %46 = vector.load %arg1[%c0_50, %c0_51, %c9, %c0_52] : memref<1x4x16x326xf32, #tpu.memory_space<vmem>>, vector<1x4x1x326xf32>
    %47 = vector.shape_cast %46 : vector<1x4x1x326xf32> to vector<4x326xf32>
    %48 = arith.maximumf %45, %47 : vector<4x326xf32>
    %c0_53 = arith.constant 0 : index
    %c0_54 = arith.constant 0 : index
    %c10 = arith.constant 10 : index
    %c0_55 = arith.constant 0 : index
    %49 = vector.load %arg1[%c0_53, %c0_54, %c10, %c0_55] : memref<1x4x16x326xf32, #tpu.memory_space<vmem>>, vector<1x4x1x326xf32>
    %50 = vector.shape_cast %49 : vector<1x4x1x326xf32> to vector<4x326xf32>
    %51 = arith.maximumf %48, %50 : vector<4x326xf32>
    %c0_56 = arith.constant 0 : index
    %c0_57 = arith.constant 0 : index
    %c11 = arith.constant 11 : index
    %c0_58 = arith.constant 0 : index
    %52 = vector.load %arg1[%c0_56, %c0_57, %c11, %c0_58] : memref<1x4x16x326xf32, #tpu.memory_space<vmem>>, vector<1x4x1x326xf32>
    %53 = vector.shape_cast %52 : vector<1x4x1x326xf32> to vector<4x326xf32>
    %54 = arith.maximumf %51, %53 : vector<4x326xf32>
    %c0_59 = arith.constant 0 : index
    %c0_60 = arith.constant 0 : index
    %c12 = arith.constant 12 : index
    %c0_61 = arith.constant 0 : index
    %55 = vector.load %arg1[%c0_59, %c0_60, %c12, %c0_61] : memref<1x4x16x326xf32, #tpu.memory_space<vmem>>, vector<1x4x1x326xf32>
    %56 = vector.shape_cast %55 : vector<1x4x1x326xf32> to vector<4x326xf32>
    %57 = arith.maximumf %54, %56 : vector<4x326xf32>
    %c0_62 = arith.constant 0 : index
    %c0_63 = arith.constant 0 : index
    %c13 = arith.constant 13 : index
    %c0_64 = arith.constant 0 : index
    %58 = vector.load %arg1[%c0_62, %c0_63, %c13, %c0_64] : memref<1x4x16x326xf32, #tpu.memory_space<vmem>>, vector<1x4x1x326xf32>
    %59 = vector.shape_cast %58 : vector<1x4x1x326xf32> to vector<4x326xf32>
    %60 = arith.maximumf %57, %59 : vector<4x326xf32>
    %c0_65 = arith.constant 0 : index
    %c0_66 = arith.constant 0 : index
    %c14 = arith.constant 14 : index
    %c0_67 = arith.constant 0 : index
    %61 = vector.load %arg1[%c0_65, %c0_66, %c14, %c0_67] : memref<1x4x16x326xf32, #tpu.memory_space<vmem>>, vector<1x4x1x326xf32>
    %62 = vector.shape_cast %61 : vector<1x4x1x326xf32> to vector<4x326xf32>
    %63 = arith.maximumf %60, %62 : vector<4x326xf32>
    %c0_68 = arith.constant 0 : index
    %c0_69 = arith.constant 0 : index
    %c15 = arith.constant 15 : index
    %c0_70 = arith.constant 0 : index
    %64 = vector.load %arg1[%c0_68, %c0_69, %c15, %c0_70] : memref<1x4x16x326xf32, #tpu.memory_space<vmem>>, vector<1x4x1x326xf32>
    %65 = vector.shape_cast %64 : vector<1x4x1x326xf32> to vector<4x326xf32>
    %66 = arith.maximumf %63, %65 : vector<4x326xf32>
    %c0_71 = arith.constant 0 : index
    %c2_72 = arith.constant 2 : index
    %c0_73 = arith.constant 0 : index
    %67 = vector.load %arg15[%c0_71, %c2_72, %c0_73] : memref<4x4x326xf32, #tpu.memory_space<vmem>>, vector<4x1x326xf32>
    %68 = vector.shape_cast %67 : vector<4x1x326xf32> to vector<4x326xf32>
    %69 = vector.shape_cast %66 : vector<4x326xf32> to vector<4x1x326xf32>
    tpu.vector_store %arg15[%c0_71, %c2_72, %c0_73], %69 {strides = array<i32>} : memref<4x4x326xf32, #tpu.memory_space<vmem>>, vector<4x1x326xf32>,
    %c0_74 = arith.constant 0 : index
    %c0_75 = arith.constant 0 : index
    %c0_76 = arith.constant 0 : index
    %70 = vector.load %arg15[%c0_74, %c0_75, %c0_76] : memref<4x4x326xf32, #tpu.memory_space<vmem>>, vector<4x1x288xf32>
    %71 = vector.shape_cast %70 : vector<4x1x288xf32> to vector<4x288xf32>
    %72 = arith.truncf %71 : vector<4x288xf32> to vector<4x288xbf16>
    %c0_77 = arith.constant 0 : index
    %c0_78 = arith.constant 0 : index
    %73 = vector.load %arg16[%c0_77, %c0_78] : memref<144x576xbf16, #tpu.memory_space<vmem>>, vector<4x288xbf16>
    tpu.vector_store %arg16[%c0_77, %c0_78], %72 {strides = array<i32>} : memref<144x576xbf16, #tpu.memory_space<vmem>>, vector<4x288xbf16>,
    %c0_79 = arith.constant 0 : index
    %c0_80 = arith.constant 0 : index
    %c1_81 = arith.constant 1 : index
    %74 = vector.load %arg15[%c0_79, %c0_80, %c1_81] : memref<4x4x326xf32, #tpu.memory_space<vmem>>, vector<4x1x288xf32>
    %75 = vector.shape_cast %74 : vector<4x1x288xf32> to vector<4x288xf32>
    %76 = arith.truncf %75 : vector<4x288xf32> to vector<4x288xbf16>
    %c4_82 = arith.constant 4 : index
    %c0_83 = arith.constant 0 : index
    %77 = vector.load %arg16[%c4_82, %c0_83] : memref<144x576xbf16, #tpu.memory_space<vmem>>, vector<4x288xbf16>
    tpu.vector_store %arg16[%c4_82, %c0_83], %76 {strides = array<i32>} : memref<144x576xbf16, #tpu.memory_space<vmem>>, vector<4x288xbf16>,
    %c0_84 = arith.constant 0 : index
    %c0_85 = arith.constant 0 : index
    %c2_86 = arith.constant 2 : index
    %78 = vector.load %arg15[%c0_84, %c0_85, %c2_86] : memref<4x4x326xf32, #tpu.memory_space<vmem>>, vector<4x1x288xf32>
    %79 = vector.shape_cast %78 : vector<4x1x288xf32> to vector<4x288xf32>
    %80 = arith.truncf %79 : vector<4x288xf32> to vector<4x288xbf16>
    %c8_87 = arith.constant 8 : index
    %c0_88 = arith.constant 0 : index
    %81 = vector.load %arg16[%c8_87, %c0_88] : memref<144x576xbf16, #tpu.memory_space<vmem>>, vector<4x288xbf16>
    tpu.vector_store %arg16[%c8_87, %c0_88], %80 {strides = array<i32>} : memref<144x576xbf16, #tpu.memory_space<vmem>>, vector<4x288xbf16>,
    %c0_89 = arith.constant 0 : index
    %c0_90 = arith.constant 0 : index
    %c18 = arith.constant 18 : index
    %82 = vector.load %arg15[%c0_89, %c0_90, %c18] : memref<4x4x326xf32, #tpu.memory_space<vmem>>, vector<4x1x288xf32>
    %83 = vector.shape_cast %82 : vector<4x1x288xf32> to vector<4x288xf32>
    %84 = arith.truncf %83 : vector<4x288xf32> to vector<4x288xbf16>
    %c12_91 = arith.constant 12 : index
    %c0_92 = arith.constant 0 : index
    %85 = vector.load %arg16[%c12_91, %c0_92] : memref<144x576xbf16, #tpu.memory_space<vmem>>, vector<4x288xbf16>
    tpu.vector_store %arg16[%c12_91, %c0_92], %84 {strides = array<i32>} : memref<144x576xbf16, #tpu.memory_space<vmem>>, vector<4x288xbf16>,
    %c0_93 = arith.constant 0 : index
    %c0_94 = arith.constant 0 : index
    %c19 = arith.constant 19 : index
    %86 = vector.load %arg15[%c0_93, %c0_94, %c19] : memref<4x4x326xf32, #tpu.memory_space<vmem>>, vector<4x1x288xf32>
    %87 = vector.shape_cast %86 : vector<4x1x288xf32> to vector<4x288xf32>
    %88 = arith.truncf %87 : vector<4x288xf32> to vector<4x288xbf16>
    %c16 = arith.constant 16 : index
    %c0_95 = arith.constant 0 : index
    %89 = vector.load %arg16[%c16, %c0_95] : memref<144x576xbf16, #tpu.memory_space<vmem>>, vector<4x288xbf16>
    tpu.vector_store %arg16[%c16, %c0_95], %88 {strides = array<i32>} : memref<144x576xbf16, #tpu.memory_space<vmem>>, vector<4x288xbf16>,
    %c0_96 = arith.constant 0 : index
    %c0_97 = arith.constant 0 : index
    %c20 = arith.constant 20 : index
    %90 = vector.load %arg15[%c0_96, %c0_97, %c20] : memref<4x4x326xf32, #tpu.memory_space<vmem>>, vector<4x1x288xf32>
    %91 = vector.shape_cast %90 : vector<4x1x288xf32> to vector<4x288xf32>
    %92 = arith.truncf %91 : vector<4x288xf32> to vector<4x288xbf16>
    %c20_98 = arith.constant 20 : index
    %c0_99 = arith.constant 0 : index
    %93 = vector.load %arg16[%c20_98, %c0_99] : memref<144x576xbf16, #tpu.memory_space<vmem>>, vector<4x288xbf16>
    tpu.vector_store %arg16[%c20_98, %c0_99], %92 {strides = array<i32>} : memref<144x576xbf16, #tpu.memory_space<vmem>>, vector<4x288xbf16>,
    %c0_100 = arith.constant 0 : index
    %c0_101 = arith.constant 0 : index
    %c36 = arith.constant 36 : index
    %94 = vector.load %arg15[%c0_100, %c0_101, %c36] : memref<4x4x326xf32, #tpu.memory_space<vmem>>, vector<4x1x288xf32>
    %95 = vector.shape_cast %94 : vector<4x1x288xf32> to vector<4x288xf32>
    %96 = arith.truncf %95 : vector<4x288xf32> to vector<4x288xbf16>
    %c24 = arith.constant 24 : index
    %c0_102 = arith.constant 0 : index
    %97 = vector.load %arg16[%c24, %c0_102] : memref<144x576xbf16, #tpu.memory_space<vmem>>, vector<4x288xbf16>
    tpu.vector_store %arg16[%c24, %c0_102], %96 {strides = array<i32>} : memref<144x576xbf16, #tpu.memory_space<vmem>>, vector<4x288xbf16>,
    %c0_103 = arith.constant 0 : index
    %c0_104 = arith.constant 0 : index
    %c37 = arith.constant 37 : index
    %98 = vector.load %arg15[%c0_103, %c0_104, %c37] : memref<4x4x326xf32, #tpu.memory_space<vmem>>, vector<4x1x288xf32>
    %99 = vector.shape_cast %98 : vector<4x1x288xf32> to vector<4x288xf32>
    %100 = arith.truncf %99 : vector<4x288xf32> to vector<4x288xbf16>
    %c28 = arith.constant 28 : index
    %c0_105 = arith.constant 0 : index
    %101 = vector.load %arg16[%c28, %c0_105] : memref<144x576xbf16, #tpu.memory_space<vmem>>, vector<4x288xbf16>
    tpu.vector_store %arg16[%c28, %c0_105], %100 {strides = array<i32>} : memref<144x576xbf16, #tpu.memory_space<vmem>>, vector<4x288xbf16>,
    %c0_106 = arith.constant 0 : index
    %c0_107 = arith.constant 0 : index
    %c38 = arith.constant 38 : index
    %102 = vector.load %arg15[%c0_106, %c0_107, %c38] : memref<4x4x326xf32, #tpu.memory_space<vmem>>, vector<4x1x288xf32>
    %103 = vector.shape_cast %102 : vector<4x1x288xf32> to vector<4x288xf32>
    %104 = arith.truncf %103 : vector<4x288xf32> to vector<4x288xbf16>
    %c32 = arith.constant 32 : index
    %c0_108 = arith.constant 0 : index
    %105 = vector.load %arg16[%c32, %c0_108] : memref<144x576xbf16, #tpu.memory_space<vmem>>, vector<4x288xbf16>
    tpu.vector_store %arg16[%c32, %c0_108], %104 {strides = array<i32>} : memref<144x576xbf16, #tpu.memory_space<vmem>>, vector<4x288xbf16>,
    %c0_109 = arith.constant 0 : index
    %c1_110 = arith.constant 1 : index
    %c0_111 = arith.constant 0 : index
    %106 = vector.load %arg15[%c0_109, %c1_110, %c0_111] : memref<4x4x326xf32, #tpu.memory_space<vmem>>, vector<4x1x288xf32>
    %107 = vector.shape_cast %106 : vector<4x1x288xf32> to vector<4x288xf32>
    %108 = arith.truncf %107 : vector<4x288xf32> to vector<4x288xbf16>
    %c36_112 = arith.constant 36 : index
    %c0_113 = arith.constant 0 : index
    %109 = vector.load %arg16[%c36_112, %c0_113] : memref<144x576xbf16, #tpu.memory_space<vmem>>, vector<4x288xbf16>
    tpu.vector_store %arg16[%c36_112, %c0_113], %108 {strides = array<i32>} : memref<144x576xbf16, #tpu.memory_space<vmem>>, vector<4x288xbf16>,
    %c0_114 = arith.constant 0 : index
    %c1_115 = arith.constant 1 : index
    %c1_116 = arith.constant 1 : index
    %110 = vector.load %arg15[%c0_114, %c1_115, %c1_116] : memref<4x4x326xf32, #tpu.memory_space<vmem>>, vector<4x1x288xf32>
    %111 = vector.shape_cast %110 : vector<4x1x288xf32> to vector<4x288xf32>
    %112 = arith.truncf %111 : vector<4x288xf32> to vector<4x288xbf16>
    %c40 = arith.constant 40 : index
    %c0_117 = arith.constant 0 : index
    %113 = vector.load %arg16[%c40, %c0_117] : memref<144x576xbf16, #tpu.memory_space<vmem>>, vector<4x288xbf16>
    tpu.vector_store %arg16[%c40, %c0_117], %112 {strides = array<i32>} : memref<144x576xbf16, #tpu.memory_space<vmem>>, vector<4x288xbf16>,
    %c0_118 = arith.constant 0 : index
    %c1_119 = arith.constant 1 : index
    %c2_120 = arith.constant 2 : index
    %114 = vector.load %arg15[%c0_118, %c1_119, %c2_120] : memref<4x4x326xf32, #tpu.memory_space<vmem>>, vector<4x1x288xf32>
    %115 = vector.shape_cast %114 : vector<4x1x288xf32> to vector<4x288xf32>
    %116 = arith.truncf %115 : vector<4x288xf32> to vector<4x288xbf16>
    %c44 = arith.constant 44 : index
    %c0_121 = arith.constant 0 : index
    %117 = vector.load %arg16[%c44, %c0_121] : memref<144x576xbf16, #tpu.memory_space<vmem>>, vector<4x288xbf16>
    tpu.vector_store %arg16[%c44, %c0_121], %116 {strides = array<i32>} : memref<144x576xbf16, #tpu.memory_space<vmem>>, vector<4x288xbf16>,
    %c0_122 = arith.constant 0 : index
    %c1_123 = arith.constant 1 : index
    %c18_124 = arith.constant 18 : index
    %118 = vector.load %arg15[%c0_122, %c1_123, %c18_124] : memref<4x4x326xf32, #tpu.memory_space<vmem>>, vector<4x1x288xf32>
    %119 = vector.shape_cast %118 : vector<4x1x288xf32> to vector<4x288xf32>
    %120 = arith.truncf %119 : vector<4x288xf32> to vector<4x288xbf16>
    %c48 = arith.constant 48 : index
    %c0_125 = arith.constant 0 : index
    %121 = vector.load %arg16[%c48, %c0_125] : memref<144x576xbf16, #tpu.memory_space<vmem>>, vector<4x288xbf16>
    tpu.vector_store %arg16[%c48, %c0_125], %120 {strides = array<i32>} : memref<144x576xbf16, #tpu.memory_space<vmem>>, vector<4x288xbf16>,
    %c0_126 = arith.constant 0 : index
    %c1_127 = arith.constant 1 : index
    %c19_128 = arith.constant 19 : index
    %122 = vector.load %arg15[%c0_126, %c1_127, %c19_128] : memref<4x4x326xf32, #tpu.memory_space<vmem>>, vector<4x1x288xf32>
    %123 = vector.shape_cast %122 : vector<4x1x288xf32> to vector<4x288xf32>
    %124 = arith.truncf %123 : vector<4x288xf32> to vector<4x288xbf16>
    %c52 = arith.constant 52 : index
    %c0_129 = arith.constant 0 : index
    %125 = vector.load %arg16[%c52, %c0_129] : memref<144x576xbf16, #tpu.memory_space<vmem>>, vector<4x288xbf16>
    tpu.vector_store %arg16[%c52, %c0_129], %124 {strides = array<i32>} : memref<144x576xbf16, #tpu.memory_space<vmem>>, vector<4x288xbf16>,
    %c0_130 = arith.constant 0 : index
    %c1_131 = arith.constant 1 : index
    %c20_132 = arith.constant 20 : index
    %126 = vector.load %arg15[%c0_130, %c1_131, %c20_132] : memref<4x4x326xf32, #tpu.memory_space<vmem>>, vector<4x1x288xf32>
    %127 = vector.shape_cast %126 : vector<4x1x288xf32> to vector<4x288xf32>
    %128 = arith.truncf %127 : vector<4x288xf32> to vector<4x288xbf16>
    %c56 = arith.constant 56 : index
    %c0_133 = arith.constant 0 : index
    %129 = vector.load %arg16[%c56, %c0_133] : memref<144x576xbf16, #tpu.memory_space<vmem>>, vector<4x288xbf16>
    tpu.vector_store %arg16[%c56, %c0_133], %128 {strides = array<i32>} : memref<144x576xbf16, #tpu.memory_space<vmem>>, vector<4x288xbf16>,
    %c0_134 = arith.constant 0 : index
    %c1_135 = arith.constant 1 : index
    %c36_136 = arith.constant 36 : index
    %130 = vector.load %arg15[%c0_134, %c1_135, %c36_136] : memref<4x4x326xf32, #tpu.memory_space<vmem>>, vector<4x1x288xf32>
    %131 = vector.shape_cast %130 : vector<4x1x288xf32> to vector<4x288xf32>
    %132 = arith.truncf %131 : vector<4x288xf32> to vector<4x288xbf16>
    %c60 = arith.constant 60 : index
    %c0_137 = arith.constant 0 : index
    %133 = vector.load %arg16[%c60, %c0_137] : memref<144x576xbf16, #tpu.memory_space<vmem>>, vector<4x288xbf16>
    tpu.vector_store %arg16[%c60, %c0_137], %132 {strides = array<i32>} : memref<144x576xbf16, #tpu.memory_space<vmem>>, vector<4x288xbf16>,
    %c0_138 = arith.constant 0 : index
    %c1_139 = arith.constant 1 : index
    %c37_140 = arith.constant 37 : index
    %134 = vector.load %arg15[%c0_138, %c1_139, %c37_140] : memref<4x4x326xf32, #tpu.memory_space<vmem>>, vector<4x1x288xf32>
    %135 = vector.shape_cast %134 : vector<4x1x288xf32> to vector<4x288xf32>
    %136 = arith.truncf %135 : vector<4x288xf32> to vector<4x288xbf16>
    %c64 = arith.constant 64 : index
    %c0_141 = arith.constant 0 : index
    %137 = vector.load %arg16[%c64, %c0_141] : memref<144x576xbf16, #tpu.memory_space<vmem>>, vector<4x288xbf16>
    tpu.vector_store %arg16[%c64, %c0_141], %136 {strides = array<i32>} : memref<144x576xbf16, #tpu.memory_space<vmem>>, vector<4x288xbf16>,
    %c0_142 = arith.constant 0 : index
    %c1_143 = arith.constant 1 : index
    %c38_144 = arith.constant 38 : index
    %138 = vector.load %arg15[%c0_142, %c1_143, %c38_144] : memref<4x4x326xf32, #tpu.memory_space<vmem>>, vector<4x1x288xf32>
    %139 = vector.shape_cast %138 : vector<4x1x288xf32> to vector<4x288xf32>
    %140 = arith.truncf %139 : vector<4x288xf32> to vector<4x288xbf16>
    %c68 = arith.constant 68 : index
    %c0_145 = arith.constant 0 : index
    %141 = vector.load %arg16[%c68, %c0_145] : memref<144x576xbf16, #tpu.memory_space<vmem>>, vector<4x288xbf16>
    tpu.vector_store %arg16[%c68, %c0_145], %140 {strides = array<i32>} : memref<144x576xbf16, #tpu.memory_space<vmem>>, vector<4x288xbf16>,
    %c0_146 = arith.constant 0 : index
    %c2_147 = arith.constant 2 : index
    %c0_148 = arith.constant 0 : index
    %142 = vector.load %arg15[%c0_146, %c2_147, %c0_148] : memref<4x4x326xf32, #tpu.memory_space<vmem>>, vector<4x1x288xf32>
    %143 = vector.shape_cast %142 : vector<4x1x288xf32> to vector<4x288xf32>
    %144 = arith.truncf %143 : vector<4x288xf32> to vector<4x288xbf16>
    %c72 = arith.constant 72 : index
    %c0_149 = arith.constant 0 : index
    %145 = vector.load %arg16[%c72, %c0_149] : memref<144x576xbf16, #tpu.memory_space<vmem>>, vector<4x288xbf16>
    tpu.vector_store %arg16[%c72, %c0_149], %144 {strides = array<i32>} : memref<144x576xbf16, #tpu.memory_space<vmem>>, vector<4x288xbf16>,
    %c0_150 = arith.constant 0 : index
    %c2_151 = arith.constant 2 : index
    %c1_152 = arith.constant 1 : index
    %146 = vector.load %arg15[%c0_150, %c2_151, %c1_152] : memref<4x4x326xf32, #tpu.memory_space<vmem>>, vector<4x1x288xf32>
    %147 = vector.shape_cast %146 : vector<4x1x288xf32> to vector<4x288xf32>
    %148 = arith.truncf %147 : vector<4x288xf32> to vector<4x288xbf16>
    %c76 = arith.constant 76 : index
    %c0_153 = arith.constant 0 : index
    %149 = vector.load %arg16[%c76, %c0_153] : memref<144x576xbf16, #tpu.memory_space<vmem>>, vector<4x288xbf16>
    tpu.vector_store %arg16[%c76, %c0_153], %148 {strides = array<i32>} : memref<144x576xbf16, #tpu.memory_space<vmem>>, vector<4x288xbf16>,
    %c0_154 = arith.constant 0 : index
    %c2_155 = arith.constant 2 : index
    %c2_156 = arith.constant 2 : index
    %150 = vector.load %arg15[%c0_154, %c2_155, %c2_156] : memref<4x4x326xf32, #tpu.memory_space<vmem>>, vector<4x1x288xf32>
    %151 = vector.shape_cast %150 : vector<4x1x288xf32> to vector<4x288xf32>
    %152 = arith.truncf %151 : vector<4x288xf32> to vector<4x288xbf16>
    %c80 = arith.constant 80 : index
    %c0_157 = arith.constant 0 : index
    %153 = vector.load %arg16[%c80, %c0_157] : memref<144x576xbf16, #tpu.memory_space<vmem>>, vector<4x288xbf16>
    tpu.vector_store %arg16[%c80, %c0_157], %152 {strides = array<i32>} : memref<144x576xbf16, #tpu.memory_space<vmem>>, vector<4x288xbf16>,
    %c0_158 = arith.constant 0 : index
    %c2_159 = arith.constant 2 : index
    %c18_160 = arith.constant 18 : index
    %154 = vector.load %arg15[%c0_158, %c2_159, %c18_160] : memref<4x4x326xf32, #tpu.memory_space<vmem>>, vector<4x1x288xf32>
    %155 = vector.shape_cast %154 : vector<4x1x288xf32> to vector<4x288xf32>
    %156 = arith.truncf %155 : vector<4x288xf32> to vector<4x288xbf16>
    %c84 = arith.constant 84 : index
    %c0_161 = arith.constant 0 : index
    %157 = vector.load %arg16[%c84, %c0_161] : memref<144x576xbf16, #tpu.memory_space<vmem>>, vector<4x288xbf16>
    tpu.vector_store %arg16[%c84, %c0_161], %156 {strides = array<i32>} : memref<144x576xbf16, #tpu.memory_space<vmem>>, vector<4x288xbf16>,
    %c0_162 = arith.constant 0 : index
    %c2_163 = arith.constant 2 : index
    %c19_164 = arith.constant 19 : index
    %158 = vector.load %arg15[%c0_162, %c2_163, %c19_164] : memref<4x4x326xf32, #tpu.memory_space<vmem>>, vector<4x1x288xf32>
    %159 = vector.shape_cast %158 : vector<4x1x288xf32> to vector<4x288xf32>
    %160 = arith.truncf %159 : vector<4x288xf32> to vector<4x288xbf16>
    %c88 = arith.constant 88 : index
    %c0_165 = arith.constant 0 : index
    %161 = vector.load %arg16[%c88, %c0_165] : memref<144x576xbf16, #tpu.memory_space<vmem>>, vector<4x288xbf16>
    tpu.vector_store %arg16[%c88, %c0_165], %160 {strides = array<i32>} : memref<144x576xbf16, #tpu.memory_space<vmem>>, vector<4x288xbf16>,
    %c0_166 = arith.constant 0 : index
    %c2_167 = arith.constant 2 : index
    %c20_168 = arith.constant 20 : index
    %162 = vector.load %arg15[%c0_166, %c2_167, %c20_168] : memref<4x4x326xf32, #tpu.memory_space<vmem>>, vector<4x1x288xf32>
    %163 = vector.shape_cast %162 : vector<4x1x288xf32> to vector<4x288xf32>
    %164 = arith.truncf %163 : vector<4x288xf32> to vector<4x288xbf16>
    %c92 = arith.constant 92 : index
    %c0_169 = arith.constant 0 : index
    %165 = vector.load %arg16[%c92, %c0_169] : memref<144x576xbf16, #tpu.memory_space<vmem>>, vector<4x288xbf16>
    tpu.vector_store %arg16[%c92, %c0_169], %164 {strides = array<i32>} : memref<144x576xbf16, #tpu.memory_space<vmem>>, vector<4x288xbf16>,
    %c0_170 = arith.constant 0 : index
    %c2_171 = arith.constant 2 : index
    %c36_172 = arith.constant 36 : index
    %166 = vector.load %arg15[%c0_170, %c2_171, %c36_172] : memref<4x4x326xf32, #tpu.memory_space<vmem>>, vector<4x1x288xf32>
    %167 = vector.shape_cast %166 : vector<4x1x288xf32> to vector<4x288xf32>
    %168 = arith.truncf %167 : vector<4x288xf32> to vector<4x288xbf16>
    %c96 = arith.constant 96 : index
    %c0_173 = arith.constant 0 : index
    %169 = vector.load %arg16[%c96, %c0_173] : memref<144x576xbf16, #tpu.memory_space<vmem>>, vector<4x288xbf16>
    tpu.vector_store %arg16[%c96, %c0_173], %168 {strides = array<i32>} : memref<144x576xbf16, #tpu.memory_space<vmem>>, vector<4x288xbf16>,
    %c0_174 = arith.constant 0 : index
    %c2_175 = arith.constant 2 : index
    %c37_176 = arith.constant 37 : index
    %170 = vector.load %arg15[%c0_174, %c2_175, %c37_176] : memref<4x4x326xf32, #tpu.memory_space<vmem>>, vector<4x1x288xf32>
    %171 = vector.shape_cast %170 : vector<4x1x288xf32> to vector<4x288xf32>
    %172 = arith.truncf %171 : vector<4x288xf32> to vector<4x288xbf16>
    %c100 = arith.constant 100 : index
    %c0_177 = arith.constant 0 : index
    %173 = vector.load %arg16[%c100, %c0_177] : memref<144x576xbf16, #tpu.memory_space<vmem>>, vector<4x288xbf16>
    tpu.vector_store %arg16[%c100, %c0_177], %172 {strides = array<i32>} : memref<144x576xbf16, #tpu.memory_space<vmem>>, vector<4x288xbf16>,
    %c0_178 = arith.constant 0 : index
    %c2_179 = arith.constant 2 : index
    %c38_180 = arith.constant 38 : index
    %174 = vector.load %arg15[%c0_178, %c2_179, %c38_180] : memref<4x4x326xf32, #tpu.memory_space<vmem>>, vector<4x1x288xf32>
    %175 = vector.shape_cast %174 : vector<4x1x288xf32> to vector<4x288xf32>
    %176 = arith.truncf %175 : vector<4x288xf32> to vector<4x288xbf16>
    %c104 = arith.constant 104 : index
    %c0_181 = arith.constant 0 : index
    %177 = vector.load %arg16[%c104, %c0_181] : memref<144x576xbf16, #tpu.memory_space<vmem>>, vector<4x288xbf16>
    tpu.vector_store %arg16[%c104, %c0_181], %176 {strides = array<i32>} : memref<144x576xbf16, #tpu.memory_space<vmem>>, vector<4x288xbf16>,
    %c0_182 = arith.constant 0 : index
    %c1_183 = arith.constant 1 : index
    %c0_184 = arith.constant 0 : index
    %178 = vector.load %arg15[%c0_182, %c1_183, %c0_184] : memref<4x4x326xf32, #tpu.memory_space<vmem>>, vector<4x1x288xf32>
    %179 = vector.shape_cast %178 : vector<4x1x288xf32> to vector<4x288xf32>
    %180 = arith.truncf %179 : vector<4x288xf32> to vector<4x288xbf16>
    %c0_185 = arith.constant 0 : index
    %c288 = arith.constant 288 : index
    %181 = vector.load %arg16[%c0_185, %c288] : memref<144x576xbf16, #tpu.memory_space<vmem>>, vector<4x288xbf16>
    tpu.vector_store %arg16[%c0_185, %c288], %180 {strides = array<i32>} : memref<144x576xbf16, #tpu.memory_space<vmem>>, vector<4x288xbf16>,
    %c0_186 = arith.constant 0 : index
    %c1_187 = arith.constant 1 : index
    %c1_188 = arith.constant 1 : index
    %182 = vector.load %arg15[%c0_186, %c1_187, %c1_188] : memref<4x4x326xf32, #tpu.memory_space<vmem>>, vector<4x1x288xf32>
    %183 = vector.shape_cast %182 : vector<4x1x288xf32> to vector<4x288xf32>
    %184 = arith.truncf %183 : vector<4x288xf32> to vector<4x288xbf16>
    %c4_189 = arith.constant 4 : index
    %c288_190 = arith.constant 288 : index
    %185 = vector.load %arg16[%c4_189, %c288_190] : memref<144x576xbf16, #tpu.memory_space<vmem>>, vector<4x288xbf16>
    tpu.vector_store %arg16[%c4_189, %c288_190], %184 {strides = array<i32>} : memref<144x576xbf16, #tpu.memory_space<vmem>>, vector<4x288xbf16>,
    %c0_191 = arith.constant 0 : index
    %c1_192 = arith.constant 1 : index
    %c2_193 = arith.constant 2 : index
    %186 = vector.load %arg15[%c0_191, %c1_192, %c2_193] : memref<4x4x326xf32, #tpu.memory_space<vmem>>, vector<4x1x288xf32>
    %187 = vector.shape_cast %186 : vector<4x1x288xf32> to vector<4x288xf32>
    %188 = arith.truncf %187 : vector<4x288xf32> to vector<4x288xbf16>
    %c8_194 = arith.constant 8 : index
    %c288_195 = arith.constant 288 : index
    %189 = vector.load %arg16[%c8_194, %c288_195] : memref<144x576xbf16, #tpu.memory_space<vmem>>, vector<4x288xbf16>
    tpu.vector_store %arg16[%c8_194, %c288_195], %188 {strides = array<i32>} : memref<144x576xbf16, #tpu.memory_space<vmem>>, vector<4x288xbf16>,
    %c0_196 = arith.constant 0 : index
    %c1_197 = arith.constant 1 : index
    %c18_198 = arith.constant 18 : index
    %190 = vector.load %arg15[%c0_196, %c1_197, %c18_198] : memref<4x4x326xf32, #tpu.memory_space<vmem>>, vector<4x1x288xf32>
    %191 = vector.shape_cast %190 : vector<4x1x288xf32> to vector<4x288xf32>
    %192 = arith.truncf %191 : vector<4x288xf32> to vector<4x288xbf16>
    %c12_199 = arith.constant 12 : index
    %c288_200 = arith.constant 288 : index
    %193 = vector.load %arg16[%c12_199, %c288_200] : memref<144x576xbf16, #tpu.memory_space<vmem>>, vector<4x288xbf16>
    tpu.vector_store %arg16[%c12_199, %c288_200], %192 {strides = array<i32>} : memref<144x576xbf16, #tpu.memory_space<vmem>>, vector<4x288xbf16>,
    %c0_201 = arith.constant 0 : index
    %c1_202 = arith.constant 1 : index
    %c19_203 = arith.constant 19 : index
    %194 = vector.load %arg15[%c0_201, %c1_202, %c19_203] : memref<4x4x326xf32, #tpu.memory_space<vmem>>, vector<4x1x288xf32>
    %195 = vector.shape_cast %194 : vector<4x1x288xf32> to vector<4x288xf32>
    %196 = arith.truncf %195 : vector<4x288xf32> to vector<4x288xbf16>
    %c16_204 = arith.constant 16 : index
    %c288_205 = arith.constant 288 : index
    %197 = vector.load %arg16[%c16_204, %c288_205] : memref<144x576xbf16, #tpu.memory_space<vmem>>, vector<4x288xbf16>
    tpu.vector_store %arg16[%c16_204, %c288_205], %196 {strides = array<i32>} : memref<144x576xbf16, #tpu.memory_space<vmem>>, vector<4x288xbf16>,
    %c0_206 = arith.constant 0 : index
    %c1_207 = arith.constant 1 : index
    %c20_208 = arith.constant 20 : index
    %198 = vector.load %arg15[%c0_206, %c1_207, %c20_208] : memref<4x4x326xf32, #tpu.memory_space<vmem>>, vector<4x1x288xf32>
    %199 = vector.shape_cast %198 : vector<4x1x288xf32> to vector<4x288xf32>
    %200 = arith.truncf %199 : vector<4x288xf32> to vector<4x288xbf16>
    %c20_209 = arith.constant 20 : index
    %c288_210 = arith.constant 288 : index
    %201 = vector.load %arg16[%c20_209, %c288_210] : memref<144x576xbf16, #tpu.memory_space<vmem>>, vector<4x288xbf16>
    tpu.vector_store %arg16[%c20_209, %c288_210], %200 {strides = array<i32>} : memref<144x576xbf16, #tpu.memory_space<vmem>>, vector<4x288xbf16>,
    %c0_211 = arith.constant 0 : index
    %c1_212 = arith.constant 1 : index
    %c36_213 = arith.constant 36 : index
    %202 = vector.load %arg15[%c0_211, %c1_212, %c36_213] : memref<4x4x326xf32, #tpu.memory_space<vmem>>, vector<4x1x288xf32>
    %203 = vector.shape_cast %202 : vector<4x1x288xf32> to vector<4x288xf32>
    %204 = arith.truncf %203 : vector<4x288xf32> to vector<4x288xbf16>
    %c24_214 = arith.constant 24 : index
    %c288_215 = arith.constant 288 : index
    %205 = vector.load %arg16[%c24_214, %c288_215] : memref<144x576xbf16, #tpu.memory_space<vmem>>, vector<4x288xbf16>
    tpu.vector_store %arg16[%c24_214, %c288_215], %204 {strides = array<i32>} : memref<144x576xbf16, #tpu.memory_space<vmem>>, vector<4x288xbf16>,
    %c0_216 = arith.constant 0 : index
    %c1_217 = arith.constant 1 : index
    %c37_218 = arith.constant 37 : index
    %206 = vector.load %arg15[%c0_216, %c1_217, %c37_218] : memref<4x4x326xf32, #tpu.memory_space<vmem>>, vector<4x1x288xf32>
    %207 = vector.shape_cast %206 : vector<4x1x288xf32> to vector<4x288xf32>
    %208 = arith.truncf %207 : vector<4x288xf32> to vector<4x288xbf16>
    %c28_219 = arith.constant 28 : index
    %c288_220 = arith.constant 288 : index
    %209 = vector.load %arg16[%c28_219, %c288_220] : memref<144x576xbf16, #tpu.memory_space<vmem>>, vector<4x288xbf16>
    tpu.vector_store %arg16[%c28_219, %c288_220], %208 {strides = array<i32>} : memref<144x576xbf16, #tpu.memory_space<vmem>>, vector<4x288xbf16>,
    %c0_221 = arith.constant 0 : index
    %c1_222 = arith.constant 1 : index
    %c38_223 = arith.constant 38 : index
    %210 = vector.load %arg15[%c0_221, %c1_222, %c38_223] : memref<4x4x326xf32, #tpu.memory_space<vmem>>, vector<4x1x288xf32>
    %211 = vector.shape_cast %210 : vector<4x1x288xf32> to vector<4x288xf32>
    %212 = arith.truncf %211 : vector<4x288xf32> to vector<4x288xbf16>
    %c32_224 = arith.constant 32 : index
    %c288_225 = arith.constant 288 : index
    %213 = vector.load %arg16[%c32_224, %c288_225] : memref<144x576xbf16, #tpu.memory_space<vmem>>, vector<4x288xbf16>
    tpu.vector_store %arg16[%c32_224, %c288_225], %212 {strides = array<i32>} : memref<144x576xbf16, #tpu.memory_space<vmem>>, vector<4x288xbf16>,
    %c0_226 = arith.constant 0 : index
    %c2_227 = arith.constant 2 : index
    %c0_228 = arith.constant 0 : index
    %214 = vector.load %arg15[%c0_226, %c2_227, %c0_228] : memref<4x4x326xf32, #tpu.memory_space<vmem>>, vector<4x1x288xf32>
    %215 = vector.shape_cast %214 : vector<4x1x288xf32> to vector<4x288xf32>
    %216 = arith.truncf %215 : vector<4x288xf32> to vector<4x288xbf16>
    %c36_229 = arith.constant 36 : index
    %c288_230 = arith.constant 288 : index
    %217 = vector.load %arg16[%c36_229, %c288_230] : memref<144x576xbf16, #tpu.memory_space<vmem>>, vector<4x288xbf16>
    tpu.vector_store %arg16[%c36_229, %c288_230], %216 {strides = array<i32>} : memref<144x576xbf16, #tpu.memory_space<vmem>>, vector<4x288xbf16>,
    %c0_231 = arith.constant 0 : index
    %c2_232 = arith.constant 2 : index
    %c1_233 = arith.constant 1 : index
    %218 = vector.load %arg15[%c0_231, %c2_232, %c1_233] : memref<4x4x326xf32, #tpu.memory_space<vmem>>, vector<4x1x288xf32>
    %219 = vector.shape_cast %218 : vector<4x1x288xf32> to vector<4x288xf32>
    %220 = arith.truncf %219 : vector<4x288xf32> to vector<4x288xbf16>
    %c40_234 = arith.constant 40 : index
    %c288_235 = arith.constant 288 : index
    %221 = vector.load %arg16[%c40_234, %c288_235] : memref<144x576xbf16, #tpu.memory_space<vmem>>, vector<4x288xbf16>
    tpu.vector_store %arg16[%c40_234, %c288_235], %220 {strides = array<i32>} : memref<144x576xbf16, #tpu.memory_space<vmem>>, vector<4x288xbf16>,
    %c0_236 = arith.constant 0 : index
    %c2_237 = arith.constant 2 : index
    %c2_238 = arith.constant 2 : index
    %222 = vector.load %arg15[%c0_236, %c2_237, %c2_238] : memref<4x4x326xf32, #tpu.memory_space<vmem>>, vector<4x1x288xf32>
    %223 = vector.shape_cast %222 : vector<4x1x288xf32> to vector<4x288xf32>
    %224 = arith.truncf %223 : vector<4x288xf32> to vector<4x288xbf16>
    %c44_239 = arith.constant 44 : index
    %c288_240 = arith.constant 288 : index
    %225 = vector.load %arg16[%c44_239, %c288_240] : memref<144x576xbf16, #tpu.memory_space<vmem>>, vector<4x288xbf16>
    tpu.vector_store %arg16[%c44_239, %c288_240], %224 {strides = array<i32>} : memref<144x576xbf16, #tpu.memory_space<vmem>>, vector<4x288xbf16>,
    %c0_241 = arith.constant 0 : index
    %c2_242 = arith.constant 2 : index
    %c18_243 = arith.constant 18 : index
    %226 = vector.load %arg15[%c0_241, %c2_242, %c18_243] : memref<4x4x326xf32, #tpu.memory_space<vmem>>, vector<4x1x288xf32>
    %227 = vector.shape_cast %226 : vector<4x1x288xf32> to vector<4x288xf32>
    %228 = arith.truncf %227 : vector<4x288xf32> to vector<4x288xbf16>
    %c48_244 = arith.constant 48 : index
    %c288_245 = arith.constant 288 : index
    %229 = vector.load %arg16[%c48_244, %c288_245] : memref<144x576xbf16, #tpu.memory_space<vmem>>, vector<4x288xbf16>
    tpu.vector_store %arg16[%c48_244, %c288_245], %228 {strides = array<i32>} : memref<144x576xbf16, #tpu.memory_space<vmem>>, vector<4x288xbf16>,
    %c0_246 = arith.constant 0 : index
    %c2_247 = arith.constant 2 : index
    %c19_248 = arith.constant 19 : index
    %230 = vector.load %arg15[%c0_246, %c2_247, %c19_248] : memref<4x4x326xf32, #tpu.memory_space<vmem>>, vector<4x1x288xf32>
    %231 = vector.shape_cast %230 : vector<4x1x288xf32> to vector<4x288xf32>
    %232 = arith.truncf %231 : vector<4x288xf32> to vector<4x288xbf16>
    %c52_249 = arith.constant 52 : index
    %c288_250 = arith.constant 288 : index
    %233 = vector.load %arg16[%c52_249, %c288_250] : memref<144x576xbf16, #tpu.memory_space<vmem>>, vector<4x288xbf16>
    tpu.vector_store %arg16[%c52_249, %c288_250], %232 {strides = array<i32>} : memref<144x576xbf16, #tpu.memory_space<vmem>>, vector<4x288xbf16>,
    %c0_251 = arith.constant 0 : index
    %c2_252 = arith.constant 2 : index
    %c20_253 = arith.constant 20 : index
    %234 = vector.load %arg15[%c0_251, %c2_252, %c20_253] : memref<4x4x326xf32, #tpu.memory_space<vmem>>, vector<4x1x288xf32>
    %235 = vector.shape_cast %234 : vector<4x1x288xf32> to vector<4x288xf32>
    %236 = arith.truncf %235 : vector<4x288xf32> to vector<4x288xbf16>
    %c56_254 = arith.constant 56 : index
    %c288_255 = arith.constant 288 : index
    %237 = vector.load %arg16[%c56_254, %c288_255] : memref<144x576xbf16, #tpu.memory_space<vmem>>, vector<4x288xbf16>
    tpu.vector_store %arg16[%c56_254, %c288_255], %236 {strides = array<i32>} : memref<144x576xbf16, #tpu.memory_space<vmem>>, vector<4x288xbf16>,
    %c0_256 = arith.constant 0 : index
    %c2_257 = arith.constant 2 : index
    %c36_258 = arith.constant 36 : index
    %238 = vector.load %arg15[%c0_256, %c2_257, %c36_258] : memref<4x4x326xf32, #tpu.memory_space<vmem>>, vector<4x1x288xf32>
    %239 = vector.shape_cast %238 : vector<4x1x288xf32> to vector<4x288xf32>
    %240 = arith.truncf %239 : vector<4x288xf32> to vector<4x288xbf16>
    %c60_259 = arith.constant 60 : index
    %c288_260 = arith.constant 288 : index
    %241 = vector.load %arg16[%c60_259, %c288_260] : memref<144x576xbf16, #tpu.memory_space<vmem>>, vector<4x288xbf16>
    tpu.vector_store %arg16[%c60_259, %c288_260], %240 {strides = array<i32>} : memref<144x576xbf16, #tpu.memory_space<vmem>>, vector<4x288xbf16>,
    %c0_261 = arith.constant 0 : index
    %c2_262 = arith.constant 2 : index
    %c37_263 = arith.constant 37 : index
    %242 = vector.load %arg15[%c0_261, %c2_262, %c37_263] : memref<4x4x326xf32, #tpu.memory_space<vmem>>, vector<4x1x288xf32>
    %243 = vector.shape_cast %242 : vector<4x1x288xf32> to vector<4x288xf32>
    %244 = arith.truncf %243 : vector<4x288xf32> to vector<4x288xbf16>
    %c64_264 = arith.constant 64 : index
    %c288_265 = arith.constant 288 : index
    %245 = vector.load %arg16[%c64_264, %c288_265] : memref<144x576xbf16, #tpu.memory_space<vmem>>, vector<4x288xbf16>
    tpu.vector_store %arg16[%c64_264, %c288_265], %244 {strides = array<i32>} : memref<144x576xbf16, #tpu.memory_space<vmem>>, vector<4x288xbf16>,
    %c0_266 = arith.constant 0 : index
    %c2_267 = arith.constant 2 : index
    %c38_268 = arith.constant 38 : index
    %246 = vector.load %arg15[%c0_266, %c2_267, %c38_268] : memref<4x4x326xf32, #tpu.memory_space<vmem>>, vector<4x1x288xf32>
    %247 = vector.shape_cast %246 : vector<4x1x288xf32> to vector<4x288xf32>
    %248 = arith.truncf %247 : vector<4x288xf32> to vector<4x288xbf16>
    %c68_269 = arith.constant 68 : index
    %c288_270 = arith.constant 288 : index
    %249 = vector.load %arg16[%c68_269, %c288_270] : memref<144x576xbf16, #tpu.memory_space<vmem>>, vector<4x288xbf16>
    tpu.vector_store %arg16[%c68_269, %c288_270], %248 {strides = array<i32>} : memref<144x576xbf16, #tpu.memory_space<vmem>>, vector<4x288xbf16>,
    %c0_271 = arith.constant 0 : index
    %c3_272 = arith.constant 3 : index
    %c0_273 = arith.constant 0 : index
    %250 = vector.load %arg15[%c0_271, %c3_272, %c0_273] : memref<4x4x326xf32, #tpu.memory_space<vmem>>, vector<4x1x288xf32>
    %251 = vector.shape_cast %250 : vector<4x1x288xf32> to vector<4x288xf32>
    %252 = arith.truncf %251 : vector<4x288xf32> to vector<4x288xbf16>
    %c72_274 = arith.constant 72 : index
    %c288_275 = arith.constant 288 : index
    %253 = vector.load %arg16[%c72_274, %c288_275] : memref<144x576xbf16, #tpu.memory_space<vmem>>, vector<4x288xbf16>
    tpu.vector_store %arg16[%c72_274, %c288_275], %252 {strides = array<i32>} : memref<144x576xbf16, #tpu.memory_space<vmem>>, vector<4x288xbf16>,
    %c0_276 = arith.constant 0 : index
    %c3_277 = arith.constant 3 : index
    %c1_278 = arith.constant 1 : index
    %254 = vector.load %arg15[%c0_276, %c3_277, %c1_278] : memref<4x4x326xf32, #tpu.memory_space<vmem>>, vector<4x1x288xf32>
    %255 = vector.shape_cast %254 : vector<4x1x288xf32> to vector<4x288xf32>
    %256 = arith.truncf %255 : vector<4x288xf32> to vector<4x288xbf16>
    %c76_279 = arith.constant 76 : index
    %c288_280 = arith.constant 288 : index
    %257 = vector.load %arg16[%c76_279, %c288_280] : memref<144x576xbf16, #tpu.memory_space<vmem>>, vector<4x288xbf16>
    tpu.vector_store %arg16[%c76_279, %c288_280], %256 {strides = array<i32>} : memref<144x576xbf16, #tpu.memory_space<vmem>>, vector<4x288xbf16>,
    %c0_281 = arith.constant 0 : index
    %c3_282 = arith.constant 3 : index
    %c2_283 = arith.constant 2 : index
    %258 = vector.load %arg15[%c0_281, %c3_282, %c2_283] : memref<4x4x326xf32, #tpu.memory_space<vmem>>, vector<4x1x288xf32>
    %259 = vector.shape_cast %258 : vector<4x1x288xf32> to vector<4x288xf32>
    %260 = arith.truncf %259 : vector<4x288xf32> to vector<4x288xbf16>
    %c80_284 = arith.constant 80 : index
    %c288_285 = arith.constant 288 : index
    %261 = vector.load %arg16[%c80_284, %c288_285] : memref<144x576xbf16, #tpu.memory_space<vmem>>, vector<4x288xbf16>
    tpu.vector_store %arg16[%c80_284, %c288_285], %260 {strides = array<i32>} : memref<144x576xbf16, #tpu.memory_space<vmem>>, vector<4x288xbf16>,
    %c0_286 = arith.constant 0 : index
    %c3_287 = arith.constant 3 : index
    %c18_288 = arith.constant 18 : index
    %262 = vector.load %arg15[%c0_286, %c3_287, %c18_288] : memref<4x4x326xf32, #tpu.memory_space<vmem>>, vector<4x1x288xf32>
    %263 = vector.shape_cast %262 : vector<4x1x288xf32> to vector<4x288xf32>
    %264 = arith.truncf %263 : vector<4x288xf32> to vector<4x288xbf16>
    %c84_289 = arith.constant 84 : index
    %c288_290 = arith.constant 288 : index
    %265 = vector.load %arg16[%c84_289, %c288_290] : memref<144x576xbf16, #tpu.memory_space<vmem>>, vector<4x288xbf16>
    tpu.vector_store %arg16[%c84_289, %c288_290], %264 {strides = array<i32>} : memref<144x576xbf16, #tpu.memory_space<vmem>>, vector<4x288xbf16>,
    %c0_291 = arith.constant 0 : index
    %c3_292 = arith.constant 3 : index
    %c19_293 = arith.constant 19 : index
    %266 = vector.load %arg15[%c0_291, %c3_292, %c19_293] : memref<4x4x326xf32, #tpu.memory_space<vmem>>, vector<4x1x288xf32>
    %267 = vector.shape_cast %266 : vector<4x1x288xf32> to vector<4x288xf32>
    %268 = arith.truncf %267 : vector<4x288xf32> to vector<4x288xbf16>
    %c88_294 = arith.constant 88 : index
    %c288_295 = arith.constant 288 : index
    %269 = vector.load %arg16[%c88_294, %c288_295] : memref<144x576xbf16, #tpu.memory_space<vmem>>, vector<4x288xbf16>
    tpu.vector_store %arg16[%c88_294, %c288_295], %268 {strides = array<i32>} : memref<144x576xbf16, #tpu.memory_space<vmem>>, vector<4x288xbf16>,
    %c0_296 = arith.constant 0 : index
    %c3_297 = arith.constant 3 : index
    %c20_298 = arith.constant 20 : index
    %270 = vector.load %arg15[%c0_296, %c3_297, %c20_298] : memref<4x4x326xf32, #tpu.memory_space<vmem>>, vector<4x1x288xf32>
    %271 = vector.shape_cast %270 : vector<4x1x288xf32> to vector<4x288xf32>
    %272 = arith.truncf %271 : vector<4x288xf32> to vector<4x288xbf16>
    %c92_299 = arith.constant 92 : index
    %c288_300 = arith.constant 288 : index
    %273 = vector.load %arg16[%c92_299, %c288_300] : memref<144x576xbf16, #tpu.memory_space<vmem>>, vector<4x288xbf16>
    tpu.vector_store %arg16[%c92_299, %c288_300], %272 {strides = array<i32>} : memref<144x576xbf16, #tpu.memory_space<vmem>>, vector<4x288xbf16>,
    %c0_301 = arith.constant 0 : index
    %c3_302 = arith.constant 3 : index
    %c36_303 = arith.constant 36 : index
    %274 = vector.load %arg15[%c0_301, %c3_302, %c36_303] : memref<4x4x326xf32, #tpu.memory_space<vmem>>, vector<4x1x288xf32>
    %275 = vector.shape_cast %274 : vector<4x1x288xf32> to vector<4x288xf32>
    %276 = arith.truncf %275 : vector<4x288xf32> to vector<4x288xbf16>
    %c96_304 = arith.constant 96 : index
    %c288_305 = arith.constant 288 : index
    %277 = vector.load %arg16[%c96_304, %c288_305] : memref<144x576xbf16, #tpu.memory_space<vmem>>, vector<4x288xbf16>
    tpu.vector_store %arg16[%c96_304, %c288_305], %276 {strides = array<i32>} : memref<144x576xbf16, #tpu.memory_space<vmem>>, vector<4x288xbf16>,
    %c0_306 = arith.constant 0 : index
    %c3_307 = arith.constant 3 : index
    %c37_308 = arith.constant 37 : index
    %278 = vector.load %arg15[%c0_306, %c3_307, %c37_308] : memref<4x4x326xf32, #tpu.memory_space<vmem>>, vector<4x1x288xf32>
    %279 = vector.shape_cast %278 : vector<4x1x288xf32> to vector<4x288xf32>
    %280 = arith.truncf %279 : vector<4x288xf32> to vector<4x288xbf16>
    %c100_309 = arith.constant 100 : index
    %c288_310 = arith.constant 288 : index
    %281 = vector.load %arg16[%c100_309, %c288_310] : memref<144x576xbf16, #tpu.memory_space<vmem>>, vector<4x288xbf16>
    tpu.vector_store %arg16[%c100_309, %c288_310], %280 {strides = array<i32>} : memref<144x576xbf16, #tpu.memory_space<vmem>>, vector<4x288xbf16>,
    %c0_311 = arith.constant 0 : index
    %c3_312 = arith.constant 3 : index
    %c38_313 = arith.constant 38 : index
    %282 = vector.load %arg15[%c0_311, %c3_312, %c38_313] : memref<4x4x326xf32, #tpu.memory_space<vmem>>, vector<4x1x288xf32>
    %283 = vector.shape_cast %282 : vector<4x1x288xf32> to vector<4x288xf32>
    %284 = arith.truncf %283 : vector<4x288xf32> to vector<4x288xbf16>
    %c104_314 = arith.constant 104 : index
    %c288_315 = arith.constant 288 : index
    %285 = vector.load %arg16[%c104_314, %c288_315] : memref<144x576xbf16, #tpu.memory_space<vmem>>, vector<4x288xbf16>
    tpu.vector_store %arg16[%c104_314, %c288_315], %284 {strides = array<i32>} : memref<144x576xbf16, #tpu.memory_space<vmem>>, vector<4x288xbf16>,
    %c0_316 = arith.constant 0 : index
    %c0_317 = arith.constant 0 : index
    %286 = vector.load %arg3[%c0_316, %c0_317] : memref<8x108xbf16, #tpu.memory_space<vmem>>, vector<8x108xbf16>
    %c0_318 = arith.constant 0 : index
    %c0_319 = arith.constant 0 : index
    %287 = vector.load %arg16[%c0_318, %c0_319] : memref<144x576xbf16, #tpu.memory_space<vmem>>, vector<108x576xbf16>
    %cst_320 = arith.constant dense<0.000000e+00> : vector<8x576xf32>
    %288 = tpu.matmul %286, %287, %cst_320 {dimension_numbers = #tpu.dot_dimension_numbers<[1], [0], [0], [1], [0, 0, 1, 1], [], []>} : vector<8x108xbf16>, vector<108x576xbf16>, vector<8x576xf32> -> vector<8x576xf32>
    %c0_321 = arith.constant 0 : index
    %c0_322 = arith.constant 0 : index
    %289 = vector.load %arg4[%c0_321, %c0_322] : memref<8x1xf32, #tpu.memory_space<vmem>>, vector<8x1xf32>
    %290 = vector.broadcast %289 : vector<8x1xf32> to vector<8x576xf32>
    %291 = arith.addf %288, %290 : vector<8x576xf32>
    %cst_323 = arith.constant 0.000000e+00 : f32
    %292 = vector.broadcast %cst_323 : f32 to vector<8x576xf32>
    %293 = arith.cmpf oge, %291, %292 : vector<8x576xf32>
    %cst_324 = arith.constant 0.00999999977 : f32
    %294 = vector.broadcast %cst_324 : f32 to vector<8x576xf32>
    %295 = arith.mulf %294, %291 : vector<8x576xf32>
    %296 = arith.select %293, %291, %295 : vector<8x576xi1>, vector<8x576xf32>
    %c0_325 = arith.constant 0 : index
    %c0_326 = arith.constant 0 : index
    %297 = vector.load %arg5[%c0_325, %c0_326] : memref<8x1xf32, #tpu.memory_space<vmem>>, vector<8x1xf32>
    %298 = vector.broadcast %297 : vector<8x1xf32> to vector<8x576xf32>
    %299 = arith.addf %296, %298 : vector<8x576xf32>
    %300 = vector.broadcast %0 : vector<1x576xf32> to vector<8x576xf32>
    %301 = arith.mulf %299, %300 : vector<8x576xf32>
    %302 = arith.truncf %301 : vector<8x576xf32> to vector<8x576xbf16>
    %303 = vector.extract_strided_slice %302 {offsets = [0, 0], sizes = [8, 288], strides = [1, 1]} : vector<8x576xbf16> to vector<8x288xbf16>
    %c0_327 = arith.constant 0 : index
    %c128 = arith.constant 128 : index
    %304 = vector.load %arg17[%c0_327, %c128] : memref<16x435xbf16, #tpu.memory_space<vmem>>, vector<8x288xbf16>
    tpu.vector_store %arg17[%c0_327, %c128], %303 {strides = array<i32>} : memref<16x435xbf16, #tpu.memory_space<vmem>>, vector<8x288xbf16>,
    %305 = vector.extract_strided_slice %302 {offsets = [0, 288], sizes = [8, 288], strides = [1, 1]} : vector<8x576xbf16> to vector<8x288xbf16>
    %c8_328 = arith.constant 8 : index
    %c128_329 = arith.constant 128 : index
    %306 = vector.load %arg17[%c8_328, %c128_329] : memref<16x435xbf16, #tpu.memory_space<vmem>>, vector<8x288xbf16>
    tpu.vector_store %arg17[%c8_328, %c128_329], %305 {strides = array<i32>} : memref<16x435xbf16, #tpu.memory_space<vmem>>, vector<8x288xbf16>,
    %c0_330 = arith.constant 0 : index
    %c109 = arith.constant 109 : index
    %307 = vector.load %arg17[%c0_330, %c109] : memref<16x435xbf16, #tpu.memory_space<vmem>>, vector<16x288xbf16>
    %c0_331 = arith.constant 0 : index
    %c0_332 = arith.constant 0 : index
    %308 = vector.load %arg16[%c0_331, %c0_332] : memref<144x576xbf16, #tpu.memory_space<vmem>>, vector<16x288xbf16>
    tpu.vector_store %arg16[%c0_331, %c0_332], %307 {strides = array<i32>} : memref<144x576xbf16, #tpu.memory_space<vmem>>, vector<16x288xbf16>,
    %c0_333 = arith.constant 0 : index
    %c110 = arith.constant 110 : index
    %309 = vector.load %arg17[%c0_333, %c110] : memref<16x435xbf16, #tpu.memory_space<vmem>>, vector<16x288xbf16>
    %c16_334 = arith.constant 16 : index
    %c0_335 = arith.constant 0 : index
    %310 = vector.load %arg16[%c16_334, %c0_335] : memref<144x576xbf16, #tpu.memory_space<vmem>>, vector<16x288xbf16>
    tpu.vector_store %arg16[%c16_334, %c0_335], %309 {strides = array<i32>} : memref<144x576xbf16, #tpu.memory_space<vmem>>, vector<16x288xbf16>,
    %c0_336 = arith.constant 0 : index
    %c111 = arith.constant 111 : index
    %311 = vector.load %arg17[%c0_336, %c111] : memref<16x435xbf16, #tpu.memory_space<vmem>>, vector<16x288xbf16>
    %c32_337 = arith.constant 32 : index
    %c0_338 = arith.constant 0 : index
    %312 = vector.load %arg16[%c32_337, %c0_338] : memref<144x576xbf16, #tpu.memory_space<vmem>>, vector<16x288xbf16>
    tpu.vector_store %arg16[%c32_337, %c0_338], %311 {strides = array<i32>} : memref<144x576xbf16, #tpu.memory_space<vmem>>, vector<16x288xbf16>,
    %c0_339 = arith.constant 0 : index
    %c127 = arith.constant 127 : index
    %313 = vector.load %arg17[%c0_339, %c127] : memref<16x435xbf16, #tpu.memory_space<vmem>>, vector<16x288xbf16>
    %c48_340 = arith.constant 48 : index
    %c0_341 = arith.constant 0 : index
    %314 = vector.load %arg16[%c48_340, %c0_341] : memref<144x576xbf16, #tpu.memory_space<vmem>>, vector<16x288xbf16>
    tpu.vector_store %arg16[%c48_340, %c0_341], %313 {strides = array<i32>} : memref<144x576xbf16, #tpu.memory_space<vmem>>, vector<16x288xbf16>,
    %c0_342 = arith.constant 0 : index
    %c128_343 = arith.constant 128 : index
    %315 = vector.load %arg17[%c0_342, %c128_343] : memref<16x435xbf16, #tpu.memory_space<vmem>>, vector<16x288xbf16>
    %c64_344 = arith.constant 64 : index
    %c0_345 = arith.constant 0 : index
    %316 = vector.load %arg16[%c64_344, %c0_345] : memref<144x576xbf16, #tpu.memory_space<vmem>>, vector<16x288xbf16>
    tpu.vector_store %arg16[%c64_344, %c0_345], %315 {strides = array<i32>} : memref<144x576xbf16, #tpu.memory_space<vmem>>, vector<16x288xbf16>,
    %c0_346 = arith.constant 0 : index
    %c129 = arith.constant 129 : index
    %317 = vector.load %arg17[%c0_346, %c129] : memref<16x435xbf16, #tpu.memory_space<vmem>>, vector<16x288xbf16>
    %c80_347 = arith.constant 80 : index
    %c0_348 = arith.constant 0 : index
    %318 = vector.load %arg16[%c80_347, %c0_348] : memref<144x576xbf16, #tpu.memory_space<vmem>>, vector<16x288xbf16>
    tpu.vector_store %arg16[%c80_347, %c0_348], %317 {strides = array<i32>} : memref<144x576xbf16, #tpu.memory_space<vmem>>, vector<16x288xbf16>,
    %c0_349 = arith.constant 0 : index
    %c145 = arith.constant 145 : index
    %319 = vector.load %arg17[%c0_349, %c145] : memref<16x435xbf16, #tpu.memory_space<vmem>>, vector<16x288xbf16>
    %c96_350 = arith.constant 96 : index
    %c0_351 = arith.constant 0 : index
    %320 = vector.load %arg16[%c96_350, %c0_351] : memref<144x576xbf16, #tpu.memory_space<vmem>>, vector<16x288xbf16>
    tpu.vector_store %arg16[%c96_350, %c0_351], %319 {strides = array<i32>} : memref<144x576xbf16, #tpu.memory_space<vmem>>, vector<16x288xbf16>,
    %c0_352 = arith.constant 0 : index
    %c146 = arith.constant 146 : index
    %321 = vector.load %arg17[%c0_352, %c146] : memref<16x435xbf16, #tpu.memory_space<vmem>>, vector<16x288xbf16>
    %c112 = arith.constant 112 : index
    %c0_353 = arith.constant 0 : index
    %322 = vector.load %arg16[%c112, %c0_353] : memref<144x576xbf16, #tpu.memory_space<vmem>>, vector<16x288xbf16>
    tpu.vector_store %arg16[%c112, %c0_353], %321 {strides = array<i32>} : memref<144x576xbf16, #tpu.memory_space<vmem>>, vector<16x288xbf16>,
    %c0_354 = arith.constant 0 : index
    %c147 = arith.constant 147 : index
    %323 = vector.load %arg17[%c0_354, %c147] : memref<16x435xbf16, #tpu.memory_space<vmem>>, vector<16x288xbf16>
    %c128_355 = arith.constant 128 : index
    %c0_356 = arith.constant 0 : index
    %324 = vector.load %arg16[%c128_355, %c0_356] : memref<144x576xbf16, #tpu.memory_space<vmem>>, vector<16x288xbf16>
    tpu.vector_store %arg16[%c128_355, %c0_356], %323 {strides = array<i32>} : memref<144x576xbf16, #tpu.memory_space<vmem>>, vector<16x288xbf16>,
    %c0_357 = arith.constant 0 : index
    %c0_358 = arith.constant 0 : index
    %325 = vector.load %arg6[%c0_357, %c0_358] : memref<16x144xbf16, #tpu.memory_space<vmem>>, vector<16x144xbf16>
    %c0_359 = arith.constant 0 : index
    %c0_360 = arith.constant 0 : index
    %326 = vector.load %arg16[%c0_359, %c0_360] : memref<144x576xbf16, #tpu.memory_space<vmem>>, vector<144x288xbf16>
    %cst_361 = arith.constant dense<0.000000e+00> : vector<16x288xf32>
    %327 = tpu.matmul %325, %326, %cst_361 {dimension_numbers = #tpu.dot_dimension_numbers<[1], [0], [0], [1], [0, 0, 1, 1], [], []>} : vector<16x144xbf16>, vector<144x288xbf16>, vector<16x288xf32> -> vector<16x288xf32>
    %c0_362 = arith.constant 0 : index
    %c0_363 = arith.constant 0 : index
    %328 = vector.load %arg7[%c0_362, %c0_363] : memref<16x1xf32, #tpu.memory_space<vmem>>, vector<16x1xf32>
    %329 = vector.broadcast %328 : vector<16x1xf32> to vector<16x288xf32>
    %330 = arith.addf %327, %329 : vector<16x288xf32>
    %cst_364 = arith.constant 0.000000e+00 : f32
    %331 = vector.broadcast %cst_364 : f32 to vector<16x288xf32>
    %332 = arith.cmpf oge, %330, %331 : vector<16x288xf32>
    %cst_365 = arith.constant 0.00999999977 : f32
    %333 = vector.broadcast %cst_365 : f32 to vector<16x288xf32>
    %334 = arith.mulf %333, %330 : vector<16x288xf32>
    %335 = arith.select %332, %330, %334 : vector<16x288xi1>, vector<16x288xf32>
    %c0_366 = arith.constant 0 : index
    %c0_367 = arith.constant 0 : index
    %336 = vector.load %arg8[%c0_366, %c0_367] : memref<16x1xf32, #tpu.memory_space<vmem>>, vector<16x1xf32>
    %337 = vector.broadcast %336 : vector<16x1xf32> to vector<16x288xf32>
    %338 = arith.addf %335, %337 : vector<16x288xf32>
    %339 = vector.broadcast %1 : vector<1x288xf32> to vector<16x288xf32>
    %340 = arith.mulf %338, %339 : vector<16x288xf32>
    %341 = arith.truncf %340 : vector<16x288xf32> to vector<16x288xbf16>
    %c0_368 = arith.constant 0 : index
    %c128_369 = arith.constant 128 : index
    %342 = vector.load %arg18[%c0_368, %c128_369] : memref<16x435xbf16, #tpu.memory_space<vmem>>, vector<16x288xbf16>
    tpu.vector_store %arg18[%c0_368, %c128_369], %341 {strides = array<i32>} : memref<16x435xbf16, #tpu.memory_space<vmem>>, vector<16x288xbf16>,
    %c0_370 = arith.constant 0 : index
    %c109_371 = arith.constant 109 : index
    %343 = vector.load %arg18[%c0_370, %c109_371] : memref<16x435xbf16, #tpu.memory_space<vmem>>, vector<16x288xbf16>
    %c0_372 = arith.constant 0 : index
    %c0_373 = arith.constant 0 : index
    %344 = vector.load %arg16[%c0_372, %c0_373] : memref<144x576xbf16, #tpu.memory_space<vmem>>, vector<16x288xbf16>
    tpu.vector_store %arg16[%c0_372, %c0_373], %343 {strides = array<i32>} : memref<144x576xbf16, #tpu.memory_space<vmem>>, vector<16x288xbf16>,
    %c0_374 = arith.constant 0 : index
    %c110_375 = arith.constant 110 : index
    %345 = vector.load %arg18[%c0_374, %c110_375] : memref<16x435xbf16, #tpu.memory_space<vmem>>, vector<16x288xbf16>
    %c16_376 = arith.constant 16 : index
    %c0_377 = arith.constant 0 : index
    %346 = vector.load %arg16[%c16_376, %c0_377] : memref<144x576xbf16, #tpu.memory_space<vmem>>, vector<16x288xbf16>
    tpu.vector_store %arg16[%c16_376, %c0_377], %345 {strides = array<i32>} : memref<144x576xbf16, #tpu.memory_space<vmem>>, vector<16x288xbf16>,
    %c0_378 = arith.constant 0 : index
    %c111_379 = arith.constant 111 : index
    %347 = vector.load %arg18[%c0_378, %c111_379] : memref<16x435xbf16, #tpu.memory_space<vmem>>, vector<16x288xbf16>
    %c32_380 = arith.constant 32 : index
    %c0_381 = arith.constant 0 : index
    %348 = vector.load %arg16[%c32_380, %c0_381] : memref<144x576xbf16, #tpu.memory_space<vmem>>, vector<16x288xbf16>
    tpu.vector_store %arg16[%c32_380, %c0_381], %347 {strides = array<i32>} : memref<144x576xbf16, #tpu.memory_space<vmem>>, vector<16x288xbf16>,
    %c0_382 = arith.constant 0 : index
    %c127_383 = arith.constant 127 : index
    %349 = vector.load %arg18[%c0_382, %c127_383] : memref<16x435xbf16, #tpu.memory_space<vmem>>, vector<16x288xbf16>
    %c48_384 = arith.constant 48 : index
    %c0_385 = arith.constant 0 : index
    %350 = vector.load %arg16[%c48_384, %c0_385] : memref<144x576xbf16, #tpu.memory_space<vmem>>, vector<16x288xbf16>
    tpu.vector_store %arg16[%c48_384, %c0_385], %349 {strides = array<i32>} : memref<144x576xbf16, #tpu.memory_space<vmem>>, vector<16x288xbf16>,
    %c0_386 = arith.constant 0 : index
    %c128_387 = arith.constant 128 : index
    %351 = vector.load %arg18[%c0_386, %c128_387] : memref<16x435xbf16, #tpu.memory_space<vmem>>, vector<16x288xbf16>
    %c64_388 = arith.constant 64 : index
    %c0_389 = arith.constant 0 : index
    %352 = vector.load %arg16[%c64_388, %c0_389] : memref<144x576xbf16, #tpu.memory_space<vmem>>, vector<16x288xbf16>
    tpu.vector_store %arg16[%c64_388, %c0_389], %351 {strides = array<i32>} : memref<144x576xbf16, #tpu.memory_space<vmem>>, vector<16x288xbf16>,
    %c0_390 = arith.constant 0 : index
    %c129_391 = arith.constant 129 : index
    %353 = vector.load %arg18[%c0_390, %c129_391] : memref<16x435xbf16, #tpu.memory_space<vmem>>, vector<16x288xbf16>
    %c80_392 = arith.constant 80 : index
    %c0_393 = arith.constant 0 : index
    %354 = vector.load %arg16[%c80_392, %c0_393] : memref<144x576xbf16, #tpu.memory_space<vmem>>, vector<16x288xbf16>
    tpu.vector_store %arg16[%c80_392, %c0_393], %353 {strides = array<i32>} : memref<144x576xbf16, #tpu.memory_space<vmem>>, vector<16x288xbf16>,
    %c0_394 = arith.constant 0 : index
    %c145_395 = arith.constant 145 : index
    %355 = vector.load %arg18[%c0_394, %c145_395] : memref<16x435xbf16, #tpu.memory_space<vmem>>, vector<16x288xbf16>
    %c96_396 = arith.constant 96 : index
    %c0_397 = arith.constant 0 : index
    %356 = vector.load %arg16[%c96_396, %c0_397] : memref<144x576xbf16, #tpu.memory_space<vmem>>, vector<16x288xbf16>
    tpu.vector_store %arg16[%c96_396, %c0_397], %355 {strides = array<i32>} : memref<144x576xbf16, #tpu.memory_space<vmem>>, vector<16x288xbf16>,
    %c0_398 = arith.constant 0 : index
    %c146_399 = arith.constant 146 : index
    %357 = vector.load %arg18[%c0_398, %c146_399] : memref<16x435xbf16, #tpu.memory_space<vmem>>, vector<16x288xbf16>
    %c112_400 = arith.constant 112 : index
    %c0_401 = arith.constant 0 : index
    %358 = vector.load %arg16[%c112_400, %c0_401] : memref<144x576xbf16, #tpu.memory_space<vmem>>, vector<16x288xbf16>
    tpu.vector_store %arg16[%c112_400, %c0_401], %357 {strides = array<i32>} : memref<144x576xbf16, #tpu.memory_space<vmem>>, vector<16x288xbf16>,
    %c0_402 = arith.constant 0 : index
    %c147_403 = arith.constant 147 : index
    %359 = vector.load %arg18[%c0_402, %c147_403] : memref<16x435xbf16, #tpu.memory_space<vmem>>, vector<16x288xbf16>
    %c128_404 = arith.constant 128 : index
    %c0_405 = arith.constant 0 : index
    %360 = vector.load %arg16[%c128_404, %c0_405] : memref<144x576xbf16, #tpu.memory_space<vmem>>, vector<16x288xbf16>
    tpu.vector_store %arg16[%c128_404, %c0_405], %359 {strides = array<i32>} : memref<144x576xbf16, #tpu.memory_space<vmem>>, vector<16x288xbf16>,
    %c0_406 = arith.constant 0 : index
    %c0_407 = arith.constant 0 : index
    %361 = vector.load %arg9[%c0_406, %c0_407] : memref<32x144xbf16, #tpu.memory_space<vmem>>, vector<32x144xbf16>
    %c0_408 = arith.constant 0 : index
    %c0_409 = arith.constant 0 : index
    %362 = vector.load %arg16[%c0_408, %c0_409] : memref<144x576xbf16, #tpu.memory_space<vmem>>, vector<144x288xbf16>
    %cst_410 = arith.constant dense<0.000000e+00> : vector<32x288xf32>
    %363 = tpu.matmul %361, %362, %cst_410 {dimension_numbers = #tpu.dot_dimension_numbers<[1], [0], [0], [1], [0, 0, 1, 1], [], []>} : vector<32x144xbf16>, vector<144x288xbf16>, vector<32x288xf32> -> vector<32x288xf32>
    %c0_411 = arith.constant 0 : index
    %c0_412 = arith.constant 0 : index
    %364 = vector.load %arg10[%c0_411, %c0_412] : memref<32x1xf32, #tpu.memory_space<vmem>>, vector<32x1xf32>
    %365 = vector.broadcast %364 : vector<32x1xf32> to vector<32x288xf32>
    %366 = arith.addf %363, %365 : vector<32x288xf32>
    %cst_413 = arith.constant 0.000000e+00 : f32
    %367 = vector.broadcast %cst_413 : f32 to vector<32x288xf32>
    %368 = arith.cmpf oge, %366, %367 : vector<32x288xf32>
    %cst_414 = arith.constant 0.00999999977 : f32
    %369 = vector.broadcast %cst_414 : f32 to vector<32x288xf32>
    %370 = arith.mulf %369, %366 : vector<32x288xf32>
    %371 = arith.select %368, %366, %370 : vector<32x288xi1>, vector<32x288xf32>
    %c0_415 = arith.constant 0 : index
    %c0_416 = arith.constant 0 : index
    %372 = vector.load %arg11[%c0_415, %c0_416] : memref<32x1xf32, #tpu.memory_space<vmem>>, vector<32x1xf32>
    %373 = vector.broadcast %372 : vector<32x1xf32> to vector<32x288xf32>
    %374 = arith.addf %371, %373 : vector<32x288xf32>
    %c0_417 = arith.constant 0 : index
    %c0_418 = arith.constant 0 : index
    %375 = vector.load %arg12[%c0_417, %c0_418] : memref<4x32xbf16, #tpu.memory_space<vmem>>, vector<4x32xbf16>
    %376 = arith.truncf %374 : vector<32x288xf32> to vector<32x288xbf16>
    %cst_419 = arith.constant dense<0.000000e+00> : vector<4x288xf32>
    %377 = tpu.matmul %375, %376, %cst_419 {dimension_numbers = #tpu.dot_dimension_numbers<[1], [0], [0], [1], [0, 0, 1, 1], [], []>} : vector<4x32xbf16>, vector<32x288xbf16>, vector<4x288xf32> -> vector<4x288xf32>
    %c0_420 = arith.constant 0 : index
    %c0_421 = arith.constant 0 : index
    %378 = vector.load %arg13[%c0_420, %c0_421] : memref<4x1xf32, #tpu.memory_space<vmem>>, vector<4x1xf32>
    %379 = vector.broadcast %378 : vector<4x1xf32> to vector<4x288xf32>
    %380 = arith.addf %377, %379 : vector<4x288xf32>
    %c0_422 = arith.constant 0 : index
    %c0_423 = arith.constant 0 : index
    %c0_424 = arith.constant 0 : index
    %381 = vector.load %arg14[%c0_422, %c0_423, %c0_424] : memref<1x4x384xf32, #tpu.memory_space<vmem>>, vector<1x4x288xf32>
    %382 = vector.shape_cast %381 : vector<1x4x288xf32> to vector<4x288xf32>
    %383 = vector.shape_cast %380 : vector<4x288xf32> to vector<1x4x288xf32>
    tpu.vector_store %arg14[%c0_422, %c0_423, %c0_424], %383 {strides = array<i32>} : memref<1x4x384xf32, #tpu.memory_space<vmem>>, vector<1x4x288xf32>,
    %cst_425 = arith.constant 0.000000e+00 : f32
    %384 = vector.broadcast %cst_425 : f32 to vector<4x96xf32>
    %c0_426 = arith.constant 0 : index
    %c0_427 = arith.constant 0 : index
    %c288_428 = arith.constant 288 : index
    %385 = vector.load %arg14[%c0_426, %c0_427, %c288_428] : memref<1x4x384xf32, #tpu.memory_space<vmem>>, vector<1x4x96xf32>
    %386 = vector.shape_cast %385 : vector<1x4x96xf32> to vector<4x96xf32>
    %387 = vector.shape_cast %384 : vector<4x96xf32> to vector<1x4x96xf32>
    tpu.vector_store %arg14[%c0_426, %c0_427, %c288_428], %387 {strides = array<i32>} : memref<1x4x384xf32, #tpu.memory_space<vmem>>, vector<1x4x96xf32>,
    return
  }
  func.func @transform_0(%arg0: i32) -> (i32, i32, i32, i32) {
    %c0_i32 = arith.constant 0 : i32
    %c0_i32_0 = arith.constant 0 : i32
    %c0_i32_1 = arith.constant 0 : i32
    %c0_i32_2 = arith.constant 0 : i32
    return %arg0, %c0_i32, %c0_i32_0, %c0_i32_1 : i32, i32, i32, i32
  }
  func.func @transform_1(%arg0: i32) -> (i32, i32) {
    %c0_i32 = arith.constant 0 : i32
    %c0_i32_0 = arith.constant 0 : i32
    %c0_i32_1 = arith.constant 0 : i32
    return %c0_i32, %c0_i32_0 : i32, i32
  }
  func.func @transform_2(%arg0: i32) -> (i32, i32) {
    %c0_i32 = arith.constant 0 : i32
    %c0_i32_0 = arith.constant 0 : i32
    %c0_i32_1 = arith.constant 0 : i32
    return %c0_i32, %c0_i32_0 : i32, i32
  }
  func.func @transform_3(%arg0: i32) -> (i32, i32) {
    %c0_i32 = arith.constant 0 : i32
    %c0_i32_0 = arith.constant 0 : i32
    %c0_i32_1 = arith.constant 0 : i32
    return %c0_i32, %c0_i32_0 : i32, i32
  }
  func.func @transform_4(%arg0: i32) -> (i32, i32) {
    %c0_i32 = arith.constant 0 : i32
    %c0_i32_0 = arith.constant 0 : i32
    %c0_i32_1 = arith.constant 0 : i32
    return %c0_i32, %c0_i32_0 : i32, i32
  }
  func.func @transform_5(%arg0: i32) -> (i32, i32) {
    %c0_i32 = arith.constant 0 : i32
    %c0_i32_0 = arith.constant 0 : i32
    %c0_i32_1 = arith.constant 0 : i32
    return %c0_i32, %c0_i32_0 : i32, i32
  }
  func.func @transform_6(%arg0: i32) -> (i32, i32) {
    %c0_i32 = arith.constant 0 : i32
    %c0_i32_0 = arith.constant 0 : i32
    %c0_i32_1 = arith.constant 0 : i32
    return %c0_i32, %c0_i32_0 : i32, i32
  }
  func.func @transform_7(%arg0: i32) -> (i32, i32) {
    %c0_i32 = arith.constant 0 : i32
    %c0_i32_0 = arith.constant 0 : i32
    %c0_i32_1 = arith.constant 0 : i32
    return %c0_i32, %c0_i32_0 : i32, i32
  }
  func.func @transform_8(%arg0: i32) -> (i32, i32) {
    %c0_i32 = arith.constant 0 : i32
    %c0_i32_0 = arith.constant 0 : i32
    %c0_i32_1 = arith.constant 0 : i32
    return %c0_i32, %c0_i32_0 : i32, i32
  }
  func.func @transform_9(%arg0: i32) -> (i32, i32) {
    %c0_i32 = arith.constant 0 : i32
    %c0_i32_0 = arith.constant 0 : i32
    %c0_i32_1 = arith.constant 0 : i32
    return %c0_i32, %c0_i32_0 : i32, i32
  }
  func.func @transform_10(%arg0: i32) -> (i32, i32) {
    %c0_i32 = arith.constant 0 : i32
    %c0_i32_0 = arith.constant 0 : i32
    %c0_i32_1 = arith.constant 0 : i32
    return %c0_i32, %c0_i32_0 : i32, i32
  }
  func.func @transform_11(%arg0: i32) -> (i32, i32) {
    %c0_i32 = arith.constant 0 : i32
    %c0_i32_0 = arith.constant 0 : i32
    %c0_i32_1 = arith.constant 0 : i32
    return %c0_i32, %c0_i32_0 : i32, i32
  }
  func.func @transform_12(%arg0: i32) -> (i32, i32) {
    %c0_i32 = arith.constant 0 : i32
    %c0_i32_0 = arith.constant 0 : i32
    %c0_i32_1 = arith.constant 0 : i32
    return %c0_i32, %c0_i32_0 : i32, i32
  }
  func.func @transform_13(%arg0: i32) -> (i32, i32, i32) {
    %c0_i32 = arith.constant 0 : i32
    %c0_i32_0 = arith.constant 0 : i32
    %c0_i32_1 = arith.constant 0 : i32
    return %arg0, %c0_i32, %c0_i32_0 : i32, i32, i32
  }
}

</mosaic_0001>

<llo_original>
// kernel: net3d2d_forward.1
$region0: #{net3d2d_forward.1}
  #allocation0 [shape = 'u32[]', space=smem, size = 0x4, offset = 0x4, fixed_abs, tag = 'smem constant byte address 0x4 - core index']
  #allocation1 [shape = 'u32[144,128]{1,0:T(1,128)}', space=vmem, size = 0x12000, scoped, tag = 'internal scratch']
  #allocation2 [shape = 'f32[4,4,326]{2,1,0:T(4,128)}', space=vmem, size = 0x6000, scoped, tag = 'scratch operand']
  #allocation3 [shape = 'bf16[144,576]{1,0:T(16,128)(2,1)}', space=vmem, size = 0x2d000, scoped, tag = 'scratch operand']
  #allocation4 [shape = 'bf16[16,435]{1,0:T(16,128)(2,1)}', space=vmem, size = 0x4000, scoped, tag = 'scratch operand']
  #allocation5 [shape = 'bf16[16,435]{1,0:T(16,128)(2,1)}', space=vmem, size = 0x4000, scoped, tag = 'scratch operand']
  %s0 = inlined_call_operand.vmem [shape: f32[2,4,16,326], index: 0, kind: input, shape index: {}]
  %s1 = inlined_call_operand.vmem [shape: f32[1,576], index: 1, kind: input, shape index: {}]
  %s2 = inlined_call_operand.vmem [shape: bf16[8,108], index: 2, kind: input, shape index: {}]
  %s3 = inlined_call_operand.vmem [shape: f32[8,1], index: 3, kind: input, shape index: {}]
  %s4 = inlined_call_operand.vmem [shape: f32[8,1], index: 4, kind: input, shape index: {}]
  %s5 = inlined_call_operand.vmem [shape: bf16[16,144], index: 5, kind: input, shape index: {}]
  %s6 = inlined_call_operand.vmem [shape: f32[16,1], index: 6, kind: input, shape index: {}]
  %s7 = inlined_call_operand.vmem [shape: f32[16,1], index: 7, kind: input, shape index: {}]
  %s8 = inlined_call_operand.vmem [shape: bf16[32,144], index: 8, kind: input, shape index: {}]
  %s9 = inlined_call_operand.vmem [shape: f32[32,1], index: 9, kind: input, shape index: {}]
  %s10 = inlined_call_operand.vmem [shape: f32[32,1], index: 10, kind: input, shape index: {}]
  %s11 = inlined_call_operand.vmem [shape: bf16[4,32], index: 11, kind: input, shape index: {}]
  %s12 = inlined_call_operand.vmem [shape: f32[4,1], index: 12, kind: input, shape index: {}]
  %s13 = inlined_call_operand.vmem [shape: f32[2,4,384], index: 13, kind: output, shape index: {}]
  %s14 = sld [smem:[#allocation0]]
  $region85: #{net3d2d_forward.1} parent=0
    _
  %s16 = ssub.s32 1, %s14
  %s17 = scalar_select 0, %s16, %s14
  loop: start=0, step=1, limit=4
  $region2: #{net3d2d_forward.1} parent=0 // loop_pre_header
    _
  $region3: #{net3d2d_forward.1} parent=0 // loop_header
    %s19 = sphi 0, %s23
    %p20 = scmp.ge.s32.totalorder %s19, 4
    %s29 = sphi 0, %s31
    %s32 = sphi 0, %s29
    %s33 = sphi 0, %s32
    %s49 = sphi 0, %s33
    %s53 = sphi 0, %s53
    %s55 = sphi 0, %s53
    %s56 = sphi 0, %s55
    %s70 = sphi 0, %s56
    %s74 = sphi 0, %s74
    %s76 = sphi 0, %s74
    %s77 = sphi 0, %s76
    %s91 = sphi 0, %s77
    %s95 = sphi 0, %s95
    %s97 = sphi 0, %s95
    %s98 = sphi 0, %s97
    %s112 = sphi 0, %s98
    %s116 = sphi 0, %s116
    %s118 = sphi 0, %s116
    %s119 = sphi 0, %s118
    %s133 = sphi 0, %s119
    %s137 = sphi 0, %s137
    %s139 = sphi 0, %s137
    %s140 = sphi 0, %s139
    %s154 = sphi 0, %s140
    %s158 = sphi 0, %s158
    %s160 = sphi 0, %s158
    %s161 = sphi 0, %s160
    %s175 = sphi 0, %s161
    %s179 = sphi 0, %s179
    %s181 = sphi 0, %s179
    %s182 = sphi 0, %s181
    %s196 = sphi 0, %s182
    %s200 = sphi 0, %s200
    %s202 = sphi 0, %s200
    %s203 = sphi 0, %s202
    %s217 = sphi 0, %s203
    %s221 = sphi 0, %s221
    %s223 = sphi 0, %s221
    %s224 = sphi 0, %s223
    %s238 = sphi 0, %s224
    %s242 = sphi 0, %s242
    %s244 = sphi 0, %s242
    %s245 = sphi 0, %s244
    %s259 = sphi 0, %s245
    %s263 = sphi 0, %s263
    %s265 = sphi 0, %s263
    %s266 = sphi 0, %s265
    %s280 = sphi 0, %s266
    %s284 = sphi 0, %s284
    %s286 = sphi 0, %s284
    %s287 = sphi 0, %s286
    %s301 = sphi 0, %s287
    %s307 = sphi 0, %s309
    %s310 = sphi 0, %s307
    %s311 = sphi 0, %s310
    %s327 = sphi 0, %s311
  $region4: #{net3d2d_forward.1} parent=0 // loop_header_branch
    %22 = sbr.rel (%p20) target = $region8
  $region5: #{net3d2d_forward.1} parent=0 // loop_body
    %s24 = ssub.s32 %s19, 1
    %s25 = ssub.s32 %s19, 2
    %s26 = sadd.s32 %s19, 1
    %s27 = ssub.s32 %s19, %s26
    %p28 = scmp.eq.s32.totalorder %s27, 0
    %s30 = sadd.s32 %s29, 1
    %s31 = scalar_select %p28, %s29, %s30
    %p34 = pneg %p28
    %p35 = scmp.eq.s32.totalorder %s19, 1
    %p36 = por %p34, %p35
    %p37 = scmp.ne.s32.totalorder %s29, %s32
    %p38 = scmp.eq.s32.totalorder %s19, 0
    %p39 = por %p37, %p38
    %p40 = scmp.ne.s32.totalorder %s29, %s32
    %p41 = scmp.eq.s32.totalorder %s24, 1
    %p42 = por %p40, %p41
    %p43 = scmp.ne.s32.totalorder %s32, %s33
    %p44 = scmp.eq.s32.totalorder %s24, 0
    %p45 = por %p43, %p44
    %p46 = scmp.ne.s32.totalorder %s32, %s33
    %p47 = scmp.eq.s32.totalorder %s25, 1
    %p48 = por %p46, %p47
    %p50 = scmp.ne.s32.totalorder %s33, %s49
    %p51 = scmp.eq.s32.totalorder %s25, 0
    %p52 = por %p50, %p51
    %s54 = sadd.s32 %s53, 1
    %p57 = scmp.eq.s32.totalorder %s19, 1
    %p58 = scmp.ne.s32.totalorder %s53, %s55
    %p59 = scmp.eq.s32.totalorder %s19, 0
    %p60 = por %p58, %p59
    %p61 = scmp.ne.s32.totalorder %s53, %s55
    %p62 = scmp.eq.s32.totalorder %s24, 1
    %p63 = por %p61, %p62
    %p64 = scmp.ne.s32.totalorder %s55, %s56
    %p65 = scmp.eq.s32.totalorder %s24, 0
    %p66 = por %p64, %p65
    %p67 = scmp.ne.s32.totalorder %s55, %s56
    %p68 = scmp.eq.s32.totalorder %s25, 1
    %p69 = por %p67, %p68
    %p71 = scmp.ne.s32.totalorder %s56, %s70
    %p72 = scmp.eq.s32.totalorder %s25, 0
    %p73 = por %p71, %p72
    %s75 = sadd.s32 %s74, 1
    %p78 = scmp.eq.s32.totalorder %s19, 1
    %p79 = scmp.ne.s32.totalorder %s74, %s76
    %p80 = scmp.eq.s32.totalorder %s19, 0
    %p81 = por %p79, %p80
    %p82 = scmp.ne.s32.totalorder %s74, %s76
    %p83 = scmp.eq.s32.totalorder %s24, 1
    %p84 = por %p82, %p83
    %p85 = scmp.ne.s32.totalorder %s76, %s77
    %p86 = scmp.eq.s32.totalorder %s24, 0
    %p87 = por %p85, %p86
    %p88 = scmp.ne.s32.totalorder %s76, %s77
    %p89 = scmp.eq.s32.totalorder %s25, 1
    %p90 = por %p88, %p89
    %p92 = scmp.ne.s32.totalorder %s77, %s91
    %p93 = scmp.eq.s32.totalorder %s25, 0
    %p94 = por %p92, %p93
    %s96 = sadd.s32 %s95, 1
    %p99 = scmp.eq.s32.totalorder %s19, 1
    %p100 = scmp.ne.s32.totalorder %s95, %s97
    %p101 = scmp.eq.s32.totalorder %s19, 0
    %p102 = por %p100, %p101
    %p103 = scmp.ne.s32.totalorder %s95, %s97
    %p104 = scmp.eq.s32.totalorder %s24, 1
    %p105 = por %p103, %p104
    %p106 = scmp.ne.s32.totalorder %s97, %s98
    %p107 = scmp.eq.s32.totalorder %s24, 0
    %p108 = por %p106, %p107
    %p109 = scmp.ne.s32.totalorder %s97, %s98
    %p110 = scmp.eq.s32.totalorder %s25, 1
    %p111 = por %p109, %p110
    %p113 = scmp.ne.s32.totalorder %s98, %s112
    %p114 = scmp.eq.s32.totalorder %s25, 0
    %p115 = por %p113, %p114
    %s117 = sadd.s32 %s116, 1
    %p120 = scmp.eq.s32.totalorder %s19, 1
    %p121 = scmp.ne.s32.totalorder %s116, %s118
    %p122 = scmp.eq.s32.totalorder %s19, 0
    %p123 = por %p121, %p122
    %p124 = scmp.ne.s32.totalorder %s116, %s118
    %p125 = scmp.eq.s32.totalorder %s24, 1
    %p126 = por %p124, %p125
    %p127 = scmp.ne.s32.totalorder %s118, %s119
    %p128 = scmp.eq.s32.totalorder %s24, 0
    %p129 = por %p127, %p128
    %p130 = scmp.ne.s32.totalorder %s118, %s119
    %p131 = scmp.eq.s32.totalorder %s25, 1
    %p132 = por %p130, %p131
    %p134 = scmp.ne.s32.totalorder %s119, %s133
    %p135 = scmp.eq.s32.totalorder %s25, 0
    %p136 = por %p134, %p135
    %s138 = sadd.s32 %s137, 1
    %p141 = scmp.eq.s32.totalorder %s19, 1
    %p142 = scmp.ne.s32.totalorder %s137, %s139
    %p143 = scmp.eq.s32.totalorder %s19, 0
    %p144 = por %p142, %p143
    %p145 = scmp.ne.s32.totalorder %s137, %s139
    %p146 = scmp.eq.s32.totalorder %s24, 1
    %p147 = por %p145, %p146
    %p148 = scmp.ne.s32.totalorder %s139, %s140
    %p149 = scmp.eq.s32.totalorder %s24, 0
    %p150 = por %p148, %p149
    %p151 = scmp.ne.s32.totalorder %s139, %s140
    %p152 = scmp.eq.s32.totalorder %s25, 1
    %p153 = por %p151, %p152
    %p155 = scmp.ne.s32.totalorder %s140, %s154
    %p156 = scmp.eq.s32.totalorder %s25, 0
    %p157 = por %p155, %p156
    %s159 = sadd.s32 %s158, 1
    %p162 = scmp.eq.s32.totalorder %s19, 1
    %p163 = scmp.ne.s32.totalorder %s158, %s160
    %p164 = scmp.eq.s32.totalorder %s19, 0
    %p165 = por %p163, %p164
    %p166 = scmp.ne.s32.totalorder %s158, %s160
    %p167 = scmp.eq.s32.totalorder %s24, 1
    %p168 = por %p166, %p167
    %p169 = scmp.ne.s32.totalorder %s160, %s161
    %p170 = scmp.eq.s32.totalorder %s24, 0
    %p171 = por %p169, %p170
    %p172 = scmp.ne.s32.totalorder %s160, %s161
    %p173 = scmp.eq.s32.totalorder %s25, 1
    %p174 = por %p172, %p173
    %p176 = scmp.ne.s32.totalorder %s161, %s175
    %p177 = scmp.eq.s32.totalorder %s25, 0
    %p178 = por %p176, %p177
    %s180 = sadd.s32 %s179, 1
    %p183 = scmp.eq.s32.totalorder %s19, 1
    %p184 = scmp.ne.s32.totalorder %s179, %s181
    %p185 = scmp.eq.s32.totalorder %s19, 0
    %p186 = por %p184, %p185
    %p187 = scmp.ne.s32.totalorder %s179, %s181
    %p188 = scmp.eq.s32.totalorder %s24, 1
    %p189 = por %p187, %p188
    %p190 = scmp.ne.s32.totalorder %s181, %s182
    %p191 = scmp.eq.s32.totalorder %s24, 0
    %p192 = por %p190, %p191
    %p193 = scmp.ne.s32.totalorder %s181, %s182
    %p194 = scmp.eq.s32.totalorder %s25, 1
    %p195 = por %p193, %p194
    %p197 = scmp.ne.s32.totalorder %s182, %s196
    %p198 = scmp.eq.s32.totalorder %s25, 0
    %p199 = por %p197, %p198
    %s201 = sadd.s32 %s200, 1
    %p204 = scmp.eq.s32.totalorder %s19, 1
    %p205 = scmp.ne.s32.totalorder %s200, %s202
    %p206 = scmp.eq.s32.totalorder %s19, 0
    %p207 = por %p205, %p206
    %p208 = scmp.ne.s32.totalorder %s200, %s202
    %p209 = scmp.eq.s32.totalorder %s24, 1
    %p210 = por %p208, %p209
    %p211 = scmp.ne.s32.totalorder %s202, %s203
    %p212 = scmp.eq.s32.totalorder %s24, 0
    %p213 = por %p211, %p212
    %p214 = scmp.ne.s32.totalorder %s202, %s203
    %p215 = scmp.eq.s32.totalorder %s25, 1
    %p216 = por %p214, %p215
    %p218 = scmp.ne.s32.totalorder %s203, %s217
    %p219 = scmp.eq.s32.totalorder %s25, 0
    %p220 = por %p218, %p219
    %s222 = sadd.s32 %s221, 1
    %p225 = scmp.eq.s32.totalorder %s19, 1
    %p226 = scmp.ne.s32.totalorder %s221, %s223
    %p227 = scmp.eq.s32.totalorder %s19, 0
    %p228 = por %p226, %p227
    %p229 = scmp.ne.s32.totalorder %s221, %s223
    %p230 = scmp.eq.s32.totalorder %s24, 1
    %p231 = por %p229, %p230
    %p232 = scmp.ne.s32.totalorder %s223, %s224
    %p233 = scmp.eq.s32.totalorder %s24, 0
    %p234 = por %p232, %p233
    %p235 = scmp.ne.s32.totalorder %s223, %s224
    %p236 = scmp.eq.s32.totalorder %s25, 1
    %p237 = por %p235, %p236
    %p239 = scmp.ne.s32.totalorder %s224, %s238
    %p240 = scmp.eq.s32.totalorder %s25, 0
    %p241 = por %p239, %p240
    %s243 = sadd.s32 %s242, 1
    %p246 = scmp.eq.s32.totalorder %s19, 1
    %p247 = scmp.ne.s32.totalorder %s242, %s244
    %p248 = scmp.eq.s32.totalorder %s19, 0
    %p249 = por %p247, %p248
    %p250 = scmp.ne.s32.totalorder %s242, %s244
    %p251 = scmp.eq.s32.totalorder %s24, 1
    %p252 = por %p250, %p251
    %p253 = scmp.ne.s32.totalorder %s244, %s245
    %p254 = scmp.eq.s32.totalorder %s24, 0
    %p255 = por %p253, %p254
    %p256 = scmp.ne.s32.totalorder %s244, %s245
    %p257 = scmp.eq.s32.totalorder %s25, 1
    %p258 = por %p256, %p257
    %p260 = scmp.ne.s32.totalorder %s245, %s259
    %p261 = scmp.eq.s32.totalorder %s25, 0
    %p262 = por %p260, %p261
    %s264 = sadd.s32 %s263, 1
    %p267 = scmp.eq.s32.totalorder %s19, 1
    %p268 = scmp.ne.s32.totalorder %s263, %s265
    %p269 = scmp.eq.s32.totalorder %s19, 0
    %p270 = por %p268, %p269
    %p271 = scmp.ne.s32.totalorder %s263, %s265
    %p272 = scmp.eq.s32.totalorder %s24, 1
    %p273 = por %p271, %p272
    %p274 = scmp.ne.s32.totalorder %s265, %s266
    %p275 = scmp.eq.s32.totalorder %s24, 0
    %p276 = por %p274, %p275
    %p277 = scmp.ne.s32.totalorder %s265, %s266
    %p278 = scmp.eq.s32.totalorder %s25, 1
    %p279 = por %p277, %p278
    %p281 = scmp.ne.s32.totalorder %s266, %s280
    %p282 = scmp.eq.s32.totalorder %s25, 0
    %p283 = por %p281, %p282
    %s285 = sadd.s32 %s284, 1
    %p288 = scmp.eq.s32.totalorder %s19, 1
    %p289 = scmp.ne.s32.totalorder %s284, %s286
    %p290 = scmp.eq.s32.totalorder %s19, 0
    %p291 = por %p289, %p290
    %p292 = scmp.ne.s32.totalorder %s284, %s286
    %p293 = scmp.eq.s32.totalorder %s24, 1
    %p294 = por %p292, %p293
    %p295 = scmp.ne.s32.totalorder %s286, %s287
    %p296 = scmp.eq.s32.totalorder %s24, 0
    %p297 = por %p295, %p296
    %p298 = scmp.ne.s32.totalorder %s286, %s287
    %p299 = scmp.eq.s32.totalorder %s25, 1
    %p300 = por %p298, %p299
    %p302 = scmp.ne.s32.totalorder %s287, %s301
    %p303 = scmp.eq.s32.totalorder %s25, 0
    %p304 = por %p302, %p303
    %s305 = ssub.s32 %s19, %s26
    %p306 = scmp.eq.s32.totalorder %s305, 0
    %s308 = sadd.s32 %s307, 1
    %s309 = scalar_select %p306, %s307, %s308
    %p312 = pneg %p306
    %p313 = scmp.eq.s32.totalorder %s19, 1
    %p314 = por %p312, %p313
    %p315 = scmp.ne.s32.totalorder %s307, %s310
    %p316 = scmp.eq.s32.totalorder %s19, 0
    %p317 = por %p315, %p316
    %p318 = scmp.ne.s32.totalorder %s307, %s310
    %p319 = scmp.eq.s32.totalorder %s24, 1
    %p320 = por %p318, %p319
    %p321 = scmp.ne.s32.totalorder %s310, %s311
    %p322 = scmp.eq.s32.totalorder %s24, 0
    %p323 = por %p321, %p322
    %p324 = scmp.ne.s32.totalorder %s310, %s311
    %p325 = scmp.eq.s32.totalorder %s25, 1
    %p326 = por %p324, %p325
    %p328 = scmp.ne.s32.totalorder %s311, %s327
    %p329 = scmp.eq.s32.totalorder %s25, 0
    %p330 = por %p328, %p329
    %p331 = scmp.le.s32.totalorder 1, %s19
    %p332 = scmp.lt.s32.totalorder %s19, 3
    %p333 = pnand %p331, %p332
    %p334 = pneg %p333
    // Predicated region
    $region9: #{net3d2d_forward.1} parent=5 // pred_check
      _
    $region10: #{net3d2d_forward.1} parent=5 // pred_check_branch
      %336 = sbr.rel (%p333) target = $region12
    $region11: #{net3d2d_forward.1} parent=5 // pred_region
      %s337 = ssub.s32 %s19, 1
      // Predicated region
      $region13: #{net3d2d_forward.1} parent=11 // pred_check
        %p338 = pneg %p66
      $region14: #{net3d2d_forward.1} parent=11 // pred_check_branch
        %340 = sbr.rel (%p338) target = $region16
      $region15: #{net3d2d_forward.1} parent=11 // pred_region
        _
      $region16: #{net3d2d_forward.1} parent=11 // pred_fallthru
        _
      // Predicated region
      $region17: #{net3d2d_forward.1} parent=11 // pred_check
        %p341 = pneg %p87
      $region18: #{net3d2d_forward.1} parent=11 // pred_check_branch
        %343 = sbr.rel (%p341) target = $region20
      $region19: #{net3d2d_forward.1} parent=11 // pred_region
        _
      $region20: #{net3d2d_forward.1} parent=11 // pred_fallthru
        _
      // Predicated region
      $region21: #{net3d2d_forward.1} parent=11 // pred_check
        %p344 = pneg %p108
      $region22: #{net3d2d_forward.1} parent=11 // pred_check_branch
        %346 = sbr.rel (%p344) target = $region24
      $region23: #{net3d2d_forward.1} parent=11 // pred_region
        _
      $region24: #{net3d2d_forward.1} parent=11 // pred_fallthru
        _
      // Predicated region
      $region25: #{net3d2d_forward.1} parent=11 // pred_check
        %p347 = pneg %p129
      $region26: #{net3d2d_forward.1} parent=11 // pred_check_branch
        %349 = sbr.rel (%p347) target = $region28
      $region27: #{net3d2d_forward.1} parent=11 // pred_region
        _
      $region28: #{net3d2d_forward.1} parent=11 // pred_fallthru
        _
      // Predicated region
      $region29: #{net3d2d_forward.1} parent=11 // pred_check
        %p350 = pneg %p150
      $region30: #{net3d2d_forward.1} parent=11 // pred_check_branch
        %352 = sbr.rel (%p350) target = $region32
      $region31: #{net3d2d_forward.1} parent=11 // pred_region
        _
      $region32: #{net3d2d_forward.1} parent=11 // pred_fallthru
        _
      // Predicated region
      $region33: #{net3d2d_forward.1} parent=11 // pred_check
        %p353 = pneg %p171
      $region34: #{net3d2d_forward.1} parent=11 // pred_check_branch
        %355 = sbr.rel (%p353) target = $region36
      $region35: #{net3d2d_forward.1} parent=11 // pred_region
        _
      $region36: #{net3d2d_forward.1} parent=11 // pred_fallthru
        _
      // Predicated region
      $region37: #{net3d2d_forward.1} parent=11 // pred_check
        %p356 = pneg %p192
      $region38: #{net3d2d_forward.1} parent=11 // pred_check_branch
        %358 = sbr.rel (%p356) target = $region40
      $region39: #{net3d2d_forward.1} parent=11 // pred_region
        _
      $region40: #{net3d2d_forward.1} parent=11 // pred_fallthru
        _
      // Predicated region
      $region41: #{net3d2d_forward.1} parent=11 // pred_check
        %p359 = pneg %p213
      $region42: #{net3d2d_forward.1} parent=11 // pred_check_branch
        %361 = sbr.rel (%p359) target = $region44
      $region43: #{net3d2d_forward.1} parent=11 // pred_region
        _
      $region44: #{net3d2d_forward.1} parent=11 // pred_fallthru
        _
      // Predicated region
      $region45: #{net3d2d_forward.1} parent=11 // pred_check
        %p362 = pneg %p234
      $region46: #{net3d2d_forward.1} parent=11 // pred_check_branch
        %364 = sbr.rel (%p362) target = $region48
      $region47: #{net3d2d_forward.1} parent=11 // pred_region
        _
      $region48: #{net3d2d_forward.1} parent=11 // pred_fallthru
        _
      // Predicated region
      $region49: #{net3d2d_forward.1} parent=11 // pred_check
        %p365 = pneg %p255
      $region50: #{net3d2d_forward.1} parent=11 // pred_check_branch
        %367 = sbr.rel (%p365) target = $region52
      $region51: #{net3d2d_forward.1} parent=11 // pred_region
        _
      $region52: #{net3d2d_forward.1} parent=11 // pred_fallthru
        _
      // Predicated region
      $region53: #{net3d2d_forward.1} parent=11 // pred_check
        %p368 = pneg %p276
      $region54: #{net3d2d_forward.1} parent=11 // pred_check_branch
        %370 = sbr.rel (%p368) target = $region56
      $region55: #{net3d2d_forward.1} parent=11 // pred_region
        _
      $region56: #{net3d2d_forward.1} parent=11 // pred_fallthru
        _
      // Predicated region
      $region57: #{net3d2d_forward.1} parent=11 // pred_check
        %p371 = pneg %p297
      $region58: #{net3d2d_forward.1} parent=11 // pred_check_branch
        %373 = sbr.rel (%p371) target = $region60
      $region59: #{net3d2d_forward.1} parent=11 // pred_region
        _
      $region60: #{net3d2d_forward.1} parent=11 // pred_fallthru
        _
    $region12: #{net3d2d_forward.1} parent=5 // pred_fallthru
      _
    %p374 = scmp.lt.s32.totalorder %s19, 2
    // Predicated region
    $region61: #{net3d2d_forward.1} parent=5 // pred_check
      %p375 = pneg %p374
    $region62: #{net3d2d_forward.1} parent=5 // pred_check_branch
      %377 = sbr.rel (%p375) target = $region64
    $region63: #{net3d2d_forward.1} parent=5 // pred_region
      // Predicated region
      $region65: #{net3d2d_forward.1} parent=63 // pred_check
        %p378 = pneg %p39
      $region66: #{net3d2d_forward.1} parent=63 // pred_check_branch
        %380 = sbr.rel (%p378) target = $region68
      $region67: #{net3d2d_forward.1} parent=63 // pred_region
        %p381 = scmp.lt.s32.totalorder %s19, 1
        %s382 = scalar_select %p381, %s19, 1
        %s383 = smul.addr %s382, 24
        %s384 = smul.addr %s383, 8
        %s385 = scalar_lea.vmem %s0, %s384
      $region68: #{net3d2d_forward.1} parent=63 // pred_fallthru
        _
    $region64: #{net3d2d_forward.1} parent=5 // pred_fallthru
      _
    %p386 = scmp.le.s32.totalorder 1, %s19
    %p387 = scmp.lt.s32.totalorder %s19, 3
    %p388 = pnand %p386, %p387
    %p389 = pneg %p388
    // Predicated region
    $region69: #{net3d2d_forward.1} parent=5 // pred_check
      _
    $region70: #{net3d2d_forward.1} parent=5 // pred_check_branch
      %391 = sbr.rel (%p388) target = $region72
    $region71: #{net3d2d_forward.1} parent=5 // pred_region
      %s392 = ssub.s32 %s19, 1
      %p393 = scmp.lt.s32.totalorder %s24, 1
      %s394 = scalar_select %p393, %s24, 1
      %s395 = smul.addr %s394, 24
      %s396 = smul.addr %s395, 8
      %s397 = scalar_lea.vmem %s0, %s396
      %p398 = pneg %p45
      %p399 = pneg %p42
      %p400 = pneg %p66
      %p401 = pneg %p63
      %p402 = pneg %p87
      %p403 = pneg %p84
      %p404 = pneg %p108
      %p405 = pneg %p105
      %p406 = pneg %p129
      %p407 = pneg %p126
      %p408 = pneg %p150
      %p409 = pneg %p147
      %p410 = pneg %p171
      %p411 = pneg %p168
      %p412 = pneg %p192
      %p413 = pneg %p189
      %p414 = pneg %p213
      %p415 = pneg %p210
      %p416 = pneg %p234
      %p417 = pneg %p231
      %p418 = pneg %p255
      %p419 = pneg %p252
      %p420 = pneg %p276
      %p421 = pneg %p273
      %p422 = pneg %p297
      %p423 = pneg %p294
      %p424 = pneg %p323
      %p425 = pneg %p320
      %p426 = scmp.lt.s32.totalorder %s24, 1
      %s427 = scalar_select %p426, %s24, 1
      %s428 = smul.addr %s427, 3
      %s429 = smul.addr %s428, 4
      %s430 = scalar_lea.vmem %s13, %s429
      %p431 = scmp.lt.s32.totalorder %s24, 1
      %s432 = scalar_select %p431, %s24, 1
      %s433 = smul.addr %s432, 24
      %s434 = smul.addr %s433, 8
      %s435 = scalar_lea.vmem %s0, %s434
      %p436 = scmp.lt.s32.totalorder %s24, 1
      %s437 = scalar_select %p436, %s24, 1
      %s438 = smul.addr %s437, 3
      %s439 = smul.addr %s438, 4
      %s440 = scalar_lea.vmem %s13, %s439
      %v442 = vld [vmem:[%s1] sm:$0x1f]
      %v443 = vlaneseq
      %vm444 = vcmp.ge.s32.totalorder %v443, 0
      %vm445 = vcmp.lt.s32.totalorder %v443, 326
      %vm446 = vmand %vm444, %vm445
      %447 = vst.msk [vmem:[#allocation2] ss:$4 sm:$0x7] %vm446, 0.0
      %s448 = scalar_lea.vmem [#allocation2], 12
      %449 = vst.msk [vmem:[%s448] ss:$4 sm:$0x7] %vm446, 0.0
      %s450 = scalar_lea.vmem [#allocation2], 24
      %451 = vst.msk [vmem:[%s450] ss:$4 sm:$0x7] %vm446, 0.0
      %s452 = scalar_lea.vmem [#allocation2], 36
      %453 = vst.msk [vmem:[%s452] ss:$4 sm:$0x7] %vm446, 0.0
      %s454 = scalar_lea.vmem [#allocation2], 3
      %455 = vst.msk [vmem:[%s454] ss:$4 sm:$0x7] %vm446, 0.0
      %s456 = scalar_lea.vmem [#allocation2], 15
      %457 = vst.msk [vmem:[%s456] ss:$4 sm:$0x7] %vm446, 0.0
      %s458 = scalar_lea.vmem [#allocation2], 27
      %459 = vst.msk [vmem:[%s458] ss:$4 sm:$0x7] %vm446, 0.0
      %s460 = scalar_lea.vmem [#allocation2], 39
      %461 = vst.msk [vmem:[%s460] ss:$4 sm:$0x7] %vm446, 0.0
      %462 = vst [vmem:[#allocation4] sm:$0xff] 0
      %vm463 = vcmask 417024
      %464 = vst.msk [vmem:[#allocation4 + $0x18] sm:$0xff] %vm463, 0
      %465 = vst [vmem:[#allocation5] sm:$0xff] 0
      %466 = vst.msk [vmem:[#allocation5 + $0x18] sm:$0xff] %vm463, 0
      %v467 = vld [vmem:[%s435] ss:$8 sm:$0x7]
      %s468 = scalar_lea.vmem %s435, 48
      %v469 = vld [vmem:[%s468] ss:$8 sm:$0x7]
      %s470 = scalar_lea.vmem %s435, 96
      %v471 = vld [vmem:[%s470] ss:$8 sm:$0x7]
      %s472 = scalar_lea.vmem %s435, 144
      %v473 = vld [vmem:[%s472] ss:$8 sm:$0x7]
      %s474 = scalar_lea.vmem %s435, 1
      %v475 = vld [vmem:[%s474] ss:$8 sm:$0x7]
      %s476 = scalar_lea.vmem %s435, 49
      %v477 = vld [vmem:[%s476] ss:$8 sm:$0x7]
      %s478 = scalar_lea.vmem %s435, 97
      %v479 = vld [vmem:[%s478] ss:$8 sm:$0x7]
      %s480 = scalar_lea.vmem %s435, 145
      %v481 = vld [vmem:[%s480] ss:$8 sm:$0x7]
      %v482 = vmax.f32 %v467, %v475
      %v483 = vmax.f32 %v469, %v477
      %v484 = vmax.f32 %v471, %v479
      %v485 = vmax.f32 %v473, %v481
      %s486 = scalar_lea.vmem %s435, 2
      %v487 = vld [vmem:[%s486] ss:$8 sm:$0x7]
      %s488 = scalar_lea.vmem %s435, 50
      %v489 = vld [vmem:[%s488] ss:$8 sm:$0x7]
      %s490 = scalar_lea.vmem %s435, 98
      %v491 = vld [vmem:[%s490] ss:$8 sm:$0x7]
      %s492 = scalar_lea.vmem %s435, 146
      %v493 = vld [vmem:[%s492] ss:$8 sm:$0x7]
      %v494 = vmax.f32 %v482, %v487
      %v495 = vmax.f32 %v483, %v489
      %v496 = vmax.f32 %v484, %v491
      %v497 = vmax.f32 %v485, %v493
      %s498 = scalar_lea.vmem %s435, 3
      %v499 = vld [vmem:[%s498] ss:$8 sm:$0x7]
      %s500 = scalar_lea.vmem %s435, 51
      %v501 = vld [vmem:[%s500] ss:$8 sm:$0x7]
      %s502 = scalar_lea.vmem %s435, 99
      %v503 = vld [vmem:[%s502] ss:$8 sm:$0x7]
      %s504 = scalar_lea.vmem %s435, 147
      %v505 = vld [vmem:[%s504] ss:$8 sm:$0x7]
      %v506 = vmax.f32 %v494, %v499
      %v507 = vmax.f32 %v495, %v501
      %v508 = vmax.f32 %v496, %v503
      %v509 = vmax.f32 %v497, %v505
      %s510 = scalar_lea.vmem %s435, 4
      %v511 = vld [vmem:[%s510] ss:$8 sm:$0x7]
      %s512 = scalar_lea.vmem %s435, 52
      %v513 = vld [vmem:[%s512] ss:$8 sm:$0x7]
      %s514 = scalar_lea.vmem %s435, 100
      %v515 = vld [vmem:[%s514] ss:$8 sm:$0x7]
      %s516 = scalar_lea.vmem %s435, 148
      %v517 = vld [vmem:[%s516] ss:$8 sm:$0x7]
      %v518 = vmax.f32 %v506, %v511
      %v519 = vmax.f32 %v507, %v513
      %v520 = vmax.f32 %v508, %v515
      %v521 = vmax.f32 %v509, %v517
      %s522 = scalar_lea.vmem %s435, 5
      %v523 = vld [vmem:[%s522] ss:$8 sm:$0x7]
      %s524 = scalar_lea.vmem %s435, 53
      %v525 = vld [vmem:[%s524] ss:$8 sm:$0x7]
      %s526 = scalar_lea.vmem %s435, 101
      %v527 = vld [vmem:[%s526] ss:$8 sm:$0x7]
      %s528 = scalar_lea.vmem %s435, 149
      %v529 = vld [vmem:[%s528] ss:$8 sm:$0x7]
      %v530 = vmax.f32 %v518, %v523
      %v531 = vmax.f32 %v519, %v525
      %v532 = vmax.f32 %v520, %v527
      %v533 = vmax.f32 %v521, %v529
      %s534 = scalar_lea.vmem %s435, 6
      %v535 = vld [vmem:[%s534] ss:$8 sm:$0x7]
      %s536 = scalar_lea.vmem %s435, 54
      %v537 = vld [vmem:[%s536] ss:$8 sm:$0x7]
      %s538 = scalar_lea.vmem %s435, 102
      %v539 = vld [vmem:[%s538] ss:$8 sm:$0x7]
      %s540 = scalar_lea.vmem %s435, 150
      %v541 = vld [vmem:[%s540] ss:$8 sm:$0x7]
      %v542 = vmax.f32 %v530, %v535
      %v543 = vmax.f32 %v531, %v537
      %v544 = vmax.f32 %v532, %v539
      %v545 = vmax.f32 %v533, %v541
      %s546 = scalar_lea.vmem %s435, 7
      %v547 = vld [vmem:[%s546] ss:$8 sm:$0x7]
      %s548 = scalar_lea.vmem %s435, 55
      %v549 = vld [vmem:[%s548] ss:$8 sm:$0x7]
      %s550 = scalar_lea.vmem %s435, 103
      %v551 = vld [vmem:[%s550] ss:$8 sm:$0x7]
      %s552 = scalar_lea.vmem %s435, 151
      %v553 = vld [vmem:[%s552] ss:$8 sm:$0x7]
      %v554 = vmax.f32 %v542, %v547
      %v555 = vmax.f32 %v543, %v549
      %v556 = vmax.f32 %v544, %v551
      %v557 = vmax.f32 %v545, %v553
      %s558 = scalar_lea.vmem [#allocation2], 1
      %559 = vst.msk [vmem:[%s558] ss:$4 sm:$0x7] %vm446, %v554
      %s560 = scalar_lea.vmem [#allocation2], 13
      %561 = vst.msk [vmem:[%s560] ss:$4 sm:$0x7] %vm446, %v555
      %s562 = scalar_lea.vmem [#allocation2], 25
      %563 = vst.msk [vmem:[%s562] ss:$4 sm:$0x7] %vm446, %v556
      %s564 = scalar_lea.vmem [#allocation2], 37
      %565 = vst.msk [vmem:[%s564] ss:$4 sm:$0x7] %vm446, %v557
      %s566 = scalar_lea.vmem %s435, 24
      %v567 = vld [vmem:[%s566] ss:$8 sm:$0x7]
      %s568 = scalar_lea.vmem %s435, 72
      %v569 = vld [vmem:[%s568] ss:$8 sm:$0x7]
      %s570 = scalar_lea.vmem %s435, 120
      %v571 = vld [vmem:[%s570] ss:$8 sm:$0x7]
      %s572 = scalar_lea.vmem %s435, 168
      %v573 = vld [vmem:[%s572] ss:$8 sm:$0x7]
      %s574 = scalar_lea.vmem %s435, 25
      %v575 = vld [vmem:[%s574] ss:$8 sm:$0x7]
      %s576 = scalar_lea.vmem %s435, 73
      %v577 = vld [vmem:[%s576] ss:$8 sm:$0x7]
      %s578 = scalar_lea.vmem %s435, 121
      %v579 = vld [vmem:[%s578] ss:$8 sm:$0x7]
      %s580 = scalar_lea.vmem %s435, 169
      %v581 = vld [vmem:[%s580] ss:$8 sm:$0x7]
      %v582 = vmax.f32 %v567, %v575
      %v583 = vmax.f32 %v569, %v577
      %v584 = vmax.f32 %v571, %v579
      %v585 = vmax.f32 %v573, %v581
      %s586 = scalar_lea.vmem %s435, 26
      %v587 = vld [vmem:[%s586] ss:$8 sm:$0x7]
      %s588 = scalar_lea.vmem %s435, 74
      %v589 = vld [vmem:[%s588] ss:$8 sm:$0x7]
      %s590 = scalar_lea.vmem %s435, 122
      %v591 = vld [vmem:[%s590] ss:$8 sm:$0x7]
      %s592 = scalar_lea.vmem %s435, 170
      %v593 = vld [vmem:[%s592] ss:$8 sm:$0x7]
      %v594 = vmax.f32 %v582, %v587
      %v595 = vmax.f32 %v583, %v589
      %v596 = vmax.f32 %v584, %v591
      %v597 = vmax.f32 %v585, %v593
      %s598 = scalar_lea.vmem %s435, 27
      %v599 = vld [vmem:[%s598] ss:$8 sm:$0x7]
      %s600 = scalar_lea.vmem %s435, 75
      %v601 = vld [vmem:[%s600] ss:$8 sm:$0x7]
      %s602 = scalar_lea.vmem %s435, 123
      %v603 = vld [vmem:[%s602] ss:$8 sm:$0x7]
      %s604 = scalar_lea.vmem %s435, 171
      %v605 = vld [vmem:[%s604] ss:$8 sm:$0x7]
      %v606 = vmax.f32 %v594, %v599
      %v607 = vmax.f32 %v595, %v601
      %v608 = vmax.f32 %v596, %v603
      %v609 = vmax.f32 %v597, %v605
      %s610 = scalar_lea.vmem %s435, 28
      %v611 = vld [vmem:[%s610] ss:$8 sm:$0x7]
      %s612 = scalar_lea.vmem %s435, 76
      %v613 = vld [vmem:[%s612] ss:$8 sm:$0x7]
      %s614 = scalar_lea.vmem %s435, 124
      %v615 = vld [vmem:[%s614] ss:$8 sm:$0x7]
      %s616 = scalar_lea.vmem %s435, 172
      %v617 = vld [vmem:[%s616] ss:$8 sm:$0x7]
      %v618 = vmax.f32 %v606, %v611
      %v619 = vmax.f32 %v607, %v613
      %v620 = vmax.f32 %v608, %v615
      %v621 = vmax.f32 %v609, %v617
      %s622 = scalar_lea.vmem %s435, 29
      %v623 = vld [vmem:[%s622] ss:$8 sm:$0x7]
      %s624 = scalar_lea.vmem %s435, 77
      %v625 = vld [vmem:[%s624] ss:$8 sm:$0x7]
      %s626 = scalar_lea.vmem %s435, 125
      %v627 = vld [vmem:[%s626] ss:$8 sm:$0x7]
      %s628 = scalar_lea.vmem %s435, 173
      %v629 = vld [vmem:[%s628] ss:$8 sm:$0x7]
      %v630 = vmax.f32 %v618, %v623
      %v631 = vmax.f32 %v619, %v625
      %v632 = vmax.f32 %v620, %v627
      %v633 = vmax.f32 %v621, %v629
      %s634 = scalar_lea.vmem %s435, 30
      %v635 = vld [vmem:[%s634] ss:$8 sm:$0x7]
      %s636 = scalar_lea.vmem %s435, 78
      %v637 = vld [vmem:[%s636] ss:$8 sm:$0x7]
      %s638 = scalar_lea.vmem %s435, 126
      %v639 = vld [vmem:[%s638] ss:$8 sm:$0x7]
      %s640 = scalar_lea.vmem %s435, 174
      %v641 = vld [vmem:[%s640] ss:$8 sm:$0x7]
      %v642 = vmax.f32 %v630, %v635
      %v643 = vmax.f32 %v631, %v637
      %v644 = vmax.f32 %v632, %v639
      %v645 = vmax.f32 %v633, %v641
      %s646 = scalar_lea.vmem %s435, 31
      %v647 = vld [vmem:[%s646] ss:$8 sm:$0x7]
      %s648 = scalar_lea.vmem %s435, 79
      %v649 = vld [vmem:[%s648] ss:$8 sm:$0x7]
      %s650 = scalar_lea.vmem %s435, 127
      %v651 = vld [vmem:[%s650] ss:$8 sm:$0x7]
      %s652 = scalar_lea.vmem %s435, 175
      %v653 = vld [vmem:[%s652] ss:$8 sm:$0x7]
      %v654 = vmax.f32 %v642, %v647
      %v655 = vmax.f32 %v643, %v649
      %v656 = vmax.f32 %v644, %v651
      %v657 = vmax.f32 %v645, %v653
      %s658 = scalar_lea.vmem [#allocation2], 2
      %659 = vst.msk [vmem:[%s658] ss:$4 sm:$0x7] %vm446, %v654
      %s660 = scalar_lea.vmem [#allocation2], 14
      %661 = vst.msk [vmem:[%s660] ss:$4 sm:$0x7] %vm446, %v655
      %s662 = scalar_lea.vmem [#allocation2], 26
      %663 = vst.msk [vmem:[%s662] ss:$4 sm:$0x7] %vm446, %v656
      %s664 = scalar_lea.vmem [#allocation2], 38
      %665 = vst.msk [vmem:[%s664] ss:$4 sm:$0x7] %vm446, %v657
      %v666 = vld [vmem:[#allocation2] ss:$4 sm:$0x7]
      %v667 = vld [vmem:[%s448] ss:$4 sm:$0x7]
      %v668 = vld [vmem:[%s450] ss:$4 sm:$0x7]
      %v669 = vld [vmem:[%s452] ss:$4 sm:$0x7]
      %v674 = vlaneseq
      %v675 = vshrl.u32 %v674, 7
      %v676 = vsub.s32 0, %v675
      %v677 = vrot.slane %v666, %v676
      %v678 = vlaneseq
      %v679 = vshrl.u32 %v678, 7
      %v680 = vsub.s32 1, %v679
      %v681 = vrot.slane %v666, %v680
      %v682 = vlaneseq
      %v683 = vshrl.u32 %v682, 7
      %v684 = vsub.s32 2, %v683
      %v685 = vrot.slane %v666, %v684
      %v686 = vlaneseq
      %v687 = vshrl.u32 %v686, 7
      %v688 = vsub.s32 0, %v687
      %v689 = vrot.slane %v667, %v688
      %v690 = vlaneseq
      %v691 = vshrl.u32 %v690, 7
      %v692 = vsub.s32 1, %v691
      %v693 = vrot.slane %v667, %v692
      %v694 = vlaneseq
      %v695 = vshrl.u32 %v694, 7
      %v696 = vsub.s32 2, %v695
      %v697 = vrot.slane %v667, %v696
      %v698 = vlaneseq
      %v699 = vshrl.u32 %v698, 7
      %v700 = vsub.s32 0, %v699
      %v701 = vrot.slane %v668, %v700
      %v702 = vlaneseq
      %v703 = vshrl.u32 %v702, 7
      %v704 = vsub.s32 1, %v703
      %v705 = vrot.slane %v668, %v704
      %v706 = vlaneseq
      %v707 = vshrl.u32 %v706, 7
      %v708 = vsub.s32 2, %v707
      %v709 = vrot.slane %v668, %v708
      %v710 = vlaneseq
      %v711 = vshrl.u32 %v710, 7
      %v712 = vsub.s32 0, %v711
      %v713 = vrot.slane %v669, %v712
      %v714 = vlaneseq
      %v715 = vshrl.u32 %v714, 7
      %v716 = vsub.s32 1, %v715
      %v717 = vrot.slane %v669, %v716
      %v718 = vlaneseq
      %v719 = vshrl.u32 %v718, 7
      %v720 = vsub.s32 2, %v719
      %v721 = vrot.slane %v669, %v720
      %v734 = vpack.c.bf16 %v677, %v677
      %v735 = vpack.c.bf16 %v681, %v681
      %v736 = vpack.c.bf16 %v685, %v685
      %v737 = vpack.c.bf16 %v689, %v689
      %v738 = vpack.c.bf16 %v693, %v693
      %v739 = vpack.c.bf16 %v697, %v697
      %v740 = vpack.c.bf16 %v701, %v701
      %v741 = vpack.c.bf16 %v705, %v705
      %v742 = vpack.c.bf16 %v709, %v709
      %v743 = vpack.c.bf16 %v713, %v713
      %v744 = vpack.c.bf16 %v717, %v717
      %v745 = vpack.c.bf16 %v721, %v721
      %v758 = vunpack.c.l.b16 %v734
      %v759 = vunpack.c.l.b16 %v735
      %v760 = vunpack.c.l.b16 %v736
      %v761 = vunpack.c.l.b16 %v737
      %v762 = vunpack.c.l.b16 %v738
      %v763 = vunpack.c.l.b16 %v739
      %v764 = vunpack.c.l.b16 %v740
      %v765 = vunpack.c.l.b16 %v741
      %v766 = vunpack.c.l.b16 %v742
      %v767 = vunpack.c.l.b16 %v743
      %v768 = vunpack.c.l.b16 %v744
      %v769 = vunpack.c.l.b16 %v745
      %v770 = vrot.slane %v761, 7
      %vm771 = vcmask 1041409
      %v772 = vsel %vm771, %v770, %v758
      %v773 = vrot.slane %v764, 6
      %vm774 = vcmask 1042434
      %v775 = vsel %vm774, %v773, %v772
      %v776 = vrot.slane %v767, 5
      %vm777 = vcmask 1043459
      %v778 = vsel %vm777, %v776, %v775
      %v779 = vrot.slane %v762, 7
      %v780 = vsel %vm771, %v779, %v759
      %v781 = vrot.slane %v765, 6
      %v782 = vsel %vm774, %v781, %v780
      %v783 = vrot.slane %v768, 5
      %v784 = vsel %vm777, %v783, %v782
      %v785 = vrot.slane %v763, 7
      %v786 = vsel %vm771, %v785, %v760
      %v787 = vrot.slane %v766, 6
      %v788 = vsel %vm774, %v787, %v786
      %v789 = vrot.slane %v769, 5
      %v790 = vsel %vm777, %v789, %v788
      %v791 = vpack.c.b16 %v778, %v778
      %v792 = vpack.c.b16 %v784, %v784
      %v793 = vpack.c.b16 %v790, %v790
      %797 = vst [vmem:[#allocation3] sm:$0x3] %v791
      %798 = vst [vmem:[#allocation3 + $0x8] sm:$0x3] %v792
      %vm799 = vcmask 254976
      %800 = vst.msk [vmem:[#allocation3 + $0x10] sm:$0x3] %vm799, %v793
      %v801 = vld [vmem:[#allocation2] ss:$4 sm:$0x7]
      %v802 = vld [vmem:[%s448] ss:$4 sm:$0x7]
      %v803 = vld [vmem:[%s450] ss:$4 sm:$0x7]
      %v804 = vld [vmem:[%s452] ss:$4 sm:$0x7]
      %v809 = vlaneseq
      %v810 = vshrl.u32 %v809, 7
      %v811 = vsub.s32 0, %v810
      %v812 = vrot.slane %v801, %v811
      %v813 = vlaneseq
      %v814 = vshrl.u32 %v813, 7
      %v815 = vsub.s32 1, %v814
      %v816 = vrot.slane %v801, %v815
      %v817 = vlaneseq
      %v818 = vshrl.u32 %v817, 7
      %v819 = vsub.s32 2, %v818
      %v820 = vrot.slane %v801, %v819
      %v821 = vlaneseq
      %v822 = vshrl.u32 %v821, 7
      %v823 = vsub.s32 0, %v822
      %v824 = vrot.slane %v802, %v823
      %v825 = vlaneseq
      %v826 = vshrl.u32 %v825, 7
      %v827 = vsub.s32 1, %v826
      %v828 = vrot.slane %v802, %v827
      %v829 = vlaneseq
      %v830 = vshrl.u32 %v829, 7
      %v831 = vsub.s32 2, %v830
      %v832 = vrot.slane %v802, %v831
      %v833 = vlaneseq
      %v834 = vshrl.u32 %v833, 7
      %v835 = vsub.s32 0, %v834
      %v836 = vrot.slane %v803, %v835
      %v837 = vlaneseq
      %v838 = vshrl.u32 %v837, 7
      %v839 = vsub.s32 1, %v838
      %v840 = vrot.slane %v803, %v839
      %v841 = vlaneseq
      %v842 = vshrl.u32 %v841, 7
      %v843 = vsub.s32 2, %v842
      %v844 = vrot.slane %v803, %v843
      %v845 = vlaneseq
      %v846 = vshrl.u32 %v845, 7
      %v847 = vsub.s32 0, %v846
      %v848 = vrot.slane %v804, %v847
      %v849 = vlaneseq
      %v850 = vshrl.u32 %v849, 7
      %v851 = vsub.s32 1, %v850
      %v852 = vrot.slane %v804, %v851
      %v853 = vlaneseq
      %v854 = vshrl.u32 %v853, 7
      %v855 = vsub.s32 2, %v854
      %v856 = vrot.slane %v804, %v855
      %v869 = vpack.c.bf16 %v812, %v812
      %v870 = vpack.c.bf16 %v816, %v816
      %v871 = vpack.c.bf16 %v820, %v820
      %v872 = vpack.c.bf16 %v824, %v824
      %v873 = vpack.c.bf16 %v828, %v828
      %v874 = vpack.c.bf16 %v832, %v832
      %v875 = vpack.c.bf16 %v836, %v836
      %v876 = vpack.c.bf16 %v840, %v840
      %v877 = vpack.c.bf16 %v844, %v844
      %v878 = vpack.c.bf16 %v848, %v848
      %v879 = vpack.c.bf16 %v852, %v852
      %v880 = vpack.c.bf16 %v856, %v856
      %v893 = vunpack.c.l.b16 %v869
      %v894 = vunpack.c.l.b16 %v870
      %v895 = vunpack.c.l.b16 %v871
      %v896 = vunpack.c.l.b16 %v872
      %v897 = vunpack.c.l.b16 %v873
      %v898 = vunpack.c.l.b16 %v874
      %v899 = vunpack.c.l.b16 %v875
      %v900 = vunpack.c.l.b16 %v876
      %v901 = vunpack.c.l.b16 %v877
      %v902 = vunpack.c.l.b16 %v878
      %v903 = vunpack.c.l.b16 %v879
      %v904 = vunpack.c.l.b16 %v880
      %v905 = vrot.slane %v893, 4
      %v906 = vrot.slane %v896, 3
      %vm907 = vcmask 1045509
      %v908 = vsel %vm907, %v906, %v905
      %v909 = vrot.slane %v899, 2
      %vm910 = vcmask 1046534
      %v911 = vsel %vm910, %v909, %v908
      %v912 = vrot.slane %v902, 1
      %vm913 = vcmask 1047559
      %v914 = vsel %vm913, %v912, %v911
      %v915 = vrot.slane %v894, 4
      %v916 = vrot.slane %v897, 3
      %v917 = vsel %vm907, %v916, %v915
      %v918 = vrot.slane %v900, 2
      %v919 = vsel %vm910, %v918, %v917
      %v920 = vrot.slane %v903, 1
      %v921 = vsel %vm913, %v920, %v919
      %v922 = vrot.slane %v895, 4
      %v923 = vrot.slane %v898, 3
      %v924 = vsel %vm907, %v923, %v922
      %v925 = vrot.slane %v901, 2
      %v926 = vsel %vm910, %v925, %v924
      %v927 = vrot.slane %v904, 1
      %v928 = vsel %vm913, %v927, %v926
      %v929 = vpack.c.b16 %v914, %v914
      %v930 = vpack.c.b16 %v921, %v921
      %v931 = vpack.c.b16 %v928, %v928
      %932 = vrot.lane.b32.xlu0 %v929, 127
      %v933 = vpop.permute.xlu0 %932
      %934 = vrot.lane.b32.xlu0 %v930, 127
      %v935 = vpop.permute.xlu0 %934
      %936 = vrot.lane.b32.xlu0 %v931, 127
      %v937 = vpop.permute.xlu0 %936
      %vm938 = vcmask 1039360
      %v939 = vsel %vm938, %v933, %v935
      %v940 = vsel %vm938, %v935, %v937
      %944 = vst [vmem:[#allocation3] sm:$0xc] %v939
      %945 = vst [vmem:[#allocation3 + $0x8] sm:$0xc] %v940
      %vm946 = vcmask 257026
      %947 = vst.msk [vmem:[#allocation3 + $0x10] sm:$0xc] %vm946, %v937
      %v948 = vld [vmem:[#allocation2] ss:$4 sm:$0x7]
      %v949 = vld [vmem:[%s448] ss:$4 sm:$0x7]
      %v950 = vld [vmem:[%s450] ss:$4 sm:$0x7]
      %v951 = vld [vmem:[%s452] ss:$4 sm:$0x7]
      %v956 = vlaneseq
      %v957 = vshrl.u32 %v956, 7
      %v958 = vsub.s32 0, %v957
      %v959 = vrot.slane %v948, %v958
      %v960 = vlaneseq
      %v961 = vshrl.u32 %v960, 7
      %v962 = vsub.s32 1, %v961
      %v963 = vrot.slane %v948, %v962
      %v964 = vlaneseq
      %v965 = vshrl.u32 %v964, 7
      %v966 = vsub.s32 2, %v965
      %v967 = vrot.slane %v948, %v966
      %v968 = vlaneseq
      %v969 = vshrl.u32 %v968, 7
      %v970 = vsub.s32 0, %v969
      %v971 = vrot.slane %v949, %v970
      %v972 = vlaneseq
      %v973 = vshrl.u32 %v972, 7
      %v974 = vsub.s32 1, %v973
      %v975 = vrot.slane %v949, %v974
      %v976 = vlaneseq
      %v977 = vshrl.u32 %v976, 7
      %v978 = vsub.s32 2, %v977
      %v979 = vrot.slane %v949, %v978
      %v980 = vlaneseq
      %v981 = vshrl.u32 %v980, 7
      %v982 = vsub.s32 0, %v981
      %v983 = vrot.slane %v950, %v982
      %v984 = vlaneseq
      %v985 = vshrl.u32 %v984, 7
      %v986 = vsub.s32 1, %v985
      %v987 = vrot.slane %v950, %v986
      %v988 = vlaneseq
      %v989 = vshrl.u32 %v988, 7
      %v990 = vsub.s32 2, %v989
      %v991 = vrot.slane %v950, %v990
      %v992 = vlaneseq
      %v993 = vshrl.u32 %v992, 7
      %v994 = vsub.s32 0, %v993
      %v995 = vrot.slane %v951, %v994
      %v996 = vlaneseq
      %v997 = vshrl.u32 %v996, 7
      %v998 = vsub.s32 1, %v997
      %v999 = vrot.slane %v951, %v998
      %v1000 = vlaneseq
      %v1001 = vshrl.u32 %v1000, 7
      %v1002 = vsub.s32 2, %v1001
      %v1003 = vrot.slane %v951, %v1002
      %v1016 = vpack.c.bf16 %v959, %v959
      %v1017 = vpack.c.bf16 %v963, %v963
      %v1018 = vpack.c.bf16 %v967, %v967
      %v1019 = vpack.c.bf16 %v971, %v971
      %v1020 = vpack.c.bf16 %v975, %v975
      %v1021 = vpack.c.bf16 %v979, %v979
      %v1022 = vpack.c.bf16 %v983, %v983
      %v1023 = vpack.c.bf16 %v987, %v987
      %v1024 = vpack.c.bf16 %v991, %v991
      %v1025 = vpack.c.bf16 %v995, %v995
      %v1026 = vpack.c.bf16 %v999, %v999
      %v1027 = vpack.c.bf16 %v1003, %v1003
      %v1040 = vunpack.c.l.b16 %v1016
      %v1041 = vunpack.c.l.b16 %v1017
      %v1042 = vunpack.c.l.b16 %v1018
      %v1043 = vunpack.c.l.b16 %v1019
      %v1044 = vunpack.c.l.b16 %v1020
      %v1045 = vunpack.c.l.b16 %v1021
      %v1046 = vunpack.c.l.b16 %v1022
      %v1047 = vunpack.c.l.b16 %v1023
      %v1048 = vunpack.c.l.b16 %v1024
      %v1049 = vunpack.c.l.b16 %v1025
      %v1050 = vunpack.c.l.b16 %v1026
      %v1051 = vunpack.c.l.b16 %v1027
      %v1052 = vrot.slane %v1043, 7
      %v1053 = vsel %vm771, %v1052, %v1040
      %v1054 = vrot.slane %v1046, 6
      %v1055 = vsel %vm774, %v1054, %v1053
      %v1056 = vrot.slane %v1049, 5
      %v1057 = vsel %vm777, %v1056, %v1055
      %v1058 = vrot.slane %v1044, 7
      %v1059 = vsel %vm771, %v1058, %v1041
      %v1060 = vrot.slane %v1047, 6
      %v1061 = vsel %vm774, %v1060, %v1059
      %v1062 = vrot.slane %v1050, 5
      %v1063 = vsel %vm777, %v1062, %v1061
      %v1064 = vrot.slane %v1045, 7
      %v1065 = vsel %vm771, %v1064, %v1042
      %v1066 = vrot.slane %v1048, 6
      %v1067 = vsel %vm774, %v1066, %v1065
      %v1068 = vrot.slane %v1051, 5
      %v1069 = vsel %vm777, %v1068, %v1067
      %v1070 = vpack.c.b16 %v1057, %v1057
      %v1071 = vpack.c.b16 %v1063, %v1063
      %v1072 = vpack.c.b16 %v1069, %v1069
      %1073 = vrot.lane.b32.xlu0 %v1070, 126
      %v1074 = vpop.permute.xlu0 %1073
      %1075 = vrot.lane.b32.xlu0 %v1071, 126
      %v1076 = vpop.permute.xlu0 %1075
      %1077 = vrot.lane.b32.xlu0 %v1072, 126
      %v1078 = vpop.permute.xlu0 %1077
      %vm1079 = vcmask 1031168
      %v1080 = vsel %vm1079, %v1074, %v1076
      %v1081 = vsel %vm1079, %v1076, %v1078
      %1085 = vst [vmem:[#allocation3] sm:$0x30] %v1080
      %1086 = vst [vmem:[#allocation3 + $0x8] sm:$0x30] %v1081
      %vm1087 = vcmask 259076
      %1088 = vst.msk [vmem:[#allocation3 + $0x10] sm:$0x30] %vm1087, %v1078
      %v1089 = vld [vmem:[#allocation2] ss:$4 sm:$0x7]
      %v1090 = vld [vmem:[%s448] ss:$4 sm:$0x7]
      %v1091 = vld [vmem:[%s450] ss:$4 sm:$0x7]
      %v1092 = vld [vmem:[%s452] ss:$4 sm:$0x7]
      %v1097 = vlaneseq
      %v1098 = vshrl.u32 %v1097, 7
      %v1099 = vsub.s32 0, %v1098
      %v1100 = vrot.slane %v1089, %v1099
      %v1101 = vlaneseq
      %v1102 = vshrl.u32 %v1101, 7
      %v1103 = vsub.s32 1, %v1102
      %v1104 = vrot.slane %v1089, %v1103
      %v1105 = vlaneseq
      %v1106 = vshrl.u32 %v1105, 7
      %v1107 = vsub.s32 2, %v1106
      %v1108 = vrot.slane %v1089, %v1107
      %v1109 = vlaneseq
      %v1110 = vshrl.u32 %v1109, 7
      %v1111 = vsub.s32 0, %v1110
      %v1112 = vrot.slane %v1090, %v1111
      %v1113 = vlaneseq
      %v1114 = vshrl.u32 %v1113, 7
      %v1115 = vsub.s32 1, %v1114
      %v1116 = vrot.slane %v1090, %v1115
      %v1117 = vlaneseq
      %v1118 = vshrl.u32 %v1117, 7
      %v1119 = vsub.s32 2, %v1118
      %v1120 = vrot.slane %v1090, %v1119
      %v1121 = vlaneseq
      %v1122 = vshrl.u32 %v1121, 7
      %v1123 = vsub.s32 0, %v1122
      %v1124 = vrot.slane %v1091, %v1123
      %v1125 = vlaneseq
      %v1126 = vshrl.u32 %v1125, 7
      %v1127 = vsub.s32 1, %v1126
      %v1128 = vrot.slane %v1091, %v1127
      %v1129 = vlaneseq
      %v1130 = vshrl.u32 %v1129, 7
      %v1131 = vsub.s32 2, %v1130
      %v1132 = vrot.slane %v1091, %v1131
      %v1133 = vlaneseq
      %v1134 = vshrl.u32 %v1133, 7
      %v1135 = vsub.s32 0, %v1134
      %v1136 = vrot.slane %v1092, %v1135
      %v1137 = vlaneseq
      %v1138 = vshrl.u32 %v1137, 7
      %v1139 = vsub.s32 1, %v1138
      %v1140 = vrot.slane %v1092, %v1139
      %v1141 = vlaneseq
      %v1142 = vshrl.u32 %v1141, 7
      %v1143 = vsub.s32 2, %v1142
      %v1144 = vrot.slane %v1092, %v1143
      %v1157 = vpack.c.bf16 %v1100, %v1100
      %v1158 = vpack.c.bf16 %v1104, %v1104
      %v1159 = vpack.c.bf16 %v1108, %v1108
      %v1160 = vpack.c.bf16 %v1112, %v1112
      %v1161 = vpack.c.bf16 %v1116, %v1116
      %v1162 = vpack.c.bf16 %v1120, %v1120
      %v1163 = vpack.c.bf16 %v1124, %v1124
      %v1164 = vpack.c.bf16 %v1128, %v1128
      %v1165 = vpack.c.bf16 %v1132, %v1132
      %v1166 = vpack.c.bf16 %v1136, %v1136
      %v1167 = vpack.c.bf16 %v1140, %v1140
      %v1168 = vpack.c.bf16 %v1144, %v1144
      %v1181 = vunpack.c.l.b16 %v1157
      %v1182 = vunpack.c.l.b16 %v1158
      %v1183 = vunpack.c.l.b16 %v1159
      %v1184 = vunpack.c.l.b16 %v1160
      %v1185 = vunpack.c.l.b16 %v1161
      %v1186 = vunpack.c.l.b16 %v1162
      %v1187 = vunpack.c.l.b16 %v1163
      %v1188 = vunpack.c.l.b16 %v1164
      %v1189 = vunpack.c.l.b16 %v1165
      %v1190 = vunpack.c.l.b16 %v1166
      %v1191 = vunpack.c.l.b16 %v1167
      %v1192 = vunpack.c.l.b16 %v1168
      %v1193 = vrot.slane %v1181, 4
      %v1194 = vrot.slane %v1184, 3
      %v1195 = vsel %vm907, %v1194, %v1193
      %v1196 = vrot.slane %v1187, 2
      %v1197 = vsel %vm910, %v1196, %v1195
      %v1198 = vrot.slane %v1190, 1
      %v1199 = vsel %vm913, %v1198, %v1197
      %v1200 = vrot.slane %v1182, 4
      %v1201 = vrot.slane %v1185, 3
      %v1202 = vsel %vm907, %v1201, %v1200
      %v1203 = vrot.slane %v1188, 2
      %v1204 = vsel %vm910, %v1203, %v1202
      %v1205 = vrot.slane %v1191, 1
      %v1206 = vsel %vm913, %v1205, %v1204
      %v1207 = vrot.slane %v1183, 4
      %v1208 = vrot.slane %v1186, 3
      %v1209 = vsel %vm907, %v1208, %v1207
      %v1210 = vrot.slane %v1189, 2
      %v1211 = vsel %vm910, %v1210, %v1209
      %v1212 = vrot.slane %v1192, 1
      %v1213 = vsel %vm913, %v1212, %v1211
      %v1214 = vpack.c.b16 %v1199, %v1199
      %v1215 = vpack.c.b16 %v1206, %v1206
      %v1216 = vpack.c.b16 %v1213, %v1213
      %1217 = vrot.lane.b32.xlu0 %v1214, 110
      %v1218 = vpop.permute.xlu0 %1217
      %1219 = vrot.lane.b32.xlu0 %v1215, 110
      %v1220 = vpop.permute.xlu0 %1219
      %1221 = vrot.lane.b32.xlu0 %v1216, 110
      %v1222 = vpop.permute.xlu0 %1221
      %vm1223 = vcmask 900096
      %v1224 = vsel %vm1223, %v1218, %v1220
      %v1225 = vsel %vm1223, %v1220, %v1222
      %1229 = vst [vmem:[#allocation3] sm:$0xc0] %v1224
      %1230 = vst [vmem:[#allocation3 + $0x8] sm:$0xc0] %v1225
      %vm1231 = vcmask 261126
      %1232 = vst.msk [vmem:[#allocation3 + $0x10] sm:$0xc0] %vm1231, %v1222
      %v1233 = vld [vmem:[#allocation2] ss:$4 sm:$0x7]
      %v1234 = vld [vmem:[%s448] ss:$4 sm:$0x7]
      %v1235 = vld [vmem:[%s450] ss:$4 sm:$0x7]
      %v1236 = vld [vmem:[%s452] ss:$4 sm:$0x7]
      %v1241 = vlaneseq
      %v1242 = vshrl.u32 %v1241, 7
      %v1243 = vsub.s32 0, %v1242
      %v1244 = vrot.slane %v1233, %v1243
      %v1245 = vlaneseq
      %v1246 = vshrl.u32 %v1245, 7
      %v1247 = vsub.s32 1, %v1246
      %v1248 = vrot.slane %v1233, %v1247
      %v1249 = vlaneseq
      %v1250 = vshrl.u32 %v1249, 7
      %v1251 = vsub.s32 2, %v1250
      %v1252 = vrot.slane %v1233, %v1251
      %v1253 = vlaneseq
      %v1254 = vshrl.u32 %v1253, 7
      %v1255 = vsub.s32 0, %v1254
      %v1256 = vrot.slane %v1234, %v1255
      %v1257 = vlaneseq
      %v1258 = vshrl.u32 %v1257, 7
      %v1259 = vsub.s32 1, %v1258
      %v1260 = vrot.slane %v1234, %v1259
      %v1261 = vlaneseq
      %v1262 = vshrl.u32 %v1261, 7
      %v1263 = vsub.s32 2, %v1262
      %v1264 = vrot.slane %v1234, %v1263
      %v1265 = vlaneseq
      %v1266 = vshrl.u32 %v1265, 7
      %v1267 = vsub.s32 0, %v1266
      %v1268 = vrot.slane %v1235, %v1267
      %v1269 = vlaneseq
      %v1270 = vshrl.u32 %v1269, 7
      %v1271 = vsub.s32 1, %v1270
      %v1272 = vrot.slane %v1235, %v1271
      %v1273 = vlaneseq
      %v1274 = vshrl.u32 %v1273, 7
      %v1275 = vsub.s32 2, %v1274
      %v1276 = vrot.slane %v1235, %v1275
      %v1277 = vlaneseq
      %v1278 = vshrl.u32 %v1277, 7
      %v1279 = vsub.s32 0, %v1278
      %v1280 = vrot.slane %v1236, %v1279
      %v1281 = vlaneseq
      %v1282 = vshrl.u32 %v1281, 7
      %v1283 = vsub.s32 1, %v1282
      %v1284 = vrot.slane %v1236, %v1283
      %v1285 = vlaneseq
      %v1286 = vshrl.u32 %v1285, 7
      %v1287 = vsub.s32 2, %v1286
      %v1288 = vrot.slane %v1236, %v1287
      %v1301 = vpack.c.bf16 %v1244, %v1244
      %v1302 = vpack.c.bf16 %v1248, %v1248
      %v1303 = vpack.c.bf16 %v1252, %v1252
      %v1304 = vpack.c.bf16 %v1256, %v1256
      %v1305 = vpack.c.bf16 %v1260, %v1260
      %v1306 = vpack.c.bf16 %v1264, %v1264
      %v1307 = vpack.c.bf16 %v1268, %v1268
      %v1308 = vpack.c.bf16 %v1272, %v1272
      %v1309 = vpack.c.bf16 %v1276, %v1276
      %v1310 = vpack.c.bf16 %v1280, %v1280
      %v1311 = vpack.c.bf16 %v1284, %v1284
      %v1312 = vpack.c.bf16 %v1288, %v1288
      %v1325 = vunpack.c.l.b16 %v1301
      %v1326 = vunpack.c.l.b16 %v1302
      %v1327 = vunpack.c.l.b16 %v1303
      %v1328 = vunpack.c.l.b16 %v1304
      %v1329 = vunpack.c.l.b16 %v1305
      %v1330 = vunpack.c.l.b16 %v1306
      %v1331 = vunpack.c.l.b16 %v1307
      %v1332 = vunpack.c.l.b16 %v1308
      %v1333 = vunpack.c.l.b16 %v1309
      %v1334 = vunpack.c.l.b16 %v1310
      %v1335 = vunpack.c.l.b16 %v1311
      %v1336 = vunpack.c.l.b16 %v1312
      %v1337 = vrot.slane %v1328, 7
      %v1338 = vsel %vm771, %v1337, %v1325
      %v1339 = vrot.slane %v1331, 6
      %v1340 = vsel %vm774, %v1339, %v1338
      %v1341 = vrot.slane %v1334, 5
      %v1342 = vsel %vm777, %v1341, %v1340
      %v1343 = vrot.slane %v1329, 7
      %v1344 = vsel %vm771, %v1343, %v1326
      %v1345 = vrot.slane %v1332, 6
      %v1346 = vsel %vm774, %v1345, %v1344
      %v1347 = vrot.slane %v1335, 5
      %v1348 = vsel %vm777, %v1347, %v1346
      %v1349 = vrot.slane %v1330, 7
      %v1350 = vsel %vm771, %v1349, %v1327
      %v1351 = vrot.slane %v1333, 6
      %v1352 = vsel %vm774, %v1351, %v1350
      %v1353 = vrot.slane %v1336, 5
      %v1354 = vsel %vm777, %v1353, %v1352
      %v1355 = vpack.c.b16 %v1342, %v1342
      %v1356 = vpack.c.b16 %v1348, %v1348
      %v1357 = vpack.c.b16 %v1354, %v1354
      %1358 = vrot.lane.b32.xlu0 %v1355, 109
      %v1359 = vpop.permute.xlu0 %1358
      %1360 = vrot.lane.b32.xlu0 %v1356, 109
      %v1361 = vpop.permute.xlu0 %1360
      %1362 = vrot.lane.b32.xlu0 %v1357, 109
      %v1363 = vpop.permute.xlu0 %1362
      %vm1364 = vcmask 891904
      %v1365 = vsel %vm1364, %v1359, %v1361
      %v1366 = vsel %vm1364, %v1361, %v1363
      %1370 = vst [vmem:[#allocation3 + $0x28] sm:$0x3] %v1365
      %1371 = vst [vmem:[#allocation3 + $0x30] sm:$0x3] %v1366
      %1372 = vst.msk [vmem:[#allocation3 + $0x38] sm:$0x3] %vm799, %v1363
      %v1373 = vld [vmem:[#allocation2] ss:$4 sm:$0x7]
      %v1374 = vld [vmem:[%s448] ss:$4 sm:$0x7]
      %v1375 = vld [vmem:[%s450] ss:$4 sm:$0x7]
      %v1376 = vld [vmem:[%s452] ss:$4 sm:$0x7]
      %v1381 = vlaneseq
      %v1382 = vshrl.u32 %v1381, 7
      %v1383 = vsub.s32 0, %v1382
      %v1384 = vrot.slane %v1373, %v1383
      %v1385 = vlaneseq
      %v1386 = vshrl.u32 %v1385, 7
      %v1387 = vsub.s32 1, %v1386
      %v1388 = vrot.slane %v1373, %v1387
      %v1389 = vlaneseq
      %v1390 = vshrl.u32 %v1389, 7
      %v1391 = vsub.s32 2, %v1390
      %v1392 = vrot.slane %v1373, %v1391
      %v1393 = vlaneseq
      %v1394 = vshrl.u32 %v1393, 7
      %v1395 = vsub.s32 0, %v1394
      %v1396 = vrot.slane %v1374, %v1395
      %v1397 = vlaneseq
      %v1398 = vshrl.u32 %v1397, 7
      %v1399 = vsub.s32 1, %v1398
      %v1400 = vrot.slane %v1374, %v1399
      %v1401 = vlaneseq
      %v1402 = vshrl.u32 %v1401, 7
      %v1403 = vsub.s32 2, %v1402
      %v1404 = vrot.slane %v1374, %v1403
      %v1405 = vlaneseq
      %v1406 = vshrl.u32 %v1405, 7
      %v1407 = vsub.s32 0, %v1406
      %v1408 = vrot.slane %v1375, %v1407
      %v1409 = vlaneseq
      %v1410 = vshrl.u32 %v1409, 7
      %v1411 = vsub.s32 1, %v1410
      %v1412 = vrot.slane %v1375, %v1411
      %v1413 = vlaneseq
      %v1414 = vshrl.u32 %v1413, 7
      %v1415 = vsub.s32 2, %v1414
      %v1416 = vrot.slane %v1375, %v1415
      %v1417 = vlaneseq
      %v1418 = vshrl.u32 %v1417, 7
      %v1419 = vsub.s32 0, %v1418
      %v1420 = vrot.slane %v1376, %v1419
      %v1421 = vlaneseq
      %v1422 = vshrl.u32 %v1421, 7
      %v1423 = vsub.s32 1, %v1422
      %v1424 = vrot.slane %v1376, %v1423
      %v1425 = vlaneseq
      %v1426 = vshrl.u32 %v1425, 7
      %v1427 = vsub.s32 2, %v1426
      %v1428 = vrot.slane %v1376, %v1427
      %v1441 = vpack.c.bf16 %v1384, %v1384
      %v1442 = vpack.c.bf16 %v1388, %v1388
      %v1443 = vpack.c.bf16 %v1392, %v1392
      %v1444 = vpack.c.bf16 %v1396, %v1396
      %v1445 = vpack.c.bf16 %v1400, %v1400
      %v1446 = vpack.c.bf16 %v1404, %v1404
      %v1447 = vpack.c.bf16 %v1408, %v1408
      %v1448 = vpack.c.bf16 %v1412, %v1412
      %v1449 = vpack.c.bf16 %v1416, %v1416
      %v1450 = vpack.c.bf16 %v1420, %v1420
      %v1451 = vpack.c.bf16 %v1424, %v1424
      %v1452 = vpack.c.bf16 %v1428, %v1428
      %v1465 = vunpack.c.l.b16 %v1441
      %v1466 = vunpack.c.l.b16 %v1442
      %v1467 = vunpack.c.l.b16 %v1443
      %v1468 = vunpack.c.l.b16 %v1444
      %v1469 = vunpack.c.l.b16 %v1445
      %v1470 = vunpack.c.l.b16 %v1446
      %v1471 = vunpack.c.l.b16 %v1447
      %v1472 = vunpack.c.l.b16 %v1448
      %v1473 = vunpack.c.l.b16 %v1449
      %v1474 = vunpack.c.l.b16 %v1450
      %v1475 = vunpack.c.l.b16 %v1451
      %v1476 = vunpack.c.l.b16 %v1452
      %v1477 = vrot.slane %v1465, 4
      %v1478 = vrot.slane %v1468, 3
      %v1479 = vsel %vm907, %v1478, %v1477
      %v1480 = vrot.slane %v1471, 2
      %v1481 = vsel %vm910, %v1480, %v1479
      %v1482 = vrot.slane %v1474, 1
      %v1483 = vsel %vm913, %v1482, %v1481
      %v1484 = vrot.slane %v1466, 4
      %v1485 = vrot.slane %v1469, 3
      %v1486 = vsel %vm907, %v1485, %v1484
      %v1487 = vrot.slane %v1472, 2
      %v1488 = vsel %vm910, %v1487, %v1486
      %v1489 = vrot.slane %v1475, 1
      %v1490 = vsel %vm913, %v1489, %v1488
      %v1491 = vrot.slane %v1467, 4
      %v1492 = vrot.slane %v1470, 3
      %v1493 = vsel %vm907, %v1492, %v1491
      %v1494 = vrot.slane %v1473, 2
      %v1495 = vsel %vm910, %v1494, %v1493
      %v1496 = vrot.slane %v1476, 1
      %v1497 = vsel %vm913, %v1496, %v1495
      %v1498 = vpack.c.b16 %v1483, %v1483
      %v1499 = vpack.c.b16 %v1490, %v1490
      %v1500 = vpack.c.b16 %v1497, %v1497
      %1501 = vrot.lane.b32.xlu0 %v1498, 108
      %v1502 = vpop.permute.xlu0 %1501
      %1503 = vrot.lane.b32.xlu0 %v1499, 108
      %v1504 = vpop.permute.xlu0 %1503
      %1505 = vrot.lane.b32.xlu0 %v1500, 108
      %v1506 = vpop.permute.xlu0 %1505
      %vm1507 = vcmask 883712
      %v1508 = vsel %vm1507, %v1502, %v1504
      %v1509 = vsel %vm1507, %v1504, %v1506
      %1513 = vst [vmem:[#allocation3 + $0x28] sm:$0xc] %v1508
      %1514 = vst [vmem:[#allocation3 + $0x30] sm:$0xc] %v1509
      %1515 = vst.msk [vmem:[#allocation3 + $0x38] sm:$0xc] %vm946, %v1506
      %v1516 = vld [vmem:[#allocation2] ss:$4 sm:$0x7]
      %v1517 = vld [vmem:[%s448] ss:$4 sm:$0x7]
      %v1518 = vld [vmem:[%s450] ss:$4 sm:$0x7]
      %v1519 = vld [vmem:[%s452] ss:$4 sm:$0x7]
      %v1524 = vlaneseq
      %v1525 = vshrl.u32 %v1524, 7
      %v1526 = vsub.s32 0, %v1525
      %v1527 = vrot.slane %v1516, %v1526
      %v1528 = vlaneseq
      %v1529 = vshrl.u32 %v1528, 7
      %v1530 = vsub.s32 1, %v1529
      %v1531 = vrot.slane %v1516, %v1530
      %v1532 = vlaneseq
      %v1533 = vshrl.u32 %v1532, 7
      %v1534 = vsub.s32 2, %v1533
      %v1535 = vrot.slane %v1516, %v1534
      %v1536 = vlaneseq
      %v1537 = vshrl.u32 %v1536, 7
      %v1538 = vsub.s32 0, %v1537
      %v1539 = vrot.slane %v1517, %v1538
      %v1540 = vlaneseq
      %v1541 = vshrl.u32 %v1540, 7
      %v1542 = vsub.s32 1, %v1541
      %v1543 = vrot.slane %v1517, %v1542
      %v1544 = vlaneseq
      %v1545 = vshrl.u32 %v1544, 7
      %v1546 = vsub.s32 2, %v1545
      %v1547 = vrot.slane %v1517, %v1546
      %v1548 = vlaneseq
      %v1549 = vshrl.u32 %v1548, 7
      %v1550 = vsub.s32 0, %v1549
      %v1551 = vrot.slane %v1518, %v1550
      %v1552 = vlaneseq
      %v1553 = vshrl.u32 %v1552, 7
      %v1554 = vsub.s32 1, %v1553
      %v1555 = vrot.slane %v1518, %v1554
      %v1556 = vlaneseq
      %v1557 = vshrl.u32 %v1556, 7
      %v1558 = vsub.s32 2, %v1557
      %v1559 = vrot.slane %v1518, %v1558
      %v1560 = vlaneseq
      %v1561 = vshrl.u32 %v1560, 7
      %v1562 = vsub.s32 0, %v1561
      %v1563 = vrot.slane %v1519, %v1562
      %v1564 = vlaneseq
      %v1565 = vshrl.u32 %v1564, 7
      %v1566 = vsub.s32 1, %v1565
      %v1567 = vrot.slane %v1519, %v1566
      %v1568 = vlaneseq
      %v1569 = vshrl.u32 %v1568, 7
      %v1570 = vsub.s32 2, %v1569
      %v1571 = vrot.slane %v1519, %v1570
      %v1584 = vpack.c.bf16 %v1527, %v1527
      %v1585 = vpack.c.bf16 %v1531, %v1531
      %v1586 = vpack.c.bf16 %v1535, %v1535
      %v1587 = vpack.c.bf16 %v1539, %v1539
      %v1588 = vpack.c.bf16 %v1543, %v1543
      %v1589 = vpack.c.bf16 %v1547, %v1547
      %v1590 = vpack.c.bf16 %v1551, %v1551
      %v1591 = vpack.c.bf16 %v1555, %v1555
      %v1592 = vpack.c.bf16 %v1559, %v1559
      %v1593 = vpack.c.bf16 %v1563, %v1563
      %v1594 = vpack.c.bf16 %v1567, %v1567
      %v1595 = vpack.c.bf16 %v1571, %v1571
      %v1608 = vunpack.c.l.b16 %v1584
      %v1609 = vunpack.c.l.b16 %v1585
      %v1610 = vunpack.c.l.b16 %v1586
      %v1611 = vunpack.c.l.b16 %v1587
      %v1612 = vunpack.c.l.b16 %v1588
      %v1613 = vunpack.c.l.b16 %v1589
      %v1614 = vunpack.c.l.b16 %v1590
      %v1615 = vunpack.c.l.b16 %v1591
      %v1616 = vunpack.c.l.b16 %v1592
      %v1617 = vunpack.c.l.b16 %v1593
      %v1618 = vunpack.c.l.b16 %v1594
      %v1619 = vunpack.c.l.b16 %v1595
      %v1620 = vrot.slane %v1611, 7
      %v1621 = vsel %vm771, %v1620, %v1608
      %v1622 = vrot.slane %v1614, 6
      %v1623 = vsel %vm774, %v1622, %v1621
      %v1624 = vrot.slane %v1617, 5
      %v1625 = vsel %vm777, %v1624, %v1623
      %v1626 = vrot.slane %v1612, 7
      %v1627 = vsel %vm771, %v1626, %v1609
      %v1628 = vrot.slane %v1615, 6
      %v1629 = vsel %vm774, %v1628, %v1627
      %v1630 = vrot.slane %v1618, 5
      %v1631 = vsel %vm777, %v1630, %v1629
      %v1632 = vrot.slane %v1613, 7
      %v1633 = vsel %vm771, %v1632, %v1610
      %v1634 = vrot.slane %v1616, 6
      %v1635 = vsel %vm774, %v1634, %v1633
      %v1636 = vrot.slane %v1619, 5
      %v1637 = vsel %vm777, %v1636, %v1635
      %v1638 = vpack.c.b16 %v1625, %v1625
      %v1639 = vpack.c.b16 %v1631, %v1631
      %v1640 = vpack.c.b16 %v1637, %v1637
      %1641 = vrot.lane.b32.xlu0 %v1638, 92
      %v1642 = vpop.permute.xlu0 %1641
      %1643 = vrot.lane.b32.xlu0 %v1639, 92
      %v1644 = vpop.permute.xlu0 %1643
      %1645 = vrot.lane.b32.xlu0 %v1640, 92
      %v1646 = vpop.permute.xlu0 %1645
      %vm1647 = vcmask 752640
      %v1648 = vsel %vm1647, %v1642, %v1644
      %v1649 = vsel %vm1647, %v1644, %v1646
      %1653 = vst [vmem:[#allocation3 + $0x28] sm:$0x30] %v1648
      %1654 = vst [vmem:[#allocation3 + $0x30] sm:$0x30] %v1649
      %1655 = vst.msk [vmem:[#allocation3 + $0x38] sm:$0x30] %vm1087, %v1646
      %v1656 = vld [vmem:[#allocation2] ss:$4 sm:$0x7]
      %v1657 = vld [vmem:[%s448] ss:$4 sm:$0x7]
      %v1658 = vld [vmem:[%s450] ss:$4 sm:$0x7]
      %v1659 = vld [vmem:[%s452] ss:$4 sm:$0x7]
      %v1664 = vlaneseq
      %v1665 = vshrl.u32 %v1664, 7
      %v1666 = vsub.s32 0, %v1665
      %v1667 = vrot.slane %v1656, %v1666
      %v1668 = vlaneseq
      %v1669 = vshrl.u32 %v1668, 7
      %v1670 = vsub.s32 1, %v1669
      %v1671 = vrot.slane %v1656, %v1670
      %v1672 = vlaneseq
      %v1673 = vshrl.u32 %v1672, 7
      %v1674 = vsub.s32 2, %v1673
      %v1675 = vrot.slane %v1656, %v1674
      %v1676 = vlaneseq
      %v1677 = vshrl.u32 %v1676, 7
      %v1678 = vsub.s32 0, %v1677
      %v1679 = vrot.slane %v1657, %v1678
      %v1680 = vlaneseq
      %v1681 = vshrl.u32 %v1680, 7
      %v1682 = vsub.s32 1, %v1681
      %v1683 = vrot.slane %v1657, %v1682
      %v1684 = vlaneseq
      %v1685 = vshrl.u32 %v1684, 7
      %v1686 = vsub.s32 2, %v1685
      %v1687 = vrot.slane %v1657, %v1686
      %v1688 = vlaneseq
      %v1689 = vshrl.u32 %v1688, 7
      %v1690 = vsub.s32 0, %v1689
      %v1691 = vrot.slane %v1658, %v1690
      %v1692 = vlaneseq
      %v1693 = vshrl.u32 %v1692, 7
      %v1694 = vsub.s32 1, %v1693
      %v1695 = vrot.slane %v1658, %v1694
      %v1696 = vlaneseq
      %v1697 = vshrl.u32 %v1696, 7
      %v1698 = vsub.s32 2, %v1697
      %v1699 = vrot.slane %v1658, %v1698
      %v1700 = vlaneseq
      %v1701 = vshrl.u32 %v1700, 7
      %v1702 = vsub.s32 0, %v1701
      %v1703 = vrot.slane %v1659, %v1702
      %v1704 = vlaneseq
      %v1705 = vshrl.u32 %v1704, 7
      %v1706 = vsub.s32 1, %v1705
      %v1707 = vrot.slane %v1659, %v1706
      %v1708 = vlaneseq
      %v1709 = vshrl.u32 %v1708, 7
      %v1710 = vsub.s32 2, %v1709
      %v1711 = vrot.slane %v1659, %v1710
      %v1724 = vpack.c.bf16 %v1667, %v1667
      %v1725 = vpack.c.bf16 %v1671, %v1671
      %v1726 = vpack.c.bf16 %v1675, %v1675
      %v1727 = vpack.c.bf16 %v1679, %v1679
      %v1728 = vpack.c.bf16 %v1683, %v1683
      %v1729 = vpack.c.bf16 %v1687, %v1687
      %v1730 = vpack.c.bf16 %v1691, %v1691
      %v1731 = vpack.c.bf16 %v1695, %v1695
      %v1732 = vpack.c.bf16 %v1699, %v1699
      %v1733 = vpack.c.bf16 %v1703, %v1703
      %v1734 = vpack.c.bf16 %v1707, %v1707
      %v1735 = vpack.c.bf16 %v1711, %v1711
      %v1748 = vunpack.c.l.b16 %v1724
      %v1749 = vunpack.c.l.b16 %v1725
      %v1750 = vunpack.c.l.b16 %v1726
      %v1751 = vunpack.c.l.b16 %v1727
      %v1752 = vunpack.c.l.b16 %v1728
      %v1753 = vunpack.c.l.b16 %v1729
      %v1754 = vunpack.c.l.b16 %v1730
      %v1755 = vunpack.c.l.b16 %v1731
      %v1756 = vunpack.c.l.b16 %v1732
      %v1757 = vunpack.c.l.b16 %v1733
      %v1758 = vunpack.c.l.b16 %v1734
      %v1759 = vunpack.c.l.b16 %v1735
      %v1760 = vrot.slane %v1748, 4
      %v1761 = vrot.slane %v1751, 3
      %v1762 = vsel %vm907, %v1761, %v1760
      %v1763 = vrot.slane %v1754, 2
      %v1764 = vsel %vm910, %v1763, %v1762
      %v1765 = vrot.slane %v1757, 1
      %v1766 = vsel %vm913, %v1765, %v1764
      %v1767 = vrot.slane %v1749, 4
      %v1768 = vrot.slane %v1752, 3
      %v1769 = vsel %vm907, %v1768, %v1767
      %v1770 = vrot.slane %v1755, 2
      %v1771 = vsel %vm910, %v1770, %v1769
      %v1772 = vrot.slane %v1758, 1
      %v1773 = vsel %vm913, %v1772, %v1771
      %v1774 = vrot.slane %v1750, 4
      %v1775 = vrot.slane %v1753, 3
      %v1776 = vsel %vm907, %v1775, %v1774
      %v1777 = vrot.slane %v1756, 2
      %v1778 = vsel %vm910, %v1777, %v1776
      %v1779 = vrot.slane %v1759, 1
      %v1780 = vsel %vm913, %v1779, %v1778
      %v1781 = vpack.c.b16 %v1766, %v1766
      %v1782 = vpack.c.b16 %v1773, %v1773
      %v1783 = vpack.c.b16 %v1780, %v1780
      %1784 = vrot.lane.b32.xlu0 %v1781, 91
      %v1785 = vpop.permute.xlu0 %1784
      %1786 = vrot.lane.b32.xlu0 %v1782, 91
      %v1787 = vpop.permute.xlu0 %1786
      %1788 = vrot.lane.b32.xlu0 %v1783, 91
      %v1789 = vpop.permute.xlu0 %1788
      %vm1790 = vcmask 744448
      %v1791 = vsel %vm1790, %v1785, %v1787
      %v1792 = vsel %vm1790, %v1787, %v1789
      %1796 = vst [vmem:[#allocation3 + $0x28] sm:$0xc0] %v1791
      %1797 = vst [vmem:[#allocation3 + $0x30] sm:$0xc0] %v1792
      %1798 = vst.msk [vmem:[#allocation3 + $0x38] sm:$0xc0] %vm1231, %v1789
      %v1799 = vld [vmem:[#allocation2] ss:$4 sm:$0x7]
      %v1800 = vld [vmem:[%s448] ss:$4 sm:$0x7]
      %v1801 = vld [vmem:[%s450] ss:$4 sm:$0x7]
      %v1802 = vld [vmem:[%s452] ss:$4 sm:$0x7]
      %v1807 = vlaneseq
      %v1808 = vshrl.u32 %v1807, 7
      %v1809 = vsub.s32 0, %v1808
      %v1810 = vrot.slane %v1799, %v1809
      %v1811 = vlaneseq
      %v1812 = vshrl.u32 %v1811, 7
      %v1813 = vsub.s32 1, %v1812
      %v1814 = vrot.slane %v1799, %v1813
      %v1815 = vlaneseq
      %v1816 = vshrl.u32 %v1815, 7
      %v1817 = vsub.s32 2, %v1816
      %v1818 = vrot.slane %v1799, %v1817
      %v1819 = vlaneseq
      %v1820 = vshrl.u32 %v1819, 7
      %v1821 = vsub.s32 0, %v1820
      %v1822 = vrot.slane %v1800, %v1821
      %v1823 = vlaneseq
      %v1824 = vshrl.u32 %v1823, 7
      %v1825 = vsub.s32 1, %v1824
      %v1826 = vrot.slane %v1800, %v1825
      %v1827 = vlaneseq
      %v1828 = vshrl.u32 %v1827, 7
      %v1829 = vsub.s32 2, %v1828
      %v1830 = vrot.slane %v1800, %v1829
      %v1831 = vlaneseq
      %v1832 = vshrl.u32 %v1831, 7
      %v1833 = vsub.s32 0, %v1832
      %v1834 = vrot.slane %v1801, %v1833
      %v1835 = vlaneseq
      %v1836 = vshrl.u32 %v1835, 7
      %v1837 = vsub.s32 1, %v1836
      %v1838 = vrot.slane %v1801, %v1837
      %v1839 = vlaneseq
      %v1840 = vshrl.u32 %v1839, 7
      %v1841 = vsub.s32 2, %v1840
      %v1842 = vrot.slane %v1801, %v1841
      %v1843 = vlaneseq
      %v1844 = vshrl.u32 %v1843, 7
      %v1845 = vsub.s32 0, %v1844
      %v1846 = vrot.slane %v1802, %v1845
      %v1847 = vlaneseq
      %v1848 = vshrl.u32 %v1847, 7
      %v1849 = vsub.s32 1, %v1848
      %v1850 = vrot.slane %v1802, %v1849
      %v1851 = vlaneseq
      %v1852 = vshrl.u32 %v1851, 7
      %v1853 = vsub.s32 2, %v1852
      %v1854 = vrot.slane %v1802, %v1853
      %v1867 = vpack.c.bf16 %v1810, %v1810
      %v1868 = vpack.c.bf16 %v1814, %v1814
      %v1869 = vpack.c.bf16 %v1818, %v1818
      %v1870 = vpack.c.bf16 %v1822, %v1822
      %v1871 = vpack.c.bf16 %v1826, %v1826
      %v1872 = vpack.c.bf16 %v1830, %v1830
      %v1873 = vpack.c.bf16 %v1834, %v1834
      %v1874 = vpack.c.bf16 %v1838, %v1838
      %v1875 = vpack.c.bf16 %v1842, %v1842
      %v1876 = vpack.c.bf16 %v1846, %v1846
      %v1877 = vpack.c.bf16 %v1850, %v1850
      %v1878 = vpack.c.bf16 %v1854, %v1854
      %v1891 = vunpack.c.l.b16 %v1867
      %v1892 = vunpack.c.l.b16 %v1868
      %v1893 = vunpack.c.l.b16 %v1869
      %v1894 = vunpack.c.l.b16 %v1870
      %v1895 = vunpack.c.l.b16 %v1871
      %v1896 = vunpack.c.l.b16 %v1872
      %v1897 = vunpack.c.l.b16 %v1873
      %v1898 = vunpack.c.l.b16 %v1874
      %v1899 = vunpack.c.l.b16 %v1875
      %v1900 = vunpack.c.l.b16 %v1876
      %v1901 = vunpack.c.l.b16 %v1877
      %v1902 = vunpack.c.l.b16 %v1878
      %v1903 = vrot.slane %v1894, 7
      %v1904 = vsel %vm771, %v1903, %v1891
      %v1905 = vrot.slane %v1897, 6
      %v1906 = vsel %vm774, %v1905, %v1904
      %v1907 = vrot.slane %v1900, 5
      %v1908 = vsel %vm777, %v1907, %v1906
      %v1909 = vrot.slane %v1895, 7
      %v1910 = vsel %vm771, %v1909, %v1892
      %v1911 = vrot.slane %v1898, 6
      %v1912 = vsel %vm774, %v1911, %v1910
      %v1913 = vrot.slane %v1901, 5
      %v1914 = vsel %vm777, %v1913, %v1912
      %v1915 = vrot.slane %v1896, 7
      %v1916 = vsel %vm771, %v1915, %v1893
      %v1917 = vrot.slane %v1899, 6
      %v1918 = vsel %vm774, %v1917, %v1916
      %v1919 = vrot.slane %v1902, 5
      %v1920 = vsel %vm777, %v1919, %v1918
      %v1921 = vpack.c.b16 %v1908, %v1908
      %v1922 = vpack.c.b16 %v1914, %v1914
      %v1923 = vpack.c.b16 %v1920, %v1920
      %1924 = vrot.lane.b32.xlu0 %v1921, 90
      %v1925 = vpop.permute.xlu0 %1924
      %1926 = vrot.lane.b32.xlu0 %v1922, 90
      %v1927 = vpop.permute.xlu0 %1926
      %1928 = vrot.lane.b32.xlu0 %v1923, 90
      %v1929 = vpop.permute.xlu0 %1928
      %vm1930 = vcmask 736256
      %v1931 = vsel %vm1930, %v1925, %v1927
      %v1932 = vsel %vm1930, %v1927, %v1929
      %1936 = vst [vmem:[#allocation3 + $0x50] sm:$0x3] %v1931
      %1937 = vst [vmem:[#allocation3 + $0x58] sm:$0x3] %v1932
      %1938 = vst.msk [vmem:[#allocation3 + $0x60] sm:$0x3] %vm799, %v1929
      %v1939 = vld [vmem:[%s558] ss:$4 sm:$0x7]
      %v1940 = vld [vmem:[%s560] ss:$4 sm:$0x7]
      %v1941 = vld [vmem:[%s562] ss:$4 sm:$0x7]
      %v1942 = vld [vmem:[%s564] ss:$4 sm:$0x7]
      %v1947 = vlaneseq
      %v1948 = vshrl.u32 %v1947, 7
      %v1949 = vsub.s32 0, %v1948
      %v1950 = vrot.slane %v1939, %v1949
      %v1951 = vlaneseq
      %v1952 = vshrl.u32 %v1951, 7
      %v1953 = vsub.s32 1, %v1952
      %v1954 = vrot.slane %v1939, %v1953
      %v1955 = vlaneseq
      %v1956 = vshrl.u32 %v1955, 7
      %v1957 = vsub.s32 2, %v1956
      %v1958 = vrot.slane %v1939, %v1957
      %v1959 = vlaneseq
      %v1960 = vshrl.u32 %v1959, 7
      %v1961 = vsub.s32 0, %v1960
      %v1962 = vrot.slane %v1940, %v1961
      %v1963 = vlaneseq
      %v1964 = vshrl.u32 %v1963, 7
      %v1965 = vsub.s32 1, %v1964
      %v1966 = vrot.slane %v1940, %v1965
      %v1967 = vlaneseq
      %v1968 = vshrl.u32 %v1967, 7
      %v1969 = vsub.s32 2, %v1968
      %v1970 = vrot.slane %v1940, %v1969
      %v1971 = vlaneseq
      %v1972 = vshrl.u32 %v1971, 7
      %v1973 = vsub.s32 0, %v1972
      %v1974 = vrot.slane %v1941, %v1973
      %v1975 = vlaneseq
      %v1976 = vshrl.u32 %v1975, 7
      %v1977 = vsub.s32 1, %v1976
      %v1978 = vrot.slane %v1941, %v1977
      %v1979 = vlaneseq
      %v1980 = vshrl.u32 %v1979, 7
      %v1981 = vsub.s32 2, %v1980
      %v1982 = vrot.slane %v1941, %v1981
      %v1983 = vlaneseq
      %v1984 = vshrl.u32 %v1983, 7
      %v1985 = vsub.s32 0, %v1984
      %v1986 = vrot.slane %v1942, %v1985
      %v1987 = vlaneseq
      %v1988 = vshrl.u32 %v1987, 7
      %v1989 = vsub.s32 1, %v1988
      %v1990 = vrot.slane %v1942, %v1989
      %v1991 = vlaneseq
      %v1992 = vshrl.u32 %v1991, 7
      %v1993 = vsub.s32 2, %v1992
      %v1994 = vrot.slane %v1942, %v1993
      %v2007 = vpack.c.bf16 %v1950, %v1950
      %v2008 = vpack.c.bf16 %v1954, %v1954
      %v2009 = vpack.c.bf16 %v1958, %v1958
      %v2010 = vpack.c.bf16 %v1962, %v1962
      %v2011 = vpack.c.bf16 %v1966, %v1966
      %v2012 = vpack.c.bf16 %v1970, %v1970
      %v2013 = vpack.c.bf16 %v1974, %v1974
      %v2014 = vpack.c.bf16 %v1978, %v1978
      %v2015 = vpack.c.bf16 %v1982, %v1982
      %v2016 = vpack.c.bf16 %v1986, %v1986
      %v2017 = vpack.c.bf16 %v1990, %v1990
      %v2018 = vpack.c.bf16 %v1994, %v1994
      %v2031 = vunpack.c.l.b16 %v2007
      %v2032 = vunpack.c.l.b16 %v2008
      %v2033 = vunpack.c.l.b16 %v2009
      %v2034 = vunpack.c.l.b16 %v2010
      %v2035 = vunpack.c.l.b16 %v2011
      %v2036 = vunpack.c.l.b16 %v2012
      %v2037 = vunpack.c.l.b16 %v2013
      %v2038 = vunpack.c.l.b16 %v2014
      %v2039 = vunpack.c.l.b16 %v2015
      %v2040 = vunpack.c.l.b16 %v2016
      %v2041 = vunpack.c.l.b16 %v2017
      %v2042 = vunpack.c.l.b16 %v2018
      %v2043 = vrot.slane %v2031, 4
      %v2044 = vrot.slane %v2034, 3
      %v2045 = vsel %vm907, %v2044, %v2043
      %v2046 = vrot.slane %v2037, 2
      %v2047 = vsel %vm910, %v2046, %v2045
      %v2048 = vrot.slane %v2040, 1
      %v2049 = vsel %vm913, %v2048, %v2047
      %v2050 = vrot.slane %v2032, 4
      %v2051 = vrot.slane %v2035, 3
      %v2052 = vsel %vm907, %v2051, %v2050
      %v2053 = vrot.slane %v2038, 2
      %v2054 = vsel %vm910, %v2053, %v2052
      %v2055 = vrot.slane %v2041, 1
      %v2056 = vsel %vm913, %v2055, %v2054
      %v2057 = vrot.slane %v2033, 4
      %v2058 = vrot.slane %v2036, 3
      %v2059 = vsel %vm907, %v2058, %v2057
      %v2060 = vrot.slane %v2039, 2
      %v2061 = vsel %vm910, %v2060, %v2059
      %v2062 = vrot.slane %v2042, 1
      %v2063 = vsel %vm913, %v2062, %v2061
      %v2064 = vpack.c.b16 %v2049, %v2049
      %v2065 = vpack.c.b16 %v2056, %v2056
      %v2066 = vpack.c.b16 %v2063, %v2063
      %2070 = vst [vmem:[#allocation3 + $0x50] sm:$0xc] %v2064
      %2071 = vst [vmem:[#allocation3 + $0x58] sm:$0xc] %v2065
      %2072 = vst.msk [vmem:[#allocation3 + $0x60] sm:$0xc] %vm946, %v2066
      %v2073 = vld [vmem:[%s558] ss:$4 sm:$0x7]
      %v2074 = vld [vmem:[%s560] ss:$4 sm:$0x7]
      %v2075 = vld [vmem:[%s562] ss:$4 sm:$0x7]
      %v2076 = vld [vmem:[%s564] ss:$4 sm:$0x7]
      %v2081 = vlaneseq
      %v2082 = vshrl.u32 %v2081, 7
      %v2083 = vsub.s32 0, %v2082
      %v2084 = vrot.slane %v2073, %v2083
      %v2085 = vlaneseq
      %v2086 = vshrl.u32 %v2085, 7
      %v2087 = vsub.s32 1, %v2086
      %v2088 = vrot.slane %v2073, %v2087
      %v2089 = vlaneseq
      %v2090 = vshrl.u32 %v2089, 7
      %v2091 = vsub.s32 2, %v2090
      %v2092 = vrot.slane %v2073, %v2091
      %v2093 = vlaneseq
      %v2094 = vshrl.u32 %v2093, 7
      %v2095 = vsub.s32 0, %v2094
      %v2096 = vrot.slane %v2074, %v2095
      %v2097 = vlaneseq
      %v2098 = vshrl.u32 %v2097, 7
      %v2099 = vsub.s32 1, %v2098
      %v2100 = vrot.slane %v2074, %v2099
      %v2101 = vlaneseq
      %v2102 = vshrl.u32 %v2101, 7
      %v2103 = vsub.s32 2, %v2102
      %v2104 = vrot.slane %v2074, %v2103
      %v2105 = vlaneseq
      %v2106 = vshrl.u32 %v2105, 7
      %v2107 = vsub.s32 0, %v2106
      %v2108 = vrot.slane %v2075, %v2107
      %v2109 = vlaneseq
      %v2110 = vshrl.u32 %v2109, 7
      %v2111 = vsub.s32 1, %v2110
      %v2112 = vrot.slane %v2075, %v2111
      %v2113 = vlaneseq
      %v2114 = vshrl.u32 %v2113, 7
      %v2115 = vsub.s32 2, %v2114
      %v2116 = vrot.slane %v2075, %v2115
      %v2117 = vlaneseq
      %v2118 = vshrl.u32 %v2117, 7
      %v2119 = vsub.s32 0, %v2118
      %v2120 = vrot.slane %v2076, %v2119
      %v2121 = vlaneseq
      %v2122 = vshrl.u32 %v2121, 7
      %v2123 = vsub.s32 1, %v2122
      %v2124 = vrot.slane %v2076, %v2123
      %v2125 = vlaneseq
      %v2126 = vshrl.u32 %v2125, 7
      %v2127 = vsub.s32 2, %v2126
      %v2128 = vrot.slane %v2076, %v2127
      %v2141 = vpack.c.bf16 %v2084, %v2084
      %v2142 = vpack.c.bf16 %v2088, %v2088
      %v2143 = vpack.c.bf16 %v2092, %v2092
      %v2144 = vpack.c.bf16 %v2096, %v2096
      %v2145 = vpack.c.bf16 %v2100, %v2100
      %v2146 = vpack.c.bf16 %v2104, %v2104
      %v2147 = vpack.c.bf16 %v2108, %v2108
      %v2148 = vpack.c.bf16 %v2112, %v2112
      %v2149 = vpack.c.bf16 %v2116, %v2116
      %v2150 = vpack.c.bf16 %v2120, %v2120
      %v2151 = vpack.c.bf16 %v2124, %v2124
      %v2152 = vpack.c.bf16 %v2128, %v2128
      %v2165 = vunpack.c.l.b16 %v2141
      %v2166 = vunpack.c.l.b16 %v2142
      %v2167 = vunpack.c.l.b16 %v2143
      %v2168 = vunpack.c.l.b16 %v2144
      %v2169 = vunpack.c.l.b16 %v2145
      %v2170 = vunpack.c.l.b16 %v2146
      %v2171 = vunpack.c.l.b16 %v2147
      %v2172 = vunpack.c.l.b16 %v2148
      %v2173 = vunpack.c.l.b16 %v2149
      %v2174 = vunpack.c.l.b16 %v2150
      %v2175 = vunpack.c.l.b16 %v2151
      %v2176 = vunpack.c.l.b16 %v2152
      %v2177 = vrot.slane %v2168, 7
      %v2178 = vsel %vm771, %v2177, %v2165
      %v2179 = vrot.slane %v2171, 6
      %v2180 = vsel %vm774, %v2179, %v2178
      %v2181 = vrot.slane %v2174, 5
      %v2182 = vsel %vm777, %v2181, %v2180
      %v2183 = vrot.slane %v2169, 7
      %v2184 = vsel %vm771, %v2183, %v2166
      %v2185 = vrot.slane %v2172, 6
      %v2186 = vsel %vm774, %v2185, %v2184
      %v2187 = vrot.slane %v2175, 5
      %v2188 = vsel %vm777, %v2187, %v2186
      %v2189 = vrot.slane %v2170, 7
      %v2190 = vsel %vm771, %v2189, %v2167
      %v2191 = vrot.slane %v2173, 6
      %v2192 = vsel %vm774, %v2191, %v2190
      %v2193 = vrot.slane %v2176, 5
      %v2194 = vsel %vm777, %v2193, %v2192
      %v2195 = vpack.c.b16 %v2182, %v2182
      %v2196 = vpack.c.b16 %v2188, %v2188
      %v2197 = vpack.c.b16 %v2194, %v2194
      %2198 = vrot.lane.b32.xlu0 %v2195, 127
      %v2199 = vpop.permute.xlu0 %2198
      %2200 = vrot.lane.b32.xlu0 %v2196, 127
      %v2201 = vpop.permute.xlu0 %2200
      %2202 = vrot.lane.b32.xlu0 %v2197, 127
      %v2203 = vpop.permute.xlu0 %2202
      %v2204 = vsel %vm938, %v2199, %v2201
      %v2205 = vsel %vm938, %v2201, %v2203
      %2209 = vst [vmem:[#allocation3 + $0x50] sm:$0x30] %v2204
      %2210 = vst [vmem:[#allocation3 + $0x58] sm:$0x30] %v2205
      %2211 = vst.msk [vmem:[#allocation3 + $0x60] sm:$0x30] %vm1087, %v2203
      %v2212 = vld [vmem:[%s558] ss:$4 sm:$0x7]
      %v2213 = vld [vmem:[%s560] ss:$4 sm:$0x7]
      %v2214 = vld [vmem:[%s562] ss:$4 sm:$0x7]
      %v2215 = vld [vmem:[%s564] ss:$4 sm:$0x7]
      %v2220 = vlaneseq
      %v2221 = vshrl.u32 %v2220, 7
      %v2222 = vsub.s32 0, %v2221
      %v2223 = vrot.slane %v2212, %v2222
      %v2224 = vlaneseq
      %v2225 = vshrl.u32 %v2224, 7
      %v2226 = vsub.s32 1, %v2225
      %v2227 = vrot.slane %v2212, %v2226
      %v2228 = vlaneseq
      %v2229 = vshrl.u32 %v2228, 7
      %v2230 = vsub.s32 2, %v2229
      %v2231 = vrot.slane %v2212, %v2230
      %v2232 = vlaneseq
      %v2233 = vshrl.u32 %v2232, 7
      %v2234 = vsub.s32 0, %v2233
      %v2235 = vrot.slane %v2213, %v2234
      %v2236 = vlaneseq
      %v2237 = vshrl.u32 %v2236, 7
      %v2238 = vsub.s32 1, %v2237
      %v2239 = vrot.slane %v2213, %v2238
      %v2240 = vlaneseq
      %v2241 = vshrl.u32 %v2240, 7
      %v2242 = vsub.s32 2, %v2241
      %v2243 = vrot.slane %v2213, %v2242
      %v2244 = vlaneseq
      %v2245 = vshrl.u32 %v2244, 7
      %v2246 = vsub.s32 0, %v2245
      %v2247 = vrot.slane %v2214, %v2246
      %v2248 = vlaneseq
      %v2249 = vshrl.u32 %v2248, 7
      %v2250 = vsub.s32 1, %v2249
      %v2251 = vrot.slane %v2214, %v2250
      %v2252 = vlaneseq
      %v2253 = vshrl.u32 %v2252, 7
      %v2254 = vsub.s32 2, %v2253
      %v2255 = vrot.slane %v2214, %v2254
      %v2256 = vlaneseq
      %v2257 = vshrl.u32 %v2256, 7
      %v2258 = vsub.s32 0, %v2257
      %v2259 = vrot.slane %v2215, %v2258
      %v2260 = vlaneseq
      %v2261 = vshrl.u32 %v2260, 7
      %v2262 = vsub.s32 1, %v2261
      %v2263 = vrot.slane %v2215, %v2262
      %v2264 = vlaneseq
      %v2265 = vshrl.u32 %v2264, 7
      %v2266 = vsub.s32 2, %v2265
      %v2267 = vrot.slane %v2215, %v2266
      %v2280 = vpack.c.bf16 %v2223, %v2223
      %v2281 = vpack.c.bf16 %v2227, %v2227
      %v2282 = vpack.c.bf16 %v2231, %v2231
      %v2283 = vpack.c.bf16 %v2235, %v2235
      %v2284 = vpack.c.bf16 %v2239, %v2239
      %v2285 = vpack.c.bf16 %v2243, %v2243
      %v2286 = vpack.c.bf16 %v2247, %v2247
      %v2287 = vpack.c.bf16 %v2251, %v2251
      %v2288 = vpack.c.bf16 %v2255, %v2255
      %v2289 = vpack.c.bf16 %v2259, %v2259
      %v2290 = vpack.c.bf16 %v2263, %v2263
      %v2291 = vpack.c.bf16 %v2267, %v2267
      %v2304 = vunpack.c.l.b16 %v2280
      %v2305 = vunpack.c.l.b16 %v2281
      %v2306 = vunpack.c.l.b16 %v2282
      %v2307 = vunpack.c.l.b16 %v2283
      %v2308 = vunpack.c.l.b16 %v2284
      %v2309 = vunpack.c.l.b16 %v2285
      %v2310 = vunpack.c.l.b16 %v2286
      %v2311 = vunpack.c.l.b16 %v2287
      %v2312 = vunpack.c.l.b16 %v2288
      %v2313 = vunpack.c.l.b16 %v2289
      %v2314 = vunpack.c.l.b16 %v2290
      %v2315 = vunpack.c.l.b16 %v2291
      %v2316 = vrot.slane %v2304, 4
      %v2317 = vrot.slane %v2307, 3
      %v2318 = vsel %vm907, %v2317, %v2316
      %v2319 = vrot.slane %v2310, 2
      %v2320 = vsel %vm910, %v2319, %v2318
      %v2321 = vrot.slane %v2313, 1
      %v2322 = vsel %vm913, %v2321, %v2320
      %v2323 = vrot.slane %v2305, 4
      %v2324 = vrot.slane %v2308, 3
      %v2325 = vsel %vm907, %v2324, %v2323
      %v2326 = vrot.slane %v2311, 2
      %v2327 = vsel %vm910, %v2326, %v2325
      %v2328 = vrot.slane %v2314, 1
      %v2329 = vsel %vm913, %v2328, %v2327
      %v2330 = vrot.slane %v2306, 4
      %v2331 = vrot.slane %v2309, 3
      %v2332 = vsel %vm907, %v2331, %v2330
      %v2333 = vrot.slane %v2312, 2
      %v2334 = vsel %vm910, %v2333, %v2332
      %v2335 = vrot.slane %v2315, 1
      %v2336 = vsel %vm913, %v2335, %v2334
      %v2337 = vpack.c.b16 %v2322, %v2322
      %v2338 = vpack.c.b16 %v2329, %v2329
      %v2339 = vpack.c.b16 %v2336, %v2336
      %2340 = vrot.lane.b32.xlu0 %v2337, 126
      %v2341 = vpop.permute.xlu0 %2340
      %2342 = vrot.lane.b32.xlu0 %v2338, 126
      %v2343 = vpop.permute.xlu0 %2342
      %2344 = vrot.lane.b32.xlu0 %v2339, 126
      %v2345 = vpop.permute.xlu0 %2344
      %v2346 = vsel %vm1079, %v2341, %v2343
      %v2347 = vsel %vm1079, %v2343, %v2345
      %2351 = vst [vmem:[#allocation3 + $0x50] sm:$0xc0] %v2346
      %2352 = vst [vmem:[#allocation3 + $0x58] sm:$0xc0] %v2347
      %2353 = vst.msk [vmem:[#allocation3 + $0x60] sm:$0xc0] %vm1231, %v2345
      %v2354 = vld [vmem:[%s558] ss:$4 sm:$0x7]
      %v2355 = vld [vmem:[%s560] ss:$4 sm:$0x7]
      %v2356 = vld [vmem:[%s562] ss:$4 sm:$0x7]
      %v2357 = vld [vmem:[%s564] ss:$4 sm:$0x7]
      %v2362 = vlaneseq
      %v2363 = vshrl.u32 %v2362, 7
      %v2364 = vsub.s32 0, %v2363
      %v2365 = vrot.slane %v2354, %v2364
      %v2366 = vlaneseq
      %v2367 = vshrl.u32 %v2366, 7
      %v2368 = vsub.s32 1, %v2367
      %v2369 = vrot.slane %v2354, %v2368
      %v2370 = vlaneseq
      %v2371 = vshrl.u32 %v2370, 7
      %v2372 = vsub.s32 2, %v2371
      %v2373 = vrot.slane %v2354, %v2372
      %v2374 = vlaneseq
      %v2375 = vshrl.u32 %v2374, 7
      %v2376 = vsub.s32 0, %v2375
      %v2377 = vrot.slane %v2355, %v2376
      %v2378 = vlaneseq
      %v2379 = vshrl.u32 %v2378, 7
      %v2380 = vsub.s32 1, %v2379
      %v2381 = vrot.slane %v2355, %v2380
      %v2382 = vlaneseq
      %v2383 = vshrl.u32 %v2382, 7
      %v2384 = vsub.s32 2, %v2383
      %v2385 = vrot.slane %v2355, %v2384
      %v2386 = vlaneseq
      %v2387 = vshrl.u32 %v2386, 7
      %v2388 = vsub.s32 0, %v2387
      %v2389 = vrot.slane %v2356, %v2388
      %v2390 = vlaneseq
      %v2391 = vshrl.u32 %v2390, 7
      %v2392 = vsub.s32 1, %v2391
      %v2393 = vrot.slane %v2356, %v2392
      %v2394 = vlaneseq
      %v2395 = vshrl.u32 %v2394, 7
      %v2396 = vsub.s32 2, %v2395
      %v2397 = vrot.slane %v2356, %v2396
      %v2398 = vlaneseq
      %v2399 = vshrl.u32 %v2398, 7
      %v2400 = vsub.s32 0, %v2399
      %v2401 = vrot.slane %v2357, %v2400
      %v2402 = vlaneseq
      %v2403 = vshrl.u32 %v2402, 7
      %v2404 = vsub.s32 1, %v2403
      %v2405 = vrot.slane %v2357, %v2404
      %v2406 = vlaneseq
      %v2407 = vshrl.u32 %v2406, 7
      %v2408 = vsub.s32 2, %v2407
      %v2409 = vrot.slane %v2357, %v2408
      %v2422 = vpack.c.bf16 %v2365, %v2365
      %v2423 = vpack.c.bf16 %v2369, %v2369
      %v2424 = vpack.c.bf16 %v2373, %v2373
      %v2425 = vpack.c.bf16 %v2377, %v2377
      %v2426 = vpack.c.bf16 %v2381, %v2381
      %v2427 = vpack.c.bf16 %v2385, %v2385
      %v2428 = vpack.c.bf16 %v2389, %v2389
      %v2429 = vpack.c.bf16 %v2393, %v2393
      %v2430 = vpack.c.bf16 %v2397, %v2397
      %v2431 = vpack.c.bf16 %v2401, %v2401
      %v2432 = vpack.c.bf16 %v2405, %v2405
      %v2433 = vpack.c.bf16 %v2409, %v2409
      %v2446 = vunpack.c.l.b16 %v2422
      %v2447 = vunpack.c.l.b16 %v2423
      %v2448 = vunpack.c.l.b16 %v2424
      %v2449 = vunpack.c.l.b16 %v2425
      %v2450 = vunpack.c.l.b16 %v2426
      %v2451 = vunpack.c.l.b16 %v2427
      %v2452 = vunpack.c.l.b16 %v2428
      %v2453 = vunpack.c.l.b16 %v2429
      %v2454 = vunpack.c.l.b16 %v2430
      %v2455 = vunpack.c.l.b16 %v2431
      %v2456 = vunpack.c.l.b16 %v2432
      %v2457 = vunpack.c.l.b16 %v2433
      %v2458 = vrot.slane %v2449, 7
      %v2459 = vsel %vm771, %v2458, %v2446
      %v2460 = vrot.slane %v2452, 6
      %v2461 = vsel %vm774, %v2460, %v2459
      %v2462 = vrot.slane %v2455, 5
      %v2463 = vsel %vm777, %v2462, %v2461
      %v2464 = vrot.slane %v2450, 7
      %v2465 = vsel %vm771, %v2464, %v2447
      %v2466 = vrot.slane %v2453, 6
      %v2467 = vsel %vm774, %v2466, %v2465
      %v2468 = vrot.slane %v2456, 5
      %v2469 = vsel %vm777, %v2468, %v2467
      %v2470 = vrot.slane %v2451, 7
      %v2471 = vsel %vm771, %v2470, %v2448
      %v2472 = vrot.slane %v2454, 6
      %v2473 = vsel %vm774, %v2472, %v2471
      %v2474 = vrot.slane %v2457, 5
      %v2475 = vsel %vm777, %v2474, %v2473
      %v2476 = vpack.c.b16 %v2463, %v2463
      %v2477 = vpack.c.b16 %v2469, %v2469
      %v2478 = vpack.c.b16 %v2475, %v2475
      %2479 = vrot.lane.b32.xlu0 %v2476, 110
      %v2480 = vpop.permute.xlu0 %2479
      %2481 = vrot.lane.b32.xlu0 %v2477, 110
      %v2482 = vpop.permute.xlu0 %2481
      %2483 = vrot.lane.b32.xlu0 %v2478, 110
      %v2484 = vpop.permute.xlu0 %2483
      %v2485 = vsel %vm1223, %v2480, %v2482
      %v2486 = vsel %vm1223, %v2482, %v2484
      %2490 = vst [vmem:[#allocation3 + $0x78] sm:$0x3] %v2485
      %2491 = vst [vmem:[#allocation3 + $0x80] sm:$0x3] %v2486
      %2492 = vst.msk [vmem:[#allocation3 + $0x88] sm:$0x3] %vm799, %v2484
      %v2493 = vld [vmem:[%s558] ss:$4 sm:$0x7]
      %v2494 = vld [vmem:[%s560] ss:$4 sm:$0x7]
      %v2495 = vld [vmem:[%s562] ss:$4 sm:$0x7]
      %v2496 = vld [vmem:[%s564] ss:$4 sm:$0x7]
      %v2501 = vlaneseq
      %v2502 = vshrl.u32 %v2501, 7
      %v2503 = vsub.s32 0, %v2502
      %v2504 = vrot.slane %v2493, %v2503
      %v2505 = vlaneseq
      %v2506 = vshrl.u32 %v2505, 7
      %v2507 = vsub.s32 1, %v2506
      %v2508 = vrot.slane %v2493, %v2507
      %v2509 = vlaneseq
      %v2510 = vshrl.u32 %v2509, 7
      %v2511 = vsub.s32 2, %v2510
      %v2512 = vrot.slane %v2493, %v2511
      %v2513 = vlaneseq
      %v2514 = vshrl.u32 %v2513, 7
      %v2515 = vsub.s32 0, %v2514
      %v2516 = vrot.slane %v2494, %v2515
      %v2517 = vlaneseq
      %v2518 = vshrl.u32 %v2517, 7
      %v2519 = vsub.s32 1, %v2518
      %v2520 = vrot.slane %v2494, %v2519
      %v2521 = vlaneseq
      %v2522 = vshrl.u32 %v2521, 7
      %v2523 = vsub.s32 2, %v2522
      %v2524 = vrot.slane %v2494, %v2523
      %v2525 = vlaneseq
      %v2526 = vshrl.u32 %v2525, 7
      %v2527 = vsub.s32 0, %v2526
      %v2528 = vrot.slane %v2495, %v2527
      %v2529 = vlaneseq
      %v2530 = vshrl.u32 %v2529, 7
      %v2531 = vsub.s32 1, %v2530
      %v2532 = vrot.slane %v2495, %v2531
      %v2533 = vlaneseq
      %v2534 = vshrl.u32 %v2533, 7
      %v2535 = vsub.s32 2, %v2534
      %v2536 = vrot.slane %v2495, %v2535
      %v2537 = vlaneseq
      %v2538 = vshrl.u32 %v2537, 7
      %v2539 = vsub.s32 0, %v2538
      %v2540 = vrot.slane %v2496, %v2539
      %v2541 = vlaneseq
      %v2542 = vshrl.u32 %v2541, 7
      %v2543 = vsub.s32 1, %v2542
      %v2544 = vrot.slane %v2496, %v2543
      %v2545 = vlaneseq
      %v2546 = vshrl.u32 %v2545, 7
      %v2547 = vsub.s32 2, %v2546
      %v2548 = vrot.slane %v2496, %v2547
      %v2561 = vpack.c.bf16 %v2504, %v2504
      %v2562 = vpack.c.bf16 %v2508, %v2508
      %v2563 = vpack.c.bf16 %v2512, %v2512
      %v2564 = vpack.c.bf16 %v2516, %v2516
      %v2565 = vpack.c.bf16 %v2520, %v2520
      %v2566 = vpack.c.bf16 %v2524, %v2524
      %v2567 = vpack.c.bf16 %v2528, %v2528
      %v2568 = vpack.c.bf16 %v2532, %v2532
      %v2569 = vpack.c.bf16 %v2536, %v2536
      %v2570 = vpack.c.bf16 %v2540, %v2540
      %v2571 = vpack.c.bf16 %v2544, %v2544
      %v2572 = vpack.c.bf16 %v2548, %v2548
      %v2585 = vunpack.c.l.b16 %v2561
      %v2586 = vunpack.c.l.b16 %v2562
      %v2587 = vunpack.c.l.b16 %v2563
      %v2588 = vunpack.c.l.b16 %v2564
      %v2589 = vunpack.c.l.b16 %v2565
      %v2590 = vunpack.c.l.b16 %v2566
      %v2591 = vunpack.c.l.b16 %v2567
      %v2592 = vunpack.c.l.b16 %v2568
      %v2593 = vunpack.c.l.b16 %v2569
      %v2594 = vunpack.c.l.b16 %v2570
      %v2595 = vunpack.c.l.b16 %v2571
      %v2596 = vunpack.c.l.b16 %v2572
      %v2597 = vrot.slane %v2585, 4
      %v2598 = vrot.slane %v2588, 3
      %v2599 = vsel %vm907, %v2598, %v2597
      %v2600 = vrot.slane %v2591, 2
      %v2601 = vsel %vm910, %v2600, %v2599
      %v2602 = vrot.slane %v2594, 1
      %v2603 = vsel %vm913, %v2602, %v2601
      %v2604 = vrot.slane %v2586, 4
      %v2605 = vrot.slane %v2589, 3
      %v2606 = vsel %vm907, %v2605, %v2604
      %v2607 = vrot.slane %v2592, 2
      %v2608 = vsel %vm910, %v2607, %v2606
      %v2609 = vrot.slane %v2595, 1
      %v2610 = vsel %vm913, %v2609, %v2608
      %v2611 = vrot.slane %v2587, 4
      %v2612 = vrot.slane %v2590, 3
      %v2613 = vsel %vm907, %v2612, %v2611
      %v2614 = vrot.slane %v2593, 2
      %v2615 = vsel %vm910, %v2614, %v2613
      %v2616 = vrot.slane %v2596, 1
      %v2617 = vsel %vm913, %v2616, %v2615
      %v2618 = vpack.c.b16 %v2603, %v2603
      %v2619 = vpack.c.b16 %v2610, %v2610
      %v2620 = vpack.c.b16 %v2617, %v2617
      %2621 = vrot.lane.b32.xlu0 %v2618, 109
      %v2622 = vpop.permute.xlu0 %2621
      %2623 = vrot.lane.b32.xlu0 %v2619, 109
      %v2624 = vpop.permute.xlu0 %2623
      %2625 = vrot.lane.b32.xlu0 %v2620, 109
      %v2626 = vpop.permute.xlu0 %2625
      %v2627 = vsel %vm1364, %v2622, %v2624
      %v2628 = vsel %vm1364, %v2624, %v2626
      %2632 = vst [vmem:[#allocation3 + $0x78] sm:$0xc] %v2627
      %2633 = vst [vmem:[#allocation3 + $0x80] sm:$0xc] %v2628
      %2634 = vst.msk [vmem:[#allocation3 + $0x88] sm:$0xc] %vm946, %v2626
      %v2635 = vld [vmem:[%s558] ss:$4 sm:$0x7]
      %v2636 = vld [vmem:[%s560] ss:$4 sm:$0x7]
      %v2637 = vld [vmem:[%s562] ss:$4 sm:$0x7]
      %v2638 = vld [vmem:[%s564] ss:$4 sm:$0x7]
      %v2643 = vlaneseq
      %v2644 = vshrl.u32 %v2643, 7
      %v2645 = vsub.s32 0, %v2644
      %v2646 = vrot.slane %v2635, %v2645
      %v2647 = vlaneseq
      %v2648 = vshrl.u32 %v2647, 7
      %v2649 = vsub.s32 1, %v2648
      %v2650 = vrot.slane %v2635, %v2649
      %v2651 = vlaneseq
      %v2652 = vshrl.u32 %v2651, 7
      %v2653 = vsub.s32 2, %v2652
      %v2654 = vrot.slane %v2635, %v2653
      %v2655 = vlaneseq
      %v2656 = vshrl.u32 %v2655, 7
      %v2657 = vsub.s32 0, %v2656
      %v2658 = vrot.slane %v2636, %v2657
      %v2659 = vlaneseq
      %v2660 = vshrl.u32 %v2659, 7
      %v2661 = vsub.s32 1, %v2660
      %v2662 = vrot.slane %v2636, %v2661
      %v2663 = vlaneseq
      %v2664 = vshrl.u32 %v2663, 7
      %v2665 = vsub.s32 2, %v2664
      %v2666 = vrot.slane %v2636, %v2665
      %v2667 = vlaneseq
      %v2668 = vshrl.u32 %v2667, 7
      %v2669 = vsub.s32 0, %v2668
      %v2670 = vrot.slane %v2637, %v2669
      %v2671 = vlaneseq
      %v2672 = vshrl.u32 %v2671, 7
      %v2673 = vsub.s32 1, %v2672
      %v2674 = vrot.slane %v2637, %v2673
      %v2675 = vlaneseq
      %v2676 = vshrl.u32 %v2675, 7
      %v2677 = vsub.s32 2, %v2676
      %v2678 = vrot.slane %v2637, %v2677
      %v2679 = vlaneseq
      %v2680 = vshrl.u32 %v2679, 7
      %v2681 = vsub.s32 0, %v2680
      %v2682 = vrot.slane %v2638, %v2681
      %v2683 = vlaneseq
      %v2684 = vshrl.u32 %v2683, 7
      %v2685 = vsub.s32 1, %v2684
      %v2686 = vrot.slane %v2638, %v2685
      %v2687 = vlaneseq
      %v2688 = vshrl.u32 %v2687, 7
      %v2689 = vsub.s32 2, %v2688
      %v2690 = vrot.slane %v2638, %v2689
      %v2703 = vpack.c.bf16 %v2646, %v2646
      %v2704 = vpack.c.bf16 %v2650, %v2650
      %v2705 = vpack.c.bf16 %v2654, %v2654
      %v2706 = vpack.c.bf16 %v2658, %v2658
      %v2707 = vpack.c.bf16 %v2662, %v2662
      %v2708 = vpack.c.bf16 %v2666, %v2666
      %v2709 = vpack.c.bf16 %v2670, %v2670
      %v2710 = vpack.c.bf16 %v2674, %v2674
      %v2711 = vpack.c.bf16 %v2678, %v2678
      %v2712 = vpack.c.bf16 %v2682, %v2682
      %v2713 = vpack.c.bf16 %v2686, %v2686
      %v2714 = vpack.c.bf16 %v2690, %v2690
      %v2727 = vunpack.c.l.b16 %v2703
      %v2728 = vunpack.c.l.b16 %v2704
      %v2729 = vunpack.c.l.b16 %v2705
      %v2730 = vunpack.c.l.b16 %v2706
      %v2731 = vunpack.c.l.b16 %v2707
      %v2732 = vunpack.c.l.b16 %v2708
      %v2733 = vunpack.c.l.b16 %v2709
      %v2734 = vunpack.c.l.b16 %v2710
      %v2735 = vunpack.c.l.b16 %v2711
      %v2736 = vunpack.c.l.b16 %v2712
      %v2737 = vunpack.c.l.b16 %v2713
      %v2738 = vunpack.c.l.b16 %v2714
      %v2739 = vrot.slane %v2730, 7
      %v2740 = vsel %vm771, %v2739, %v2727
      %v2741 = vrot.slane %v2733, 6
      %v2742 = vsel %vm774, %v2741, %v2740
      %v2743 = vrot.slane %v2736, 5
      %v2744 = vsel %vm777, %v2743, %v2742
      %v2745 = vrot.slane %v2731, 7
      %v2746 = vsel %vm771, %v2745, %v2728
      %v2747 = vrot.slane %v2734, 6
      %v2748 = vsel %vm774, %v2747, %v2746
      %v2749 = vrot.slane %v2737, 5
      %v2750 = vsel %vm777, %v2749, %v2748
      %v2751 = vrot.slane %v2732, 7
      %v2752 = vsel %vm771, %v2751, %v2729
      %v2753 = vrot.slane %v2735, 6
      %v2754 = vsel %vm774, %v2753, %v2752
      %v2755 = vrot.slane %v2738, 5
      %v2756 = vsel %vm777, %v2755, %v2754
      %v2757 = vpack.c.b16 %v2744, %v2744
      %v2758 = vpack.c.b16 %v2750, %v2750
      %v2759 = vpack.c.b16 %v2756, %v2756
      %2760 = vrot.lane.b32.xlu0 %v2757, 108
      %v2761 = vpop.permute.xlu0 %2760
      %2762 = vrot.lane.b32.xlu0 %v2758, 108
      %v2763 = vpop.permute.xlu0 %2762
      %2764 = vrot.lane.b32.xlu0 %v2759, 108
      %v2765 = vpop.permute.xlu0 %2764
      %v2766 = vsel %vm1507, %v2761, %v2763
      %v2767 = vsel %vm1507, %v2763, %v2765
      %2771 = vst [vmem:[#allocation3 + $0x78] sm:$0x30] %v2766
      %2772 = vst [vmem:[#allocation3 + $0x80] sm:$0x30] %v2767
      %2773 = vst.msk [vmem:[#allocation3 + $0x88] sm:$0x30] %vm1087, %v2765
      %v2774 = vld [vmem:[%s558] ss:$4 sm:$0x7]
      %v2775 = vld [vmem:[%s560] ss:$4 sm:$0x7]
      %v2776 = vld [vmem:[%s562] ss:$4 sm:$0x7]
      %v2777 = vld [vmem:[%s564] ss:$4 sm:$0x7]
      %v2782 = vlaneseq
      %v2783 = vshrl.u32 %v2782, 7
      %v2784 = vsub.s32 0, %v2783
      %v2785 = vrot.slane %v2774, %v2784
      %v2786 = vlaneseq
      %v2787 = vshrl.u32 %v2786, 7
      %v2788 = vsub.s32 1, %v2787
      %v2789 = vrot.slane %v2774, %v2788
      %v2790 = vlaneseq
      %v2791 = vshrl.u32 %v2790, 7
      %v2792 = vsub.s32 2, %v2791
      %v2793 = vrot.slane %v2774, %v2792
      %v2794 = vlaneseq
      %v2795 = vshrl.u32 %v2794, 7
      %v2796 = vsub.s32 0, %v2795
      %v2797 = vrot.slane %v2775, %v2796
      %v2798 = vlaneseq
      %v2799 = vshrl.u32 %v2798, 7
      %v2800 = vsub.s32 1, %v2799
      %v2801 = vrot.slane %v2775, %v2800
      %v2802 = vlaneseq
      %v2803 = vshrl.u32 %v2802, 7
      %v2804 = vsub.s32 2, %v2803
      %v2805 = vrot.slane %v2775, %v2804
      %v2806 = vlaneseq
      %v2807 = vshrl.u32 %v2806, 7
      %v2808 = vsub.s32 0, %v2807
      %v2809 = vrot.slane %v2776, %v2808
      %v2810 = vlaneseq
      %v2811 = vshrl.u32 %v2810, 7
      %v2812 = vsub.s32 1, %v2811
      %v2813 = vrot.slane %v2776, %v2812
      %v2814 = vlaneseq
      %v2815 = vshrl.u32 %v2814, 7
      %v2816 = vsub.s32 2, %v2815
      %v2817 = vrot.slane %v2776, %v2816
      %v2818 = vlaneseq
      %v2819 = vshrl.u32 %v2818, 7
      %v2820 = vsub.s32 0, %v2819
      %v2821 = vrot.slane %v2777, %v2820
      %v2822 = vlaneseq
      %v2823 = vshrl.u32 %v2822, 7
      %v2824 = vsub.s32 1, %v2823
      %v2825 = vrot.slane %v2777, %v2824
      %v2826 = vlaneseq
      %v2827 = vshrl.u32 %v2826, 7
      %v2828 = vsub.s32 2, %v2827
      %v2829 = vrot.slane %v2777, %v2828
      %v2842 = vpack.c.bf16 %v2785, %v2785
      %v2843 = vpack.c.bf16 %v2789, %v2789
      %v2844 = vpack.c.bf16 %v2793, %v2793
      %v2845 = vpack.c.bf16 %v2797, %v2797
      %v2846 = vpack.c.bf16 %v2801, %v2801
      %v2847 = vpack.c.bf16 %v2805, %v2805
      %v2848 = vpack.c.bf16 %v2809, %v2809
      %v2849 = vpack.c.bf16 %v2813, %v2813
      %v2850 = vpack.c.bf16 %v2817, %v2817
      %v2851 = vpack.c.bf16 %v2821, %v2821
      %v2852 = vpack.c.bf16 %v2825, %v2825
      %v2853 = vpack.c.bf16 %v2829, %v2829
      %v2866 = vunpack.c.l.b16 %v2842
      %v2867 = vunpack.c.l.b16 %v2843
      %v2868 = vunpack.c.l.b16 %v2844
      %v2869 = vunpack.c.l.b16 %v2845
      %v2870 = vunpack.c.l.b16 %v2846
      %v2871 = vunpack.c.l.b16 %v2847
      %v2872 = vunpack.c.l.b16 %v2848
      %v2873 = vunpack.c.l.b16 %v2849
      %v2874 = vunpack.c.l.b16 %v2850
      %v2875 = vunpack.c.l.b16 %v2851
      %v2876 = vunpack.c.l.b16 %v2852
      %v2877 = vunpack.c.l.b16 %v2853
      %v2878 = vrot.slane %v2866, 4
      %v2879 = vrot.slane %v2869, 3
      %v2880 = vsel %vm907, %v2879, %v2878
      %v2881 = vrot.slane %v2872, 2
      %v2882 = vsel %vm910, %v2881, %v2880
      %v2883 = vrot.slane %v2875, 1
      %v2884 = vsel %vm913, %v2883, %v2882
      %v2885 = vrot.slane %v2867, 4
      %v2886 = vrot.slane %v2870, 3
      %v2887 = vsel %vm907, %v2886, %v2885
      %v2888 = vrot.slane %v2873, 2
      %v2889 = vsel %vm910, %v2888, %v2887
      %v2890 = vrot.slane %v2876, 1
      %v2891 = vsel %vm913, %v2890, %v2889
      %v2892 = vrot.slane %v2868, 4
      %v2893 = vrot.slane %v2871, 3
      %v2894 = vsel %vm907, %v2893, %v2892
      %v2895 = vrot.slane %v2874, 2
      %v2896 = vsel %vm910, %v2895, %v2894
      %v2897 = vrot.slane %v2877, 1
      %v2898 = vsel %vm913, %v2897, %v2896
      %v2899 = vpack.c.b16 %v2884, %v2884
      %v2900 = vpack.c.b16 %v2891, %v2891
      %v2901 = vpack.c.b16 %v2898, %v2898
      %2902 = vrot.lane.b32.xlu0 %v2899, 92
      %v2903 = vpop.permute.xlu0 %2902
      %2904 = vrot.lane.b32.xlu0 %v2900, 92
      %v2905 = vpop.permute.xlu0 %2904
      %2906 = vrot.lane.b32.xlu0 %v2901, 92
      %v2907 = vpop.permute.xlu0 %2906
      %v2908 = vsel %vm1647, %v2903, %v2905
      %v2909 = vsel %vm1647, %v2905, %v2907
      %2913 = vst [vmem:[#allocation3 + $0x78] sm:$0xc0] %v2908
      %2914 = vst [vmem:[#allocation3 + $0x80] sm:$0xc0] %v2909
      %2915 = vst.msk [vmem:[#allocation3 + $0x88] sm:$0xc0] %vm1231, %v2907
      %v2916 = vld [vmem:[%s558] ss:$4 sm:$0x7]
      %v2917 = vld [vmem:[%s560] ss:$4 sm:$0x7]
      %v2918 = vld [vmem:[%s562] ss:$4 sm:$0x7]
      %v2919 = vld [vmem:[%s564] ss:$4 sm:$0x7]
      %v2924 = vlaneseq
      %v2925 = vshrl.u32 %v2924, 7
      %v2926 = vsub.s32 0, %v2925
      %v2927 = vrot.slane %v2916, %v2926
      %v2928 = vlaneseq
      %v2929 = vshrl.u32 %v2928, 7
      %v2930 = vsub.s32 1, %v2929
      %v2931 = vrot.slane %v2916, %v2930
      %v2932 = vlaneseq
      %v2933 = vshrl.u32 %v2932, 7
      %v2934 = vsub.s32 2, %v2933
      %v2935 = vrot.slane %v2916, %v2934
      %v2936 = vlaneseq
      %v2937 = vshrl.u32 %v2936, 7
      %v2938 = vsub.s32 0, %v2937
      %v2939 = vrot.slane %v2917, %v2938
      %v2940 = vlaneseq
      %v2941 = vshrl.u32 %v2940, 7
      %v2942 = vsub.s32 1, %v2941
      %v2943 = vrot.slane %v2917, %v2942
      %v2944 = vlaneseq
      %v2945 = vshrl.u32 %v2944, 7
      %v2946 = vsub.s32 2, %v2945
      %v2947 = vrot.slane %v2917, %v2946
      %v2948 = vlaneseq
      %v2949 = vshrl.u32 %v2948, 7
      %v2950 = vsub.s32 0, %v2949
      %v2951 = vrot.slane %v2918, %v2950
      %v2952 = vlaneseq
      %v2953 = vshrl.u32 %v2952, 7
      %v2954 = vsub.s32 1, %v2953
      %v2955 = vrot.slane %v2918, %v2954
      %v2956 = vlaneseq
      %v2957 = vshrl.u32 %v2956, 7
      %v2958 = vsub.s32 2, %v2957
      %v2959 = vrot.slane %v2918, %v2958
      %v2960 = vlaneseq
      %v2961 = vshrl.u32 %v2960, 7
      %v2962 = vsub.s32 0, %v2961
      %v2963 = vrot.slane %v2919, %v2962
      %v2964 = vlaneseq
      %v2965 = vshrl.u32 %v2964, 7
      %v2966 = vsub.s32 1, %v2965
      %v2967 = vrot.slane %v2919, %v2966
      %v2968 = vlaneseq
      %v2969 = vshrl.u32 %v2968, 7
      %v2970 = vsub.s32 2, %v2969
      %v2971 = vrot.slane %v2919, %v2970
      %v2984 = vpack.c.bf16 %v2927, %v2927
      %v2985 = vpack.c.bf16 %v2931, %v2931
      %v2986 = vpack.c.bf16 %v2935, %v2935
      %v2987 = vpack.c.bf16 %v2939, %v2939
      %v2988 = vpack.c.bf16 %v2943, %v2943
      %v2989 = vpack.c.bf16 %v2947, %v2947
      %v2990 = vpack.c.bf16 %v2951, %v2951
      %v2991 = vpack.c.bf16 %v2955, %v2955
      %v2992 = vpack.c.bf16 %v2959, %v2959
      %v2993 = vpack.c.bf16 %v2963, %v2963
      %v2994 = vpack.c.bf16 %v2967, %v2967
      %v2995 = vpack.c.bf16 %v2971, %v2971
      %v3008 = vunpack.c.l.b16 %v2984
      %v3009 = vunpack.c.l.b16 %v2985
      %v3010 = vunpack.c.l.b16 %v2986
      %v3011 = vunpack.c.l.b16 %v2987
      %v3012 = vunpack.c.l.b16 %v2988
      %v3013 = vunpack.c.l.b16 %v2989
      %v3014 = vunpack.c.l.b16 %v2990
      %v3015 = vunpack.c.l.b16 %v2991
      %v3016 = vunpack.c.l.b16 %v2992
      %v3017 = vunpack.c.l.b16 %v2993
      %v3018 = vunpack.c.l.b16 %v2994
      %v3019 = vunpack.c.l.b16 %v2995
      %v3020 = vrot.slane %v3011, 7
      %v3021 = vsel %vm771, %v3020, %v3008
      %v3022 = vrot.slane %v3014, 6
      %v3023 = vsel %vm774, %v3022, %v3021
      %v3024 = vrot.slane %v3017, 5
      %v3025 = vsel %vm777, %v3024, %v3023
      %v3026 = vrot.slane %v3012, 7
      %v3027 = vsel %vm771, %v3026, %v3009
      %v3028 = vrot.slane %v3015, 6
      %v3029 = vsel %vm774, %v3028, %v3027
      %v3030 = vrot.slane %v3018, 5
      %v3031 = vsel %vm777, %v3030, %v3029
      %v3032 = vrot.slane %v3013, 7
      %v3033 = vsel %vm771, %v3032, %v3010
      %v3034 = vrot.slane %v3016, 6
      %v3035 = vsel %vm774, %v3034, %v3033
      %v3036 = vrot.slane %v3019, 5
      %v3037 = vsel %vm777, %v3036, %v3035
      %v3038 = vpack.c.b16 %v3025, %v3025
      %v3039 = vpack.c.b16 %v3031, %v3031
      %v3040 = vpack.c.b16 %v3037, %v3037
      %3041 = vrot.lane.b32.xlu0 %v3038, 91
      %v3042 = vpop.permute.xlu0 %3041
      %3043 = vrot.lane.b32.xlu0 %v3039, 91
      %v3044 = vpop.permute.xlu0 %3043
      %3045 = vrot.lane.b32.xlu0 %v3040, 91
      %v3046 = vpop.permute.xlu0 %3045
      %v3047 = vsel %vm1790, %v3042, %v3044
      %v3048 = vsel %vm1790, %v3044, %v3046
      %3052 = vst [vmem:[#allocation3 + $0xa0] sm:$0x3] %v3047
      %3053 = vst [vmem:[#allocation3 + $0xa8] sm:$0x3] %v3048
      %3054 = vst.msk [vmem:[#allocation3 + $0xb0] sm:$0x3] %vm799, %v3046
      %v3055 = vld [vmem:[%s558] ss:$4 sm:$0x7]
      %v3056 = vld [vmem:[%s560] ss:$4 sm:$0x7]
      %v3057 = vld [vmem:[%s562] ss:$4 sm:$0x7]
      %v3058 = vld [vmem:[%s564] ss:$4 sm:$0x7]
      %v3063 = vlaneseq
      %v3064 = vshrl.u32 %v3063, 7
      %v3065 = vsub.s32 0, %v3064
      %v3066 = vrot.slane %v3055, %v3065
      %v3067 = vlaneseq
      %v3068 = vshrl.u32 %v3067, 7
      %v3069 = vsub.s32 1, %v3068
      %v3070 = vrot.slane %v3055, %v3069
      %v3071 = vlaneseq
      %v3072 = vshrl.u32 %v3071, 7
      %v3073 = vsub.s32 2, %v3072
      %v3074 = vrot.slane %v3055, %v3073
      %v3075 = vlaneseq
      %v3076 = vshrl.u32 %v3075, 7
      %v3077 = vsub.s32 0, %v3076
      %v3078 = vrot.slane %v3056, %v3077
      %v3079 = vlaneseq
      %v3080 = vshrl.u32 %v3079, 7
      %v3081 = vsub.s32 1, %v3080
      %v3082 = vrot.slane %v3056, %v3081
      %v3083 = vlaneseq
      %v3084 = vshrl.u32 %v3083, 7
      %v3085 = vsub.s32 2, %v3084
      %v3086 = vrot.slane %v3056, %v3085
      %v3087 = vlaneseq
      %v3088 = vshrl.u32 %v3087, 7
      %v3089 = vsub.s32 0, %v3088
      %v3090 = vrot.slane %v3057, %v3089
      %v3091 = vlaneseq
      %v3092 = vshrl.u32 %v3091, 7
      %v3093 = vsub.s32 1, %v3092
      %v3094 = vrot.slane %v3057, %v3093
      %v3095 = vlaneseq
      %v3096 = vshrl.u32 %v3095, 7
      %v3097 = vsub.s32 2, %v3096
      %v3098 = vrot.slane %v3057, %v3097
      %v3099 = vlaneseq
      %v3100 = vshrl.u32 %v3099, 7
      %v3101 = vsub.s32 0, %v3100
      %v3102 = vrot.slane %v3058, %v3101
      %v3103 = vlaneseq
      %v3104 = vshrl.u32 %v3103, 7
      %v3105 = vsub.s32 1, %v3104
      %v3106 = vrot.slane %v3058, %v3105
      %v3107 = vlaneseq
      %v3108 = vshrl.u32 %v3107, 7
      %v3109 = vsub.s32 2, %v3108
      %v3110 = vrot.slane %v3058, %v3109
      %v3123 = vpack.c.bf16 %v3066, %v3066
      %v3124 = vpack.c.bf16 %v3070, %v3070
      %v3125 = vpack.c.bf16 %v3074, %v3074
      %v3126 = vpack.c.bf16 %v3078, %v3078
      %v3127 = vpack.c.bf16 %v3082, %v3082
      %v3128 = vpack.c.bf16 %v3086, %v3086
      %v3129 = vpack.c.bf16 %v3090, %v3090
      %v3130 = vpack.c.bf16 %v3094, %v3094
      %v3131 = vpack.c.bf16 %v3098, %v3098
      %v3132 = vpack.c.bf16 %v3102, %v3102
      %v3133 = vpack.c.bf16 %v3106, %v3106
      %v3134 = vpack.c.bf16 %v3110, %v3110
      %v3147 = vunpack.c.l.b16 %v3123
      %v3148 = vunpack.c.l.b16 %v3124
      %v3149 = vunpack.c.l.b16 %v3125
      %v3150 = vunpack.c.l.b16 %v3126
      %v3151 = vunpack.c.l.b16 %v3127
      %v3152 = vunpack.c.l.b16 %v3128
      %v3153 = vunpack.c.l.b16 %v3129
      %v3154 = vunpack.c.l.b16 %v3130
      %v3155 = vunpack.c.l.b16 %v3131
      %v3156 = vunpack.c.l.b16 %v3132
      %v3157 = vunpack.c.l.b16 %v3133
      %v3158 = vunpack.c.l.b16 %v3134
      %v3159 = vrot.slane %v3147, 4
      %v3160 = vrot.slane %v3150, 3
      %v3161 = vsel %vm907, %v3160, %v3159
      %v3162 = vrot.slane %v3153, 2
      %v3163 = vsel %vm910, %v3162, %v3161
      %v3164 = vrot.slane %v3156, 1
      %v3165 = vsel %vm913, %v3164, %v3163
      %v3166 = vrot.slane %v3148, 4
      %v3167 = vrot.slane %v3151, 3
      %v3168 = vsel %vm907, %v3167, %v3166
      %v3169 = vrot.slane %v3154, 2
      %v3170 = vsel %vm910, %v3169, %v3168
      %v3171 = vrot.slane %v3157, 1
      %v3172 = vsel %vm913, %v3171, %v3170
      %v3173 = vrot.slane %v3149, 4
      %v3174 = vrot.slane %v3152, 3
      %v3175 = vsel %vm907, %v3174, %v3173
      %v3176 = vrot.slane %v3155, 2
      %v3177 = vsel %vm910, %v3176, %v3175
      %v3178 = vrot.slane %v3158, 1
      %v3179 = vsel %vm913, %v3178, %v3177
      %v3180 = vpack.c.b16 %v3165, %v3165
      %v3181 = vpack.c.b16 %v3172, %v3172
      %v3182 = vpack.c.b16 %v3179, %v3179
      %3183 = vrot.lane.b32.xlu0 %v3180, 90
      %v3184 = vpop.permute.xlu0 %3183
      %3185 = vrot.lane.b32.xlu0 %v3181, 90
      %v3186 = vpop.permute.xlu0 %3185
      %3187 = vrot.lane.b32.xlu0 %v3182, 90
      %v3188 = vpop.permute.xlu0 %3187
      %v3189 = vsel %vm1930, %v3184, %v3186
      %v3190 = vsel %vm1930, %v3186, %v3188
      %3194 = vst [vmem:[#allocation3 + $0xa0] sm:$0xc] %v3189
      %3195 = vst [vmem:[#allocation3 + $0xa8] sm:$0xc] %v3190
      %3196 = vst.msk [vmem:[#allocation3 + $0xb0] sm:$0xc] %vm946, %v3188
      %v3197 = vld [vmem:[%s658] ss:$4 sm:$0x7]
      %v3198 = vld [vmem:[%s660] ss:$4 sm:$0x7]
      %v3199 = vld [vmem:[%s662] ss:$4 sm:$0x7]
      %v3200 = vld [vmem:[%s664] ss:$4 sm:$0x7]
      %v3205 = vlaneseq
      %v3206 = vshrl.u32 %v3205, 7
      %v3207 = vsub.s32 0, %v3206
      %v3208 = vrot.slane %v3197, %v3207
      %v3209 = vlaneseq
      %v3210 = vshrl.u32 %v3209, 7
      %v3211 = vsub.s32 1, %v3210
      %v3212 = vrot.slane %v3197, %v3211
      %v3213 = vlaneseq
      %v3214 = vshrl.u32 %v3213, 7
      %v3215 = vsub.s32 2, %v3214
      %v3216 = vrot.slane %v3197, %v3215
      %v3217 = vlaneseq
      %v3218 = vshrl.u32 %v3217, 7
      %v3219 = vsub.s32 0, %v3218
      %v3220 = vrot.slane %v3198, %v3219
      %v3221 = vlaneseq
      %v3222 = vshrl.u32 %v3221, 7
      %v3223 = vsub.s32 1, %v3222
      %v3224 = vrot.slane %v3198, %v3223
      %v3225 = vlaneseq
      %v3226 = vshrl.u32 %v3225, 7
      %v3227 = vsub.s32 2, %v3226
      %v3228 = vrot.slane %v3198, %v3227
      %v3229 = vlaneseq
      %v3230 = vshrl.u32 %v3229, 7
      %v3231 = vsub.s32 0, %v3230
      %v3232 = vrot.slane %v3199, %v3231
      %v3233 = vlaneseq
      %v3234 = vshrl.u32 %v3233, 7
      %v3235 = vsub.s32 1, %v3234
      %v3236 = vrot.slane %v3199, %v3235
      %v3237 = vlaneseq
      %v3238 = vshrl.u32 %v3237, 7
      %v3239 = vsub.s32 2, %v3238
      %v3240 = vrot.slane %v3199, %v3239
      %v3241 = vlaneseq
      %v3242 = vshrl.u32 %v3241, 7
      %v3243 = vsub.s32 0, %v3242
      %v3244 = vrot.slane %v3200, %v3243
      %v3245 = vlaneseq
      %v3246 = vshrl.u32 %v3245, 7
      %v3247 = vsub.s32 1, %v3246
      %v3248 = vrot.slane %v3200, %v3247
      %v3249 = vlaneseq
      %v3250 = vshrl.u32 %v3249, 7
      %v3251 = vsub.s32 2, %v3250
      %v3252 = vrot.slane %v3200, %v3251
      %v3265 = vpack.c.bf16 %v3208, %v3208
      %v3266 = vpack.c.bf16 %v3212, %v3212
      %v3267 = vpack.c.bf16 %v3216, %v3216
      %v3268 = vpack.c.bf16 %v3220, %v3220
      %v3269 = vpack.c.bf16 %v3224, %v3224
      %v3270 = vpack.c.bf16 %v3228, %v3228
      %v3271 = vpack.c.bf16 %v3232, %v3232
      %v3272 = vpack.c.bf16 %v3236, %v3236
      %v3273 = vpack.c.bf16 %v3240, %v3240
      %v3274 = vpack.c.bf16 %v3244, %v3244
      %v3275 = vpack.c.bf16 %v3248, %v3248
      %v3276 = vpack.c.bf16 %v3252, %v3252
      %v3289 = vunpack.c.l.b16 %v3265
      %v3290 = vunpack.c.l.b16 %v3266
      %v3291 = vunpack.c.l.b16 %v3267
      %v3292 = vunpack.c.l.b16 %v3268
      %v3293 = vunpack.c.l.b16 %v3269
      %v3294 = vunpack.c.l.b16 %v3270
      %v3295 = vunpack.c.l.b16 %v3271
      %v3296 = vunpack.c.l.b16 %v3272
      %v3297 = vunpack.c.l.b16 %v3273
      %v3298 = vunpack.c.l.b16 %v3274
      %v3299 = vunpack.c.l.b16 %v3275
      %v3300 = vunpack.c.l.b16 %v3276
      %v3301 = vrot.slane %v3292, 7
      %v3302 = vsel %vm771, %v3301, %v3289
      %v3303 = vrot.slane %v3295, 6
      %v3304 = vsel %vm774, %v3303, %v3302
      %v3305 = vrot.slane %v3298, 5
      %v3306 = vsel %vm777, %v3305, %v3304
      %v3307 = vrot.slane %v3293, 7
      %v3308 = vsel %vm771, %v3307, %v3290
      %v3309 = vrot.slane %v3296, 6
      %v3310 = vsel %vm774, %v3309, %v3308
      %v3311 = vrot.slane %v3299, 5
      %v3312 = vsel %vm777, %v3311, %v3310
      %v3313 = vrot.slane %v3294, 7
      %v3314 = vsel %vm771, %v3313, %v3291
      %v3315 = vrot.slane %v3297, 6
      %v3316 = vsel %vm774, %v3315, %v3314
      %v3317 = vrot.slane %v3300, 5
      %v3318 = vsel %vm777, %v3317, %v3316
      %v3319 = vpack.c.b16 %v3306, %v3306
      %v3320 = vpack.c.b16 %v3312, %v3312
      %v3321 = vpack.c.b16 %v3318, %v3318
      %3325 = vst [vmem:[#allocation3 + $0xa0] sm:$0x30] %v3319
      %3326 = vst [vmem:[#allocation3 + $0xa8] sm:$0x30] %v3320
      %3327 = vst.msk [vmem:[#allocation3 + $0xb0] sm:$0x30] %vm1087, %v3321
      %v3328 = vld [vmem:[%s658] ss:$4 sm:$0x7]
      %v3329 = vld [vmem:[%s660] ss:$4 sm:$0x7]
      %v3330 = vld [vmem:[%s662] ss:$4 sm:$0x7]
      %v3331 = vld [vmem:[%s664] ss:$4 sm:$0x7]
      %v3336 = vlaneseq
      %v3337 = vshrl.u32 %v3336, 7
      %v3338 = vsub.s32 0, %v3337
      %v3339 = vrot.slane %v3328, %v3338
      %v3340 = vlaneseq
      %v3341 = vshrl.u32 %v3340, 7
      %v3342 = vsub.s32 1, %v3341
      %v3343 = vrot.slane %v3328, %v3342
      %v3344 = vlaneseq
      %v3345 = vshrl.u32 %v3344, 7
      %v3346 = vsub.s32 2, %v3345
      %v3347 = vrot.slane %v3328, %v3346
      %v3348 = vlaneseq
      %v3349 = vshrl.u32 %v3348, 7
      %v3350 = vsub.s32 0, %v3349
      %v3351 = vrot.slane %v3329, %v3350
      %v3352 = vlaneseq
      %v3353 = vshrl.u32 %v3352, 7
      %v3354 = vsub.s32 1, %v3353
      %v3355 = vrot.slane %v3329, %v3354
      %v3356 = vlaneseq
      %v3357 = vshrl.u32 %v3356, 7
      %v3358 = vsub.s32 2, %v3357
      %v3359 = vrot.slane %v3329, %v3358
      %v3360 = vlaneseq
      %v3361 = vshrl.u32 %v3360, 7
      %v3362 = vsub.s32 0, %v3361
      %v3363 = vrot.slane %v3330, %v3362
      %v3364 = vlaneseq
      %v3365 = vshrl.u32 %v3364, 7
      %v3366 = vsub.s32 1, %v3365
      %v3367 = vrot.slane %v3330, %v3366
      %v3368 = vlaneseq
      %v3369 = vshrl.u32 %v3368, 7
      %v3370 = vsub.s32 2, %v3369
      %v3371 = vrot.slane %v3330, %v3370
      %v3372 = vlaneseq
      %v3373 = vshrl.u32 %v3372, 7
      %v3374 = vsub.s32 0, %v3373
      %v3375 = vrot.slane %v3331, %v3374
      %v3376 = vlaneseq
      %v3377 = vshrl.u32 %v3376, 7
      %v3378 = vsub.s32 1, %v3377
      %v3379 = vrot.slane %v3331, %v3378
      %v3380 = vlaneseq
      %v3381 = vshrl.u32 %v3380, 7
      %v3382 = vsub.s32 2, %v3381
      %v3383 = vrot.slane %v3331, %v3382
      %v3396 = vpack.c.bf16 %v3339, %v3339
      %v3397 = vpack.c.bf16 %v3343, %v3343
      %v3398 = vpack.c.bf16 %v3347, %v3347
      %v3399 = vpack.c.bf16 %v3351, %v3351
      %v3400 = vpack.c.bf16 %v3355, %v3355
      %v3401 = vpack.c.bf16 %v3359, %v3359
      %v3402 = vpack.c.bf16 %v3363, %v3363
      %v3403 = vpack.c.bf16 %v3367, %v3367
      %v3404 = vpack.c.bf16 %v3371, %v3371
      %v3405 = vpack.c.bf16 %v3375, %v3375
      %v3406 = vpack.c.bf16 %v3379, %v3379
      %v3407 = vpack.c.bf16 %v3383, %v3383
      %v3420 = vunpack.c.l.b16 %v3396
      %v3421 = vunpack.c.l.b16 %v3397
      %v3422 = vunpack.c.l.b16 %v3398
      %v3423 = vunpack.c.l.b16 %v3399
      %v3424 = vunpack.c.l.b16 %v3400
      %v3425 = vunpack.c.l.b16 %v3401
      %v3426 = vunpack.c.l.b16 %v3402
      %v3427 = vunpack.c.l.b16 %v3403
      %v3428 = vunpack.c.l.b16 %v3404
      %v3429 = vunpack.c.l.b16 %v3405
      %v3430 = vunpack.c.l.b16 %v3406
      %v3431 = vunpack.c.l.b16 %v3407
      %v3432 = vrot.slane %v3420, 4
      %v3433 = vrot.slane %v3423, 3
      %v3434 = vsel %vm907, %v3433, %v3432
      %v3435 = vrot.slane %v3426, 2
      %v3436 = vsel %vm910, %v3435, %v3434
      %v3437 = vrot.slane %v3429, 1
      %v3438 = vsel %vm913, %v3437, %v3436
      %v3439 = vrot.slane %v3421, 4
      %v3440 = vrot.slane %v3424, 3
      %v3441 = vsel %vm907, %v3440, %v3439
      %v3442 = vrot.slane %v3427, 2
      %v3443 = vsel %vm910, %v3442, %v3441
      %v3444 = vrot.slane %v3430, 1
      %v3445 = vsel %vm913, %v3444, %v3443
      %v3446 = vrot.slane %v3422, 4
      %v3447 = vrot.slane %v3425, 3
      %v3448 = vsel %vm907, %v3447, %v3446
      %v3449 = vrot.slane %v3428, 2
      %v3450 = vsel %vm910, %v3449, %v3448
      %v3451 = vrot.slane %v3431, 1
      %v3452 = vsel %vm913, %v3451, %v3450
      %v3453 = vpack.c.b16 %v3438, %v3438
      %v3454 = vpack.c.b16 %v3445, %v3445
      %v3455 = vpack.c.b16 %v3452, %v3452
      %3456 = vrot.lane.b32.xlu0 %v3453, 127
      %v3457 = vpop.permute.xlu0 %3456
      %3458 = vrot.lane.b32.xlu0 %v3454, 127
      %v3459 = vpop.permute.xlu0 %3458
      %3460 = vrot.lane.b32.xlu0 %v3455, 127
      %v3461 = vpop.permute.xlu0 %3460
      %v3462 = vsel %vm938, %v3457, %v3459
      %v3463 = vsel %vm938, %v3459, %v3461
      %3467 = vst [vmem:[#allocation3 + $0xa0] sm:$0xc0] %v3462
      %3468 = vst [vmem:[#allocation3 + $0xa8] sm:$0xc0] %v3463
      %3469 = vst.msk [vmem:[#allocation3 + $0xb0] sm:$0xc0] %vm1231, %v3461
      %v3470 = vld [vmem:[%s658] ss:$4 sm:$0x7]
      %v3471 = vld [vmem:[%s660] ss:$4 sm:$0x7]
      %v3472 = vld [vmem:[%s662] ss:$4 sm:$0x7]
      %v3473 = vld [vmem:[%s664] ss:$4 sm:$0x7]
      %v3478 = vlaneseq
      %v3479 = vshrl.u32 %v3478, 7
      %v3480 = vsub.s32 0, %v3479
      %v3481 = vrot.slane %v3470, %v3480
      %v3482 = vlaneseq
      %v3483 = vshrl.u32 %v3482, 7
      %v3484 = vsub.s32 1, %v3483
      %v3485 = vrot.slane %v3470, %v3484
      %v3486 = vlaneseq
      %v3487 = vshrl.u32 %v3486, 7
      %v3488 = vsub.s32 2, %v3487
      %v3489 = vrot.slane %v3470, %v3488
      %v3490 = vlaneseq
      %v3491 = vshrl.u32 %v3490, 7
      %v3492 = vsub.s32 0, %v3491
      %v3493 = vrot.slane %v3471, %v3492
      %v3494 = vlaneseq
      %v3495 = vshrl.u32 %v3494, 7
      %v3496 = vsub.s32 1, %v3495
      %v3497 = vrot.slane %v3471, %v3496
      %v3498 = vlaneseq
      %v3499 = vshrl.u32 %v3498, 7
      %v3500 = vsub.s32 2, %v3499
      %v3501 = vrot.slane %v3471, %v3500
      %v3502 = vlaneseq
      %v3503 = vshrl.u32 %v3502, 7
      %v3504 = vsub.s32 0, %v3503
      %v3505 = vrot.slane %v3472, %v3504
      %v3506 = vlaneseq
      %v3507 = vshrl.u32 %v3506, 7
      %v3508 = vsub.s32 1, %v3507
      %v3509 = vrot.slane %v3472, %v3508
      %v3510 = vlaneseq
      %v3511 = vshrl.u32 %v3510, 7
      %v3512 = vsub.s32 2, %v3511
      %v3513 = vrot.slane %v3472, %v3512
      %v3514 = vlaneseq
      %v3515 = vshrl.u32 %v3514, 7
      %v3516 = vsub.s32 0, %v3515
      %v3517 = vrot.slane %v3473, %v3516
      %v3518 = vlaneseq
      %v3519 = vshrl.u32 %v3518, 7
      %v3520 = vsub.s32 1, %v3519
      %v3521 = vrot.slane %v3473, %v3520
      %v3522 = vlaneseq
      %v3523 = vshrl.u32 %v3522, 7
      %v3524 = vsub.s32 2, %v3523
      %v3525 = vrot.slane %v3473, %v3524
      %v3538 = vpack.c.bf16 %v3481, %v3481
      %v3539 = vpack.c.bf16 %v3485, %v3485
      %v3540 = vpack.c.bf16 %v3489, %v3489
      %v3541 = vpack.c.bf16 %v3493, %v3493
      %v3542 = vpack.c.bf16 %v3497, %v3497
      %v3543 = vpack.c.bf16 %v3501, %v3501
      %v3544 = vpack.c.bf16 %v3505, %v3505
      %v3545 = vpack.c.bf16 %v3509, %v3509
      %v3546 = vpack.c.bf16 %v3513, %v3513
      %v3547 = vpack.c.bf16 %v3517, %v3517
      %v3548 = vpack.c.bf16 %v3521, %v3521
      %v3549 = vpack.c.bf16 %v3525, %v3525
      %v3562 = vunpack.c.l.b16 %v3538
      %v3563 = vunpack.c.l.b16 %v3539
      %v3564 = vunpack.c.l.b16 %v3540
      %v3565 = vunpack.c.l.b16 %v3541
      %v3566 = vunpack.c.l.b16 %v3542
      %v3567 = vunpack.c.l.b16 %v3543
      %v3568 = vunpack.c.l.b16 %v3544
      %v3569 = vunpack.c.l.b16 %v3545
      %v3570 = vunpack.c.l.b16 %v3546
      %v3571 = vunpack.c.l.b16 %v3547
      %v3572 = vunpack.c.l.b16 %v3548
      %v3573 = vunpack.c.l.b16 %v3549
      %v3574 = vrot.slane %v3565, 7
      %v3575 = vsel %vm771, %v3574, %v3562
      %v3576 = vrot.slane %v3568, 6
      %v3577 = vsel %vm774, %v3576, %v3575
      %v3578 = vrot.slane %v3571, 5
      %v3579 = vsel %vm777, %v3578, %v3577
      %v3580 = vrot.slane %v3566, 7
      %v3581 = vsel %vm771, %v3580, %v3563
      %v3582 = vrot.slane %v3569, 6
      %v3583 = vsel %vm774, %v3582, %v3581
      %v3584 = vrot.slane %v3572, 5
      %v3585 = vsel %vm777, %v3584, %v3583
      %v3586 = vrot.slane %v3567, 7
      %v3587 = vsel %vm771, %v3586, %v3564
      %v3588 = vrot.slane %v3570, 6
      %v3589 = vsel %vm774, %v3588, %v3587
      %v3590 = vrot.slane %v3573, 5
      %v3591 = vsel %vm777, %v3590, %v3589
      %v3592 = vpack.c.b16 %v3579, %v3579
      %v3593 = vpack.c.b16 %v3585, %v3585
      %v3594 = vpack.c.b16 %v3591, %v3591
      %3595 = vrot.lane.b32.xlu0 %v3592, 126
      %v3596 = vpop.permute.xlu0 %3595
      %3597 = vrot.lane.b32.xlu0 %v3593, 126
      %v3598 = vpop.permute.xlu0 %3597
      %3599 = vrot.lane.b32.xlu0 %v3594, 126
      %v3600 = vpop.permute.xlu0 %3599
      %v3601 = vsel %vm1079, %v3596, %v3598
      %v3602 = vsel %vm1079, %v3598, %v3600
      %3606 = vst [vmem:[#allocation3 + $0xc8] sm:$0x3] %v3601
      %3607 = vst [vmem:[#allocation3 + $0xd0] sm:$0x3] %v3602
      %3608 = vst.msk [vmem:[#allocation3 + $0xd8] sm:$0x3] %vm799, %v3600
      %v3609 = vld [vmem:[%s658] ss:$4 sm:$0x7]
      %v3610 = vld [vmem:[%s660] ss:$4 sm:$0x7]
      %v3611 = vld [vmem:[%s662] ss:$4 sm:$0x7]
      %v3612 = vld [vmem:[%s664] ss:$4 sm:$0x7]
      %v3617 = vlaneseq
      %v3618 = vshrl.u32 %v3617, 7
      %v3619 = vsub.s32 0, %v3618
      %v3620 = vrot.slane %v3609, %v3619
      %v3621 = vlaneseq
      %v3622 = vshrl.u32 %v3621, 7
      %v3623 = vsub.s32 1, %v3622
      %v3624 = vrot.slane %v3609, %v3623
      %v3625 = vlaneseq
      %v3626 = vshrl.u32 %v3625, 7
      %v3627 = vsub.s32 2, %v3626
      %v3628 = vrot.slane %v3609, %v3627
      %v3629 = vlaneseq
      %v3630 = vshrl.u32 %v3629, 7
      %v3631 = vsub.s32 0, %v3630
      %v3632 = vrot.slane %v3610, %v3631
      %v3633 = vlaneseq
      %v3634 = vshrl.u32 %v3633, 7
      %v3635 = vsub.s32 1, %v3634
      %v3636 = vrot.slane %v3610, %v3635
      %v3637 = vlaneseq
      %v3638 = vshrl.u32 %v3637, 7
      %v3639 = vsub.s32 2, %v3638
      %v3640 = vrot.slane %v3610, %v3639
      %v3641 = vlaneseq
      %v3642 = vshrl.u32 %v3641, 7
      %v3643 = vsub.s32 0, %v3642
      %v3644 = vrot.slane %v3611, %v3643
      %v3645 = vlaneseq
      %v3646 = vshrl.u32 %v3645, 7
      %v3647 = vsub.s32 1, %v3646
      %v3648 = vrot.slane %v3611, %v3647
      %v3649 = vlaneseq
      %v3650 = vshrl.u32 %v3649, 7
      %v3651 = vsub.s32 2, %v3650
      %v3652 = vrot.slane %v3611, %v3651
      %v3653 = vlaneseq
      %v3654 = vshrl.u32 %v3653, 7
      %v3655 = vsub.s32 0, %v3654
      %v3656 = vrot.slane %v3612, %v3655
      %v3657 = vlaneseq
      %v3658 = vshrl.u32 %v3657, 7
      %v3659 = vsub.s32 1, %v3658
      %v3660 = vrot.slane %v3612, %v3659
      %v3661 = vlaneseq
      %v3662 = vshrl.u32 %v3661, 7
      %v3663 = vsub.s32 2, %v3662
      %v3664 = vrot.slane %v3612, %v3663
      %v3677 = vpack.c.bf16 %v3620, %v3620
      %v3678 = vpack.c.bf16 %v3624, %v3624
      %v3679 = vpack.c.bf16 %v3628, %v3628
      %v3680 = vpack.c.bf16 %v3632, %v3632
      %v3681 = vpack.c.bf16 %v3636, %v3636
      %v3682 = vpack.c.bf16 %v3640, %v3640
      %v3683 = vpack.c.bf16 %v3644, %v3644
      %v3684 = vpack.c.bf16 %v3648, %v3648
      %v3685 = vpack.c.bf16 %v3652, %v3652
      %v3686 = vpack.c.bf16 %v3656, %v3656
      %v3687 = vpack.c.bf16 %v3660, %v3660
      %v3688 = vpack.c.bf16 %v3664, %v3664
      %v3701 = vunpack.c.l.b16 %v3677
      %v3702 = vunpack.c.l.b16 %v3678
      %v3703 = vunpack.c.l.b16 %v3679
      %v3704 = vunpack.c.l.b16 %v3680
      %v3705 = vunpack.c.l.b16 %v3681
      %v3706 = vunpack.c.l.b16 %v3682
      %v3707 = vunpack.c.l.b16 %v3683
      %v3708 = vunpack.c.l.b16 %v3684
      %v3709 = vunpack.c.l.b16 %v3685
      %v3710 = vunpack.c.l.b16 %v3686
      %v3711 = vunpack.c.l.b16 %v3687
      %v3712 = vunpack.c.l.b16 %v3688
      %v3713 = vrot.slane %v3701, 4
      %v3714 = vrot.slane %v3704, 3
      %v3715 = vsel %vm907, %v3714, %v3713
      %v3716 = vrot.slane %v3707, 2
      %v3717 = vsel %vm910, %v3716, %v3715
      %v3718 = vrot.slane %v3710, 1
      %v3719 = vsel %vm913, %v3718, %v3717
      %v3720 = vrot.slane %v3702, 4
      %v3721 = vrot.slane %v3705, 3
      %v3722 = vsel %vm907, %v3721, %v3720
      %v3723 = vrot.slane %v3708, 2
      %v3724 = vsel %vm910, %v3723, %v3722
      %v3725 = vrot.slane %v3711, 1
      %v3726 = vsel %vm913, %v3725, %v3724
      %v3727 = vrot.slane %v3703, 4
      %v3728 = vrot.slane %v3706, 3
      %v3729 = vsel %vm907, %v3728, %v3727
      %v3730 = vrot.slane %v3709, 2
      %v3731 = vsel %vm910, %v3730, %v3729
      %v3732 = vrot.slane %v3712, 1
      %v3733 = vsel %vm913, %v3732, %v3731
      %v3734 = vpack.c.b16 %v3719, %v3719
      %v3735 = vpack.c.b16 %v3726, %v3726
      %v3736 = vpack.c.b16 %v3733, %v3733
      %3737 = vrot.lane.b32.xlu0 %v3734, 110
      %v3738 = vpop.permute.xlu0 %3737
      %3739 = vrot.lane.b32.xlu0 %v3735, 110
      %v3740 = vpop.permute.xlu0 %3739
      %3741 = vrot.lane.b32.xlu0 %v3736, 110
      %v3742 = vpop.permute.xlu0 %3741
      %v3743 = vsel %vm1223, %v3738, %v3740
      %v3744 = vsel %vm1223, %v3740, %v3742
      %3748 = vst [vmem:[#allocation3 + $0xc8] sm:$0xc] %v3743
      %3749 = vst [vmem:[#allocation3 + $0xd0] sm:$0xc] %v3744
      %3750 = vst.msk [vmem:[#allocation3 + $0xd8] sm:$0xc] %vm946, %v3742
      %v3751 = vld [vmem:[%s658] ss:$4 sm:$0x7]
      %v3752 = vld [vmem:[%s660] ss:$4 sm:$0x7]
      %v3753 = vld [vmem:[%s662] ss:$4 sm:$0x7]
      %v3754 = vld [vmem:[%s664] ss:$4 sm:$0x7]
      %v3759 = vlaneseq
      %v3760 = vshrl.u32 %v3759, 7
      %v3761 = vsub.s32 0, %v3760
      %v3762 = vrot.slane %v3751, %v3761
      %v3763 = vlaneseq
      %v3764 = vshrl.u32 %v3763, 7
      %v3765 = vsub.s32 1, %v3764
      %v3766 = vrot.slane %v3751, %v3765
      %v3767 = vlaneseq
      %v3768 = vshrl.u32 %v3767, 7
      %v3769 = vsub.s32 2, %v3768
      %v3770 = vrot.slane %v3751, %v3769
      %v3771 = vlaneseq
      %v3772 = vshrl.u32 %v3771, 7
      %v3773 = vsub.s32 0, %v3772
      %v3774 = vrot.slane %v3752, %v3773
      %v3775 = vlaneseq
      %v3776 = vshrl.u32 %v3775, 7
      %v3777 = vsub.s32 1, %v3776
      %v3778 = vrot.slane %v3752, %v3777
      %v3779 = vlaneseq
      %v3780 = vshrl.u32 %v3779, 7
      %v3781 = vsub.s32 2, %v3780
      %v3782 = vrot.slane %v3752, %v3781
      %v3783 = vlaneseq
      %v3784 = vshrl.u32 %v3783, 7
      %v3785 = vsub.s32 0, %v3784
      %v3786 = vrot.slane %v3753, %v3785
      %v3787 = vlaneseq
      %v3788 = vshrl.u32 %v3787, 7
      %v3789 = vsub.s32 1, %v3788
      %v3790 = vrot.slane %v3753, %v3789
      %v3791 = vlaneseq
      %v3792 = vshrl.u32 %v3791, 7
      %v3793 = vsub.s32 2, %v3792
      %v3794 = vrot.slane %v3753, %v3793
      %v3795 = vlaneseq
      %v3796 = vshrl.u32 %v3795, 7
      %v3797 = vsub.s32 0, %v3796
      %v3798 = vrot.slane %v3754, %v3797
      %v3799 = vlaneseq
      %v3800 = vshrl.u32 %v3799, 7
      %v3801 = vsub.s32 1, %v3800
      %v3802 = vrot.slane %v3754, %v3801
      %v3803 = vlaneseq
      %v3804 = vshrl.u32 %v3803, 7
      %v3805 = vsub.s32 2, %v3804
      %v3806 = vrot.slane %v3754, %v3805
      %v3819 = vpack.c.bf16 %v3762, %v3762
      %v3820 = vpack.c.bf16 %v3766, %v3766
      %v3821 = vpack.c.bf16 %v3770, %v3770
      %v3822 = vpack.c.bf16 %v3774, %v3774
      %v3823 = vpack.c.bf16 %v3778, %v3778
      %v3824 = vpack.c.bf16 %v3782, %v3782
      %v3825 = vpack.c.bf16 %v3786, %v3786
      %v3826 = vpack.c.bf16 %v3790, %v3790
      %v3827 = vpack.c.bf16 %v3794, %v3794
      %v3828 = vpack.c.bf16 %v3798, %v3798
      %v3829 = vpack.c.bf16 %v3802, %v3802
      %v3830 = vpack.c.bf16 %v3806, %v3806
      %v3843 = vunpack.c.l.b16 %v3819
      %v3844 = vunpack.c.l.b16 %v3820
      %v3845 = vunpack.c.l.b16 %v3821
      %v3846 = vunpack.c.l.b16 %v3822
      %v3847 = vunpack.c.l.b16 %v3823
      %v3848 = vunpack.c.l.b16 %v3824
      %v3849 = vunpack.c.l.b16 %v3825
      %v3850 = vunpack.c.l.b16 %v3826
      %v3851 = vunpack.c.l.b16 %v3827
      %v3852 = vunpack.c.l.b16 %v3828
      %v3853 = vunpack.c.l.b16 %v3829
      %v3854 = vunpack.c.l.b16 %v3830
      %v3855 = vrot.slane %v3846, 7
      %v3856 = vsel %vm771, %v3855, %v3843
      %v3857 = vrot.slane %v3849, 6
      %v3858 = vsel %vm774, %v3857, %v3856
      %v3859 = vrot.slane %v3852, 5
      %v3860 = vsel %vm777, %v3859, %v3858
      %v3861 = vrot.slane %v3847, 7
      %v3862 = vsel %vm771, %v3861, %v3844
      %v3863 = vrot.slane %v3850, 6
      %v3864 = vsel %vm774, %v3863, %v3862
      %v3865 = vrot.slane %v3853, 5
      %v3866 = vsel %vm777, %v3865, %v3864
      %v3867 = vrot.slane %v3848, 7
      %v3868 = vsel %vm771, %v3867, %v3845
      %v3869 = vrot.slane %v3851, 6
      %v3870 = vsel %vm774, %v3869, %v3868
      %v3871 = vrot.slane %v3854, 5
      %v3872 = vsel %vm777, %v3871, %v3870
      %v3873 = vpack.c.b16 %v3860, %v3860
      %v3874 = vpack.c.b16 %v3866, %v3866
      %v3875 = vpack.c.b16 %v3872, %v3872
      %3876 = vrot.lane.b32.xlu0 %v3873, 109
      %v3877 = vpop.permute.xlu0 %3876
      %3878 = vrot.lane.b32.xlu0 %v3874, 109
      %v3879 = vpop.permute.xlu0 %3878
      %3880 = vrot.lane.b32.xlu0 %v3875, 109
      %v3881 = vpop.permute.xlu0 %3880
      %v3882 = vsel %vm1364, %v3877, %v3879
      %v3883 = vsel %vm1364, %v3879, %v3881
      %3887 = vst [vmem:[#allocation3 + $0xc8] sm:$0x30] %v3882
      %3888 = vst [vmem:[#allocation3 + $0xd0] sm:$0x30] %v3883
      %3889 = vst.msk [vmem:[#allocation3 + $0xd8] sm:$0x30] %vm1087, %v3881
      %v3890 = vld [vmem:[%s658] ss:$4 sm:$0x7]
      %v3891 = vld [vmem:[%s660] ss:$4 sm:$0x7]
      %v3892 = vld [vmem:[%s662] ss:$4 sm:$0x7]
      %v3893 = vld [vmem:[%s664] ss:$4 sm:$0x7]
      %v3898 = vlaneseq
      %v3899 = vshrl.u32 %v3898, 7
      %v3900 = vsub.s32 0, %v3899
      %v3901 = vrot.slane %v3890, %v3900
      %v3902 = vlaneseq
      %v3903 = vshrl.u32 %v3902, 7
      %v3904 = vsub.s32 1, %v3903
      %v3905 = vrot.slane %v3890, %v3904
      %v3906 = vlaneseq
      %v3907 = vshrl.u32 %v3906, 7
      %v3908 = vsub.s32 2, %v3907
      %v3909 = vrot.slane %v3890, %v3908
      %v3910 = vlaneseq
      %v3911 = vshrl.u32 %v3910, 7
      %v3912 = vsub.s32 0, %v3911
      %v3913 = vrot.slane %v3891, %v3912
      %v3914 = vlaneseq
      %v3915 = vshrl.u32 %v3914, 7
      %v3916 = vsub.s32 1, %v3915
      %v3917 = vrot.slane %v3891, %v3916
      %v3918 = vlaneseq
      %v3919 = vshrl.u32 %v3918, 7
      %v3920 = vsub.s32 2, %v3919
      %v3921 = vrot.slane %v3891, %v3920
      %v3922 = vlaneseq
      %v3923 = vshrl.u32 %v3922, 7
      %v3924 = vsub.s32 0, %v3923
      %v3925 = vrot.slane %v3892, %v3924
      %v3926 = vlaneseq
      %v3927 = vshrl.u32 %v3926, 7
      %v3928 = vsub.s32 1, %v3927
      %v3929 = vrot.slane %v3892, %v3928
      %v3930 = vlaneseq
      %v3931 = vshrl.u32 %v3930, 7
      %v3932 = vsub.s32 2, %v3931
      %v3933 = vrot.slane %v3892, %v3932
      %v3934 = vlaneseq
      %v3935 = vshrl.u32 %v3934, 7
      %v3936 = vsub.s32 0, %v3935
      %v3937 = vrot.slane %v3893, %v3936
      %v3938 = vlaneseq
      %v3939 = vshrl.u32 %v3938, 7
      %v3940 = vsub.s32 1, %v3939
      %v3941 = vrot.slane %v3893, %v3940
      %v3942 = vlaneseq
      %v3943 = vshrl.u32 %v3942, 7
      %v3944 = vsub.s32 2, %v3943
      %v3945 = vrot.slane %v3893, %v3944
      %v3958 = vpack.c.bf16 %v3901, %v3901
      %v3959 = vpack.c.bf16 %v3905, %v3905
      %v3960 = vpack.c.bf16 %v3909, %v3909
      %v3961 = vpack.c.bf16 %v3913, %v3913
      %v3962 = vpack.c.bf16 %v3917, %v3917
      %v3963 = vpack.c.bf16 %v3921, %v3921
      %v3964 = vpack.c.bf16 %v3925, %v3925
      %v3965 = vpack.c.bf16 %v3929, %v3929
      %v3966 = vpack.c.bf16 %v3933, %v3933
      %v3967 = vpack.c.bf16 %v3937, %v3937
      %v3968 = vpack.c.bf16 %v3941, %v3941
      %v3969 = vpack.c.bf16 %v3945, %v3945
      %v3982 = vunpack.c.l.b16 %v3958
      %v3983 = vunpack.c.l.b16 %v3959
      %v3984 = vunpack.c.l.b16 %v3960
      %v3985 = vunpack.c.l.b16 %v3961
      %v3986 = vunpack.c.l.b16 %v3962
      %v3987 = vunpack.c.l.b16 %v3963
      %v3988 = vunpack.c.l.b16 %v3964
      %v3989 = vunpack.c.l.b16 %v3965
      %v3990 = vunpack.c.l.b16 %v3966
      %v3991 = vunpack.c.l.b16 %v3967
      %v3992 = vunpack.c.l.b16 %v3968
      %v3993 = vunpack.c.l.b16 %v3969
      %v3994 = vrot.slane %v3982, 4
      %v3995 = vrot.slane %v3985, 3
      %v3996 = vsel %vm907, %v3995, %v3994
      %v3997 = vrot.slane %v3988, 2
      %v3998 = vsel %vm910, %v3997, %v3996
      %v3999 = vrot.slane %v3991, 1
      %v4000 = vsel %vm913, %v3999, %v3998
      %v4001 = vrot.slane %v3983, 4
      %v4002 = vrot.slane %v3986, 3
      %v4003 = vsel %vm907, %v4002, %v4001
      %v4004 = vrot.slane %v3989, 2
      %v4005 = vsel %vm910, %v4004, %v4003
      %v4006 = vrot.slane %v3992, 1
      %v4007 = vsel %vm913, %v4006, %v4005
      %v4008 = vrot.slane %v3984, 4
      %v4009 = vrot.slane %v3987, 3
      %v4010 = vsel %vm907, %v4009, %v4008
      %v4011 = vrot.slane %v3990, 2
      %v4012 = vsel %vm910, %v4011, %v4010
      %v4013 = vrot.slane %v3993, 1
      %v4014 = vsel %vm913, %v4013, %v4012
      %v4015 = vpack.c.b16 %v4000, %v4000
      %v4016 = vpack.c.b16 %v4007, %v4007
      %v4017 = vpack.c.b16 %v4014, %v4014
      %4018 = vrot.lane.b32.xlu0 %v4015, 108
      %v4019 = vpop.permute.xlu0 %4018
      %4020 = vrot.lane.b32.xlu0 %v4016, 108
      %v4021 = vpop.permute.xlu0 %4020
      %4022 = vrot.lane.b32.xlu0 %v4017, 108
      %v4023 = vpop.permute.xlu0 %4022
      %v4024 = vsel %vm1507, %v4019, %v4021
      %v4025 = vsel %vm1507, %v4021, %v4023
      %4029 = vst [vmem:[#allocation3 + $0xc8] sm:$0xc0] %v4024
      %4030 = vst [vmem:[#allocation3 + $0xd0] sm:$0xc0] %v4025
      %4031 = vst.msk [vmem:[#allocation3 + $0xd8] sm:$0xc0] %vm1231, %v4023
      %v4032 = vld [vmem:[%s658] ss:$4 sm:$0x7]
      %v4033 = vld [vmem:[%s660] ss:$4 sm:$0x7]
      %v4034 = vld [vmem:[%s662] ss:$4 sm:$0x7]
      %v4035 = vld [vmem:[%s664] ss:$4 sm:$0x7]
      %v4040 = vlaneseq
      %v4041 = vshrl.u32 %v4040, 7
      %v4042 = vsub.s32 0, %v4041
      %v4043 = vrot.slane %v4032, %v4042
      %v4044 = vlaneseq
      %v4045 = vshrl.u32 %v4044, 7
      %v4046 = vsub.s32 1, %v4045
      %v4047 = vrot.slane %v4032, %v4046
      %v4048 = vlaneseq
      %v4049 = vshrl.u32 %v4048, 7
      %v4050 = vsub.s32 2, %v4049
      %v4051 = vrot.slane %v4032, %v4050
      %v4052 = vlaneseq
      %v4053 = vshrl.u32 %v4052, 7
      %v4054 = vsub.s32 0, %v4053
      %v4055 = vrot.slane %v4033, %v4054
      %v4056 = vlaneseq
      %v4057 = vshrl.u32 %v4056, 7
      %v4058 = vsub.s32 1, %v4057
      %v4059 = vrot.slane %v4033, %v4058
      %v4060 = vlaneseq
      %v4061 = vshrl.u32 %v4060, 7
      %v4062 = vsub.s32 2, %v4061
      %v4063 = vrot.slane %v4033, %v4062
      %v4064 = vlaneseq
      %v4065 = vshrl.u32 %v4064, 7
      %v4066 = vsub.s32 0, %v4065
      %v4067 = vrot.slane %v4034, %v4066
      %v4068 = vlaneseq
      %v4069 = vshrl.u32 %v4068, 7
      %v4070 = vsub.s32 1, %v4069
      %v4071 = vrot.slane %v4034, %v4070
      %v4072 = vlaneseq
      %v4073 = vshrl.u32 %v4072, 7
      %v4074 = vsub.s32 2, %v4073
      %v4075 = vrot.slane %v4034, %v4074
      %v4076 = vlaneseq
      %v4077 = vshrl.u32 %v4076, 7
      %v4078 = vsub.s32 0, %v4077
      %v4079 = vrot.slane %v4035, %v4078
      %v4080 = vlaneseq
      %v4081 = vshrl.u32 %v4080, 7
      %v4082 = vsub.s32 1, %v4081
      %v4083 = vrot.slane %v4035, %v4082
      %v4084 = vlaneseq
      %v4085 = vshrl.u32 %v4084, 7
      %v4086 = vsub.s32 2, %v4085
      %v4087 = vrot.slane %v4035, %v4086
      %v4100 = vpack.c.bf16 %v4043, %v4043
      %v4101 = vpack.c.bf16 %v4047, %v4047
      %v4102 = vpack.c.bf16 %v4051, %v4051
      %v4103 = vpack.c.bf16 %v4055, %v4055
      %v4104 = vpack.c.bf16 %v4059, %v4059
      %v4105 = vpack.c.bf16 %v4063, %v4063
      %v4106 = vpack.c.bf16 %v4067, %v4067
      %v4107 = vpack.c.bf16 %v4071, %v4071
      %v4108 = vpack.c.bf16 %v4075, %v4075
      %v4109 = vpack.c.bf16 %v4079, %v4079
      %v4110 = vpack.c.bf16 %v4083, %v4083
      %v4111 = vpack.c.bf16 %v4087, %v4087
      %v4124 = vunpack.c.l.b16 %v4100
      %v4125 = vunpack.c.l.b16 %v4101
      %v4126 = vunpack.c.l.b16 %v4102
      %v4127 = vunpack.c.l.b16 %v4103
      %v4128 = vunpack.c.l.b16 %v4104
      %v4129 = vunpack.c.l.b16 %v4105
      %v4130 = vunpack.c.l.b16 %v4106
      %v4131 = vunpack.c.l.b16 %v4107
      %v4132 = vunpack.c.l.b16 %v4108
      %v4133 = vunpack.c.l.b16 %v4109
      %v4134 = vunpack.c.l.b16 %v4110
      %v4135 = vunpack.c.l.b16 %v4111
      %v4136 = vrot.slane %v4127, 7
      %v4137 = vsel %vm771, %v4136, %v4124
      %v4138 = vrot.slane %v4130, 6
      %v4139 = vsel %vm774, %v4138, %v4137
      %v4140 = vrot.slane %v4133, 5
      %v4141 = vsel %vm777, %v4140, %v4139
      %v4142 = vrot.slane %v4128, 7
      %v4143 = vsel %vm771, %v4142, %v4125
      %v4144 = vrot.slane %v4131, 6
      %v4145 = vsel %vm774, %v4144, %v4143
      %v4146 = vrot.slane %v4134, 5
      %v4147 = vsel %vm777, %v4146, %v4145
      %v4148 = vrot.slane %v4129, 7
      %v4149 = vsel %vm771, %v4148, %v4126
      %v4150 = vrot.slane %v4132, 6
      %v4151 = vsel %vm774, %v4150, %v4149
      %v4152 = vrot.slane %v4135, 5
      %v4153 = vsel %vm777, %v4152, %v4151
      %v4154 = vpack.c.b16 %v4141, %v4141
      %v4155 = vpack.c.b16 %v4147, %v4147
      %v4156 = vpack.c.b16 %v4153, %v4153
      %4157 = vrot.lane.b32.xlu0 %v4154, 92
      %v4158 = vpop.permute.xlu0 %4157
      %4159 = vrot.lane.b32.xlu0 %v4155, 92
      %v4160 = vpop.permute.xlu0 %4159
      %4161 = vrot.lane.b32.xlu0 %v4156, 92
      %v4162 = vpop.permute.xlu0 %4161
      %v4163 = vsel %vm1647, %v4158, %v4160
      %v4164 = vsel %vm1647, %v4160, %v4162
      %4168 = vst [vmem:[#allocation3 + $0xf0] sm:$0x3] %v4163
      %4169 = vst [vmem:[#allocation3 + $0xf8] sm:$0x3] %v4164
      %4170 = vst.msk [vmem:[#allocation3 + $0x100] sm:$0x3] %vm799, %v4162
      %v4171 = vld [vmem:[%s658] ss:$4 sm:$0x7]
      %v4172 = vld [vmem:[%s660] ss:$4 sm:$0x7]
      %v4173 = vld [vmem:[%s662] ss:$4 sm:$0x7]
      %v4174 = vld [vmem:[%s664] ss:$4 sm:$0x7]
      %v4179 = vlaneseq
      %v4180 = vshrl.u32 %v4179, 7
      %v4181 = vsub.s32 0, %v4180
      %v4182 = vrot.slane %v4171, %v4181
      %v4183 = vlaneseq
      %v4184 = vshrl.u32 %v4183, 7
      %v4185 = vsub.s32 1, %v4184
      %v4186 = vrot.slane %v4171, %v4185
      %v4187 = vlaneseq
      %v4188 = vshrl.u32 %v4187, 7
      %v4189 = vsub.s32 2, %v4188
      %v4190 = vrot.slane %v4171, %v4189
      %v4191 = vlaneseq
      %v4192 = vshrl.u32 %v4191, 7
      %v4193 = vsub.s32 0, %v4192
      %v4194 = vrot.slane %v4172, %v4193
      %v4195 = vlaneseq
      %v4196 = vshrl.u32 %v4195, 7
      %v4197 = vsub.s32 1, %v4196
      %v4198 = vrot.slane %v4172, %v4197
      %v4199 = vlaneseq
      %v4200 = vshrl.u32 %v4199, 7
      %v4201 = vsub.s32 2, %v4200
      %v4202 = vrot.slane %v4172, %v4201
      %v4203 = vlaneseq
      %v4204 = vshrl.u32 %v4203, 7
      %v4205 = vsub.s32 0, %v4204
      %v4206 = vrot.slane %v4173, %v4205
      %v4207 = vlaneseq
      %v4208 = vshrl.u32 %v4207, 7
      %v4209 = vsub.s32 1, %v4208
      %v4210 = vrot.slane %v4173, %v4209
      %v4211 = vlaneseq
      %v4212 = vshrl.u32 %v4211, 7
      %v4213 = vsub.s32 2, %v4212
      %v4214 = vrot.slane %v4173, %v4213
      %v4215 = vlaneseq
      %v4216 = vshrl.u32 %v4215, 7
      %v4217 = vsub.s32 0, %v4216
      %v4218 = vrot.slane %v4174, %v4217
      %v4219 = vlaneseq
      %v4220 = vshrl.u32 %v4219, 7
      %v4221 = vsub.s32 1, %v4220
      %v4222 = vrot.slane %v4174, %v4221
      %v4223 = vlaneseq
      %v4224 = vshrl.u32 %v4223, 7
      %v4225 = vsub.s32 2, %v4224
      %v4226 = vrot.slane %v4174, %v4225
      %v4239 = vpack.c.bf16 %v4182, %v4182
      %v4240 = vpack.c.bf16 %v4186, %v4186
      %v4241 = vpack.c.bf16 %v4190, %v4190
      %v4242 = vpack.c.bf16 %v4194, %v4194
      %v4243 = vpack.c.bf16 %v4198, %v4198
      %v4244 = vpack.c.bf16 %v4202, %v4202
      %v4245 = vpack.c.bf16 %v4206, %v4206
      %v4246 = vpack.c.bf16 %v4210, %v4210
      %v4247 = vpack.c.bf16 %v4214, %v4214
      %v4248 = vpack.c.bf16 %v4218, %v4218
      %v4249 = vpack.c.bf16 %v4222, %v4222
      %v4250 = vpack.c.bf16 %v4226, %v4226
      %v4263 = vunpack.c.l.b16 %v4239
      %v4264 = vunpack.c.l.b16 %v4240
      %v4265 = vunpack.c.l.b16 %v4241
      %v4266 = vunpack.c.l.b16 %v4242
      %v4267 = vunpack.c.l.b16 %v4243
      %v4268 = vunpack.c.l.b16 %v4244
      %v4269 = vunpack.c.l.b16 %v4245
      %v4270 = vunpack.c.l.b16 %v4246
      %v4271 = vunpack.c.l.b16 %v4247
      %v4272 = vunpack.c.l.b16 %v4248
      %v4273 = vunpack.c.l.b16 %v4249
      %v4274 = vunpack.c.l.b16 %v4250
      %v4275 = vrot.slane %v4263, 4
      %v4276 = vrot.slane %v4266, 3
      %v4277 = vsel %vm907, %v4276, %v4275
      %v4278 = vrot.slane %v4269, 2
      %v4279 = vsel %vm910, %v4278, %v4277
      %v4280 = vrot.slane %v4272, 1
      %v4281 = vsel %vm913, %v4280, %v4279
      %v4282 = vrot.slane %v4264, 4
      %v4283 = vrot.slane %v4267, 3
      %v4284 = vsel %vm907, %v4283, %v4282
      %v4285 = vrot.slane %v4270, 2
      %v4286 = vsel %vm910, %v4285, %v4284
      %v4287 = vrot.slane %v4273, 1
      %v4288 = vsel %vm913, %v4287, %v4286
      %v4289 = vrot.slane %v4265, 4
      %v4290 = vrot.slane %v4268, 3
      %v4291 = vsel %vm907, %v4290, %v4289
      %v4292 = vrot.slane %v4271, 2
      %v4293 = vsel %vm910, %v4292, %v4291
      %v4294 = vrot.slane %v4274, 1
      %v4295 = vsel %vm913, %v4294, %v4293
      %v4296 = vpack.c.b16 %v4281, %v4281
      %v4297 = vpack.c.b16 %v4288, %v4288
      %v4298 = vpack.c.b16 %v4295, %v4295
      %4299 = vrot.lane.b32.xlu0 %v4296, 91
      %v4300 = vpop.permute.xlu0 %4299
      %4301 = vrot.lane.b32.xlu0 %v4297, 91
      %v4302 = vpop.permute.xlu0 %4301
      %4303 = vrot.lane.b32.xlu0 %v4298, 91
      %v4304 = vpop.permute.xlu0 %4303
      %v4305 = vsel %vm1790, %v4300, %v4302
      %v4306 = vsel %vm1790, %v4302, %v4304
      %4310 = vst [vmem:[#allocation3 + $0xf0] sm:$0xc] %v4305
      %4311 = vst [vmem:[#allocation3 + $0xf8] sm:$0xc] %v4306
      %4312 = vst.msk [vmem:[#allocation3 + $0x100] sm:$0xc] %vm946, %v4304
      %v4313 = vld [vmem:[%s658] ss:$4 sm:$0x7]
      %v4314 = vld [vmem:[%s660] ss:$4 sm:$0x7]
      %v4315 = vld [vmem:[%s662] ss:$4 sm:$0x7]
      %v4316 = vld [vmem:[%s664] ss:$4 sm:$0x7]
      %v4321 = vlaneseq
      %v4322 = vshrl.u32 %v4321, 7
      %v4323 = vsub.s32 0, %v4322
      %v4324 = vrot.slane %v4313, %v4323
      %v4325 = vlaneseq
      %v4326 = vshrl.u32 %v4325, 7
      %v4327 = vsub.s32 1, %v4326
      %v4328 = vrot.slane %v4313, %v4327
      %v4329 = vlaneseq
      %v4330 = vshrl.u32 %v4329, 7
      %v4331 = vsub.s32 2, %v4330
      %v4332 = vrot.slane %v4313, %v4331
      %v4333 = vlaneseq
      %v4334 = vshrl.u32 %v4333, 7
      %v4335 = vsub.s32 0, %v4334
      %v4336 = vrot.slane %v4314, %v4335
      %v4337 = vlaneseq
      %v4338 = vshrl.u32 %v4337, 7
      %v4339 = vsub.s32 1, %v4338
      %v4340 = vrot.slane %v4314, %v4339
      %v4341 = vlaneseq
      %v4342 = vshrl.u32 %v4341, 7
      %v4343 = vsub.s32 2, %v4342
      %v4344 = vrot.slane %v4314, %v4343
      %v4345 = vlaneseq
      %v4346 = vshrl.u32 %v4345, 7
      %v4347 = vsub.s32 0, %v4346
      %v4348 = vrot.slane %v4315, %v4347
      %v4349 = vlaneseq
      %v4350 = vshrl.u32 %v4349, 7
      %v4351 = vsub.s32 1, %v4350
      %v4352 = vrot.slane %v4315, %v4351
      %v4353 = vlaneseq
      %v4354 = vshrl.u32 %v4353, 7
      %v4355 = vsub.s32 2, %v4354
      %v4356 = vrot.slane %v4315, %v4355
      %v4357 = vlaneseq
      %v4358 = vshrl.u32 %v4357, 7
      %v4359 = vsub.s32 0, %v4358
      %v4360 = vrot.slane %v4316, %v4359
      %v4361 = vlaneseq
      %v4362 = vshrl.u32 %v4361, 7
      %v4363 = vsub.s32 1, %v4362
      %v4364 = vrot.slane %v4316, %v4363
      %v4365 = vlaneseq
      %v4366 = vshrl.u32 %v4365, 7
      %v4367 = vsub.s32 2, %v4366
      %v4368 = vrot.slane %v4316, %v4367
      %v4381 = vpack.c.bf16 %v4324, %v4324
      %v4382 = vpack.c.bf16 %v4328, %v4328
      %v4383 = vpack.c.bf16 %v4332, %v4332
      %v4384 = vpack.c.bf16 %v4336, %v4336
      %v4385 = vpack.c.bf16 %v4340, %v4340
      %v4386 = vpack.c.bf16 %v4344, %v4344
      %v4387 = vpack.c.bf16 %v4348, %v4348
      %v4388 = vpack.c.bf16 %v4352, %v4352
      %v4389 = vpack.c.bf16 %v4356, %v4356
      %v4390 = vpack.c.bf16 %v4360, %v4360
      %v4391 = vpack.c.bf16 %v4364, %v4364
      %v4392 = vpack.c.bf16 %v4368, %v4368
      %v4405 = vunpack.c.l.b16 %v4381
      %v4406 = vunpack.c.l.b16 %v4382
      %v4407 = vunpack.c.l.b16 %v4383
      %v4408 = vunpack.c.l.b16 %v4384
      %v4409 = vunpack.c.l.b16 %v4385
      %v4410 = vunpack.c.l.b16 %v4386
      %v4411 = vunpack.c.l.b16 %v4387
      %v4412 = vunpack.c.l.b16 %v4388
      %v4413 = vunpack.c.l.b16 %v4389
      %v4414 = vunpack.c.l.b16 %v4390
      %v4415 = vunpack.c.l.b16 %v4391
      %v4416 = vunpack.c.l.b16 %v4392
      %v4417 = vrot.slane %v4408, 7
      %v4418 = vsel %vm771, %v4417, %v4405
      %v4419 = vrot.slane %v4411, 6
      %v4420 = vsel %vm774, %v4419, %v4418
      %v4421 = vrot.slane %v4414, 5
      %v4422 = vsel %vm777, %v4421, %v4420
      %v4423 = vrot.slane %v4409, 7
      %v4424 = vsel %vm771, %v4423, %v4406
      %v4425 = vrot.slane %v4412, 6
      %v4426 = vsel %vm774, %v4425, %v4424
      %v4427 = vrot.slane %v4415, 5
      %v4428 = vsel %vm777, %v4427, %v4426
      %v4429 = vrot.slane %v4410, 7
      %v4430 = vsel %vm771, %v4429, %v4407
      %v4431 = vrot.slane %v4413, 6
      %v4432 = vsel %vm774, %v4431, %v4430
      %v4433 = vrot.slane %v4416, 5
      %v4434 = vsel %vm777, %v4433, %v4432
      %v4435 = vpack.c.b16 %v4422, %v4422
      %v4436 = vpack.c.b16 %v4428, %v4428
      %v4437 = vpack.c.b16 %v4434, %v4434
      %4438 = vrot.lane.b32.xlu0 %v4435, 90
      %v4439 = vpop.permute.xlu0 %4438
      %4440 = vrot.lane.b32.xlu0 %v4436, 90
      %v4441 = vpop.permute.xlu0 %4440
      %4442 = vrot.lane.b32.xlu0 %v4437, 90
      %v4443 = vpop.permute.xlu0 %4442
      %v4444 = vsel %vm1930, %v4439, %v4441
      %v4445 = vsel %vm1930, %v4441, %v4443
      %4449 = vst [vmem:[#allocation3 + $0xf0] sm:$0x30] %v4444
      %4450 = vst [vmem:[#allocation3 + $0xf8] sm:$0x30] %v4445
      %4451 = vst.msk [vmem:[#allocation3 + $0x100] sm:$0x30] %vm1087, %v4443
      %v4452 = vld [vmem:[%s558] ss:$4 sm:$0x7]
      %v4453 = vld [vmem:[%s560] ss:$4 sm:$0x7]
      %v4454 = vld [vmem:[%s562] ss:$4 sm:$0x7]
      %v4455 = vld [vmem:[%s564] ss:$4 sm:$0x7]
      %v4460 = vlaneseq
      %v4461 = vshrl.u32 %v4460, 7
      %v4462 = vsub.s32 0, %v4461
      %v4463 = vrot.slane %v4452, %v4462
      %v4464 = vlaneseq
      %v4465 = vshrl.u32 %v4464, 7
      %v4466 = vsub.s32 1, %v4465
      %v4467 = vrot.slane %v4452, %v4466
      %v4468 = vlaneseq
      %v4469 = vshrl.u32 %v4468, 7
      %v4470 = vsub.s32 2, %v4469
      %v4471 = vrot.slane %v4452, %v4470
      %v4472 = vlaneseq
      %v4473 = vshrl.u32 %v4472, 7
      %v4474 = vsub.s32 0, %v4473
      %v4475 = vrot.slane %v4453, %v4474
      %v4476 = vlaneseq
      %v4477 = vshrl.u32 %v4476, 7
      %v4478 = vsub.s32 1, %v4477
      %v4479 = vrot.slane %v4453, %v4478
      %v4480 = vlaneseq
      %v4481 = vshrl.u32 %v4480, 7
      %v4482 = vsub.s32 2, %v4481
      %v4483 = vrot.slane %v4453, %v4482
      %v4484 = vlaneseq
      %v4485 = vshrl.u32 %v4484, 7
      %v4486 = vsub.s32 0, %v4485
      %v4487 = vrot.slane %v4454, %v4486
      %v4488 = vlaneseq
      %v4489 = vshrl.u32 %v4488, 7
      %v4490 = vsub.s32 1, %v4489
      %v4491 = vrot.slane %v4454, %v4490
      %v4492 = vlaneseq
      %v4493 = vshrl.u32 %v4492, 7
      %v4494 = vsub.s32 2, %v4493
      %v4495 = vrot.slane %v4454, %v4494
      %v4496 = vlaneseq
      %v4497 = vshrl.u32 %v4496, 7
      %v4498 = vsub.s32 0, %v4497
      %v4499 = vrot.slane %v4455, %v4498
      %v4500 = vlaneseq
      %v4501 = vshrl.u32 %v4500, 7
      %v4502 = vsub.s32 1, %v4501
      %v4503 = vrot.slane %v4455, %v4502
      %v4504 = vlaneseq
      %v4505 = vshrl.u32 %v4504, 7
      %v4506 = vsub.s32 2, %v4505
      %v4507 = vrot.slane %v4455, %v4506
      %v4520 = vpack.c.bf16 %v4463, %v4463
      %v4521 = vpack.c.bf16 %v4467, %v4467
      %v4522 = vpack.c.bf16 %v4471, %v4471
      %v4523 = vpack.c.bf16 %v4475, %v4475
      %v4524 = vpack.c.bf16 %v4479, %v4479
      %v4525 = vpack.c.bf16 %v4483, %v4483
      %v4526 = vpack.c.bf16 %v4487, %v4487
      %v4527 = vpack.c.bf16 %v4491, %v4491
      %v4528 = vpack.c.bf16 %v4495, %v4495
      %v4529 = vpack.c.bf16 %v4499, %v4499
      %v4530 = vpack.c.bf16 %v4503, %v4503
      %v4531 = vpack.c.bf16 %v4507, %v4507
      %v4544 = vunpack.c.l.b16 %v4520
      %v4545 = vunpack.c.l.b16 %v4521
      %v4546 = vunpack.c.l.b16 %v4522
      %v4547 = vunpack.c.l.b16 %v4523
      %v4548 = vunpack.c.l.b16 %v4524
      %v4549 = vunpack.c.l.b16 %v4525
      %v4550 = vunpack.c.l.b16 %v4526
      %v4551 = vunpack.c.l.b16 %v4527
      %v4552 = vunpack.c.l.b16 %v4528
      %v4553 = vunpack.c.l.b16 %v4529
      %v4554 = vunpack.c.l.b16 %v4530
      %v4555 = vunpack.c.l.b16 %v4531
      %v4556 = vrot.slane %v4547, 7
      %v4557 = vsel %vm771, %v4556, %v4544
      %v4558 = vrot.slane %v4550, 6
      %v4559 = vsel %vm774, %v4558, %v4557
      %v4560 = vrot.slane %v4553, 5
      %v4561 = vsel %vm777, %v4560, %v4559
      %v4562 = vrot.slane %v4548, 7
      %v4563 = vsel %vm771, %v4562, %v4545
      %v4564 = vrot.slane %v4551, 6
      %v4565 = vsel %vm774, %v4564, %v4563
      %v4566 = vrot.slane %v4554, 5
      %v4567 = vsel %vm777, %v4566, %v4565
      %v4568 = vrot.slane %v4549, 7
      %v4569 = vsel %vm771, %v4568, %v4546
      %v4570 = vrot.slane %v4552, 6
      %v4571 = vsel %vm774, %v4570, %v4569
      %v4572 = vrot.slane %v4555, 5
      %v4573 = vsel %vm777, %v4572, %v4571
      %v4574 = vpack.c.b16 %v4561, %v4561
      %v4575 = vpack.c.b16 %v4567, %v4567
      %v4576 = vpack.c.b16 %v4573, %v4573
      %4577 = vrot.lane.b32.xlu0 %v4574, 32
      %v4578 = vpop.permute.xlu0 %4577
      %4579 = vrot.lane.b32.xlu0 %v4575, 32
      %v4580 = vpop.permute.xlu0 %4579
      %4581 = vrot.lane.b32.xlu0 %v4576, 32
      %v4582 = vpop.permute.xlu0 %4581
      %vm4583 = vcmask 261120
      %v4584 = vsel %vm4583, %v4578, %v4580
      %v4585 = vsel %vm4583, %v4580, %v4582
      %vm4589 = vcmask 1041664
      %4590 = vst.msk [vmem:[#allocation3 + $0x10] sm:$0x3] %vm4589, %v4578
      %4591 = vst [vmem:[#allocation3 + $0x18] sm:$0x3] %v4584
      %vm4592 = vcmask 517120
      %4593 = vst.msk [vmem:[#allocation3 + $0x20] sm:$0x3] %vm4592, %v4585
      %v4594 = vld [vmem:[%s558] ss:$4 sm:$0x7]
      %v4595 = vld [vmem:[%s560] ss:$4 sm:$0x7]
      %v4596 = vld [vmem:[%s562] ss:$4 sm:$0x7]
      %v4597 = vld [vmem:[%s564] ss:$4 sm:$0x7]
      %v4602 = vlaneseq
      %v4603 = vshrl.u32 %v4602, 7
      %v4604 = vsub.s32 0, %v4603
      %v4605 = vrot.slane %v4594, %v4604
      %v4606 = vlaneseq
      %v4607 = vshrl.u32 %v4606, 7
      %v4608 = vsub.s32 1, %v4607
      %v4609 = vrot.slane %v4594, %v4608
      %v4610 = vlaneseq
      %v4611 = vshrl.u32 %v4610, 7
      %v4612 = vsub.s32 2, %v4611
      %v4613 = vrot.slane %v4594, %v4612
      %v4614 = vlaneseq
      %v4615 = vshrl.u32 %v4614, 7
      %v4616 = vsub.s32 0, %v4615
      %v4617 = vrot.slane %v4595, %v4616
      %v4618 = vlaneseq
      %v4619 = vshrl.u32 %v4618, 7
      %v4620 = vsub.s32 1, %v4619
      %v4621 = vrot.slane %v4595, %v4620
      %v4622 = vlaneseq
      %v4623 = vshrl.u32 %v4622, 7
      %v4624 = vsub.s32 2, %v4623
      %v4625 = vrot.slane %v4595, %v4624
      %v4626 = vlaneseq
      %v4627 = vshrl.u32 %v4626, 7
      %v4628 = vsub.s32 0, %v4627
      %v4629 = vrot.slane %v4596, %v4628
      %v4630 = vlaneseq
      %v4631 = vshrl.u32 %v4630, 7
      %v4632 = vsub.s32 1, %v4631
      %v4633 = vrot.slane %v4596, %v4632
      %v4634 = vlaneseq
      %v4635 = vshrl.u32 %v4634, 7
      %v4636 = vsub.s32 2, %v4635
      %v4637 = vrot.slane %v4596, %v4636
      %v4638 = vlaneseq
      %v4639 = vshrl.u32 %v4638, 7
      %v4640 = vsub.s32 0, %v4639
      %v4641 = vrot.slane %v4597, %v4640
      %v4642 = vlaneseq
      %v4643 = vshrl.u32 %v4642, 7
      %v4644 = vsub.s32 1, %v4643
      %v4645 = vrot.slane %v4597, %v4644
      %v4646 = vlaneseq
      %v4647 = vshrl.u32 %v4646, 7
      %v4648 = vsub.s32 2, %v4647
      %v4649 = vrot.slane %v4597, %v4648
      %v4662 = vpack.c.bf16 %v4605, %v4605
      %v4663 = vpack.c.bf16 %v4609, %v4609
      %v4664 = vpack.c.bf16 %v4613, %v4613
      %v4665 = vpack.c.bf16 %v4617, %v4617
      %v4666 = vpack.c.bf16 %v4621, %v4621
      %v4667 = vpack.c.bf16 %v4625, %v4625
      %v4668 = vpack.c.bf16 %v4629, %v4629
      %v4669 = vpack.c.bf16 %v4633, %v4633
      %v4670 = vpack.c.bf16 %v4637, %v4637
      %v4671 = vpack.c.bf16 %v4641, %v4641
      %v4672 = vpack.c.bf16 %v4645, %v4645
      %v4673 = vpack.c.bf16 %v4649, %v4649
      %v4686 = vunpack.c.l.b16 %v4662
      %v4687 = vunpack.c.l.b16 %v4663
      %v4688 = vunpack.c.l.b16 %v4664
      %v4689 = vunpack.c.l.b16 %v4665
      %v4690 = vunpack.c.l.b16 %v4666
      %v4691 = vunpack.c.l.b16 %v4667
      %v4692 = vunpack.c.l.b16 %v4668
      %v4693 = vunpack.c.l.b16 %v4669
      %v4694 = vunpack.c.l.b16 %v4670
      %v4695 = vunpack.c.l.b16 %v4671
      %v4696 = vunpack.c.l.b16 %v4672
      %v4697 = vunpack.c.l.b16 %v4673
      %v4698 = vrot.slane %v4686, 4
      %v4699 = vrot.slane %v4689, 3
      %v4700 = vsel %vm907, %v4699, %v4698
      %v4701 = vrot.slane %v4692, 2
      %v4702 = vsel %vm910, %v4701, %v4700
      %v4703 = vrot.slane %v4695, 1
      %v4704 = vsel %vm913, %v4703, %v4702
      %v4705 = vrot.slane %v4687, 4
      %v4706 = vrot.slane %v4690, 3
      %v4707 = vsel %vm907, %v4706, %v4705
      %v4708 = vrot.slane %v4693, 2
      %v4709 = vsel %vm910, %v4708, %v4707
      %v4710 = vrot.slane %v4696, 1
      %v4711 = vsel %vm913, %v4710, %v4709
      %v4712 = vrot.slane %v4688, 4
      %v4713 = vrot.slane %v4691, 3
      %v4714 = vsel %vm907, %v4713, %v4712
      %v4715 = vrot.slane %v4694, 2
      %v4716 = vsel %vm910, %v4715, %v4714
      %v4717 = vrot.slane %v4697, 1
      %v4718 = vsel %vm913, %v4717, %v4716
      %v4719 = vpack.c.b16 %v4704, %v4704
      %v4720 = vpack.c.b16 %v4711, %v4711
      %v4721 = vpack.c.b16 %v4718, %v4718
      %4722 = vrot.lane.b32.xlu0 %v4719, 31
      %v4723 = vpop.permute.xlu0 %4722
      %4724 = vrot.lane.b32.xlu0 %v4720, 31
      %v4725 = vpop.permute.xlu0 %4724
      %4726 = vrot.lane.b32.xlu0 %v4721, 31
      %v4727 = vpop.permute.xlu0 %4726
      %vm4728 = vcmask 252928
      %v4729 = vsel %vm4728, %v4723, %v4725
      %v4730 = vsel %vm4728, %v4725, %v4727
      %vm4734 = vcmask 1043714
      %4735 = vst.msk [vmem:[#allocation3 + $0x10] sm:$0xc] %vm4734, %v4723
      %4736 = vst [vmem:[#allocation3 + $0x18] sm:$0xc] %v4729
      %vm4737 = vcmask 519170
      %4738 = vst.msk [vmem:[#allocation3 + $0x20] sm:$0xc] %vm4737, %v4730
      %v4739 = vld [vmem:[%s558] ss:$4 sm:$0x7]
      %v4740 = vld [vmem:[%s560] ss:$4 sm:$0x7]
      %v4741 = vld [vmem:[%s562] ss:$4 sm:$0x7]
      %v4742 = vld [vmem:[%s564] ss:$4 sm:$0x7]
      %v4747 = vlaneseq
      %v4748 = vshrl.u32 %v4747, 7
      %v4749 = vsub.s32 0, %v4748
      %v4750 = vrot.slane %v4739, %v4749
      %v4751 = vlaneseq
      %v4752 = vshrl.u32 %v4751, 7
      %v4753 = vsub.s32 1, %v4752
      %v4754 = vrot.slane %v4739, %v4753
      %v4755 = vlaneseq
      %v4756 = vshrl.u32 %v4755, 7
      %v4757 = vsub.s32 2, %v4756
      %v4758 = vrot.slane %v4739, %v4757
      %v4759 = vlaneseq
      %v4760 = vshrl.u32 %v4759, 7
      %v4761 = vsub.s32 0, %v4760
      %v4762 = vrot.slane %v4740, %v4761
      %v4763 = vlaneseq
      %v4764 = vshrl.u32 %v4763, 7
      %v4765 = vsub.s32 1, %v4764
      %v4766 = vrot.slane %v4740, %v4765
      %v4767 = vlaneseq
      %v4768 = vshrl.u32 %v4767, 7
      %v4769 = vsub.s32 2, %v4768
      %v4770 = vrot.slane %v4740, %v4769
      %v4771 = vlaneseq
      %v4772 = vshrl.u32 %v4771, 7
      %v4773 = vsub.s32 0, %v4772
      %v4774 = vrot.slane %v4741, %v4773
      %v4775 = vlaneseq
      %v4776 = vshrl.u32 %v4775, 7
      %v4777 = vsub.s32 1, %v4776
      %v4778 = vrot.slane %v4741, %v4777
      %v4779 = vlaneseq
      %v4780 = vshrl.u32 %v4779, 7
      %v4781 = vsub.s32 2, %v4780
      %v4782 = vrot.slane %v4741, %v4781
      %v4783 = vlaneseq
      %v4784 = vshrl.u32 %v4783, 7
      %v4785 = vsub.s32 0, %v4784
      %v4786 = vrot.slane %v4742, %v4785
      %v4787 = vlaneseq
      %v4788 = vshrl.u32 %v4787, 7
      %v4789 = vsub.s32 1, %v4788
      %v4790 = vrot.slane %v4742, %v4789
      %v4791 = vlaneseq
      %v4792 = vshrl.u32 %v4791, 7
      %v4793 = vsub.s32 2, %v4792
      %v4794 = vrot.slane %v4742, %v4793
      %v4807 = vpack.c.bf16 %v4750, %v4750
      %v4808 = vpack.c.bf16 %v4754, %v4754
      %v4809 = vpack.c.bf16 %v4758, %v4758
      %v4810 = vpack.c.bf16 %v4762, %v4762
      %v4811 = vpack.c.bf16 %v4766, %v4766
      %v4812 = vpack.c.bf16 %v4770, %v4770
      %v4813 = vpack.c.bf16 %v4774, %v4774
      %v4814 = vpack.c.bf16 %v4778, %v4778
      %v4815 = vpack.c.bf16 %v4782, %v4782
      %v4816 = vpack.c.bf16 %v4786, %v4786
      %v4817 = vpack.c.bf16 %v4790, %v4790
      %v4818 = vpack.c.bf16 %v4794, %v4794
      %v4831 = vunpack.c.l.b16 %v4807
      %v4832 = vunpack.c.l.b16 %v4808
      %v4833 = vunpack.c.l.b16 %v4809
      %v4834 = vunpack.c.l.b16 %v4810
      %v4835 = vunpack.c.l.b16 %v4811
      %v4836 = vunpack.c.l.b16 %v4812
      %v4837 = vunpack.c.l.b16 %v4813
      %v4838 = vunpack.c.l.b16 %v4814
      %v4839 = vunpack.c.l.b16 %v4815
      %v4840 = vunpack.c.l.b16 %v4816
      %v4841 = vunpack.c.l.b16 %v4817
      %v4842 = vunpack.c.l.b16 %v4818
      %v4843 = vrot.slane %v4834, 7
      %v4844 = vsel %vm771, %v4843, %v4831
      %v4845 = vrot.slane %v4837, 6
      %v4846 = vsel %vm774, %v4845, %v4844
      %v4847 = vrot.slane %v4840, 5
      %v4848 = vsel %vm777, %v4847, %v4846
      %v4849 = vrot.slane %v4835, 7
      %v4850 = vsel %vm771, %v4849, %v4832
      %v4851 = vrot.slane %v4838, 6
      %v4852 = vsel %vm774, %v4851, %v4850
      %v4853 = vrot.slane %v4841, 5
      %v4854 = vsel %vm777, %v4853, %v4852
      %v4855 = vrot.slane %v4836, 7
      %v4856 = vsel %vm771, %v4855, %v4833
      %v4857 = vrot.slane %v4839, 6
      %v4858 = vsel %vm774, %v4857, %v4856
      %v4859 = vrot.slane %v4842, 5
      %v4860 = vsel %vm777, %v4859, %v4858
      %v4861 = vpack.c.b16 %v4848, %v4848
      %v4862 = vpack.c.b16 %v4854, %v4854
      %v4863 = vpack.c.b16 %v4860, %v4860
      %4864 = vrot.lane.b32.xlu0 %v4861, 30
      %v4865 = vpop.permute.xlu0 %4864
      %4866 = vrot.lane.b32.xlu0 %v4862, 30
      %v4867 = vpop.permute.xlu0 %4866
      %4868 = vrot.lane.b32.xlu0 %v4863, 30
      %v4869 = vpop.permute.xlu0 %4868
      %vm4870 = vcmask 244736
      %v4871 = vsel %vm4870, %v4865, %v4867
      %v4872 = vsel %vm4870, %v4867, %v4869
      %vm4876 = vcmask 1045764
      %4877 = vst.msk [vmem:[#allocation3 + $0x10] sm:$0x30] %vm4876, %v4865
      %4878 = vst [vmem:[#allocation3 + $0x18] sm:$0x30] %v4871
      %vm4879 = vcmask 521220
      %4880 = vst.msk [vmem:[#allocation3 + $0x20] sm:$0x30] %vm4879, %v4872
      %v4881 = vld [vmem:[%s558] ss:$4 sm:$0x7]
      %v4882 = vld [vmem:[%s560] ss:$4 sm:$0x7]
      %v4883 = vld [vmem:[%s562] ss:$4 sm:$0x7]
      %v4884 = vld [vmem:[%s564] ss:$4 sm:$0x7]
      %v4889 = vlaneseq
      %v4890 = vshrl.u32 %v4889, 7
      %v4891 = vsub.s32 0, %v4890
      %v4892 = vrot.slane %v4881, %v4891
      %v4893 = vlaneseq
      %v4894 = vshrl.u32 %v4893, 7
      %v4895 = vsub.s32 1, %v4894
      %v4896 = vrot.slane %v4881, %v4895
      %v4897 = vlaneseq
      %v4898 = vshrl.u32 %v4897, 7
      %v4899 = vsub.s32 2, %v4898
      %v4900 = vrot.slane %v4881, %v4899
      %v4901 = vlaneseq
      %v4902 = vshrl.u32 %v4901, 7
      %v4903 = vsub.s32 0, %v4902
      %v4904 = vrot.slane %v4882, %v4903
      %v4905 = vlaneseq
      %v4906 = vshrl.u32 %v4905, 7
      %v4907 = vsub.s32 1, %v4906
      %v4908 = vrot.slane %v4882, %v4907
      %v4909 = vlaneseq
      %v4910 = vshrl.u32 %v4909, 7
      %v4911 = vsub.s32 2, %v4910
      %v4912 = vrot.slane %v4882, %v4911
      %v4913 = vlaneseq
      %v4914 = vshrl.u32 %v4913, 7
      %v4915 = vsub.s32 0, %v4914
      %v4916 = vrot.slane %v4883, %v4915
      %v4917 = vlaneseq
      %v4918 = vshrl.u32 %v4917, 7
      %v4919 = vsub.s32 1, %v4918
      %v4920 = vrot.slane %v4883, %v4919
      %v4921 = vlaneseq
      %v4922 = vshrl.u32 %v4921, 7
      %v4923 = vsub.s32 2, %v4922
      %v4924 = vrot.slane %v4883, %v4923
      %v4925 = vlaneseq
      %v4926 = vshrl.u32 %v4925, 7
      %v4927 = vsub.s32 0, %v4926
      %v4928 = vrot.slane %v4884, %v4927
      %v4929 = vlaneseq
      %v4930 = vshrl.u32 %v4929, 7
      %v4931 = vsub.s32 1, %v4930
      %v4932 = vrot.slane %v4884, %v4931
      %v4933 = vlaneseq
      %v4934 = vshrl.u32 %v4933, 7
      %v4935 = vsub.s32 2, %v4934
      %v4936 = vrot.slane %v4884, %v4935
      %v4949 = vpack.c.bf16 %v4892, %v4892
      %v4950 = vpack.c.bf16 %v4896, %v4896
      %v4951 = vpack.c.bf16 %v4900, %v4900
      %v4952 = vpack.c.bf16 %v4904, %v4904
      %v4953 = vpack.c.bf16 %v4908, %v4908
      %v4954 = vpack.c.bf16 %v4912, %v4912
      %v4955 = vpack.c.bf16 %v4916, %v4916
      %v4956 = vpack.c.bf16 %v4920, %v4920
      %v4957 = vpack.c.bf16 %v4924, %v4924
      %v4958 = vpack.c.bf16 %v4928, %v4928
      %v4959 = vpack.c.bf16 %v4932, %v4932
      %v4960 = vpack.c.bf16 %v4936, %v4936
      %v4973 = vunpack.c.l.b16 %v4949
      %v4974 = vunpack.c.l.b16 %v4950
      %v4975 = vunpack.c.l.b16 %v4951
      %v4976 = vunpack.c.l.b16 %v4952
      %v4977 = vunpack.c.l.b16 %v4953
      %v4978 = vunpack.c.l.b16 %v4954
      %v4979 = vunpack.c.l.b16 %v4955
      %v4980 = vunpack.c.l.b16 %v4956
      %v4981 = vunpack.c.l.b16 %v4957
      %v4982 = vunpack.c.l.b16 %v4958
      %v4983 = vunpack.c.l.b16 %v4959
      %v4984 = vunpack.c.l.b16 %v4960
      %v4985 = vrot.slane %v4973, 4
      %v4986 = vrot.slane %v4976, 3
      %v4987 = vsel %vm907, %v4986, %v4985
      %v4988 = vrot.slane %v4979, 2
      %v4989 = vsel %vm910, %v4988, %v4987
      %v4990 = vrot.slane %v4982, 1
      %v4991 = vsel %vm913, %v4990, %v4989
      %v4992 = vrot.slane %v4974, 4
      %v4993 = vrot.slane %v4977, 3
      %v4994 = vsel %vm907, %v4993, %v4992
      %v4995 = vrot.slane %v4980, 2
      %v4996 = vsel %vm910, %v4995, %v4994
      %v4997 = vrot.slane %v4983, 1
      %v4998 = vsel %vm913, %v4997, %v4996
      %v4999 = vrot.slane %v4975, 4
      %v5000 = vrot.slane %v4978, 3
      %v5001 = vsel %vm907, %v5000, %v4999
      %v5002 = vrot.slane %v4981, 2
      %v5003 = vsel %vm910, %v5002, %v5001
      %v5004 = vrot.slane %v4984, 1
      %v5005 = vsel %vm913, %v5004, %v5003
      %v5006 = vpack.c.b16 %v4991, %v4991
      %v5007 = vpack.c.b16 %v4998, %v4998
      %v5008 = vpack.c.b16 %v5005, %v5005
      %5009 = vrot.lane.b32.xlu0 %v5006, 14
      %v5010 = vpop.permute.xlu0 %5009
      %5011 = vrot.lane.b32.xlu0 %v5007, 14
      %v5012 = vpop.permute.xlu0 %5011
      %5013 = vrot.lane.b32.xlu0 %v5008, 14
      %v5014 = vpop.permute.xlu0 %5013
      %vm5015 = vcmask 113664
      %v5016 = vsel %vm5015, %v5010, %v5012
      %v5017 = vsel %vm5015, %v5012, %v5014
      %vm5021 = vcmask 1047814
      %5022 = vst.msk [vmem:[#allocation3 + $0x10] sm:$0xc0] %vm5021, %v5010
      %5023 = vst [vmem:[#allocation3 + $0x18] sm:$0xc0] %v5016
      %vm5024 = vcmask 523270
      %5025 = vst.msk [vmem:[#allocation3 + $0x20] sm:$0xc0] %vm5024, %v5017
      %v5026 = vld [vmem:[%s558] ss:$4 sm:$0x7]
      %v5027 = vld [vmem:[%s560] ss:$4 sm:$0x7]
      %v5028 = vld [vmem:[%s562] ss:$4 sm:$0x7]
      %v5029 = vld [vmem:[%s564] ss:$4 sm:$0x7]
      %v5034 = vlaneseq
      %v5035 = vshrl.u32 %v5034, 7
      %v5036 = vsub.s32 0, %v5035
      %v5037 = vrot.slane %v5026, %v5036
      %v5038 = vlaneseq
      %v5039 = vshrl.u32 %v5038, 7
      %v5040 = vsub.s32 1, %v5039
      %v5041 = vrot.slane %v5026, %v5040
      %v5042 = vlaneseq
      %v5043 = vshrl.u32 %v5042, 7
      %v5044 = vsub.s32 2, %v5043
      %v5045 = vrot.slane %v5026, %v5044
      %v5046 = vlaneseq
      %v5047 = vshrl.u32 %v5046, 7
      %v5048 = vsub.s32 0, %v5047
      %v5049 = vrot.slane %v5027, %v5048
      %v5050 = vlaneseq
      %v5051 = vshrl.u32 %v5050, 7
      %v5052 = vsub.s32 1, %v5051
      %v5053 = vrot.slane %v5027, %v5052
      %v5054 = vlaneseq
      %v5055 = vshrl.u32 %v5054, 7
      %v5056 = vsub.s32 2, %v5055
      %v5057 = vrot.slane %v5027, %v5056
      %v5058 = vlaneseq
      %v5059 = vshrl.u32 %v5058, 7
      %v5060 = vsub.s32 0, %v5059
      %v5061 = vrot.slane %v5028, %v5060
      %v5062 = vlaneseq
      %v5063 = vshrl.u32 %v5062, 7
      %v5064 = vsub.s32 1, %v5063
      %v5065 = vrot.slane %v5028, %v5064
      %v5066 = vlaneseq
      %v5067 = vshrl.u32 %v5066, 7
      %v5068 = vsub.s32 2, %v5067
      %v5069 = vrot.slane %v5028, %v5068
      %v5070 = vlaneseq
      %v5071 = vshrl.u32 %v5070, 7
      %v5072 = vsub.s32 0, %v5071
      %v5073 = vrot.slane %v5029, %v5072
      %v5074 = vlaneseq
      %v5075 = vshrl.u32 %v5074, 7
      %v5076 = vsub.s32 1, %v5075
      %v5077 = vrot.slane %v5029, %v5076
      %v5078 = vlaneseq
      %v5079 = vshrl.u32 %v5078, 7
      %v5080 = vsub.s32 2, %v5079
      %v5081 = vrot.slane %v5029, %v5080
      %v5094 = vpack.c.bf16 %v5037, %v5037
      %v5095 = vpack.c.bf16 %v5041, %v5041
      %v5096 = vpack.c.bf16 %v5045, %v5045
      %v5097 = vpack.c.bf16 %v5049, %v5049
      %v5098 = vpack.c.bf16 %v5053, %v5053
      %v5099 = vpack.c.bf16 %v5057, %v5057
      %v5100 = vpack.c.bf16 %v5061, %v5061
      %v5101 = vpack.c.bf16 %v5065, %v5065
      %v5102 = vpack.c.bf16 %v5069, %v5069
      %v5103 = vpack.c.bf16 %v5073, %v5073
      %v5104 = vpack.c.bf16 %v5077, %v5077
      %v5105 = vpack.c.bf16 %v5081, %v5081
      %v5118 = vunpack.c.l.b16 %v5094
      %v5119 = vunpack.c.l.b16 %v5095
      %v5120 = vunpack.c.l.b16 %v5096
      %v5121 = vunpack.c.l.b16 %v5097
      %v5122 = vunpack.c.l.b16 %v5098
      %v5123 = vunpack.c.l.b16 %v5099
      %v5124 = vunpack.c.l.b16 %v5100
      %v5125 = vunpack.c.l.b16 %v5101
      %v5126 = vunpack.c.l.b16 %v5102
      %v5127 = vunpack.c.l.b16 %v5103
      %v5128 = vunpack.c.l.b16 %v5104
      %v5129 = vunpack.c.l.b16 %v5105
      %v5130 = vrot.slane %v5121, 7
      %v5131 = vsel %vm771, %v5130, %v5118
      %v5132 = vrot.slane %v5124, 6
      %v5133 = vsel %vm774, %v5132, %v5131
      %v5134 = vrot.slane %v5127, 5
      %v5135 = vsel %vm777, %v5134, %v5133
      %v5136 = vrot.slane %v5122, 7
      %v5137 = vsel %vm771, %v5136, %v5119
      %v5138 = vrot.slane %v5125, 6
      %v5139 = vsel %vm774, %v5138, %v5137
      %v5140 = vrot.slane %v5128, 5
      %v5141 = vsel %vm777, %v5140, %v5139
      %v5142 = vrot.slane %v5123, 7
      %v5143 = vsel %vm771, %v5142, %v5120
      %v5144 = vrot.slane %v5126, 6
      %v5145 = vsel %vm774, %v5144, %v5143
      %v5146 = vrot.slane %v5129, 5
      %v5147 = vsel %vm777, %v5146, %v5145
      %v5148 = vpack.c.b16 %v5135, %v5135
      %v5149 = vpack.c.b16 %v5141, %v5141
      %v5150 = vpack.c.b16 %v5147, %v5147
      %5151 = vrot.lane.b32.xlu0 %v5148, 13
      %v5152 = vpop.permute.xlu0 %5151
      %5153 = vrot.lane.b32.xlu0 %v5149, 13
      %v5154 = vpop.permute.xlu0 %5153
      %5155 = vrot.lane.b32.xlu0 %v5150, 13
      %v5156 = vpop.permute.xlu0 %5155
      %vm5157 = vcmask 105472
      %v5158 = vsel %vm5157, %v5152, %v5154
      %v5159 = vsel %vm5157, %v5154, %v5156
      %5163 = vst.msk [vmem:[#allocation3 + $0x38] sm:$0x3] %vm4589, %v5152
      %5164 = vst [vmem:[#allocation3 + $0x40] sm:$0x3] %v5158
      %5165 = vst.msk [vmem:[#allocation3 + $0x48] sm:$0x3] %vm4592, %v5159
      %v5166 = vld [vmem:[%s558] ss:$4 sm:$0x7]
      %v5167 = vld [vmem:[%s560] ss:$4 sm:$0x7]
      %v5168 = vld [vmem:[%s562] ss:$4 sm:$0x7]
      %v5169 = vld [vmem:[%s564] ss:$4 sm:$0x7]
      %v5174 = vlaneseq
      %v5175 = vshrl.u32 %v5174, 7
      %v5176 = vsub.s32 0, %v5175
      %v5177 = vrot.slane %v5166, %v5176
      %v5178 = vlaneseq
      %v5179 = vshrl.u32 %v5178, 7
      %v5180 = vsub.s32 1, %v5179
      %v5181 = vrot.slane %v5166, %v5180
      %v5182 = vlaneseq
      %v5183 = vshrl.u32 %v5182, 7
      %v5184 = vsub.s32 2, %v5183
      %v5185 = vrot.slane %v5166, %v5184
      %v5186 = vlaneseq
      %v5187 = vshrl.u32 %v5186, 7
      %v5188 = vsub.s32 0, %v5187
      %v5189 = vrot.slane %v5167, %v5188
      %v5190 = vlaneseq
      %v5191 = vshrl.u32 %v5190, 7
      %v5192 = vsub.s32 1, %v5191
      %v5193 = vrot.slane %v5167, %v5192
      %v5194 = vlaneseq
      %v5195 = vshrl.u32 %v5194, 7
      %v5196 = vsub.s32 2, %v5195
      %v5197 = vrot.slane %v5167, %v5196
      %v5198 = vlaneseq
      %v5199 = vshrl.u32 %v5198, 7
      %v5200 = vsub.s32 0, %v5199
      %v5201 = vrot.slane %v5168, %v5200
      %v5202 = vlaneseq
      %v5203 = vshrl.u32 %v5202, 7
      %v5204 = vsub.s32 1, %v5203
      %v5205 = vrot.slane %v5168, %v5204
      %v5206 = vlaneseq
      %v5207 = vshrl.u32 %v5206, 7
      %v5208 = vsub.s32 2, %v5207
      %v5209 = vrot.slane %v5168, %v5208
      %v5210 = vlaneseq
      %v5211 = vshrl.u32 %v5210, 7
      %v5212 = vsub.s32 0, %v5211
      %v5213 = vrot.slane %v5169, %v5212
      %v5214 = vlaneseq
      %v5215 = vshrl.u32 %v5214, 7
      %v5216 = vsub.s32 1, %v5215
      %v5217 = vrot.slane %v5169, %v5216
      %v5218 = vlaneseq
      %v5219 = vshrl.u32 %v5218, 7
      %v5220 = vsub.s32 2, %v5219
      %v5221 = vrot.slane %v5169, %v5220
      %v5234 = vpack.c.bf16 %v5177, %v5177
      %v5235 = vpack.c.bf16 %v5181, %v5181
      %v5236 = vpack.c.bf16 %v5185, %v5185
      %v5237 = vpack.c.bf16 %v5189, %v5189
      %v5238 = vpack.c.bf16 %v5193, %v5193
      %v5239 = vpack.c.bf16 %v5197, %v5197
      %v5240 = vpack.c.bf16 %v5201, %v5201
      %v5241 = vpack.c.bf16 %v5205, %v5205
      %v5242 = vpack.c.bf16 %v5209, %v5209
      %v5243 = vpack.c.bf16 %v5213, %v5213
      %v5244 = vpack.c.bf16 %v5217, %v5217
      %v5245 = vpack.c.bf16 %v5221, %v5221
      %v5258 = vunpack.c.l.b16 %v5234
      %v5259 = vunpack.c.l.b16 %v5235
      %v5260 = vunpack.c.l.b16 %v5236
      %v5261 = vunpack.c.l.b16 %v5237
      %v5262 = vunpack.c.l.b16 %v5238
      %v5263 = vunpack.c.l.b16 %v5239
      %v5264 = vunpack.c.l.b16 %v5240
      %v5265 = vunpack.c.l.b16 %v5241
      %v5266 = vunpack.c.l.b16 %v5242
      %v5267 = vunpack.c.l.b16 %v5243
      %v5268 = vunpack.c.l.b16 %v5244
      %v5269 = vunpack.c.l.b16 %v5245
      %v5270 = vrot.slane %v5258, 4
      %v5271 = vrot.slane %v5261, 3
      %v5272 = vsel %vm907, %v5271, %v5270
      %v5273 = vrot.slane %v5264, 2
      %v5274 = vsel %vm910, %v5273, %v5272
      %v5275 = vrot.slane %v5267, 1
      %v5276 = vsel %vm913, %v5275, %v5274
      %v5277 = vrot.slane %v5259, 4
      %v5278 = vrot.slane %v5262, 3
      %v5279 = vsel %vm907, %v5278, %v5277
      %v5280 = vrot.slane %v5265, 2
      %v5281 = vsel %vm910, %v5280, %v5279
      %v5282 = vrot.slane %v5268, 1
      %v5283 = vsel %vm913, %v5282, %v5281
      %v5284 = vrot.slane %v5260, 4
      %v5285 = vrot.slane %v5263, 3
      %v5286 = vsel %vm907, %v5285, %v5284
      %v5287 = vrot.slane %v5266, 2
      %v5288 = vsel %vm910, %v5287, %v5286
      %v5289 = vrot.slane %v5269, 1
      %v5290 = vsel %vm913, %v5289, %v5288
      %v5291 = vpack.c.b16 %v5276, %v5276
      %v5292 = vpack.c.b16 %v5283, %v5283
      %v5293 = vpack.c.b16 %v5290, %v5290
      %5294 = vrot.lane.b32.xlu0 %v5291, 12
      %v5295 = vpop.permute.xlu0 %5294
      %5296 = vrot.lane.b32.xlu0 %v5292, 12
      %v5297 = vpop.permute.xlu0 %5296
      %5298 = vrot.lane.b32.xlu0 %v5293, 12
      %v5299 = vpop.permute.xlu0 %5298
      %vm5300 = vcmask 97280
      %v5301 = vsel %vm5300, %v5295, %v5297
      %v5302 = vsel %vm5300, %v5297, %v5299
      %5306 = vst.msk [vmem:[#allocation3 + $0x38] sm:$0xc] %vm4734, %v5295
      %5307 = vst [vmem:[#allocation3 + $0x40] sm:$0xc] %v5301
      %5308 = vst.msk [vmem:[#allocation3 + $0x48] sm:$0xc] %vm4737, %v5302
      %v5309 = vld [vmem:[%s558] ss:$4 sm:$0x7]
      %v5310 = vld [vmem:[%s560] ss:$4 sm:$0x7]
      %v5311 = vld [vmem:[%s562] ss:$4 sm:$0x7]
      %v5312 = vld [vmem:[%s564] ss:$4 sm:$0x7]
      %v5317 = vlaneseq
      %v5318 = vshrl.u32 %v5317, 7
      %v5319 = vsub.s32 0, %v5318
      %v5320 = vrot.slane %v5309, %v5319
      %v5321 = vlaneseq
      %v5322 = vshrl.u32 %v5321, 7
      %v5323 = vsub.s32 1, %v5322
      %v5324 = vrot.slane %v5309, %v5323
      %v5325 = vlaneseq
      %v5326 = vshrl.u32 %v5325, 7
      %v5327 = vsub.s32 2, %v5326
      %v5328 = vrot.slane %v5309, %v5327
      %v5329 = vlaneseq
      %v5330 = vshrl.u32 %v5329, 7
      %v5331 = vsub.s32 0, %v5330
      %v5332 = vrot.slane %v5310, %v5331
      %v5333 = vlaneseq
      %v5334 = vshrl.u32 %v5333, 7
      %v5335 = vsub.s32 1, %v5334
      %v5336 = vrot.slane %v5310, %v5335
      %v5337 = vlaneseq
      %v5338 = vshrl.u32 %v5337, 7
      %v5339 = vsub.s32 2, %v5338
      %v5340 = vrot.slane %v5310, %v5339
      %v5341 = vlaneseq
      %v5342 = vshrl.u32 %v5341, 7
      %v5343 = vsub.s32 0, %v5342
      %v5344 = vrot.slane %v5311, %v5343
      %v5345 = vlaneseq
      %v5346 = vshrl.u32 %v5345, 7
      %v5347 = vsub.s32 1, %v5346
      %v5348 = vrot.slane %v5311, %v5347
      %v5349 = vlaneseq
      %v5350 = vshrl.u32 %v5349, 7
      %v5351 = vsub.s32 2, %v5350
      %v5352 = vrot.slane %v5311, %v5351
      %v5353 = vlaneseq
      %v5354 = vshrl.u32 %v5353, 7
      %v5355 = vsub.s32 0, %v5354
      %v5356 = vrot.slane %v5312, %v5355
      %v5357 = vlaneseq
      %v5358 = vshrl.u32 %v5357, 7
      %v5359 = vsub.s32 1, %v5358
      %v5360 = vrot.slane %v5312, %v5359
      %v5361 = vlaneseq
      %v5362 = vshrl.u32 %v5361, 7
      %v5363 = vsub.s32 2, %v5362
      %v5364 = vrot.slane %v5312, %v5363
      %v5377 = vpack.c.bf16 %v5320, %v5320
      %v5378 = vpack.c.bf16 %v5324, %v5324
      %v5379 = vpack.c.bf16 %v5328, %v5328
      %v5380 = vpack.c.bf16 %v5332, %v5332
      %v5381 = vpack.c.bf16 %v5336, %v5336
      %v5382 = vpack.c.bf16 %v5340, %v5340
      %v5383 = vpack.c.bf16 %v5344, %v5344
      %v5384 = vpack.c.bf16 %v5348, %v5348
      %v5385 = vpack.c.bf16 %v5352, %v5352
      %v5386 = vpack.c.bf16 %v5356, %v5356
      %v5387 = vpack.c.bf16 %v5360, %v5360
      %v5388 = vpack.c.bf16 %v5364, %v5364
      %v5401 = vunpack.c.l.b16 %v5377
      %v5402 = vunpack.c.l.b16 %v5378
      %v5403 = vunpack.c.l.b16 %v5379
      %v5404 = vunpack.c.l.b16 %v5380
      %v5405 = vunpack.c.l.b16 %v5381
      %v5406 = vunpack.c.l.b16 %v5382
      %v5407 = vunpack.c.l.b16 %v5383
      %v5408 = vunpack.c.l.b16 %v5384
      %v5409 = vunpack.c.l.b16 %v5385
      %v5410 = vunpack.c.l.b16 %v5386
      %v5411 = vunpack.c.l.b16 %v5387
      %v5412 = vunpack.c.l.b16 %v5388
      %v5413 = vrot.slane %v5404, 7
      %v5414 = vsel %vm771, %v5413, %v5401
      %v5415 = vrot.slane %v5407, 6
      %v5416 = vsel %vm774, %v5415, %v5414
      %v5417 = vrot.slane %v5410, 5
      %v5418 = vsel %vm777, %v5417, %v5416
      %v5419 = vrot.slane %v5405, 7
      %v5420 = vsel %vm771, %v5419, %v5402
      %v5421 = vrot.slane %v5408, 6
      %v5422 = vsel %vm774, %v5421, %v5420
      %v5423 = vrot.slane %v5411, 5
      %v5424 = vsel %vm777, %v5423, %v5422
      %v5425 = vrot.slane %v5406, 7
      %v5426 = vsel %vm771, %v5425, %v5403
      %v5427 = vrot.slane %v5409, 6
      %v5428 = vsel %vm774, %v5427, %v5426
      %v5429 = vrot.slane %v5412, 5
      %v5430 = vsel %vm777, %v5429, %v5428
      %v5431 = vpack.c.b16 %v5418, %v5418
      %v5432 = vpack.c.b16 %v5424, %v5424
      %v5433 = vpack.c.b16 %v5430, %v5430
      %5434 = vrot.lane.b32.xlu0 %v5431, 124
      %v5435 = vpop.permute.xlu0 %5434
      %5436 = vrot.lane.b32.xlu0 %v5432, 124
      %v5437 = vpop.permute.xlu0 %5436
      %5438 = vrot.lane.b32.xlu0 %v5433, 124
      %v5439 = vpop.permute.xlu0 %5438
      %vm5440 = vcmask 1014784
      %v5441 = vsel %vm5440, %v5435, %v5437
      %v5442 = vsel %vm5440, %v5437, %v5439
      %5446 = vst.msk [vmem:[#allocation3 + $0x38] sm:$0x30] %vm4876, %v5441
      %5447 = vst [vmem:[#allocation3 + $0x40] sm:$0x30] %v5442
      %5448 = vst.msk [vmem:[#allocation3 + $0x48] sm:$0x30] %vm4879, %v5439
      %v5449 = vld [vmem:[%s558] ss:$4 sm:$0x7]
      %v5450 = vld [vmem:[%s560] ss:$4 sm:$0x7]
      %v5451 = vld [vmem:[%s562] ss:$4 sm:$0x7]
      %v5452 = vld [vmem:[%s564] ss:$4 sm:$0x7]
      %v5457 = vlaneseq
      %v5458 = vshrl.u32 %v5457, 7
      %v5459 = vsub.s32 0, %v5458
      %v5460 = vrot.slane %v5449, %v5459
      %v5461 = vlaneseq
      %v5462 = vshrl.u32 %v5461, 7
      %v5463 = vsub.s32 1, %v5462
      %v5464 = vrot.slane %v5449, %v5463
      %v5465 = vlaneseq
      %v5466 = vshrl.u32 %v5465, 7
      %v5467 = vsub.s32 2, %v5466
      %v5468 = vrot.slane %v5449, %v5467
      %v5469 = vlaneseq
      %v5470 = vshrl.u32 %v5469, 7
      %v5471 = vsub.s32 0, %v5470
      %v5472 = vrot.slane %v5450, %v5471
      %v5473 = vlaneseq
      %v5474 = vshrl.u32 %v5473, 7
      %v5475 = vsub.s32 1, %v5474
      %v5476 = vrot.slane %v5450, %v5475
      %v5477 = vlaneseq
      %v5478 = vshrl.u32 %v5477, 7
      %v5479 = vsub.s32 2, %v5478
      %v5480 = vrot.slane %v5450, %v5479
      %v5481 = vlaneseq
      %v5482 = vshrl.u32 %v5481, 7
      %v5483 = vsub.s32 0, %v5482
      %v5484 = vrot.slane %v5451, %v5483
      %v5485 = vlaneseq
      %v5486 = vshrl.u32 %v5485, 7
      %v5487 = vsub.s32 1, %v5486
      %v5488 = vrot.slane %v5451, %v5487
      %v5489 = vlaneseq
      %v5490 = vshrl.u32 %v5489, 7
      %v5491 = vsub.s32 2, %v5490
      %v5492 = vrot.slane %v5451, %v5491
      %v5493 = vlaneseq
      %v5494 = vshrl.u32 %v5493, 7
      %v5495 = vsub.s32 0, %v5494
      %v5496 = vrot.slane %v5452, %v5495
      %v5497 = vlaneseq
      %v5498 = vshrl.u32 %v5497, 7
      %v5499 = vsub.s32 1, %v5498
      %v5500 = vrot.slane %v5452, %v5499
      %v5501 = vlaneseq
      %v5502 = vshrl.u32 %v5501, 7
      %v5503 = vsub.s32 2, %v5502
      %v5504 = vrot.slane %v5452, %v5503
      %v5517 = vpack.c.bf16 %v5460, %v5460
      %v5518 = vpack.c.bf16 %v5464, %v5464
      %v5519 = vpack.c.bf16 %v5468, %v5468
      %v5520 = vpack.c.bf16 %v5472, %v5472
      %v5521 = vpack.c.bf16 %v5476, %v5476
      %v5522 = vpack.c.bf16 %v5480, %v5480
      %v5523 = vpack.c.bf16 %v5484, %v5484
      %v5524 = vpack.c.bf16 %v5488, %v5488
      %v5525 = vpack.c.bf16 %v5492, %v5492
      %v5526 = vpack.c.bf16 %v5496, %v5496
      %v5527 = vpack.c.bf16 %v5500, %v5500
      %v5528 = vpack.c.bf16 %v5504, %v5504
      %v5541 = vunpack.c.l.b16 %v5517
      %v5542 = vunpack.c.l.b16 %v5518
      %v5543 = vunpack.c.l.b16 %v5519
      %v5544 = vunpack.c.l.b16 %v5520
      %v5545 = vunpack.c.l.b16 %v5521
      %v5546 = vunpack.c.l.b16 %v5522
      %v5547 = vunpack.c.l.b16 %v5523
      %v5548 = vunpack.c.l.b16 %v5524
      %v5549 = vunpack.c.l.b16 %v5525
      %v5550 = vunpack.c.l.b16 %v5526
      %v5551 = vunpack.c.l.b16 %v5527
      %v5552 = vunpack.c.l.b16 %v5528
      %v5553 = vrot.slane %v5541, 4
      %v5554 = vrot.slane %v5544, 3
      %v5555 = vsel %vm907, %v5554, %v5553
      %v5556 = vrot.slane %v5547, 2
      %v5557 = vsel %vm910, %v5556, %v5555
      %v5558 = vrot.slane %v5550, 1
      %v5559 = vsel %vm913, %v5558, %v5557
      %v5560 = vrot.slane %v5542, 4
      %v5561 = vrot.slane %v5545, 3
      %v5562 = vsel %vm907, %v5561, %v5560
      %v5563 = vrot.slane %v5548, 2
      %v5564 = vsel %vm910, %v5563, %v5562
      %v5565 = vrot.slane %v5551, 1
      %v5566 = vsel %vm913, %v5565, %v5564
      %v5567 = vrot.slane %v5543, 4
      %v5568 = vrot.slane %v5546, 3
      %v5569 = vsel %vm907, %v5568, %v5567
      %v5570 = vrot.slane %v5549, 2
      %v5571 = vsel %vm910, %v5570, %v5569
      %v5572 = vrot.slane %v5552, 1
      %v5573 = vsel %vm913, %v5572, %v5571
      %v5574 = vpack.c.b16 %v5559, %v5559
      %v5575 = vpack.c.b16 %v5566, %v5566
      %v5576 = vpack.c.b16 %v5573, %v5573
      %5577 = vrot.lane.b32.xlu0 %v5574, 123
      %v5578 = vpop.permute.xlu0 %5577
      %5579 = vrot.lane.b32.xlu0 %v5575, 123
      %v5580 = vpop.permute.xlu0 %5579
      %5581 = vrot.lane.b32.xlu0 %v5576, 123
      %v5582 = vpop.permute.xlu0 %5581
      %vm5583 = vcmask 1006592
      %v5584 = vsel %vm5583, %v5578, %v5580
      %v5585 = vsel %vm5583, %v5580, %v5582
      %5589 = vst.msk [vmem:[#allocation3 + $0x38] sm:$0xc0] %vm5021, %v5584
      %5590 = vst [vmem:[#allocation3 + $0x40] sm:$0xc0] %v5585
      %5591 = vst.msk [vmem:[#allocation3 + $0x48] sm:$0xc0] %vm5024, %v5582
      %v5592 = vld [vmem:[%s558] ss:$4 sm:$0x7]
      %v5593 = vld [vmem:[%s560] ss:$4 sm:$0x7]
      %v5594 = vld [vmem:[%s562] ss:$4 sm:$0x7]
      %v5595 = vld [vmem:[%s564] ss:$4 sm:$0x7]
      %v5600 = vlaneseq
      %v5601 = vshrl.u32 %v5600, 7
      %v5602 = vsub.s32 0, %v5601
      %v5603 = vrot.slane %v5592, %v5602
      %v5604 = vlaneseq
      %v5605 = vshrl.u32 %v5604, 7
      %v5606 = vsub.s32 1, %v5605
      %v5607 = vrot.slane %v5592, %v5606
      %v5608 = vlaneseq
      %v5609 = vshrl.u32 %v5608, 7
      %v5610 = vsub.s32 2, %v5609
      %v5611 = vrot.slane %v5592, %v5610
      %v5612 = vlaneseq
      %v5613 = vshrl.u32 %v5612, 7
      %v5614 = vsub.s32 0, %v5613
      %v5615 = vrot.slane %v5593, %v5614
      %v5616 = vlaneseq
      %v5617 = vshrl.u32 %v5616, 7
      %v5618 = vsub.s32 1, %v5617
      %v5619 = vrot.slane %v5593, %v5618
      %v5620 = vlaneseq
      %v5621 = vshrl.u32 %v5620, 7
      %v5622 = vsub.s32 2, %v5621
      %v5623 = vrot.slane %v5593, %v5622
      %v5624 = vlaneseq
      %v5625 = vshrl.u32 %v5624, 7
      %v5626 = vsub.s32 0, %v5625
      %v5627 = vrot.slane %v5594, %v5626
      %v5628 = vlaneseq
      %v5629 = vshrl.u32 %v5628, 7
      %v5630 = vsub.s32 1, %v5629
      %v5631 = vrot.slane %v5594, %v5630
      %v5632 = vlaneseq
      %v5633 = vshrl.u32 %v5632, 7
      %v5634 = vsub.s32 2, %v5633
      %v5635 = vrot.slane %v5594, %v5634
      %v5636 = vlaneseq
      %v5637 = vshrl.u32 %v5636, 7
      %v5638 = vsub.s32 0, %v5637
      %v5639 = vrot.slane %v5595, %v5638
      %v5640 = vlaneseq
      %v5641 = vshrl.u32 %v5640, 7
      %v5642 = vsub.s32 1, %v5641
      %v5643 = vrot.slane %v5595, %v5642
      %v5644 = vlaneseq
      %v5645 = vshrl.u32 %v5644, 7
      %v5646 = vsub.s32 2, %v5645
      %v5647 = vrot.slane %v5595, %v5646
      %v5660 = vpack.c.bf16 %v5603, %v5603
      %v5661 = vpack.c.bf16 %v5607, %v5607
      %v5662 = vpack.c.bf16 %v5611, %v5611
      %v5663 = vpack.c.bf16 %v5615, %v5615
      %v5664 = vpack.c.bf16 %v5619, %v5619
      %v5665 = vpack.c.bf16 %v5623, %v5623
      %v5666 = vpack.c.bf16 %v5627, %v5627
      %v5667 = vpack.c.bf16 %v5631, %v5631
      %v5668 = vpack.c.bf16 %v5635, %v5635
      %v5669 = vpack.c.bf16 %v5639, %v5639
      %v5670 = vpack.c.bf16 %v5643, %v5643
      %v5671 = vpack.c.bf16 %v5647, %v5647
      %v5684 = vunpack.c.l.b16 %v5660
      %v5685 = vunpack.c.l.b16 %v5661
      %v5686 = vunpack.c.l.b16 %v5662
      %v5687 = vunpack.c.l.b16 %v5663
      %v5688 = vunpack.c.l.b16 %v5664
      %v5689 = vunpack.c.l.b16 %v5665
      %v5690 = vunpack.c.l.b16 %v5666
      %v5691 = vunpack.c.l.b16 %v5667
      %v5692 = vunpack.c.l.b16 %v5668
      %v5693 = vunpack.c.l.b16 %v5669
      %v5694 = vunpack.c.l.b16 %v5670
      %v5695 = vunpack.c.l.b16 %v5671
      %v5696 = vrot.slane %v5687, 7
      %v5697 = vsel %vm771, %v5696, %v5684
      %v5698 = vrot.slane %v5690, 6
      %v5699 = vsel %vm774, %v5698, %v5697
      %v5700 = vrot.slane %v5693, 5
      %v5701 = vsel %vm777, %v5700, %v5699
      %v5702 = vrot.slane %v5688, 7
      %v5703 = vsel %vm771, %v5702, %v5685
      %v5704 = vrot.slane %v5691, 6
      %v5705 = vsel %vm774, %v5704, %v5703
      %v5706 = vrot.slane %v5694, 5
      %v5707 = vsel %vm777, %v5706, %v5705
      %v5708 = vrot.slane %v5689, 7
      %v5709 = vsel %vm771, %v5708, %v5686
      %v5710 = vrot.slane %v5692, 6
      %v5711 = vsel %vm774, %v5710, %v5709
      %v5712 = vrot.slane %v5695, 5
      %v5713 = vsel %vm777, %v5712, %v5711
      %v5714 = vpack.c.b16 %v5701, %v5701
      %v5715 = vpack.c.b16 %v5707, %v5707
      %v5716 = vpack.c.b16 %v5713, %v5713
      %5717 = vrot.lane.b32.xlu0 %v5714, 122
      %v5718 = vpop.permute.xlu0 %5717
      %5719 = vrot.lane.b32.xlu0 %v5715, 122
      %v5720 = vpop.permute.xlu0 %5719
      %5721 = vrot.lane.b32.xlu0 %v5716, 122
      %v5722 = vpop.permute.xlu0 %5721
      %vm5723 = vcmask 998400
      %v5724 = vsel %vm5723, %v5718, %v5720
      %v5725 = vsel %vm5723, %v5720, %v5722
      %5729 = vst.msk [vmem:[#allocation3 + $0x60] sm:$0x3] %vm4589, %v5724
      %5730 = vst [vmem:[#allocation3 + $0x68] sm:$0x3] %v5725
      %5731 = vst.msk [vmem:[#allocation3 + $0x70] sm:$0x3] %vm4592, %v5722
      %v5732 = vld [vmem:[%s658] ss:$4 sm:$0x7]
      %v5733 = vld [vmem:[%s660] ss:$4 sm:$0x7]
      %v5734 = vld [vmem:[%s662] ss:$4 sm:$0x7]
      %v5735 = vld [vmem:[%s664] ss:$4 sm:$0x7]
      %v5740 = vlaneseq
      %v5741 = vshrl.u32 %v5740, 7
      %v5742 = vsub.s32 0, %v5741
      %v5743 = vrot.slane %v5732, %v5742
      %v5744 = vlaneseq
      %v5745 = vshrl.u32 %v5744, 7
      %v5746 = vsub.s32 1, %v5745
      %v5747 = vrot.slane %v5732, %v5746
      %v5748 = vlaneseq
      %v5749 = vshrl.u32 %v5748, 7
      %v5750 = vsub.s32 2, %v5749
      %v5751 = vrot.slane %v5732, %v5750
      %v5752 = vlaneseq
      %v5753 = vshrl.u32 %v5752, 7
      %v5754 = vsub.s32 0, %v5753
      %v5755 = vrot.slane %v5733, %v5754
      %v5756 = vlaneseq
      %v5757 = vshrl.u32 %v5756, 7
      %v5758 = vsub.s32 1, %v5757
      %v5759 = vrot.slane %v5733, %v5758
      %v5760 = vlaneseq
      %v5761 = vshrl.u32 %v5760, 7
      %v5762 = vsub.s32 2, %v5761
      %v5763 = vrot.slane %v5733, %v5762
      %v5764 = vlaneseq
      %v5765 = vshrl.u32 %v5764, 7
      %v5766 = vsub.s32 0, %v5765
      %v5767 = vrot.slane %v5734, %v5766
      %v5768 = vlaneseq
      %v5769 = vshrl.u32 %v5768, 7
      %v5770 = vsub.s32 1, %v5769
      %v5771 = vrot.slane %v5734, %v5770
      %v5772 = vlaneseq
      %v5773 = vshrl.u32 %v5772, 7
      %v5774 = vsub.s32 2, %v5773
      %v5775 = vrot.slane %v5734, %v5774
      %v5776 = vlaneseq
      %v5777 = vshrl.u32 %v5776, 7
      %v5778 = vsub.s32 0, %v5777
      %v5779 = vrot.slane %v5735, %v5778
      %v5780 = vlaneseq
      %v5781 = vshrl.u32 %v5780, 7
      %v5782 = vsub.s32 1, %v5781
      %v5783 = vrot.slane %v5735, %v5782
      %v5784 = vlaneseq
      %v5785 = vshrl.u32 %v5784, 7
      %v5786 = vsub.s32 2, %v5785
      %v5787 = vrot.slane %v5735, %v5786
      %v5800 = vpack.c.bf16 %v5743, %v5743
      %v5801 = vpack.c.bf16 %v5747, %v5747
      %v5802 = vpack.c.bf16 %v5751, %v5751
      %v5803 = vpack.c.bf16 %v5755, %v5755
      %v5804 = vpack.c.bf16 %v5759, %v5759
      %v5805 = vpack.c.bf16 %v5763, %v5763
      %v5806 = vpack.c.bf16 %v5767, %v5767
      %v5807 = vpack.c.bf16 %v5771, %v5771
      %v5808 = vpack.c.bf16 %v5775, %v5775
      %v5809 = vpack.c.bf16 %v5779, %v5779
      %v5810 = vpack.c.bf16 %v5783, %v5783
      %v5811 = vpack.c.bf16 %v5787, %v5787
      %v5824 = vunpack.c.l.b16 %v5800
      %v5825 = vunpack.c.l.b16 %v5801
      %v5826 = vunpack.c.l.b16 %v5802
      %v5827 = vunpack.c.l.b16 %v5803
      %v5828 = vunpack.c.l.b16 %v5804
      %v5829 = vunpack.c.l.b16 %v5805
      %v5830 = vunpack.c.l.b16 %v5806
      %v5831 = vunpack.c.l.b16 %v5807
      %v5832 = vunpack.c.l.b16 %v5808
      %v5833 = vunpack.c.l.b16 %v5809
      %v5834 = vunpack.c.l.b16 %v5810
      %v5835 = vunpack.c.l.b16 %v5811
      %v5836 = vrot.slane %v5824, 4
      %v5837 = vrot.slane %v5827, 3
      %v5838 = vsel %vm907, %v5837, %v5836
      %v5839 = vrot.slane %v5830, 2
      %v5840 = vsel %vm910, %v5839, %v5838
      %v5841 = vrot.slane %v5833, 1
      %v5842 = vsel %vm913, %v5841, %v5840
      %v5843 = vrot.slane %v5825, 4
      %v5844 = vrot.slane %v5828, 3
      %v5845 = vsel %vm907, %v5844, %v5843
      %v5846 = vrot.slane %v5831, 2
      %v5847 = vsel %vm910, %v5846, %v5845
      %v5848 = vrot.slane %v5834, 1
      %v5849 = vsel %vm913, %v5848, %v5847
      %v5850 = vrot.slane %v5826, 4
      %v5851 = vrot.slane %v5829, 3
      %v5852 = vsel %vm907, %v5851, %v5850
      %v5853 = vrot.slane %v5832, 2
      %v5854 = vsel %vm910, %v5853, %v5852
      %v5855 = vrot.slane %v5835, 1
      %v5856 = vsel %vm913, %v5855, %v5854
      %v5857 = vpack.c.b16 %v5842, %v5842
      %v5858 = vpack.c.b16 %v5849, %v5849
      %v5859 = vpack.c.b16 %v5856, %v5856
      %5860 = vrot.lane.b32.xlu0 %v5857, 32
      %v5861 = vpop.permute.xlu0 %5860
      %5862 = vrot.lane.b32.xlu0 %v5858, 32
      %v5863 = vpop.permute.xlu0 %5862
      %5864 = vrot.lane.b32.xlu0 %v5859, 32
      %v5865 = vpop.permute.xlu0 %5864
      %v5866 = vsel %vm4583, %v5861, %v5863
      %v5867 = vsel %vm4583, %v5863, %v5865
      %5871 = vst.msk [vmem:[#allocation3 + $0x60] sm:$0xc] %vm4734, %v5861
      %5872 = vst [vmem:[#allocation3 + $0x68] sm:$0xc] %v5866
      %5873 = vst.msk [vmem:[#allocation3 + $0x70] sm:$0xc] %vm4737, %v5867
      %v5874 = vld [vmem:[%s658] ss:$4 sm:$0x7]
      %v5875 = vld [vmem:[%s660] ss:$4 sm:$0x7]
      %v5876 = vld [vmem:[%s662] ss:$4 sm:$0x7]
      %v5877 = vld [vmem:[%s664] ss:$4 sm:$0x7]
      %v5882 = vlaneseq
      %v5883 = vshrl.u32 %v5882, 7
      %v5884 = vsub.s32 0, %v5883
      %v5885 = vrot.slane %v5874, %v5884
      %v5886 = vlaneseq
      %v5887 = vshrl.u32 %v5886, 7
      %v5888 = vsub.s32 1, %v5887
      %v5889 = vrot.slane %v5874, %v5888
      %v5890 = vlaneseq
      %v5891 = vshrl.u32 %v5890, 7
      %v5892 = vsub.s32 2, %v5891
      %v5893 = vrot.slane %v5874, %v5892
      %v5894 = vlaneseq
      %v5895 = vshrl.u32 %v5894, 7
      %v5896 = vsub.s32 0, %v5895
      %v5897 = vrot.slane %v5875, %v5896
      %v5898 = vlaneseq
      %v5899 = vshrl.u32 %v5898, 7
      %v5900 = vsub.s32 1, %v5899
      %v5901 = vrot.slane %v5875, %v5900
      %v5902 = vlaneseq
      %v5903 = vshrl.u32 %v5902, 7
      %v5904 = vsub.s32 2, %v5903
      %v5905 = vrot.slane %v5875, %v5904
      %v5906 = vlaneseq
      %v5907 = vshrl.u32 %v5906, 7
      %v5908 = vsub.s32 0, %v5907
      %v5909 = vrot.slane %v5876, %v5908
      %v5910 = vlaneseq
      %v5911 = vshrl.u32 %v5910, 7
      %v5912 = vsub.s32 1, %v5911
      %v5913 = vrot.slane %v5876, %v5912
      %v5914 = vlaneseq
      %v5915 = vshrl.u32 %v5914, 7
      %v5916 = vsub.s32 2, %v5915
      %v5917 = vrot.slane %v5876, %v5916
      %v5918 = vlaneseq
      %v5919 = vshrl.u32 %v5918, 7
      %v5920 = vsub.s32 0, %v5919
      %v5921 = vrot.slane %v5877, %v5920
      %v5922 = vlaneseq
      %v5923 = vshrl.u32 %v5922, 7
      %v5924 = vsub.s32 1, %v5923
      %v5925 = vrot.slane %v5877, %v5924
      %v5926 = vlaneseq
      %v5927 = vshrl.u32 %v5926, 7
      %v5928 = vsub.s32 2, %v5927
      %v5929 = vrot.slane %v5877, %v5928
      %v5942 = vpack.c.bf16 %v5885, %v5885
      %v5943 = vpack.c.bf16 %v5889, %v5889
      %v5944 = vpack.c.bf16 %v5893, %v5893
      %v5945 = vpack.c.bf16 %v5897, %v5897
      %v5946 = vpack.c.bf16 %v5901, %v5901
      %v5947 = vpack.c.bf16 %v5905, %v5905
      %v5948 = vpack.c.bf16 %v5909, %v5909
      %v5949 = vpack.c.bf16 %v5913, %v5913
      %v5950 = vpack.c.bf16 %v5917, %v5917
      %v5951 = vpack.c.bf16 %v5921, %v5921
      %v5952 = vpack.c.bf16 %v5925, %v5925
      %v5953 = vpack.c.bf16 %v5929, %v5929
      %v5966 = vunpack.c.l.b16 %v5942
      %v5967 = vunpack.c.l.b16 %v5943
      %v5968 = vunpack.c.l.b16 %v5944
      %v5969 = vunpack.c.l.b16 %v5945
      %v5970 = vunpack.c.l.b16 %v5946
      %v5971 = vunpack.c.l.b16 %v5947
      %v5972 = vunpack.c.l.b16 %v5948
      %v5973 = vunpack.c.l.b16 %v5949
      %v5974 = vunpack.c.l.b16 %v5950
      %v5975 = vunpack.c.l.b16 %v5951
      %v5976 = vunpack.c.l.b16 %v5952
      %v5977 = vunpack.c.l.b16 %v5953
      %v5978 = vrot.slane %v5969, 7
      %v5979 = vsel %vm771, %v5978, %v5966
      %v5980 = vrot.slane %v5972, 6
      %v5981 = vsel %vm774, %v5980, %v5979
      %v5982 = vrot.slane %v5975, 5
      %v5983 = vsel %vm777, %v5982, %v5981
      %v5984 = vrot.slane %v5970, 7
      %v5985 = vsel %vm771, %v5984, %v5967
      %v5986 = vrot.slane %v5973, 6
      %v5987 = vsel %vm774, %v5986, %v5985
      %v5988 = vrot.slane %v5976, 5
      %v5989 = vsel %vm777, %v5988, %v5987
      %v5990 = vrot.slane %v5971, 7
      %v5991 = vsel %vm771, %v5990, %v5968
      %v5992 = vrot.slane %v5974, 6
      %v5993 = vsel %vm774, %v5992, %v5991
      %v5994 = vrot.slane %v5977, 5
      %v5995 = vsel %vm777, %v5994, %v5993
      %v5996 = vpack.c.b16 %v5983, %v5983
      %v5997 = vpack.c.b16 %v5989, %v5989
      %v5998 = vpack.c.b16 %v5995, %v5995
      %5999 = vrot.lane.b32.xlu0 %v5996, 31
      %v6000 = vpop.permute.xlu0 %5999
      %6001 = vrot.lane.b32.xlu0 %v5997, 31
      %v6002 = vpop.permute.xlu0 %6001
      %6003 = vrot.lane.b32.xlu0 %v5998, 31
      %v6004 = vpop.permute.xlu0 %6003
      %v6005 = vsel %vm4728, %v6000, %v6002
      %v6006 = vsel %vm4728, %v6002, %v6004
      %6010 = vst.msk [vmem:[#allocation3 + $0x60] sm:$0x30] %vm4876, %v6000
      %6011 = vst [vmem:[#allocation3 + $0x68] sm:$0x30] %v6005
      %6012 = vst.msk [vmem:[#allocation3 + $0x70] sm:$0x30] %vm4879, %v6006
      %v6013 = vld [vmem:[%s658] ss:$4 sm:$0x7]
      %v6014 = vld [vmem:[%s660] ss:$4 sm:$0x7]
      %v6015 = vld [vmem:[%s662] ss:$4 sm:$0x7]
      %v6016 = vld [vmem:[%s664] ss:$4 sm:$0x7]
      %v6021 = vlaneseq
      %v6022 = vshrl.u32 %v6021, 7
      %v6023 = vsub.s32 0, %v6022
      %v6024 = vrot.slane %v6013, %v6023
      %v6025 = vlaneseq
      %v6026 = vshrl.u32 %v6025, 7
      %v6027 = vsub.s32 1, %v6026
      %v6028 = vrot.slane %v6013, %v6027
      %v6029 = vlaneseq
      %v6030 = vshrl.u32 %v6029, 7
      %v6031 = vsub.s32 2, %v6030
      %v6032 = vrot.slane %v6013, %v6031
      %v6033 = vlaneseq
      %v6034 = vshrl.u32 %v6033, 7
      %v6035 = vsub.s32 0, %v6034
      %v6036 = vrot.slane %v6014, %v6035
      %v6037 = vlaneseq
      %v6038 = vshrl.u32 %v6037, 7
      %v6039 = vsub.s32 1, %v6038
      %v6040 = vrot.slane %v6014, %v6039
      %v6041 = vlaneseq
      %v6042 = vshrl.u32 %v6041, 7
      %v6043 = vsub.s32 2, %v6042
      %v6044 = vrot.slane %v6014, %v6043
      %v6045 = vlaneseq
      %v6046 = vshrl.u32 %v6045, 7
      %v6047 = vsub.s32 0, %v6046
      %v6048 = vrot.slane %v6015, %v6047
      %v6049 = vlaneseq
      %v6050 = vshrl.u32 %v6049, 7
      %v6051 = vsub.s32 1, %v6050
      %v6052 = vrot.slane %v6015, %v6051
      %v6053 = vlaneseq
      %v6054 = vshrl.u32 %v6053, 7
      %v6055 = vsub.s32 2, %v6054
      %v6056 = vrot.slane %v6015, %v6055
      %v6057 = vlaneseq
      %v6058 = vshrl.u32 %v6057, 7
      %v6059 = vsub.s32 0, %v6058
      %v6060 = vrot.slane %v6016, %v6059
      %v6061 = vlaneseq
      %v6062 = vshrl.u32 %v6061, 7
      %v6063 = vsub.s32 1, %v6062
      %v6064 = vrot.slane %v6016, %v6063
      %v6065 = vlaneseq
      %v6066 = vshrl.u32 %v6065, 7
      %v6067 = vsub.s32 2, %v6066
      %v6068 = vrot.slane %v6016, %v6067
      %v6081 = vpack.c.bf16 %v6024, %v6024
      %v6082 = vpack.c.bf16 %v6028, %v6028
      %v6083 = vpack.c.bf16 %v6032, %v6032
      %v6084 = vpack.c.bf16 %v6036, %v6036
      %v6085 = vpack.c.bf16 %v6040, %v6040
      %v6086 = vpack.c.bf16 %v6044, %v6044
      %v6087 = vpack.c.bf16 %v6048, %v6048
      %v6088 = vpack.c.bf16 %v6052, %v6052
      %v6089 = vpack.c.bf16 %v6056, %v6056
      %v6090 = vpack.c.bf16 %v6060, %v6060
      %v6091 = vpack.c.bf16 %v6064, %v6064
      %v6092 = vpack.c.bf16 %v6068, %v6068
      %v6105 = vunpack.c.l.b16 %v6081
      %v6106 = vunpack.c.l.b16 %v6082
      %v6107 = vunpack.c.l.b16 %v6083
      %v6108 = vunpack.c.l.b16 %v6084
      %v6109 = vunpack.c.l.b16 %v6085
      %v6110 = vunpack.c.l.b16 %v6086
      %v6111 = vunpack.c.l.b16 %v6087
      %v6112 = vunpack.c.l.b16 %v6088
      %v6113 = vunpack.c.l.b16 %v6089
      %v6114 = vunpack.c.l.b16 %v6090
      %v6115 = vunpack.c.l.b16 %v6091
      %v6116 = vunpack.c.l.b16 %v6092
      %v6117 = vrot.slane %v6105, 4
      %v6118 = vrot.slane %v6108, 3
      %v6119 = vsel %vm907, %v6118, %v6117
      %v6120 = vrot.slane %v6111, 2
      %v6121 = vsel %vm910, %v6120, %v6119
      %v6122 = vrot.slane %v6114, 1
      %v6123 = vsel %vm913, %v6122, %v6121
      %v6124 = vrot.slane %v6106, 4
      %v6125 = vrot.slane %v6109, 3
      %v6126 = vsel %vm907, %v6125, %v6124
      %v6127 = vrot.slane %v6112, 2
      %v6128 = vsel %vm910, %v6127, %v6126
      %v6129 = vrot.slane %v6115, 1
      %v6130 = vsel %vm913, %v6129, %v6128
      %v6131 = vrot.slane %v6107, 4
      %v6132 = vrot.slane %v6110, 3
      %v6133 = vsel %vm907, %v6132, %v6131
      %v6134 = vrot.slane %v6113, 2
      %v6135 = vsel %vm910, %v6134, %v6133
      %v6136 = vrot.slane %v6116, 1
      %v6137 = vsel %vm913, %v6136, %v6135
      %v6138 = vpack.c.b16 %v6123, %v6123
      %v6139 = vpack.c.b16 %v6130, %v6130
      %v6140 = vpack.c.b16 %v6137, %v6137
      %6141 = vrot.lane.b32.xlu0 %v6138, 30
      %v6142 = vpop.permute.xlu0 %6141
      %6143 = vrot.lane.b32.xlu0 %v6139, 30
      %v6144 = vpop.permute.xlu0 %6143
      %6145 = vrot.lane.b32.xlu0 %v6140, 30
      %v6146 = vpop.permute.xlu0 %6145
      %v6147 = vsel %vm4870, %v6142, %v6144
      %v6148 = vsel %vm4870, %v6144, %v6146
      %6152 = vst.msk [vmem:[#allocation3 + $0x60] sm:$0xc0] %vm5021, %v6142
      %6153 = vst [vmem:[#allocation3 + $0x68] sm:$0xc0] %v6147
      %6154 = vst.msk [vmem:[#allocation3 + $0x70] sm:$0xc0] %vm5024, %v6148
      %v6155 = vld [vmem:[%s658] ss:$4 sm:$0x7]
      %v6156 = vld [vmem:[%s660] ss:$4 sm:$0x7]
      %v6157 = vld [vmem:[%s662] ss:$4 sm:$0x7]
      %v6158 = vld [vmem:[%s664] ss:$4 sm:$0x7]
      %v6163 = vlaneseq
      %v6164 = vshrl.u32 %v6163, 7
      %v6165 = vsub.s32 0, %v6164
      %v6166 = vrot.slane %v6155, %v6165
      %v6167 = vlaneseq
      %v6168 = vshrl.u32 %v6167, 7
      %v6169 = vsub.s32 1, %v6168
      %v6170 = vrot.slane %v6155, %v6169
      %v6171 = vlaneseq
      %v6172 = vshrl.u32 %v6171, 7
      %v6173 = vsub.s32 2, %v6172
      %v6174 = vrot.slane %v6155, %v6173
      %v6175 = vlaneseq
      %v6176 = vshrl.u32 %v6175, 7
      %v6177 = vsub.s32 0, %v6176
      %v6178 = vrot.slane %v6156, %v6177
      %v6179 = vlaneseq
      %v6180 = vshrl.u32 %v6179, 7
      %v6181 = vsub.s32 1, %v6180
      %v6182 = vrot.slane %v6156, %v6181
      %v6183 = vlaneseq
      %v6184 = vshrl.u32 %v6183, 7
      %v6185 = vsub.s32 2, %v6184
      %v6186 = vrot.slane %v6156, %v6185
      %v6187 = vlaneseq
      %v6188 = vshrl.u32 %v6187, 7
      %v6189 = vsub.s32 0, %v6188
      %v6190 = vrot.slane %v6157, %v6189
      %v6191 = vlaneseq
      %v6192 = vshrl.u32 %v6191, 7
      %v6193 = vsub.s32 1, %v6192
      %v6194 = vrot.slane %v6157, %v6193
      %v6195 = vlaneseq
      %v6196 = vshrl.u32 %v6195, 7
      %v6197 = vsub.s32 2, %v6196
      %v6198 = vrot.slane %v6157, %v6197
      %v6199 = vlaneseq
      %v6200 = vshrl.u32 %v6199, 7
      %v6201 = vsub.s32 0, %v6200
      %v6202 = vrot.slane %v6158, %v6201
      %v6203 = vlaneseq
      %v6204 = vshrl.u32 %v6203, 7
      %v6205 = vsub.s32 1, %v6204
      %v6206 = vrot.slane %v6158, %v6205
      %v6207 = vlaneseq
      %v6208 = vshrl.u32 %v6207, 7
      %v6209 = vsub.s32 2, %v6208
      %v6210 = vrot.slane %v6158, %v6209
      %v6223 = vpack.c.bf16 %v6166, %v6166
      %v6224 = vpack.c.bf16 %v6170, %v6170
      %v6225 = vpack.c.bf16 %v6174, %v6174
      %v6226 = vpack.c.bf16 %v6178, %v6178
      %v6227 = vpack.c.bf16 %v6182, %v6182
      %v6228 = vpack.c.bf16 %v6186, %v6186
      %v6229 = vpack.c.bf16 %v6190, %v6190
      %v6230 = vpack.c.bf16 %v6194, %v6194
      %v6231 = vpack.c.bf16 %v6198, %v6198
      %v6232 = vpack.c.bf16 %v6202, %v6202
      %v6233 = vpack.c.bf16 %v6206, %v6206
      %v6234 = vpack.c.bf16 %v6210, %v6210
      %v6247 = vunpack.c.l.b16 %v6223
      %v6248 = vunpack.c.l.b16 %v6224
      %v6249 = vunpack.c.l.b16 %v6225
      %v6250 = vunpack.c.l.b16 %v6226
      %v6251 = vunpack.c.l.b16 %v6227
      %v6252 = vunpack.c.l.b16 %v6228
      %v6253 = vunpack.c.l.b16 %v6229
      %v6254 = vunpack.c.l.b16 %v6230
      %v6255 = vunpack.c.l.b16 %v6231
      %v6256 = vunpack.c.l.b16 %v6232
      %v6257 = vunpack.c.l.b16 %v6233
      %v6258 = vunpack.c.l.b16 %v6234
      %v6259 = vrot.slane %v6250, 7
      %v6260 = vsel %vm771, %v6259, %v6247
      %v6261 = vrot.slane %v6253, 6
      %v6262 = vsel %vm774, %v6261, %v6260
      %v6263 = vrot.slane %v6256, 5
      %v6264 = vsel %vm777, %v6263, %v6262
      %v6265 = vrot.slane %v6251, 7
      %v6266 = vsel %vm771, %v6265, %v6248
      %v6267 = vrot.slane %v6254, 6
      %v6268 = vsel %vm774, %v6267, %v6266
      %v6269 = vrot.slane %v6257, 5
      %v6270 = vsel %vm777, %v6269, %v6268
      %v6271 = vrot.slane %v6252, 7
      %v6272 = vsel %vm771, %v6271, %v6249
      %v6273 = vrot.slane %v6255, 6
      %v6274 = vsel %vm774, %v6273, %v6272
      %v6275 = vrot.slane %v6258, 5
      %v6276 = vsel %vm777, %v6275, %v6274
      %v6277 = vpack.c.b16 %v6264, %v6264
      %v6278 = vpack.c.b16 %v6270, %v6270
      %v6279 = vpack.c.b16 %v6276, %v6276
      %6280 = vrot.lane.b32.xlu0 %v6277, 14
      %v6281 = vpop.permute.xlu0 %6280
      %6282 = vrot.lane.b32.xlu0 %v6278, 14
      %v6283 = vpop.permute.xlu0 %6282
      %6284 = vrot.lane.b32.xlu0 %v6279, 14
      %v6285 = vpop.permute.xlu0 %6284
      %v6286 = vsel %vm5015, %v6281, %v6283
      %v6287 = vsel %vm5015, %v6283, %v6285
      %6291 = vst.msk [vmem:[#allocation3 + $0x88] sm:$0x3] %vm4589, %v6281
      %6292 = vst [vmem:[#allocation3 + $0x90] sm:$0x3] %v6286
      %6293 = vst.msk [vmem:[#allocation3 + $0x98] sm:$0x3] %vm4592, %v6287
      %v6294 = vld [vmem:[%s658] ss:$4 sm:$0x7]
      %v6295 = vld [vmem:[%s660] ss:$4 sm:$0x7]
      %v6296 = vld [vmem:[%s662] ss:$4 sm:$0x7]
      %v6297 = vld [vmem:[%s664] ss:$4 sm:$0x7]
      %v6302 = vlaneseq
      %v6303 = vshrl.u32 %v6302, 7
      %v6304 = vsub.s32 0, %v6303
      %v6305 = vrot.slane %v6294, %v6304
      %v6306 = vlaneseq
      %v6307 = vshrl.u32 %v6306, 7
      %v6308 = vsub.s32 1, %v6307
      %v6309 = vrot.slane %v6294, %v6308
      %v6310 = vlaneseq
      %v6311 = vshrl.u32 %v6310, 7
      %v6312 = vsub.s32 2, %v6311
      %v6313 = vrot.slane %v6294, %v6312
      %v6314 = vlaneseq
      %v6315 = vshrl.u32 %v6314, 7
      %v6316 = vsub.s32 0, %v6315
      %v6317 = vrot.slane %v6295, %v6316
      %v6318 = vlaneseq
      %v6319 = vshrl.u32 %v6318, 7
      %v6320 = vsub.s32 1, %v6319
      %v6321 = vrot.slane %v6295, %v6320
      %v6322 = vlaneseq
      %v6323 = vshrl.u32 %v6322, 7
      %v6324 = vsub.s32 2, %v6323
      %v6325 = vrot.slane %v6295, %v6324
      %v6326 = vlaneseq
      %v6327 = vshrl.u32 %v6326, 7
      %v6328 = vsub.s32 0, %v6327
      %v6329 = vrot.slane %v6296, %v6328
      %v6330 = vlaneseq
      %v6331 = vshrl.u32 %v6330, 7
      %v6332 = vsub.s32 1, %v6331
      %v6333 = vrot.slane %v6296, %v6332
      %v6334 = vlaneseq
      %v6335 = vshrl.u32 %v6334, 7
      %v6336 = vsub.s32 2, %v6335
      %v6337 = vrot.slane %v6296, %v6336
      %v6338 = vlaneseq
      %v6339 = vshrl.u32 %v6338, 7
      %v6340 = vsub.s32 0, %v6339
      %v6341 = vrot.slane %v6297, %v6340
      %v6342 = vlaneseq
      %v6343 = vshrl.u32 %v6342, 7
      %v6344 = vsub.s32 1, %v6343
      %v6345 = vrot.slane %v6297, %v6344
      %v6346 = vlaneseq
      %v6347 = vshrl.u32 %v6346, 7
      %v6348 = vsub.s32 2, %v6347
      %v6349 = vrot.slane %v6297, %v6348
      %v6362 = vpack.c.bf16 %v6305, %v6305
      %v6363 = vpack.c.bf16 %v6309, %v6309
      %v6364 = vpack.c.bf16 %v6313, %v6313
      %v6365 = vpack.c.bf16 %v6317, %v6317
      %v6366 = vpack.c.bf16 %v6321, %v6321
      %v6367 = vpack.c.bf16 %v6325, %v6325
      %v6368 = vpack.c.bf16 %v6329, %v6329
      %v6369 = vpack.c.bf16 %v6333, %v6333
      %v6370 = vpack.c.bf16 %v6337, %v6337
      %v6371 = vpack.c.bf16 %v6341, %v6341
      %v6372 = vpack.c.bf16 %v6345, %v6345
      %v6373 = vpack.c.bf16 %v6349, %v6349
      %v6386 = vunpack.c.l.b16 %v6362
      %v6387 = vunpack.c.l.b16 %v6363
      %v6388 = vunpack.c.l.b16 %v6364
      %v6389 = vunpack.c.l.b16 %v6365
      %v6390 = vunpack.c.l.b16 %v6366
      %v6391 = vunpack.c.l.b16 %v6367
      %v6392 = vunpack.c.l.b16 %v6368
      %v6393 = vunpack.c.l.b16 %v6369
      %v6394 = vunpack.c.l.b16 %v6370
      %v6395 = vunpack.c.l.b16 %v6371
      %v6396 = vunpack.c.l.b16 %v6372
      %v6397 = vunpack.c.l.b16 %v6373
      %v6398 = vrot.slane %v6386, 4
      %v6399 = vrot.slane %v6389, 3
      %v6400 = vsel %vm907, %v6399, %v6398
      %v6401 = vrot.slane %v6392, 2
      %v6402 = vsel %vm910, %v6401, %v6400
      %v6403 = vrot.slane %v6395, 1
      %v6404 = vsel %vm913, %v6403, %v6402
      %v6405 = vrot.slane %v6387, 4
      %v6406 = vrot.slane %v6390, 3
      %v6407 = vsel %vm907, %v6406, %v6405
      %v6408 = vrot.slane %v6393, 2
      %v6409 = vsel %vm910, %v6408, %v6407
      %v6410 = vrot.slane %v6396, 1
      %v6411 = vsel %vm913, %v6410, %v6409
      %v6412 = vrot.slane %v6388, 4
      %v6413 = vrot.slane %v6391, 3
      %v6414 = vsel %vm907, %v6413, %v6412
      %v6415 = vrot.slane %v6394, 2
      %v6416 = vsel %vm910, %v6415, %v6414
      %v6417 = vrot.slane %v6397, 1
      %v6418 = vsel %vm913, %v6417, %v6416
      %v6419 = vpack.c.b16 %v6404, %v6404
      %v6420 = vpack.c.b16 %v6411, %v6411
      %v6421 = vpack.c.b16 %v6418, %v6418
      %6422 = vrot.lane.b32.xlu0 %v6419, 13
      %v6423 = vpop.permute.xlu0 %6422
      %6424 = vrot.lane.b32.xlu0 %v6420, 13
      %v6425 = vpop.permute.xlu0 %6424
      %6426 = vrot.lane.b32.xlu0 %v6421, 13
      %v6427 = vpop.permute.xlu0 %6426
      %v6428 = vsel %vm5157, %v6423, %v6425
      %v6429 = vsel %vm5157, %v6425, %v6427
      %6433 = vst.msk [vmem:[#allocation3 + $0x88] sm:$0xc] %vm4734, %v6423
      %6434 = vst [vmem:[#allocation3 + $0x90] sm:$0xc] %v6428
      %6435 = vst.msk [vmem:[#allocation3 + $0x98] sm:$0xc] %vm4737, %v6429
      %v6436 = vld [vmem:[%s658] ss:$4 sm:$0x7]
      %v6437 = vld [vmem:[%s660] ss:$4 sm:$0x7]
      %v6438 = vld [vmem:[%s662] ss:$4 sm:$0x7]
      %v6439 = vld [vmem:[%s664] ss:$4 sm:$0x7]
      %v6444 = vlaneseq
      %v6445 = vshrl.u32 %v6444, 7
      %v6446 = vsub.s32 0, %v6445
      %v6447 = vrot.slane %v6436, %v6446
      %v6448 = vlaneseq
      %v6449 = vshrl.u32 %v6448, 7
      %v6450 = vsub.s32 1, %v6449
      %v6451 = vrot.slane %v6436, %v6450
      %v6452 = vlaneseq
      %v6453 = vshrl.u32 %v6452, 7
      %v6454 = vsub.s32 2, %v6453
      %v6455 = vrot.slane %v6436, %v6454
      %v6456 = vlaneseq
      %v6457 = vshrl.u32 %v6456, 7
      %v6458 = vsub.s32 0, %v6457
      %v6459 = vrot.slane %v6437, %v6458
      %v6460 = vlaneseq
      %v6461 = vshrl.u32 %v6460, 7
      %v6462 = vsub.s32 1, %v6461
      %v6463 = vrot.slane %v6437, %v6462
      %v6464 = vlaneseq
      %v6465 = vshrl.u32 %v6464, 7
      %v6466 = vsub.s32 2, %v6465
      %v6467 = vrot.slane %v6437, %v6466
      %v6468 = vlaneseq
      %v6469 = vshrl.u32 %v6468, 7
      %v6470 = vsub.s32 0, %v6469
      %v6471 = vrot.slane %v6438, %v6470
      %v6472 = vlaneseq
      %v6473 = vshrl.u32 %v6472, 7
      %v6474 = vsub.s32 1, %v6473
      %v6475 = vrot.slane %v6438, %v6474
      %v6476 = vlaneseq
      %v6477 = vshrl.u32 %v6476, 7
      %v6478 = vsub.s32 2, %v6477
      %v6479 = vrot.slane %v6438, %v6478
      %v6480 = vlaneseq
      %v6481 = vshrl.u32 %v6480, 7
      %v6482 = vsub.s32 0, %v6481
      %v6483 = vrot.slane %v6439, %v6482
      %v6484 = vlaneseq
      %v6485 = vshrl.u32 %v6484, 7
      %v6486 = vsub.s32 1, %v6485
      %v6487 = vrot.slane %v6439, %v6486
      %v6488 = vlaneseq
      %v6489 = vshrl.u32 %v6488, 7
      %v6490 = vsub.s32 2, %v6489
      %v6491 = vrot.slane %v6439, %v6490
      %v6504 = vpack.c.bf16 %v6447, %v6447
      %v6505 = vpack.c.bf16 %v6451, %v6451
      %v6506 = vpack.c.bf16 %v6455, %v6455
      %v6507 = vpack.c.bf16 %v6459, %v6459
      %v6508 = vpack.c.bf16 %v6463, %v6463
      %v6509 = vpack.c.bf16 %v6467, %v6467
      %v6510 = vpack.c.bf16 %v6471, %v6471
      %v6511 = vpack.c.bf16 %v6475, %v6475
      %v6512 = vpack.c.bf16 %v6479, %v6479
      %v6513 = vpack.c.bf16 %v6483, %v6483
      %v6514 = vpack.c.bf16 %v6487, %v6487
      %v6515 = vpack.c.bf16 %v6491, %v6491
      %v6528 = vunpack.c.l.b16 %v6504
      %v6529 = vunpack.c.l.b16 %v6505
      %v6530 = vunpack.c.l.b16 %v6506
      %v6531 = vunpack.c.l.b16 %v6507
      %v6532 = vunpack.c.l.b16 %v6508
      %v6533 = vunpack.c.l.b16 %v6509
      %v6534 = vunpack.c.l.b16 %v6510
      %v6535 = vunpack.c.l.b16 %v6511
      %v6536 = vunpack.c.l.b16 %v6512
      %v6537 = vunpack.c.l.b16 %v6513
      %v6538 = vunpack.c.l.b16 %v6514
      %v6539 = vunpack.c.l.b16 %v6515
      %v6540 = vrot.slane %v6531, 7
      %v6541 = vsel %vm771, %v6540, %v6528
      %v6542 = vrot.slane %v6534, 6
      %v6543 = vsel %vm774, %v6542, %v6541
      %v6544 = vrot.slane %v6537, 5
      %v6545 = vsel %vm777, %v6544, %v6543
      %v6546 = vrot.slane %v6532, 7
      %v6547 = vsel %vm771, %v6546, %v6529
      %v6548 = vrot.slane %v6535, 6
      %v6549 = vsel %vm774, %v6548, %v6547
      %v6550 = vrot.slane %v6538, 5
      %v6551 = vsel %vm777, %v6550, %v6549
      %v6552 = vrot.slane %v6533, 7
      %v6553 = vsel %vm771, %v6552, %v6530
      %v6554 = vrot.slane %v6536, 6
      %v6555 = vsel %vm774, %v6554, %v6553
      %v6556 = vrot.slane %v6539, 5
      %v6557 = vsel %vm777, %v6556, %v6555
      %v6558 = vpack.c.b16 %v6545, %v6545
      %v6559 = vpack.c.b16 %v6551, %v6551
      %v6560 = vpack.c.b16 %v6557, %v6557
      %6561 = vrot.lane.b32.xlu0 %v6558, 12
      %v6562 = vpop.permute.xlu0 %6561
      %6563 = vrot.lane.b32.xlu0 %v6559, 12
      %v6564 = vpop.permute.xlu0 %6563
      %6565 = vrot.lane.b32.xlu0 %v6560, 12
      %v6566 = vpop.permute.xlu0 %6565
      %v6567 = vsel %vm5300, %v6562, %v6564
      %v6568 = vsel %vm5300, %v6564, %v6566
      %6572 = vst.msk [vmem:[#allocation3 + $0x88] sm:$0x30] %vm4876, %v6562
      %6573 = vst [vmem:[#allocation3 + $0x90] sm:$0x30] %v6567
      %6574 = vst.msk [vmem:[#allocation3 + $0x98] sm:$0x30] %vm4879, %v6568
      %v6575 = vld [vmem:[%s658] ss:$4 sm:$0x7]
      %v6576 = vld [vmem:[%s660] ss:$4 sm:$0x7]
      %v6577 = vld [vmem:[%s662] ss:$4 sm:$0x7]
      %v6578 = vld [vmem:[%s664] ss:$4 sm:$0x7]
      %v6583 = vlaneseq
      %v6584 = vshrl.u32 %v6583, 7
      %v6585 = vsub.s32 0, %v6584
      %v6586 = vrot.slane %v6575, %v6585
      %v6587 = vlaneseq
      %v6588 = vshrl.u32 %v6587, 7
      %v6589 = vsub.s32 1, %v6588
      %v6590 = vrot.slane %v6575, %v6589
      %v6591 = vlaneseq
      %v6592 = vshrl.u32 %v6591, 7
      %v6593 = vsub.s32 2, %v6592
      %v6594 = vrot.slane %v6575, %v6593
      %v6595 = vlaneseq
      %v6596 = vshrl.u32 %v6595, 7
      %v6597 = vsub.s32 0, %v6596
      %v6598 = vrot.slane %v6576, %v6597
      %v6599 = vlaneseq
      %v6600 = vshrl.u32 %v6599, 7
      %v6601 = vsub.s32 1, %v6600
      %v6602 = vrot.slane %v6576, %v6601
      %v6603 = vlaneseq
      %v6604 = vshrl.u32 %v6603, 7
      %v6605 = vsub.s32 2, %v6604
      %v6606 = vrot.slane %v6576, %v6605
      %v6607 = vlaneseq
      %v6608 = vshrl.u32 %v6607, 7
      %v6609 = vsub.s32 0, %v6608
      %v6610 = vrot.slane %v6577, %v6609
      %v6611 = vlaneseq
      %v6612 = vshrl.u32 %v6611, 7
      %v6613 = vsub.s32 1, %v6612
      %v6614 = vrot.slane %v6577, %v6613
      %v6615 = vlaneseq
      %v6616 = vshrl.u32 %v6615, 7
      %v6617 = vsub.s32 2, %v6616
      %v6618 = vrot.slane %v6577, %v6617
      %v6619 = vlaneseq
      %v6620 = vshrl.u32 %v6619, 7
      %v6621 = vsub.s32 0, %v6620
      %v6622 = vrot.slane %v6578, %v6621
      %v6623 = vlaneseq
      %v6624 = vshrl.u32 %v6623, 7
      %v6625 = vsub.s32 1, %v6624
      %v6626 = vrot.slane %v6578, %v6625
      %v6627 = vlaneseq
      %v6628 = vshrl.u32 %v6627, 7
      %v6629 = vsub.s32 2, %v6628
      %v6630 = vrot.slane %v6578, %v6629
      %v6643 = vpack.c.bf16 %v6586, %v6586
      %v6644 = vpack.c.bf16 %v6590, %v6590
      %v6645 = vpack.c.bf16 %v6594, %v6594
      %v6646 = vpack.c.bf16 %v6598, %v6598
      %v6647 = vpack.c.bf16 %v6602, %v6602
      %v6648 = vpack.c.bf16 %v6606, %v6606
      %v6649 = vpack.c.bf16 %v6610, %v6610
      %v6650 = vpack.c.bf16 %v6614, %v6614
      %v6651 = vpack.c.bf16 %v6618, %v6618
      %v6652 = vpack.c.bf16 %v6622, %v6622
      %v6653 = vpack.c.bf16 %v6626, %v6626
      %v6654 = vpack.c.bf16 %v6630, %v6630
      %v6667 = vunpack.c.l.b16 %v6643
      %v6668 = vunpack.c.l.b16 %v6644
      %v6669 = vunpack.c.l.b16 %v6645
      %v6670 = vunpack.c.l.b16 %v6646
      %v6671 = vunpack.c.l.b16 %v6647
      %v6672 = vunpack.c.l.b16 %v6648
      %v6673 = vunpack.c.l.b16 %v6649
      %v6674 = vunpack.c.l.b16 %v6650
      %v6675 = vunpack.c.l.b16 %v6651
      %v6676 = vunpack.c.l.b16 %v6652
      %v6677 = vunpack.c.l.b16 %v6653
      %v6678 = vunpack.c.l.b16 %v6654
      %v6679 = vrot.slane %v6667, 4
      %v6680 = vrot.slane %v6670, 3
      %v6681 = vsel %vm907, %v6680, %v6679
      %v6682 = vrot.slane %v6673, 2
      %v6683 = vsel %vm910, %v6682, %v6681
      %v6684 = vrot.slane %v6676, 1
      %v6685 = vsel %vm913, %v6684, %v6683
      %v6686 = vrot.slane %v6668, 4
      %v6687 = vrot.slane %v6671, 3
      %v6688 = vsel %vm907, %v6687, %v6686
      %v6689 = vrot.slane %v6674, 2
      %v6690 = vsel %vm910, %v6689, %v6688
      %v6691 = vrot.slane %v6677, 1
      %v6692 = vsel %vm913, %v6691, %v6690
      %v6693 = vrot.slane %v6669, 4
      %v6694 = vrot.slane %v6672, 3
      %v6695 = vsel %vm907, %v6694, %v6693
      %v6696 = vrot.slane %v6675, 2
      %v6697 = vsel %vm910, %v6696, %v6695
      %v6698 = vrot.slane %v6678, 1
      %v6699 = vsel %vm913, %v6698, %v6697
      %v6700 = vpack.c.b16 %v6685, %v6685
      %v6701 = vpack.c.b16 %v6692, %v6692
      %v6702 = vpack.c.b16 %v6699, %v6699
      %6703 = vrot.lane.b32.xlu0 %v6700, 124
      %v6704 = vpop.permute.xlu0 %6703
      %6705 = vrot.lane.b32.xlu0 %v6701, 124
      %v6706 = vpop.permute.xlu0 %6705
      %6707 = vrot.lane.b32.xlu0 %v6702, 124
      %v6708 = vpop.permute.xlu0 %6707
      %v6709 = vsel %vm5440, %v6704, %v6706
      %v6710 = vsel %vm5440, %v6706, %v6708
      %6714 = vst.msk [vmem:[#allocation3 + $0x88] sm:$0xc0] %vm5021, %v6709
      %6715 = vst [vmem:[#allocation3 + $0x90] sm:$0xc0] %v6710
      %6716 = vst.msk [vmem:[#allocation3 + $0x98] sm:$0xc0] %vm5024, %v6708
      %v6717 = vld [vmem:[%s658] ss:$4 sm:$0x7]
      %v6718 = vld [vmem:[%s660] ss:$4 sm:$0x7]
      %v6719 = vld [vmem:[%s662] ss:$4 sm:$0x7]
      %v6720 = vld [vmem:[%s664] ss:$4 sm:$0x7]
      %v6725 = vlaneseq
      %v6726 = vshrl.u32 %v6725, 7
      %v6727 = vsub.s32 0, %v6726
      %v6728 = vrot.slane %v6717, %v6727
      %v6729 = vlaneseq
      %v6730 = vshrl.u32 %v6729, 7
      %v6731 = vsub.s32 1, %v6730
      %v6732 = vrot.slane %v6717, %v6731
      %v6733 = vlaneseq
      %v6734 = vshrl.u32 %v6733, 7
      %v6735 = vsub.s32 2, %v6734
      %v6736 = vrot.slane %v6717, %v6735
      %v6737 = vlaneseq
      %v6738 = vshrl.u32 %v6737, 7
      %v6739 = vsub.s32 0, %v6738
      %v6740 = vrot.slane %v6718, %v6739
      %v6741 = vlaneseq
      %v6742 = vshrl.u32 %v6741, 7
      %v6743 = vsub.s32 1, %v6742
      %v6744 = vrot.slane %v6718, %v6743
      %v6745 = vlaneseq
      %v6746 = vshrl.u32 %v6745, 7
      %v6747 = vsub.s32 2, %v6746
      %v6748 = vrot.slane %v6718, %v6747
      %v6749 = vlaneseq
      %v6750 = vshrl.u32 %v6749, 7
      %v6751 = vsub.s32 0, %v6750
      %v6752 = vrot.slane %v6719, %v6751
      %v6753 = vlaneseq
      %v6754 = vshrl.u32 %v6753, 7
      %v6755 = vsub.s32 1, %v6754
      %v6756 = vrot.slane %v6719, %v6755
      %v6757 = vlaneseq
      %v6758 = vshrl.u32 %v6757, 7
      %v6759 = vsub.s32 2, %v6758
      %v6760 = vrot.slane %v6719, %v6759
      %v6761 = vlaneseq
      %v6762 = vshrl.u32 %v6761, 7
      %v6763 = vsub.s32 0, %v6762
      %v6764 = vrot.slane %v6720, %v6763
      %v6765 = vlaneseq
      %v6766 = vshrl.u32 %v6765, 7
      %v6767 = vsub.s32 1, %v6766
      %v6768 = vrot.slane %v6720, %v6767
      %v6769 = vlaneseq
      %v6770 = vshrl.u32 %v6769, 7
      %v6771 = vsub.s32 2, %v6770
      %v6772 = vrot.slane %v6720, %v6771
      %v6785 = vpack.c.bf16 %v6728, %v6728
      %v6786 = vpack.c.bf16 %v6732, %v6732
      %v6787 = vpack.c.bf16 %v6736, %v6736
      %v6788 = vpack.c.bf16 %v6740, %v6740
      %v6789 = vpack.c.bf16 %v6744, %v6744
      %v6790 = vpack.c.bf16 %v6748, %v6748
      %v6791 = vpack.c.bf16 %v6752, %v6752
      %v6792 = vpack.c.bf16 %v6756, %v6756
      %v6793 = vpack.c.bf16 %v6760, %v6760
      %v6794 = vpack.c.bf16 %v6764, %v6764
      %v6795 = vpack.c.bf16 %v6768, %v6768
      %v6796 = vpack.c.bf16 %v6772, %v6772
      %v6809 = vunpack.c.l.b16 %v6785
      %v6810 = vunpack.c.l.b16 %v6786
      %v6811 = vunpack.c.l.b16 %v6787
      %v6812 = vunpack.c.l.b16 %v6788
      %v6813 = vunpack.c.l.b16 %v6789
      %v6814 = vunpack.c.l.b16 %v6790
      %v6815 = vunpack.c.l.b16 %v6791
      %v6816 = vunpack.c.l.b16 %v6792
      %v6817 = vunpack.c.l.b16 %v6793
      %v6818 = vunpack.c.l.b16 %v6794
      %v6819 = vunpack.c.l.b16 %v6795
      %v6820 = vunpack.c.l.b16 %v6796
      %v6821 = vrot.slane %v6812, 7
      %v6822 = vsel %vm771, %v6821, %v6809
      %v6823 = vrot.slane %v6815, 6
      %v6824 = vsel %vm774, %v6823, %v6822
      %v6825 = vrot.slane %v6818, 5
      %v6826 = vsel %vm777, %v6825, %v6824
      %v6827 = vrot.slane %v6813, 7
      %v6828 = vsel %vm771, %v6827, %v6810
      %v6829 = vrot.slane %v6816, 6
      %v6830 = vsel %vm774, %v6829, %v6828
      %v6831 = vrot.slane %v6819, 5
      %v6832 = vsel %vm777, %v6831, %v6830
      %v6833 = vrot.slane %v6814, 7
      %v6834 = vsel %vm771, %v6833, %v6811
      %v6835 = vrot.slane %v6817, 6
      %v6836 = vsel %vm774, %v6835, %v6834
      %v6837 = vrot.slane %v6820, 5
      %v6838 = vsel %vm777, %v6837, %v6836
      %v6839 = vpack.c.b16 %v6826, %v6826
      %v6840 = vpack.c.b16 %v6832, %v6832
      %v6841 = vpack.c.b16 %v6838, %v6838
      %6842 = vrot.lane.b32.xlu0 %v6839, 123
      %v6843 = vpop.permute.xlu0 %6842
      %6844 = vrot.lane.b32.xlu0 %v6840, 123
      %v6845 = vpop.permute.xlu0 %6844
      %6846 = vrot.lane.b32.xlu0 %v6841, 123
      %v6847 = vpop.permute.xlu0 %6846
      %v6848 = vsel %vm5583, %v6843, %v6845
      %v6849 = vsel %vm5583, %v6845, %v6847
      %6853 = vst.msk [vmem:[#allocation3 + $0xb0] sm:$0x3] %vm4589, %v6848
      %6854 = vst [vmem:[#allocation3 + $0xb8] sm:$0x3] %v6849
      %6855 = vst.msk [vmem:[#allocation3 + $0xc0] sm:$0x3] %vm4592, %v6847
      %v6856 = vld [vmem:[%s658] ss:$4 sm:$0x7]
      %v6857 = vld [vmem:[%s660] ss:$4 sm:$0x7]
      %v6858 = vld [vmem:[%s662] ss:$4 sm:$0x7]
      %v6859 = vld [vmem:[%s664] ss:$4 sm:$0x7]
      %v6864 = vlaneseq
      %v6865 = vshrl.u32 %v6864, 7
      %v6866 = vsub.s32 0, %v6865
      %v6867 = vrot.slane %v6856, %v6866
      %v6868 = vlaneseq
      %v6869 = vshrl.u32 %v6868, 7
      %v6870 = vsub.s32 1, %v6869
      %v6871 = vrot.slane %v6856, %v6870
      %v6872 = vlaneseq
      %v6873 = vshrl.u32 %v6872, 7
      %v6874 = vsub.s32 2, %v6873
      %v6875 = vrot.slane %v6856, %v6874
      %v6876 = vlaneseq
      %v6877 = vshrl.u32 %v6876, 7
      %v6878 = vsub.s32 0, %v6877
      %v6879 = vrot.slane %v6857, %v6878
      %v6880 = vlaneseq
      %v6881 = vshrl.u32 %v6880, 7
      %v6882 = vsub.s32 1, %v6881
      %v6883 = vrot.slane %v6857, %v6882
      %v6884 = vlaneseq
      %v6885 = vshrl.u32 %v6884, 7
      %v6886 = vsub.s32 2, %v6885
      %v6887 = vrot.slane %v6857, %v6886
      %v6888 = vlaneseq
      %v6889 = vshrl.u32 %v6888, 7
      %v6890 = vsub.s32 0, %v6889
      %v6891 = vrot.slane %v6858, %v6890
      %v6892 = vlaneseq
      %v6893 = vshrl.u32 %v6892, 7
      %v6894 = vsub.s32 1, %v6893
      %v6895 = vrot.slane %v6858, %v6894
      %v6896 = vlaneseq
      %v6897 = vshrl.u32 %v6896, 7
      %v6898 = vsub.s32 2, %v6897
      %v6899 = vrot.slane %v6858, %v6898
      %v6900 = vlaneseq
      %v6901 = vshrl.u32 %v6900, 7
      %v6902 = vsub.s32 0, %v6901
      %v6903 = vrot.slane %v6859, %v6902
      %v6904 = vlaneseq
      %v6905 = vshrl.u32 %v6904, 7
      %v6906 = vsub.s32 1, %v6905
      %v6907 = vrot.slane %v6859, %v6906
      %v6908 = vlaneseq
      %v6909 = vshrl.u32 %v6908, 7
      %v6910 = vsub.s32 2, %v6909
      %v6911 = vrot.slane %v6859, %v6910
      %v6924 = vpack.c.bf16 %v6867, %v6867
      %v6925 = vpack.c.bf16 %v6871, %v6871
      %v6926 = vpack.c.bf16 %v6875, %v6875
      %v6927 = vpack.c.bf16 %v6879, %v6879
      %v6928 = vpack.c.bf16 %v6883, %v6883
      %v6929 = vpack.c.bf16 %v6887, %v6887
      %v6930 = vpack.c.bf16 %v6891, %v6891
      %v6931 = vpack.c.bf16 %v6895, %v6895
      %v6932 = vpack.c.bf16 %v6899, %v6899
      %v6933 = vpack.c.bf16 %v6903, %v6903
      %v6934 = vpack.c.bf16 %v6907, %v6907
      %v6935 = vpack.c.bf16 %v6911, %v6911
      %v6948 = vunpack.c.l.b16 %v6924
      %v6949 = vunpack.c.l.b16 %v6925
      %v6950 = vunpack.c.l.b16 %v6926
      %v6951 = vunpack.c.l.b16 %v6927
      %v6952 = vunpack.c.l.b16 %v6928
      %v6953 = vunpack.c.l.b16 %v6929
      %v6954 = vunpack.c.l.b16 %v6930
      %v6955 = vunpack.c.l.b16 %v6931
      %v6956 = vunpack.c.l.b16 %v6932
      %v6957 = vunpack.c.l.b16 %v6933
      %v6958 = vunpack.c.l.b16 %v6934
      %v6959 = vunpack.c.l.b16 %v6935
      %v6960 = vrot.slane %v6948, 4
      %v6961 = vrot.slane %v6951, 3
      %v6962 = vsel %vm907, %v6961, %v6960
      %v6963 = vrot.slane %v6954, 2
      %v6964 = vsel %vm910, %v6963, %v6962
      %v6965 = vrot.slane %v6957, 1
      %v6966 = vsel %vm913, %v6965, %v6964
      %v6967 = vrot.slane %v6949, 4
      %v6968 = vrot.slane %v6952, 3
      %v6969 = vsel %vm907, %v6968, %v6967
      %v6970 = vrot.slane %v6955, 2
      %v6971 = vsel %vm910, %v6970, %v6969
      %v6972 = vrot.slane %v6958, 1
      %v6973 = vsel %vm913, %v6972, %v6971
      %v6974 = vrot.slane %v6950, 4
      %v6975 = vrot.slane %v6953, 3
      %v6976 = vsel %vm907, %v6975, %v6974
      %v6977 = vrot.slane %v6956, 2
      %v6978 = vsel %vm910, %v6977, %v6976
      %v6979 = vrot.slane %v6959, 1
      %v6980 = vsel %vm913, %v6979, %v6978
      %v6981 = vpack.c.b16 %v6966, %v6966
      %v6982 = vpack.c.b16 %v6973, %v6973
      %v6983 = vpack.c.b16 %v6980, %v6980
      %6984 = vrot.lane.b32.xlu0 %v6981, 122
      %v6985 = vpop.permute.xlu0 %6984
      %6986 = vrot.lane.b32.xlu0 %v6982, 122
      %v6987 = vpop.permute.xlu0 %6986
      %6988 = vrot.lane.b32.xlu0 %v6983, 122
      %v6989 = vpop.permute.xlu0 %6988
      %v6990 = vsel %vm5723, %v6985, %v6987
      %v6991 = vsel %vm5723, %v6987, %v6989
      %6995 = vst.msk [vmem:[#allocation3 + $0xb0] sm:$0xc] %vm4734, %v6990
      %6996 = vst [vmem:[#allocation3 + $0xb8] sm:$0xc] %v6991
      %6997 = vst.msk [vmem:[#allocation3 + $0xc0] sm:$0xc] %vm4737, %v6989
      %v6998 = vld [vmem:[%s454] ss:$4 sm:$0x7]
      %v6999 = vld [vmem:[%s456] ss:$4 sm:$0x7]
      %v7000 = vld [vmem:[%s458] ss:$4 sm:$0x7]
      %v7001 = vld [vmem:[%s460] ss:$4 sm:$0x7]
      %v7006 = vlaneseq
      %v7007 = vshrl.u32 %v7006, 7
      %v7008 = vsub.s32 0, %v7007
      %v7009 = vrot.slane %v6998, %v7008
      %v7010 = vlaneseq
      %v7011 = vshrl.u32 %v7010, 7
      %v7012 = vsub.s32 1, %v7011
      %v7013 = vrot.slane %v6998, %v7012
      %v7014 = vlaneseq
      %v7015 = vshrl.u32 %v7014, 7
      %v7016 = vsub.s32 2, %v7015
      %v7017 = vrot.slane %v6998, %v7016
      %v7018 = vlaneseq
      %v7019 = vshrl.u32 %v7018, 7
      %v7020 = vsub.s32 0, %v7019
      %v7021 = vrot.slane %v6999, %v7020
      %v7022 = vlaneseq
      %v7023 = vshrl.u32 %v7022, 7
      %v7024 = vsub.s32 1, %v7023
      %v7025 = vrot.slane %v6999, %v7024
      %v7026 = vlaneseq
      %v7027 = vshrl.u32 %v7026, 7
      %v7028 = vsub.s32 2, %v7027
      %v7029 = vrot.slane %v6999, %v7028
      %v7030 = vlaneseq
      %v7031 = vshrl.u32 %v7030, 7
      %v7032 = vsub.s32 0, %v7031
      %v7033 = vrot.slane %v7000, %v7032
      %v7034 = vlaneseq
      %v7035 = vshrl.u32 %v7034, 7
      %v7036 = vsub.s32 1, %v7035
      %v7037 = vrot.slane %v7000, %v7036
      %v7038 = vlaneseq
      %v7039 = vshrl.u32 %v7038, 7
      %v7040 = vsub.s32 2, %v7039
      %v7041 = vrot.slane %v7000, %v7040
      %v7042 = vlaneseq
      %v7043 = vshrl.u32 %v7042, 7
      %v7044 = vsub.s32 0, %v7043
      %v7045 = vrot.slane %v7001, %v7044
      %v7046 = vlaneseq
      %v7047 = vshrl.u32 %v7046, 7
      %v7048 = vsub.s32 1, %v7047
      %v7049 = vrot.slane %v7001, %v7048
      %v7050 = vlaneseq
      %v7051 = vshrl.u32 %v7050, 7
      %v7052 = vsub.s32 2, %v7051
      %v7053 = vrot.slane %v7001, %v7052
      %v7066 = vpack.c.bf16 %v7009, %v7009
      %v7067 = vpack.c.bf16 %v7013, %v7013
      %v7068 = vpack.c.bf16 %v7017, %v7017
      %v7069 = vpack.c.bf16 %v7021, %v7021
      %v7070 = vpack.c.bf16 %v7025, %v7025
      %v7071 = vpack.c.bf16 %v7029, %v7029
      %v7072 = vpack.c.bf16 %v7033, %v7033
      %v7073 = vpack.c.bf16 %v7037, %v7037
      %v7074 = vpack.c.bf16 %v7041, %v7041
      %v7075 = vpack.c.bf16 %v7045, %v7045
      %v7076 = vpack.c.bf16 %v7049, %v7049
      %v7077 = vpack.c.bf16 %v7053, %v7053
      %v7090 = vunpack.c.l.b16 %v7066
      %v7091 = vunpack.c.l.b16 %v7067
      %v7092 = vunpack.c.l.b16 %v7068
      %v7093 = vunpack.c.l.b16 %v7069
      %v7094 = vunpack.c.l.b16 %v7070
      %v7095 = vunpack.c.l.b16 %v7071
      %v7096 = vunpack.c.l.b16 %v7072
      %v7097 = vunpack.c.l.b16 %v7073
      %v7098 = vunpack.c.l.b16 %v7074
      %v7099 = vunpack.c.l.b16 %v7075
      %v7100 = vunpack.c.l.b16 %v7076
      %v7101 = vunpack.c.l.b16 %v7077
      %v7102 = vrot.slane %v7093, 7
      %v7103 = vsel %vm771, %v7102, %v7090
      %v7104 = vrot.slane %v7096, 6
      %v7105 = vsel %vm774, %v7104, %v7103
      %v7106 = vrot.slane %v7099, 5
      %v7107 = vsel %vm777, %v7106, %v7105
      %v7108 = vrot.slane %v7094, 7
      %v7109 = vsel %vm771, %v7108, %v7091
      %v7110 = vrot.slane %v7097, 6
      %v7111 = vsel %vm774, %v7110, %v7109
      %v7112 = vrot.slane %v7100, 5
      %v7113 = vsel %vm777, %v7112, %v7111
      %v7114 = vrot.slane %v7095, 7
      %v7115 = vsel %vm771, %v7114, %v7092
      %v7116 = vrot.slane %v7098, 6
      %v7117 = vsel %vm774, %v7116, %v7115
      %v7118 = vrot.slane %v7101, 5
      %v7119 = vsel %vm777, %v7118, %v7117
      %v7120 = vpack.c.b16 %v7107, %v7107
      %v7121 = vpack.c.b16 %v7113, %v7113
      %v7122 = vpack.c.b16 %v7119, %v7119
      %7123 = vrot.lane.b32.xlu0 %v7120, 32
      %v7124 = vpop.permute.xlu0 %7123
      %7125 = vrot.lane.b32.xlu0 %v7121, 32
      %v7126 = vpop.permute.xlu0 %7125
      %7127 = vrot.lane.b32.xlu0 %v7122, 32
      %v7128 = vpop.permute.xlu0 %7127
      %v7129 = vsel %vm4583, %v7124, %v7126
      %v7130 = vsel %vm4583, %v7126, %v7128
      %7134 = vst.msk [vmem:[#allocation3 + $0xb0] sm:$0x30] %vm4876, %v7124
      %7135 = vst [vmem:[#allocation3 + $0xb8] sm:$0x30] %v7129
      %7136 = vst.msk [vmem:[#allocation3 + $0xc0] sm:$0x30] %vm4879, %v7130
      %v7137 = vld [vmem:[%s454] ss:$4 sm:$0x7]
      %v7138 = vld [vmem:[%s456] ss:$4 sm:$0x7]
      %v7139 = vld [vmem:[%s458] ss:$4 sm:$0x7]
      %v7140 = vld [vmem:[%s460] ss:$4 sm:$0x7]
      %v7145 = vlaneseq
      %v7146 = vshrl.u32 %v7145, 7
      %v7147 = vsub.s32 0, %v7146
      %v7148 = vrot.slane %v7137, %v7147
      %v7149 = vlaneseq
      %v7150 = vshrl.u32 %v7149, 7
      %v7151 = vsub.s32 1, %v7150
      %v7152 = vrot.slane %v7137, %v7151
      %v7153 = vlaneseq
      %v7154 = vshrl.u32 %v7153, 7
      %v7155 = vsub.s32 2, %v7154
      %v7156 = vrot.slane %v7137, %v7155
      %v7157 = vlaneseq
      %v7158 = vshrl.u32 %v7157, 7
      %v7159 = vsub.s32 0, %v7158
      %v7160 = vrot.slane %v7138, %v7159
      %v7161 = vlaneseq
      %v7162 = vshrl.u32 %v7161, 7
      %v7163 = vsub.s32 1, %v7162
      %v7164 = vrot.slane %v7138, %v7163
      %v7165 = vlaneseq
      %v7166 = vshrl.u32 %v7165, 7
      %v7167 = vsub.s32 2, %v7166
      %v7168 = vrot.slane %v7138, %v7167
      %v7169 = vlaneseq
      %v7170 = vshrl.u32 %v7169, 7
      %v7171 = vsub.s32 0, %v7170
      %v7172 = vrot.slane %v7139, %v7171
      %v7173 = vlaneseq
      %v7174 = vshrl.u32 %v7173, 7
      %v7175 = vsub.s32 1, %v7174
      %v7176 = vrot.slane %v7139, %v7175
      %v7177 = vlaneseq
      %v7178 = vshrl.u32 %v7177, 7
      %v7179 = vsub.s32 2, %v7178
      %v7180 = vrot.slane %v7139, %v7179
      %v7181 = vlaneseq
      %v7182 = vshrl.u32 %v7181, 7
      %v7183 = vsub.s32 0, %v7182
      %v7184 = vrot.slane %v7140, %v7183
      %v7185 = vlaneseq
      %v7186 = vshrl.u32 %v7185, 7
      %v7187 = vsub.s32 1, %v7186
      %v7188 = vrot.slane %v7140, %v7187
      %v7189 = vlaneseq
      %v7190 = vshrl.u32 %v7189, 7
      %v7191 = vsub.s32 2, %v7190
      %v7192 = vrot.slane %v7140, %v7191
      %v7205 = vpack.c.bf16 %v7148, %v7148
      %v7206 = vpack.c.bf16 %v7152, %v7152
      %v7207 = vpack.c.bf16 %v7156, %v7156
      %v7208 = vpack.c.bf16 %v7160, %v7160
      %v7209 = vpack.c.bf16 %v7164, %v7164
      %v7210 = vpack.c.bf16 %v7168, %v7168
      %v7211 = vpack.c.bf16 %v7172, %v7172
      %v7212 = vpack.c.bf16 %v7176, %v7176
      %v7213 = vpack.c.bf16 %v7180, %v7180
      %v7214 = vpack.c.bf16 %v7184, %v7184
      %v7215 = vpack.c.bf16 %v7188, %v7188
      %v7216 = vpack.c.bf16 %v7192, %v7192
      %v7229 = vunpack.c.l.b16 %v7205
      %v7230 = vunpack.c.l.b16 %v7206
      %v7231 = vunpack.c.l.b16 %v7207
      %v7232 = vunpack.c.l.b16 %v7208
      %v7233 = vunpack.c.l.b16 %v7209
      %v7234 = vunpack.c.l.b16 %v7210
      %v7235 = vunpack.c.l.b16 %v7211
      %v7236 = vunpack.c.l.b16 %v7212
      %v7237 = vunpack.c.l.b16 %v7213
      %v7238 = vunpack.c.l.b16 %v7214
      %v7239 = vunpack.c.l.b16 %v7215
      %v7240 = vunpack.c.l.b16 %v7216
      %v7241 = vrot.slane %v7229, 4
      %v7242 = vrot.slane %v7232, 3
      %v7243 = vsel %vm907, %v7242, %v7241
      %v7244 = vrot.slane %v7235, 2
      %v7245 = vsel %vm910, %v7244, %v7243
      %v7246 = vrot.slane %v7238, 1
      %v7247 = vsel %vm913, %v7246, %v7245
      %v7248 = vrot.slane %v7230, 4
      %v7249 = vrot.slane %v7233, 3
      %v7250 = vsel %vm907, %v7249, %v7248
      %v7251 = vrot.slane %v7236, 2
      %v7252 = vsel %vm910, %v7251, %v7250
      %v7253 = vrot.slane %v7239, 1
      %v7254 = vsel %vm913, %v7253, %v7252
      %v7255 = vrot.slane %v7231, 4
      %v7256 = vrot.slane %v7234, 3
      %v7257 = vsel %vm907, %v7256, %v7255
      %v7258 = vrot.slane %v7237, 2
      %v7259 = vsel %vm910, %v7258, %v7257
      %v7260 = vrot.slane %v7240, 1
      %v7261 = vsel %vm913, %v7260, %v7259
      %v7262 = vpack.c.b16 %v7247, %v7247
      %v7263 = vpack.c.b16 %v7254, %v7254
      %v7264 = vpack.c.b16 %v7261, %v7261
      %7265 = vrot.lane.b32.xlu0 %v7262, 31
      %v7266 = vpop.permute.xlu0 %7265
      %7267 = vrot.lane.b32.xlu0 %v7263, 31
      %v7268 = vpop.permute.xlu0 %7267
      %7269 = vrot.lane.b32.xlu0 %v7264, 31
      %v7270 = vpop.permute.xlu0 %7269
      %v7271 = vsel %vm4728, %v7266, %v7268
      %v7272 = vsel %vm4728, %v7268, %v7270
      %7276 = vst.msk [vmem:[#allocation3 + $0xb0] sm:$0xc0] %vm5021, %v7266
      %7277 = vst [vmem:[#allocation3 + $0xb8] sm:$0xc0] %v7271
      %7278 = vst.msk [vmem:[#allocation3 + $0xc0] sm:$0xc0] %vm5024, %v7272
      %v7279 = vld [vmem:[%s454] ss:$4 sm:$0x7]
      %v7280 = vld [vmem:[%s456] ss:$4 sm:$0x7]
      %v7281 = vld [vmem:[%s458] ss:$4 sm:$0x7]
      %v7282 = vld [vmem:[%s460] ss:$4 sm:$0x7]
      %v7287 = vlaneseq
      %v7288 = vshrl.u32 %v7287, 7
      %v7289 = vsub.s32 0, %v7288
      %v7290 = vrot.slane %v7279, %v7289
      %v7291 = vlaneseq
      %v7292 = vshrl.u32 %v7291, 7
      %v7293 = vsub.s32 1, %v7292
      %v7294 = vrot.slane %v7279, %v7293
      %v7295 = vlaneseq
      %v7296 = vshrl.u32 %v7295, 7
      %v7297 = vsub.s32 2, %v7296
      %v7298 = vrot.slane %v7279, %v7297
      %v7299 = vlaneseq
      %v7300 = vshrl.u32 %v7299, 7
      %v7301 = vsub.s32 0, %v7300
      %v7302 = vrot.slane %v7280, %v7301
      %v7303 = vlaneseq
      %v7304 = vshrl.u32 %v7303, 7
      %v7305 = vsub.s32 1, %v7304
      %v7306 = vrot.slane %v7280, %v7305
      %v7307 = vlaneseq
      %v7308 = vshrl.u32 %v7307, 7
      %v7309 = vsub.s32 2, %v7308
      %v7310 = vrot.slane %v7280, %v7309
      %v7311 = vlaneseq
      %v7312 = vshrl.u32 %v7311, 7
      %v7313 = vsub.s32 0, %v7312
      %v7314 = vrot.slane %v7281, %v7313
      %v7315 = vlaneseq
      %v7316 = vshrl.u32 %v7315, 7
      %v7317 = vsub.s32 1, %v7316
      %v7318 = vrot.slane %v7281, %v7317
      %v7319 = vlaneseq
      %v7320 = vshrl.u32 %v7319, 7
      %v7321 = vsub.s32 2, %v7320
      %v7322 = vrot.slane %v7281, %v7321
      %v7323 = vlaneseq
      %v7324 = vshrl.u32 %v7323, 7
      %v7325 = vsub.s32 0, %v7324
      %v7326 = vrot.slane %v7282, %v7325
      %v7327 = vlaneseq
      %v7328 = vshrl.u32 %v7327, 7
      %v7329 = vsub.s32 1, %v7328
      %v7330 = vrot.slane %v7282, %v7329
      %v7331 = vlaneseq
      %v7332 = vshrl.u32 %v7331, 7
      %v7333 = vsub.s32 2, %v7332
      %v7334 = vrot.slane %v7282, %v7333
      %v7347 = vpack.c.bf16 %v7290, %v7290
      %v7348 = vpack.c.bf16 %v7294, %v7294
      %v7349 = vpack.c.bf16 %v7298, %v7298
      %v7350 = vpack.c.bf16 %v7302, %v7302
      %v7351 = vpack.c.bf16 %v7306, %v7306
      %v7352 = vpack.c.bf16 %v7310, %v7310
      %v7353 = vpack.c.bf16 %v7314, %v7314
      %v7354 = vpack.c.bf16 %v7318, %v7318
      %v7355 = vpack.c.bf16 %v7322, %v7322
      %v7356 = vpack.c.bf16 %v7326, %v7326
      %v7357 = vpack.c.bf16 %v7330, %v7330
      %v7358 = vpack.c.bf16 %v7334, %v7334
      %v7371 = vunpack.c.l.b16 %v7347
      %v7372 = vunpack.c.l.b16 %v7348
      %v7373 = vunpack.c.l.b16 %v7349
      %v7374 = vunpack.c.l.b16 %v7350
      %v7375 = vunpack.c.l.b16 %v7351
      %v7376 = vunpack.c.l.b16 %v7352
      %v7377 = vunpack.c.l.b16 %v7353
      %v7378 = vunpack.c.l.b16 %v7354
      %v7379 = vunpack.c.l.b16 %v7355
      %v7380 = vunpack.c.l.b16 %v7356
      %v7381 = vunpack.c.l.b16 %v7357
      %v7382 = vunpack.c.l.b16 %v7358
      %v7383 = vrot.slane %v7374, 7
      %v7384 = vsel %vm771, %v7383, %v7371
      %v7385 = vrot.slane %v7377, 6
      %v7386 = vsel %vm774, %v7385, %v7384
      %v7387 = vrot.slane %v7380, 5
      %v7388 = vsel %vm777, %v7387, %v7386
      %v7389 = vrot.slane %v7375, 7
      %v7390 = vsel %vm771, %v7389, %v7372
      %v7391 = vrot.slane %v7378, 6
      %v7392 = vsel %vm774, %v7391, %v7390
      %v7393 = vrot.slane %v7381, 5
      %v7394 = vsel %vm777, %v7393, %v7392
      %v7395 = vrot.slane %v7376, 7
      %v7396 = vsel %vm771, %v7395, %v7373
      %v7397 = vrot.slane %v7379, 6
      %v7398 = vsel %vm774, %v7397, %v7396
      %v7399 = vrot.slane %v7382, 5
      %v7400 = vsel %vm777, %v7399, %v7398
      %v7401 = vpack.c.b16 %v7388, %v7388
      %v7402 = vpack.c.b16 %v7394, %v7394
      %v7403 = vpack.c.b16 %v7400, %v7400
      %7404 = vrot.lane.b32.xlu0 %v7401, 30
      %v7405 = vpop.permute.xlu0 %7404
      %7406 = vrot.lane.b32.xlu0 %v7402, 30
      %v7407 = vpop.permute.xlu0 %7406
      %7408 = vrot.lane.b32.xlu0 %v7403, 30
      %v7409 = vpop.permute.xlu0 %7408
      %v7410 = vsel %vm4870, %v7405, %v7407
      %v7411 = vsel %vm4870, %v7407, %v7409
      %7415 = vst.msk [vmem:[#allocation3 + $0xd8] sm:$0x3] %vm4589, %v7405
      %7416 = vst [vmem:[#allocation3 + $0xe0] sm:$0x3] %v7410
      %7417 = vst.msk [vmem:[#allocation3 + $0xe8] sm:$0x3] %vm4592, %v7411
      %v7418 = vld [vmem:[%s454] ss:$4 sm:$0x7]
      %v7419 = vld [vmem:[%s456] ss:$4 sm:$0x7]
      %v7420 = vld [vmem:[%s458] ss:$4 sm:$0x7]
      %v7421 = vld [vmem:[%s460] ss:$4 sm:$0x7]
      %v7426 = vlaneseq
      %v7427 = vshrl.u32 %v7426, 7
      %v7428 = vsub.s32 0, %v7427
      %v7429 = vrot.slane %v7418, %v7428
      %v7430 = vlaneseq
      %v7431 = vshrl.u32 %v7430, 7
      %v7432 = vsub.s32 1, %v7431
      %v7433 = vrot.slane %v7418, %v7432
      %v7434 = vlaneseq
      %v7435 = vshrl.u32 %v7434, 7
      %v7436 = vsub.s32 2, %v7435
      %v7437 = vrot.slane %v7418, %v7436
      %v7438 = vlaneseq
      %v7439 = vshrl.u32 %v7438, 7
      %v7440 = vsub.s32 0, %v7439
      %v7441 = vrot.slane %v7419, %v7440
      %v7442 = vlaneseq
      %v7443 = vshrl.u32 %v7442, 7
      %v7444 = vsub.s32 1, %v7443
      %v7445 = vrot.slane %v7419, %v7444
      %v7446 = vlaneseq
      %v7447 = vshrl.u32 %v7446, 7
      %v7448 = vsub.s32 2, %v7447
      %v7449 = vrot.slane %v7419, %v7448
      %v7450 = vlaneseq
      %v7451 = vshrl.u32 %v7450, 7
      %v7452 = vsub.s32 0, %v7451
      %v7453 = vrot.slane %v7420, %v7452
      %v7454 = vlaneseq
      %v7455 = vshrl.u32 %v7454, 7
      %v7456 = vsub.s32 1, %v7455
      %v7457 = vrot.slane %v7420, %v7456
      %v7458 = vlaneseq
      %v7459 = vshrl.u32 %v7458, 7
      %v7460 = vsub.s32 2, %v7459
      %v7461 = vrot.slane %v7420, %v7460
      %v7462 = vlaneseq
      %v7463 = vshrl.u32 %v7462, 7
      %v7464 = vsub.s32 0, %v7463
      %v7465 = vrot.slane %v7421, %v7464
      %v7466 = vlaneseq
      %v7467 = vshrl.u32 %v7466, 7
      %v7468 = vsub.s32 1, %v7467
      %v7469 = vrot.slane %v7421, %v7468
      %v7470 = vlaneseq
      %v7471 = vshrl.u32 %v7470, 7
      %v7472 = vsub.s32 2, %v7471
      %v7473 = vrot.slane %v7421, %v7472
      %v7486 = vpack.c.bf16 %v7429, %v7429
      %v7487 = vpack.c.bf16 %v7433, %v7433
      %v7488 = vpack.c.bf16 %v7437, %v7437
      %v7489 = vpack.c.bf16 %v7441, %v7441
      %v7490 = vpack.c.bf16 %v7445, %v7445
      %v7491 = vpack.c.bf16 %v7449, %v7449
      %v7492 = vpack.c.bf16 %v7453, %v7453
      %v7493 = vpack.c.bf16 %v7457, %v7457
      %v7494 = vpack.c.bf16 %v7461, %v7461
      %v7495 = vpack.c.bf16 %v7465, %v7465
      %v7496 = vpack.c.bf16 %v7469, %v7469
      %v7497 = vpack.c.bf16 %v7473, %v7473
      %v7510 = vunpack.c.l.b16 %v7486
      %v7511 = vunpack.c.l.b16 %v7487
      %v7512 = vunpack.c.l.b16 %v7488
      %v7513 = vunpack.c.l.b16 %v7489
      %v7514 = vunpack.c.l.b16 %v7490
      %v7515 = vunpack.c.l.b16 %v7491
      %v7516 = vunpack.c.l.b16 %v7492
      %v7517 = vunpack.c.l.b16 %v7493
      %v7518 = vunpack.c.l.b16 %v7494
      %v7519 = vunpack.c.l.b16 %v7495
      %v7520 = vunpack.c.l.b16 %v7496
      %v7521 = vunpack.c.l.b16 %v7497
      %v7522 = vrot.slane %v7510, 4
      %v7523 = vrot.slane %v7513, 3
      %v7524 = vsel %vm907, %v7523, %v7522
      %v7525 = vrot.slane %v7516, 2
      %v7526 = vsel %vm910, %v7525, %v7524
      %v7527 = vrot.slane %v7519, 1
      %v7528 = vsel %vm913, %v7527, %v7526
      %v7529 = vrot.slane %v7511, 4
      %v7530 = vrot.slane %v7514, 3
      %v7531 = vsel %vm907, %v7530, %v7529
      %v7532 = vrot.slane %v7517, 2
      %v7533 = vsel %vm910, %v7532, %v7531
      %v7534 = vrot.slane %v7520, 1
      %v7535 = vsel %vm913, %v7534, %v7533
      %v7536 = vrot.slane %v7512, 4
      %v7537 = vrot.slane %v7515, 3
      %v7538 = vsel %vm907, %v7537, %v7536
      %v7539 = vrot.slane %v7518, 2
      %v7540 = vsel %vm910, %v7539, %v7538
      %v7541 = vrot.slane %v7521, 1
      %v7542 = vsel %vm913, %v7541, %v7540
      %v7543 = vpack.c.b16 %v7528, %v7528
      %v7544 = vpack.c.b16 %v7535, %v7535
      %v7545 = vpack.c.b16 %v7542, %v7542
      %7546 = vrot.lane.b32.xlu0 %v7543, 14
      %v7547 = vpop.permute.xlu0 %7546
      %7548 = vrot.lane.b32.xlu0 %v7544, 14
      %v7549 = vpop.permute.xlu0 %7548
      %7550 = vrot.lane.b32.xlu0 %v7545, 14
      %v7551 = vpop.permute.xlu0 %7550
      %v7552 = vsel %vm5015, %v7547, %v7549
      %v7553 = vsel %vm5015, %v7549, %v7551
      %7557 = vst.msk [vmem:[#allocation3 + $0xd8] sm:$0xc] %vm4734, %v7547
      %7558 = vst [vmem:[#allocation3 + $0xe0] sm:$0xc] %v7552
      %7559 = vst.msk [vmem:[#allocation3 + $0xe8] sm:$0xc] %vm4737, %v7553
      %v7560 = vld [vmem:[%s454] ss:$4 sm:$0x7]
      %v7561 = vld [vmem:[%s456] ss:$4 sm:$0x7]
      %v7562 = vld [vmem:[%s458] ss:$4 sm:$0x7]
      %v7563 = vld [vmem:[%s460] ss:$4 sm:$0x7]
      %v7568 = vlaneseq
      %v7569 = vshrl.u32 %v7568, 7
      %v7570 = vsub.s32 0, %v7569
      %v7571 = vrot.slane %v7560, %v7570
      %v7572 = vlaneseq
      %v7573 = vshrl.u32 %v7572, 7
      %v7574 = vsub.s32 1, %v7573
      %v7575 = vrot.slane %v7560, %v7574
      %v7576 = vlaneseq
      %v7577 = vshrl.u32 %v7576, 7
      %v7578 = vsub.s32 2, %v7577
      %v7579 = vrot.slane %v7560, %v7578
      %v7580 = vlaneseq
      %v7581 = vshrl.u32 %v7580, 7
      %v7582 = vsub.s32 0, %v7581
      %v7583 = vrot.slane %v7561, %v7582
      %v7584 = vlaneseq
      %v7585 = vshrl.u32 %v7584, 7
      %v7586 = vsub.s32 1, %v7585
      %v7587 = vrot.slane %v7561, %v7586
      %v7588 = vlaneseq
      %v7589 = vshrl.u32 %v7588, 7
      %v7590 = vsub.s32 2, %v7589
      %v7591 = vrot.slane %v7561, %v7590
      %v7592 = vlaneseq
      %v7593 = vshrl.u32 %v7592, 7
      %v7594 = vsub.s32 0, %v7593
      %v7595 = vrot.slane %v7562, %v7594
      %v7596 = vlaneseq
      %v7597 = vshrl.u32 %v7596, 7
      %v7598 = vsub.s32 1, %v7597
      %v7599 = vrot.slane %v7562, %v7598
      %v7600 = vlaneseq
      %v7601 = vshrl.u32 %v7600, 7
      %v7602 = vsub.s32 2, %v7601
      %v7603 = vrot.slane %v7562, %v7602
      %v7604 = vlaneseq
      %v7605 = vshrl.u32 %v7604, 7
      %v7606 = vsub.s32 0, %v7605
      %v7607 = vrot.slane %v7563, %v7606
      %v7608 = vlaneseq
      %v7609 = vshrl.u32 %v7608, 7
      %v7610 = vsub.s32 1, %v7609
      %v7611 = vrot.slane %v7563, %v7610
      %v7612 = vlaneseq
      %v7613 = vshrl.u32 %v7612, 7
      %v7614 = vsub.s32 2, %v7613
      %v7615 = vrot.slane %v7563, %v7614
      %v7628 = vpack.c.bf16 %v7571, %v7571
      %v7629 = vpack.c.bf16 %v7575, %v7575
      %v7630 = vpack.c.bf16 %v7579, %v7579
      %v7631 = vpack.c.bf16 %v7583, %v7583
      %v7632 = vpack.c.bf16 %v7587, %v7587
      %v7633 = vpack.c.bf16 %v7591, %v7591
      %v7634 = vpack.c.bf16 %v7595, %v7595
      %v7635 = vpack.c.bf16 %v7599, %v7599
      %v7636 = vpack.c.bf16 %v7603, %v7603
      %v7637 = vpack.c.bf16 %v7607, %v7607
      %v7638 = vpack.c.bf16 %v7611, %v7611
      %v7639 = vpack.c.bf16 %v7615, %v7615
      %v7652 = vunpack.c.l.b16 %v7628
      %v7653 = vunpack.c.l.b16 %v7629
      %v7654 = vunpack.c.l.b16 %v7630
      %v7655 = vunpack.c.l.b16 %v7631
      %v7656 = vunpack.c.l.b16 %v7632
      %v7657 = vunpack.c.l.b16 %v7633
      %v7658 = vunpack.c.l.b16 %v7634
      %v7659 = vunpack.c.l.b16 %v7635
      %v7660 = vunpack.c.l.b16 %v7636
      %v7661 = vunpack.c.l.b16 %v7637
      %v7662 = vunpack.c.l.b16 %v7638
      %v7663 = vunpack.c.l.b16 %v7639
      %v7664 = vrot.slane %v7655, 7
      %v7665 = vsel %vm771, %v7664, %v7652
      %v7666 = vrot.slane %v7658, 6
      %v7667 = vsel %vm774, %v7666, %v7665
      %v7668 = vrot.slane %v7661, 5
      %v7669 = vsel %vm777, %v7668, %v7667
      %v7670 = vrot.slane %v7656, 7
      %v7671 = vsel %vm771, %v7670, %v7653
      %v7672 = vrot.slane %v7659, 6
      %v7673 = vsel %vm774, %v7672, %v7671
      %v7674 = vrot.slane %v7662, 5
      %v7675 = vsel %vm777, %v7674, %v7673
      %v7676 = vrot.slane %v7657, 7
      %v7677 = vsel %vm771, %v7676, %v7654
      %v7678 = vrot.slane %v7660, 6
      %v7679 = vsel %vm774, %v7678, %v7677
      %v7680 = vrot.slane %v7663, 5
      %v7681 = vsel %vm777, %v7680, %v7679
      %v7682 = vpack.c.b16 %v7669, %v7669
      %v7683 = vpack.c.b16 %v7675, %v7675
      %v7684 = vpack.c.b16 %v7681, %v7681
      %7685 = vrot.lane.b32.xlu0 %v7682, 13
      %v7686 = vpop.permute.xlu0 %7685
      %7687 = vrot.lane.b32.xlu0 %v7683, 13
      %v7688 = vpop.permute.xlu0 %7687
      %7689 = vrot.lane.b32.xlu0 %v7684, 13
      %v7690 = vpop.permute.xlu0 %7689
      %v7691 = vsel %vm5157, %v7686, %v7688
      %v7692 = vsel %vm5157, %v7688, %v7690
      %7696 = vst.msk [vmem:[#allocation3 + $0xd8] sm:$0x30] %vm4876, %v7686
      %7697 = vst [vmem:[#allocation3 + $0xe0] sm:$0x30] %v7691
      %7698 = vst.msk [vmem:[#allocation3 + $0xe8] sm:$0x30] %vm4879, %v7692
      %v7699 = vld [vmem:[%s454] ss:$4 sm:$0x7]
      %v7700 = vld [vmem:[%s456] ss:$4 sm:$0x7]
      %v7701 = vld [vmem:[%s458] ss:$4 sm:$0x7]
      %v7702 = vld [vmem:[%s460] ss:$4 sm:$0x7]
      %v7707 = vlaneseq
      %v7708 = vshrl.u32 %v7707, 7
      %v7709 = vsub.s32 0, %v7708
      %v7710 = vrot.slane %v7699, %v7709
      %v7711 = vlaneseq
      %v7712 = vshrl.u32 %v7711, 7
      %v7713 = vsub.s32 1, %v7712
      %v7714 = vrot.slane %v7699, %v7713
      %v7715 = vlaneseq
      %v7716 = vshrl.u32 %v7715, 7
      %v7717 = vsub.s32 2, %v7716
      %v7718 = vrot.slane %v7699, %v7717
      %v7719 = vlaneseq
      %v7720 = vshrl.u32 %v7719, 7
      %v7721 = vsub.s32 0, %v7720
      %v7722 = vrot.slane %v7700, %v7721
      %v7723 = vlaneseq
      %v7724 = vshrl.u32 %v7723, 7
      %v7725 = vsub.s32 1, %v7724
      %v7726 = vrot.slane %v7700, %v7725
      %v7727 = vlaneseq
      %v7728 = vshrl.u32 %v7727, 7
      %v7729 = vsub.s32 2, %v7728
      %v7730 = vrot.slane %v7700, %v7729
      %v7731 = vlaneseq
      %v7732 = vshrl.u32 %v7731, 7
      %v7733 = vsub.s32 0, %v7732
      %v7734 = vrot.slane %v7701, %v7733
      %v7735 = vlaneseq
      %v7736 = vshrl.u32 %v7735, 7
      %v7737 = vsub.s32 1, %v7736
      %v7738 = vrot.slane %v7701, %v7737
      %v7739 = vlaneseq
      %v7740 = vshrl.u32 %v7739, 7
      %v7741 = vsub.s32 2, %v7740
      %v7742 = vrot.slane %v7701, %v7741
      %v7743 = vlaneseq
      %v7744 = vshrl.u32 %v7743, 7
      %v7745 = vsub.s32 0, %v7744
      %v7746 = vrot.slane %v7702, %v7745
      %v7747 = vlaneseq
      %v7748 = vshrl.u32 %v7747, 7
      %v7749 = vsub.s32 1, %v7748
      %v7750 = vrot.slane %v7702, %v7749
      %v7751 = vlaneseq
      %v7752 = vshrl.u32 %v7751, 7
      %v7753 = vsub.s32 2, %v7752
      %v7754 = vrot.slane %v7702, %v7753
      %v7767 = vpack.c.bf16 %v7710, %v7710
      %v7768 = vpack.c.bf16 %v7714, %v7714
      %v7769 = vpack.c.bf16 %v7718, %v7718
      %v7770 = vpack.c.bf16 %v7722, %v7722
      %v7771 = vpack.c.bf16 %v7726, %v7726
      %v7772 = vpack.c.bf16 %v7730, %v7730
      %v7773 = vpack.c.bf16 %v7734, %v7734
      %v7774 = vpack.c.bf16 %v7738, %v7738
      %v7775 = vpack.c.bf16 %v7742, %v7742
      %v7776 = vpack.c.bf16 %v7746, %v7746
      %v7777 = vpack.c.bf16 %v7750, %v7750
      %v7778 = vpack.c.bf16 %v7754, %v7754
      %v7791 = vunpack.c.l.b16 %v7767
      %v7792 = vunpack.c.l.b16 %v7768
      %v7793 = vunpack.c.l.b16 %v7769
      %v7794 = vunpack.c.l.b16 %v7770
      %v7795 = vunpack.c.l.b16 %v7771
      %v7796 = vunpack.c.l.b16 %v7772
      %v7797 = vunpack.c.l.b16 %v7773
      %v7798 = vunpack.c.l.b16 %v7774
      %v7799 = vunpack.c.l.b16 %v7775
      %v7800 = vunpack.c.l.b16 %v7776
      %v7801 = vunpack.c.l.b16 %v7777
      %v7802 = vunpack.c.l.b16 %v7778
      %v7803 = vrot.slane %v7791, 4
      %v7804 = vrot.slane %v7794, 3
      %v7805 = vsel %vm907, %v7804, %v7803
      %v7806 = vrot.slane %v7797, 2
      %v7807 = vsel %vm910, %v7806, %v7805
      %v7808 = vrot.slane %v7800, 1
      %v7809 = vsel %vm913, %v7808, %v7807
      %v7810 = vrot.slane %v7792, 4
      %v7811 = vrot.slane %v7795, 3
      %v7812 = vsel %vm907, %v7811, %v7810
      %v7813 = vrot.slane %v7798, 2
      %v7814 = vsel %vm910, %v7813, %v7812
      %v7815 = vrot.slane %v7801, 1
      %v7816 = vsel %vm913, %v7815, %v7814
      %v7817 = vrot.slane %v7793, 4
      %v7818 = vrot.slane %v7796, 3
      %v7819 = vsel %vm907, %v7818, %v7817
      %v7820 = vrot.slane %v7799, 2
      %v7821 = vsel %vm910, %v7820, %v7819
      %v7822 = vrot.slane %v7802, 1
      %v7823 = vsel %vm913, %v7822, %v7821
      %v7824 = vpack.c.b16 %v7809, %v7809
      %v7825 = vpack.c.b16 %v7816, %v7816
      %v7826 = vpack.c.b16 %v7823, %v7823
      %7827 = vrot.lane.b32.xlu0 %v7824, 12
      %v7828 = vpop.permute.xlu0 %7827
      %7829 = vrot.lane.b32.xlu0 %v7825, 12
      %v7830 = vpop.permute.xlu0 %7829
      %7831 = vrot.lane.b32.xlu0 %v7826, 12
      %v7832 = vpop.permute.xlu0 %7831
      %v7833 = vsel %vm5300, %v7828, %v7830
      %v7834 = vsel %vm5300, %v7830, %v7832
      %7838 = vst.msk [vmem:[#allocation3 + $0xd8] sm:$0xc0] %vm5021, %v7828
      %7839 = vst [vmem:[#allocation3 + $0xe0] sm:$0xc0] %v7833
      %7840 = vst.msk [vmem:[#allocation3 + $0xe8] sm:$0xc0] %vm5024, %v7834
      %v7841 = vld [vmem:[%s454] ss:$4 sm:$0x7]
      %v7842 = vld [vmem:[%s456] ss:$4 sm:$0x7]
      %v7843 = vld [vmem:[%s458] ss:$4 sm:$0x7]
      %v7844 = vld [vmem:[%s460] ss:$4 sm:$0x7]
      %v7849 = vlaneseq
      %v7850 = vshrl.u32 %v7849, 7
      %v7851 = vsub.s32 0, %v7850
      %v7852 = vrot.slane %v7841, %v7851
      %v7853 = vlaneseq
      %v7854 = vshrl.u32 %v7853, 7
      %v7855 = vsub.s32 1, %v7854
      %v7856 = vrot.slane %v7841, %v7855
      %v7857 = vlaneseq
      %v7858 = vshrl.u32 %v7857, 7
      %v7859 = vsub.s32 2, %v7858
      %v7860 = vrot.slane %v7841, %v7859
      %v7861 = vlaneseq
      %v7862 = vshrl.u32 %v7861, 7
      %v7863 = vsub.s32 0, %v7862
      %v7864 = vrot.slane %v7842, %v7863
      %v7865 = vlaneseq
      %v7866 = vshrl.u32 %v7865, 7
      %v7867 = vsub.s32 1, %v7866
      %v7868 = vrot.slane %v7842, %v7867
      %v7869 = vlaneseq
      %v7870 = vshrl.u32 %v7869, 7
      %v7871 = vsub.s32 2, %v7870
      %v7872 = vrot.slane %v7842, %v7871
      %v7873 = vlaneseq
      %v7874 = vshrl.u32 %v7873, 7
      %v7875 = vsub.s32 0, %v7874
      %v7876 = vrot.slane %v7843, %v7875
      %v7877 = vlaneseq
      %v7878 = vshrl.u32 %v7877, 7
      %v7879 = vsub.s32 1, %v7878
      %v7880 = vrot.slane %v7843, %v7879
      %v7881 = vlaneseq
      %v7882 = vshrl.u32 %v7881, 7
      %v7883 = vsub.s32 2, %v7882
      %v7884 = vrot.slane %v7843, %v7883
      %v7885 = vlaneseq
      %v7886 = vshrl.u32 %v7885, 7
      %v7887 = vsub.s32 0, %v7886
      %v7888 = vrot.slane %v7844, %v7887
      %v7889 = vlaneseq
      %v7890 = vshrl.u32 %v7889, 7
      %v7891 = vsub.s32 1, %v7890
      %v7892 = vrot.slane %v7844, %v7891
      %v7893 = vlaneseq
      %v7894 = vshrl.u32 %v7893, 7
      %v7895 = vsub.s32 2, %v7894
      %v7896 = vrot.slane %v7844, %v7895
      %v7909 = vpack.c.bf16 %v7852, %v7852
      %v7910 = vpack.c.bf16 %v7856, %v7856
      %v7911 = vpack.c.bf16 %v7860, %v7860
      %v7912 = vpack.c.bf16 %v7864, %v7864
      %v7913 = vpack.c.bf16 %v7868, %v7868
      %v7914 = vpack.c.bf16 %v7872, %v7872
      %v7915 = vpack.c.bf16 %v7876, %v7876
      %v7916 = vpack.c.bf16 %v7880, %v7880
      %v7917 = vpack.c.bf16 %v7884, %v7884
      %v7918 = vpack.c.bf16 %v7888, %v7888
      %v7919 = vpack.c.bf16 %v7892, %v7892
      %v7920 = vpack.c.bf16 %v7896, %v7896
      %v7933 = vunpack.c.l.b16 %v7909
      %v7934 = vunpack.c.l.b16 %v7910
      %v7935 = vunpack.c.l.b16 %v7911
      %v7936 = vunpack.c.l.b16 %v7912
      %v7937 = vunpack.c.l.b16 %v7913
      %v7938 = vunpack.c.l.b16 %v7914
      %v7939 = vunpack.c.l.b16 %v7915
      %v7940 = vunpack.c.l.b16 %v7916
      %v7941 = vunpack.c.l.b16 %v7917
      %v7942 = vunpack.c.l.b16 %v7918
      %v7943 = vunpack.c.l.b16 %v7919
      %v7944 = vunpack.c.l.b16 %v7920
      %v7945 = vrot.slane %v7936, 7
      %v7946 = vsel %vm771, %v7945, %v7933
      %v7947 = vrot.slane %v7939, 6
      %v7948 = vsel %vm774, %v7947, %v7946
      %v7949 = vrot.slane %v7942, 5
      %v7950 = vsel %vm777, %v7949, %v7948
      %v7951 = vrot.slane %v7937, 7
      %v7952 = vsel %vm771, %v7951, %v7934
      %v7953 = vrot.slane %v7940, 6
      %v7954 = vsel %vm774, %v7953, %v7952
      %v7955 = vrot.slane %v7943, 5
      %v7956 = vsel %vm777, %v7955, %v7954
      %v7957 = vrot.slane %v7938, 7
      %v7958 = vsel %vm771, %v7957, %v7935
      %v7959 = vrot.slane %v7941, 6
      %v7960 = vsel %vm774, %v7959, %v7958
      %v7961 = vrot.slane %v7944, 5
      %v7962 = vsel %vm777, %v7961, %v7960
      %v7963 = vpack.c.b16 %v7950, %v7950
      %v7964 = vpack.c.b16 %v7956, %v7956
      %v7965 = vpack.c.b16 %v7962, %v7962
      %7966 = vrot.lane.b32.xlu0 %v7963, 124
      %v7967 = vpop.permute.xlu0 %7966
      %7968 = vrot.lane.b32.xlu0 %v7964, 124
      %v7969 = vpop.permute.xlu0 %7968
      %7970 = vrot.lane.b32.xlu0 %v7965, 124
      %v7971 = vpop.permute.xlu0 %7970
      %v7972 = vsel %vm5440, %v7967, %v7969
      %v7973 = vsel %vm5440, %v7969, %v7971
      %7977 = vst.msk [vmem:[#allocation3 + $0x100] sm:$0x3] %vm4589, %v7972
      %7978 = vst [vmem:[#allocation3 + $0x108] sm:$0x3] %v7973
      %7979 = vst.msk [vmem:[#allocation3 + $0x110] sm:$0x3] %vm4592, %v7971
      %v7980 = vld [vmem:[%s454] ss:$4 sm:$0x7]
      %v7981 = vld [vmem:[%s456] ss:$4 sm:$0x7]
      %v7982 = vld [vmem:[%s458] ss:$4 sm:$0x7]
      %v7983 = vld [vmem:[%s460] ss:$4 sm:$0x7]
      %v7988 = vlaneseq
      %v7989 = vshrl.u32 %v7988, 7
      %v7990 = vsub.s32 0, %v7989
      %v7991 = vrot.slane %v7980, %v7990
      %v7992 = vlaneseq
      %v7993 = vshrl.u32 %v7992, 7
      %v7994 = vsub.s32 1, %v7993
      %v7995 = vrot.slane %v7980, %v7994
      %v7996 = vlaneseq
      %v7997 = vshrl.u32 %v7996, 7
      %v7998 = vsub.s32 2, %v7997
      %v7999 = vrot.slane %v7980, %v7998
      %v8000 = vlaneseq
      %v8001 = vshrl.u32 %v8000, 7
      %v8002 = vsub.s32 0, %v8001
      %v8003 = vrot.slane %v7981, %v8002
      %v8004 = vlaneseq
      %v8005 = vshrl.u32 %v8004, 7
      %v8006 = vsub.s32 1, %v8005
      %v8007 = vrot.slane %v7981, %v8006
      %v8008 = vlaneseq
      %v8009 = vshrl.u32 %v8008, 7
      %v8010 = vsub.s32 2, %v8009
      %v8011 = vrot.slane %v7981, %v8010
      %v8012 = vlaneseq
      %v8013 = vshrl.u32 %v8012, 7
      %v8014 = vsub.s32 0, %v8013
      %v8015 = vrot.slane %v7982, %v8014
      %v8016 = vlaneseq
      %v8017 = vshrl.u32 %v8016, 7
      %v8018 = vsub.s32 1, %v8017
      %v8019 = vrot.slane %v7982, %v8018
      %v8020 = vlaneseq
      %v8021 = vshrl.u32 %v8020, 7
      %v8022 = vsub.s32 2, %v8021
      %v8023 = vrot.slane %v7982, %v8022
      %v8024 = vlaneseq
      %v8025 = vshrl.u32 %v8024, 7
      %v8026 = vsub.s32 0, %v8025
      %v8027 = vrot.slane %v7983, %v8026
      %v8028 = vlaneseq
      %v8029 = vshrl.u32 %v8028, 7
      %v8030 = vsub.s32 1, %v8029
      %v8031 = vrot.slane %v7983, %v8030
      %v8032 = vlaneseq
      %v8033 = vshrl.u32 %v8032, 7
      %v8034 = vsub.s32 2, %v8033
      %v8035 = vrot.slane %v7983, %v8034
      %v8048 = vpack.c.bf16 %v7991, %v7991
      %v8049 = vpack.c.bf16 %v7995, %v7995
      %v8050 = vpack.c.bf16 %v7999, %v7999
      %v8051 = vpack.c.bf16 %v8003, %v8003
      %v8052 = vpack.c.bf16 %v8007, %v8007
      %v8053 = vpack.c.bf16 %v8011, %v8011
      %v8054 = vpack.c.bf16 %v8015, %v8015
      %v8055 = vpack.c.bf16 %v8019, %v8019
      %v8056 = vpack.c.bf16 %v8023, %v8023
      %v8057 = vpack.c.bf16 %v8027, %v8027
      %v8058 = vpack.c.bf16 %v8031, %v8031
      %v8059 = vpack.c.bf16 %v8035, %v8035
      %v8072 = vunpack.c.l.b16 %v8048
      %v8073 = vunpack.c.l.b16 %v8049
      %v8074 = vunpack.c.l.b16 %v8050
      %v8075 = vunpack.c.l.b16 %v8051
      %v8076 = vunpack.c.l.b16 %v8052
      %v8077 = vunpack.c.l.b16 %v8053
      %v8078 = vunpack.c.l.b16 %v8054
      %v8079 = vunpack.c.l.b16 %v8055
      %v8080 = vunpack.c.l.b16 %v8056
      %v8081 = vunpack.c.l.b16 %v8057
      %v8082 = vunpack.c.l.b16 %v8058
      %v8083 = vunpack.c.l.b16 %v8059
      %v8084 = vrot.slane %v8072, 4
      %v8085 = vrot.slane %v8075, 3
      %v8086 = vsel %vm907, %v8085, %v8084
      %v8087 = vrot.slane %v8078, 2
      %v8088 = vsel %vm910, %v8087, %v8086
      %v8089 = vrot.slane %v8081, 1
      %v8090 = vsel %vm913, %v8089, %v8088
      %v8091 = vrot.slane %v8073, 4
      %v8092 = vrot.slane %v8076, 3
      %v8093 = vsel %vm907, %v8092, %v8091
      %v8094 = vrot.slane %v8079, 2
      %v8095 = vsel %vm910, %v8094, %v8093
      %v8096 = vrot.slane %v8082, 1
      %v8097 = vsel %vm913, %v8096, %v8095
      %v8098 = vrot.slane %v8074, 4
      %v8099 = vrot.slane %v8077, 3
      %v8100 = vsel %vm907, %v8099, %v8098
      %v8101 = vrot.slane %v8080, 2
      %v8102 = vsel %vm910, %v8101, %v8100
      %v8103 = vrot.slane %v8083, 1
      %v8104 = vsel %vm913, %v8103, %v8102
      %v8105 = vpack.c.b16 %v8090, %v8090
      %v8106 = vpack.c.b16 %v8097, %v8097
      %v8107 = vpack.c.b16 %v8104, %v8104
      %8108 = vrot.lane.b32.xlu0 %v8105, 123
      %v8109 = vpop.permute.xlu0 %8108
      %8110 = vrot.lane.b32.xlu0 %v8106, 123
      %v8111 = vpop.permute.xlu0 %8110
      %8112 = vrot.lane.b32.xlu0 %v8107, 123
      %v8113 = vpop.permute.xlu0 %8112
      %v8114 = vsel %vm5583, %v8109, %v8111
      %v8115 = vsel %vm5583, %v8111, %v8113
      %8119 = vst.msk [vmem:[#allocation3 + $0x100] sm:$0xc] %vm4734, %v8114
      %8120 = vst [vmem:[#allocation3 + $0x108] sm:$0xc] %v8115
      %8121 = vst.msk [vmem:[#allocation3 + $0x110] sm:$0xc] %vm4737, %v8113
      %v8122 = vld [vmem:[%s454] ss:$4 sm:$0x7]
      %v8123 = vld [vmem:[%s456] ss:$4 sm:$0x7]
      %v8124 = vld [vmem:[%s458] ss:$4 sm:$0x7]
      %v8125 = vld [vmem:[%s460] ss:$4 sm:$0x7]
      %v8130 = vlaneseq
      %v8131 = vshrl.u32 %v8130, 7
      %v8132 = vsub.s32 0, %v8131
      %v8133 = vrot.slane %v8122, %v8132
      %v8134 = vlaneseq
      %v8135 = vshrl.u32 %v8134, 7
      %v8136 = vsub.s32 1, %v8135
      %v8137 = vrot.slane %v8122, %v8136
      %v8138 = vlaneseq
      %v8139 = vshrl.u32 %v8138, 7
      %v8140 = vsub.s32 2, %v8139
      %v8141 = vrot.slane %v8122, %v8140
      %v8142 = vlaneseq
      %v8143 = vshrl.u32 %v8142, 7
      %v8144 = vsub.s32 0, %v8143
      %v8145 = vrot.slane %v8123, %v8144
      %v8146 = vlaneseq
      %v8147 = vshrl.u32 %v8146, 7
      %v8148 = vsub.s32 1, %v8147
      %v8149 = vrot.slane %v8123, %v8148
      %v8150 = vlaneseq
      %v8151 = vshrl.u32 %v8150, 7
      %v8152 = vsub.s32 2, %v8151
      %v8153 = vrot.slane %v8123, %v8152
      %v8154 = vlaneseq
      %v8155 = vshrl.u32 %v8154, 7
      %v8156 = vsub.s32 0, %v8155
      %v8157 = vrot.slane %v8124, %v8156
      %v8158 = vlaneseq
      %v8159 = vshrl.u32 %v8158, 7
      %v8160 = vsub.s32 1, %v8159
      %v8161 = vrot.slane %v8124, %v8160
      %v8162 = vlaneseq
      %v8163 = vshrl.u32 %v8162, 7
      %v8164 = vsub.s32 2, %v8163
      %v8165 = vrot.slane %v8124, %v8164
      %v8166 = vlaneseq
      %v8167 = vshrl.u32 %v8166, 7
      %v8168 = vsub.s32 0, %v8167
      %v8169 = vrot.slane %v8125, %v8168
      %v8170 = vlaneseq
      %v8171 = vshrl.u32 %v8170, 7
      %v8172 = vsub.s32 1, %v8171
      %v8173 = vrot.slane %v8125, %v8172
      %v8174 = vlaneseq
      %v8175 = vshrl.u32 %v8174, 7
      %v8176 = vsub.s32 2, %v8175
      %v8177 = vrot.slane %v8125, %v8176
      %v8190 = vpack.c.bf16 %v8133, %v8133
      %v8191 = vpack.c.bf16 %v8137, %v8137
      %v8192 = vpack.c.bf16 %v8141, %v8141
      %v8193 = vpack.c.bf16 %v8145, %v8145
      %v8194 = vpack.c.bf16 %v8149, %v8149
      %v8195 = vpack.c.bf16 %v8153, %v8153
      %v8196 = vpack.c.bf16 %v8157, %v8157
      %v8197 = vpack.c.bf16 %v8161, %v8161
      %v8198 = vpack.c.bf16 %v8165, %v8165
      %v8199 = vpack.c.bf16 %v8169, %v8169
      %v8200 = vpack.c.bf16 %v8173, %v8173
      %v8201 = vpack.c.bf16 %v8177, %v8177
      %v8214 = vunpack.c.l.b16 %v8190
      %v8215 = vunpack.c.l.b16 %v8191
      %v8216 = vunpack.c.l.b16 %v8192
      %v8217 = vunpack.c.l.b16 %v8193
      %v8218 = vunpack.c.l.b16 %v8194
      %v8219 = vunpack.c.l.b16 %v8195
      %v8220 = vunpack.c.l.b16 %v8196
      %v8221 = vunpack.c.l.b16 %v8197
      %v8222 = vunpack.c.l.b16 %v8198
      %v8223 = vunpack.c.l.b16 %v8199
      %v8224 = vunpack.c.l.b16 %v8200
      %v8225 = vunpack.c.l.b16 %v8201
      %v8226 = vrot.slane %v8217, 7
      %v8227 = vsel %vm771, %v8226, %v8214
      %v8228 = vrot.slane %v8220, 6
      %v8229 = vsel %vm774, %v8228, %v8227
      %v8230 = vrot.slane %v8223, 5
      %v8231 = vsel %vm777, %v8230, %v8229
      %v8232 = vrot.slane %v8218, 7
      %v8233 = vsel %vm771, %v8232, %v8215
      %v8234 = vrot.slane %v8221, 6
      %v8235 = vsel %vm774, %v8234, %v8233
      %v8236 = vrot.slane %v8224, 5
      %v8237 = vsel %vm777, %v8236, %v8235
      %v8238 = vrot.slane %v8219, 7
      %v8239 = vsel %vm771, %v8238, %v8216
      %v8240 = vrot.slane %v8222, 6
      %v8241 = vsel %vm774, %v8240, %v8239
      %v8242 = vrot.slane %v8225, 5
      %v8243 = vsel %vm777, %v8242, %v8241
      %v8244 = vpack.c.b16 %v8231, %v8231
      %v8245 = vpack.c.b16 %v8237, %v8237
      %v8246 = vpack.c.b16 %v8243, %v8243
      %8247 = vrot.lane.b32.xlu0 %v8244, 122
      %v8248 = vpop.permute.xlu0 %8247
      %8249 = vrot.lane.b32.xlu0 %v8245, 122
      %v8250 = vpop.permute.xlu0 %8249
      %8251 = vrot.lane.b32.xlu0 %v8246, 122
      %v8252 = vpop.permute.xlu0 %8251
      %v8253 = vsel %vm5723, %v8248, %v8250
      %v8254 = vsel %vm5723, %v8250, %v8252
      %8258 = vst.msk [vmem:[#allocation3 + $0x100] sm:$0x30] %vm4876, %v8253
      %8259 = vst [vmem:[#allocation3 + $0x108] sm:$0x30] %v8254
      %8260 = vst.msk [vmem:[#allocation3 + $0x110] sm:$0x30] %vm4879, %v8252
      %v8261 = vld [vmem:[%s2] sm:$0xf]
      %v8262 = vld [vmem:[#allocation3] sm:$0xff]
      %v8263 = vld [vmem:[#allocation3 + $0x8] sm:$0xff]
      %v8264 = vld [vmem:[#allocation3 + $0x10] sm:$0xff]
      %v8265 = vld [vmem:[#allocation3 + $0x18] sm:$0xff]
      %v8266 = vld [vmem:[#allocation3 + $0x20] sm:$0xff]
      %v8267 = vld [vmem:[#allocation3 + $0x28] sm:$0xff]
      %v8268 = vld [vmem:[#allocation3 + $0x30] sm:$0xff]
      %v8269 = vld [vmem:[#allocation3 + $0x38] sm:$0xff]
      %v8270 = vld [vmem:[#allocation3 + $0x40] sm:$0xff]
      %v8271 = vld [vmem:[#allocation3 + $0x48] sm:$0xff]
      %v8272 = vld [vmem:[#allocation3 + $0x50] sm:$0xff]
      %v8273 = vld [vmem:[#allocation3 + $0x58] sm:$0xff]
      %v8274 = vld [vmem:[#allocation3 + $0x60] sm:$0xff]
      %v8275 = vld [vmem:[#allocation3 + $0x68] sm:$0xff]
      %v8276 = vld [vmem:[#allocation3 + $0x70] sm:$0xff]
      %v8277 = vld [vmem:[#allocation3 + $0x78] sm:$0xff]
      %v8278 = vld [vmem:[#allocation3 + $0x80] sm:$0xff]
      %v8279 = vld [vmem:[#allocation3 + $0x88] sm:$0xff]
      %v8280 = vld [vmem:[#allocation3 + $0x90] sm:$0xff]
      %v8281 = vld [vmem:[#allocation3 + $0x98] sm:$0xff]
      %v8282 = vld [vmem:[#allocation3 + $0xa0] sm:$0xff]
      %v8283 = vld [vmem:[#allocation3 + $0xa8] sm:$0xff]
      %v8284 = vld [vmem:[#allocation3 + $0xb0] sm:$0xff]
      %v8285 = vld [vmem:[#allocation3 + $0xb8] sm:$0xff]
      %v8286 = vld [vmem:[#allocation3 + $0xc0] sm:$0xff]
      %v8287 = vld [vmem:[#allocation3 + $0xc8] sm:$0xff]
      %v8288 = vld [vmem:[#allocation3 + $0xd0] sm:$0xff]
      %v8289 = vld [vmem:[#allocation3 + $0xd8] sm:$0xff]
      %v8290 = vld [vmem:[#allocation3 + $0xe0] sm:$0xff]
      %v8291 = vld [vmem:[#allocation3 + $0xe8] sm:$0xff]
      %v8292 = vld [vmem:[#allocation3 + $0xf0] sm:$0x3f]
      %v8293 = vld [vmem:[#allocation3 + $0xf8] sm:$0x3f]
      %v8294 = vld [vmem:[#allocation3 + $0x100] sm:$0x3f]
      %v8295 = vld [vmem:[#allocation3 + $0x108] sm:$0x3f]
      %v8296 = vld [vmem:[#allocation3 + $0x110] sm:$0x3f]
      %v8297 = vld [vmem:[%s3] sm:$0xff]
      %8299 = vset.pattern.permute.xlu0 0
      %8300 = vperm.xlu0 %8299, %v8297
      %v8301 = vpop.permute.xlu0 %8300
      %vm8303 = vcmask 883712
      %v8305 = vsel %vm8303, %v8261, 0
      %vm8307 = vcmask 1045504
      %v8309 = vsel %vm8307, %v8292, 0
      %v8312 = vsel %vm8307, %v8293, 0
      %v8315 = vsel %vm8307, %v8294, 0
      %v8318 = vsel %vm8307, %v8295, 0
      %v8321 = vsel %vm8307, %v8296, 0
      %8323 = vmatprep.subr.bf16.mxu0 %v8263
      %8324 = vmatpush1.bf16.msra.mxu0 %v8262
      %8325 = vmatprep.subr.bf16.mxu0 %v8268
      %8326 = vmatpush1.bf16.msra.mxu0 %v8267
      %8327 = vmatprep.subr.bf16.mxu0 %v8273
      %8328 = vmatpush1.bf16.msra.mxu0 %v8272
      %8329 = vmatprep.subr.bf16.mxu0 %v8278
      %8330 = vmatpush1.bf16.msra.mxu0 %v8277
      %8331 = vmatprep.subr.bf16.mxu0 %v8283
      %8332 = vmatpush1.bf16.msra.mxu0 %v8282
      %8333 = vmatprep.subr.bf16.mxu0 %v8288
      %8334 = vmatpush1.bf16.msra.mxu0 %v8287
      %8335 = vmatprep.subr.bf16.mxu0 %v8312
      %8336 = vmatpush1.bf16.msra.mxu0 %v8309
      %8337 = vmatprep.subr.bf16.mxu0 0
      %8338 = vmatpush1.bf16.msra.mxu0 0
      %8339 = vmatprep.subr.bf16.mxu0 0
      %8340 = vmatpush1.bf16.msra.mxu0 0
      %8341 = vmatprep.subr.bf16.mxu0 0
      %8342 = vmatpush1.bf16.msra.mxu0 0
      %8343 = vmatprep.subr.bf16.mxu0 0
      %8344 = vmatpush1.bf16.msra.mxu0 0
      %8345 = vmatprep.subr.bf16.mxu0 0
      %8346 = vmatpush1.bf16.msra.mxu0 0
      %8347 = vmatprep.subr.bf16.mxu0 0
      %8348 = vmatpush1.bf16.msra.mxu0 0
      %8349 = vmatprep.subr.bf16.mxu0 0
      %8350 = vmatpush1.bf16.msra.mxu0 0
      %8351 = vmatprep.subr.bf16.mxu0 0
      %8352 = vmatpush1.bf16.msra.mxu0 0
      %8353 = vmatprep.subr.bf16.mxu0 0
      %8354 = vmatpush1.bf16.msra.mxu0 0
      %8355 = vmatprep.mubr.bf16.mxu0 0
      %8356 = vmatmul.mubr.bf16.gmra.mrb[0].mxu0 %v8305
      %v8357 = vpop.f32.mrb[0].mxu0
      %v8358 = vadd.f32 %v8301, %v8357
      %v8359 = vpop.f32.mrb[0].mxu0
      %v8360 = vadd.f32 %v8301, %v8359
      %v8361 = vpop.f32.mrb[0].mxu0
      %v8362 = vpop.f32.mrb[0].mxu0
      %8363 = vdwg.mxu0
      %8364 = vmatprep.subr.bf16.mxu0 %v8265
      %8365 = vmatpush1.bf16.msra.mxu0 %v8264
      %8366 = vmatprep.subr.bf16.mxu0 %v8270
      %8367 = vmatpush1.bf16.msra.mxu0 %v8269
      %8368 = vmatprep.subr.bf16.mxu0 %v8275
      %8369 = vmatpush1.bf16.msra.mxu0 %v8274
      %8370 = vmatprep.subr.bf16.mxu0 %v8280
      %8371 = vmatpush1.bf16.msra.mxu0 %v8279
      %8372 = vmatprep.subr.bf16.mxu0 %v8285
      %8373 = vmatpush1.bf16.msra.mxu0 %v8284
      %8374 = vmatprep.subr.bf16.mxu0 %v8290
      %8375 = vmatpush1.bf16.msra.mxu0 %v8289
      %8376 = vmatprep.subr.bf16.mxu0 %v8318
      %8377 = vmatpush1.bf16.msra.mxu0 %v8315
      %8378 = vmatprep.subr.bf16.mxu0 0
      %8379 = vmatpush1.bf16.msra.mxu0 0
      %8380 = vmatprep.subr.bf16.mxu0 0
      %8381 = vmatpush1.bf16.msra.mxu0 0
      %8382 = vmatprep.subr.bf16.mxu0 0
      %8383 = vmatpush1.bf16.msra.mxu0 0
      %8384 = vmatprep.subr.bf16.mxu0 0
      %8385 = vmatpush1.bf16.msra.mxu0 0
      %8386 = vmatprep.subr.bf16.mxu0 0
      %8387 = vmatpush1.bf16.msra.mxu0 0
      %8388 = vmatprep.subr.bf16.mxu0 0
      %8389 = vmatpush1.bf16.msra.mxu0 0
      %8390 = vmatprep.subr.bf16.mxu0 0
      %8391 = vmatpush1.bf16.msra.mxu0 0
      %8392 = vmatprep.subr.bf16.mxu0 0
      %8393 = vmatpush1.bf16.msra.mxu0 0
      %8394 = vmatprep.subr.bf16.mxu0 0
      %8395 = vmatpush1.bf16.msra.mxu0 0
      %8396 = vmatprep.mubr.bf16.mxu0 0
      %8397 = vmatmul.mubr.bf16.gmra.mrb[0].mxu0 %v8305
      %v8398 = vpop.f32.mrb[0].mxu0
      %v8399 = vadd.f32 %v8301, %v8398
      %v8400 = vpop.f32.mrb[0].mxu0
      %v8401 = vadd.f32 %v8301, %v8400
      %v8402 = vpop.f32.mrb[0].mxu0
      %v8403 = vpop.f32.mrb[0].mxu0
      %8404 = vdwg.mxu0
      %8405 = vmatprep.subr.bf16.mxu0 0
      %8406 = vmatpush1.bf16.msra.mxu0 %v8266
      %8407 = vmatprep.subr.bf16.mxu0 0
      %8408 = vmatpush1.bf16.msra.mxu0 %v8271
      %8409 = vmatprep.subr.bf16.mxu0 0
      %8410 = vmatpush1.bf16.msra.mxu0 %v8276
      %8411 = vmatprep.subr.bf16.mxu0 0
      %8412 = vmatpush1.bf16.msra.mxu0 %v8281
      %8413 = vmatprep.subr.bf16.mxu0 0
      %8414 = vmatpush1.bf16.msra.mxu0 %v8286
      %8415 = vmatprep.subr.bf16.mxu0 0
      %8416 = vmatpush1.bf16.msra.mxu0 %v8291
      %8417 = vmatprep.subr.bf16.mxu0 0
      %8418 = vmatpush1.bf16.msra.mxu0 %v8321
      %8419 = vmatprep.subr.bf16.mxu0 0
      %8420 = vmatpush1.bf16.msra.mxu0 0
      %8421 = vmatprep.subr.bf16.mxu0 0
      %8422 = vmatpush1.bf16.msra.mxu0 0
      %8423 = vmatprep.subr.bf16.mxu0 0
      %8424 = vmatpush1.bf16.msra.mxu0 0
      %8425 = vmatprep.subr.bf16.mxu0 0
      %8426 = vmatpush1.bf16.msra.mxu0 0
      %8427 = vmatprep.subr.bf16.mxu0 0
      %8428 = vmatpush1.bf16.msra.mxu0 0
      %8429 = vmatprep.subr.bf16.mxu0 0
      %8430 = vmatpush1.bf16.msra.mxu0 0
      %8431 = vmatprep.subr.bf16.mxu0 0
      %8432 = vmatpush1.bf16.msra.mxu0 0
      %8433 = vmatprep.subr.bf16.mxu0 0
      %8434 = vmatpush1.bf16.msra.mxu0 0
      %8435 = vmatprep.subr.bf16.mxu0 0
      %8436 = vmatpush1.bf16.msra.mxu0 0
      %8437 = vmatprep.mubr.bf16.mxu0 0
      %8438 = vmatmul.mubr.bf16.gmra.mrb[0].mxu0 %v8305
      %v8439 = vpop.f32.mrb[0].mxu0
      %v8440 = vadd.f32 %v8301, %v8439
      %v8441 = vpop.f32.mrb[0].mxu0
      %v8442 = vpop.f32.mrb[0].mxu0
      %v8443 = vpop.f32.mrb[0].mxu0
      %8444 = vdwg.mxu0
      %vm8445 = vcmp.ge.f32.partialorder %v8358, 0.0
      %vm8446 = vcmp.ge.f32.partialorder %v8360, 0.0
      %vm8447 = vcmp.ge.f32.partialorder %v8399, 0.0
      %vm8448 = vcmp.ge.f32.partialorder %v8401, 0.0
      %vm8449 = vcmp.ge.f32.partialorder %v8440, 0.0
      %v8450 = vmul.f32 %v8358, 0.01
      %v8451 = vmul.f32 %v8360, 0.01
      %v8452 = vmul.f32 %v8399, 0.01
      %v8453 = vmul.f32 %v8401, 0.01
      %v8454 = vmul.f32 %v8440, 0.01
      %v8455 = vsel %vm8445, %v8358, %v8450
      %v8456 = vsel %vm8446, %v8360, %v8451
      %v8457 = vsel %vm8447, %v8399, %v8452
      %v8458 = vsel %vm8448, %v8401, %v8453
      %v8459 = vsel %vm8449, %v8440, %v8454
      %v8460 = vld [vmem:[%s4] sm:$0xff]
      %8462 = vset.pattern.permute.xlu0 0
      %8463 = vperm.xlu0 %8462, %v8460
      %v8464 = vpop.permute.xlu0 %8463
      %v8466 = vadd.f32 %v8455, %v8464
      %v8467 = vadd.f32 %v8456, %v8464
      %v8468 = vadd.f32 %v8457, %v8464
      %v8469 = vadd.f32 %v8458, %v8464
      %v8470 = vadd.f32 %v8459, %v8464
      %v8472 = vlaneseq
      %v8473 = vshrl.u32 %v8472, 7
      %v8474 = vsub.s32 0, %v8473
      %v8475 = vrot.slane %v442, %v8474
      %v8476 = vlaneseq
      %v8477 = vshrl.u32 %v8476, 7
      %v8478 = vsub.s32 1, %v8477
      %v8479 = vrot.slane %v442, %v8478
      %v8480 = vlaneseq
      %v8481 = vshrl.u32 %v8480, 7
      %v8482 = vsub.s32 2, %v8481
      %v8483 = vrot.slane %v442, %v8482
      %v8484 = vlaneseq
      %v8485 = vshrl.u32 %v8484, 7
      %v8486 = vsub.s32 3, %v8485
      %v8487 = vrot.slane %v442, %v8486
      %v8488 = vlaneseq
      %v8489 = vshrl.u32 %v8488, 7
      %v8490 = vsub.s32 4, %v8489
      %v8491 = vrot.slane %v442, %v8490
      %v8497 = vmul.f32 %v8466, %v8475
      %v8498 = vmul.f32 %v8467, %v8479
      %v8499 = vmul.f32 %v8468, %v8483
      %v8500 = vmul.f32 %v8469, %v8487
      %v8501 = vmul.f32 %v8470, %v8491
      %v8502 = vpack.c.bf16 %v8497, %v8497
      %v8503 = vpack.c.bf16 %v8498, %v8498
      %v8504 = vpack.c.bf16 %v8499, %v8499
      %v8505 = vpack.c.bf16 %v8500, %v8500
      %v8506 = vpack.c.bf16 %v8501, %v8501
      %8507 = vst [vmem:[#allocation4 + $0x8] sm:$0xf] %v8502
      %8508 = vst [vmem:[#allocation4 + $0x10] sm:$0xf] %v8503
      %vm8509 = vcmask 257024
      %8510 = vst.msk [vmem:[#allocation4 + $0x18] sm:$0xf] %vm8509, %v8504
      %v8514 = vrot.slane %v8504, 4
      %v8515 = vrot.slane %v8505, 4
      %v8516 = vrot.slane %v8506, 4
      %8517 = vrot.lane.b32.xlu0 %v8514, 96
      %v8518 = vpop.permute.xlu0 %8517
      %8519 = vrot.lane.b32.xlu0 %v8515, 96
      %v8520 = vpop.permute.xlu0 %8519
      %8521 = vrot.lane.b32.xlu0 %v8516, 96
      %v8522 = vpop.permute.xlu0 %8521
      %vm8523 = vcmask 785408
      %v8524 = vsel %vm8523, %v8518, %v8520
      %v8525 = vsel %vm8523, %v8520, %v8522
      %8529 = vst [vmem:[#allocation4 + $0x8] sm:$0xf0] %v8524
      %8530 = vst [vmem:[#allocation4 + $0x10] sm:$0xf0] %v8525
      %vm8531 = vcmask 261124
      %8532 = vst.msk [vmem:[#allocation4 + $0x18] sm:$0xf0] %vm8531, %v8522
      %v8533 = vld [vmem:[#allocation4] sm:$0xff]
      %v8534 = vld [vmem:[#allocation4 + $0x8] sm:$0xff]
      %v8535 = vld [vmem:[#allocation4 + $0x10] sm:$0xff]
      %v8536 = vld [vmem:[#allocation4 + $0x18] sm:$0xff]
      %8541 = vrot.lane.b32.xlu0 %v8533, 19
      %v8542 = vpop.permute.xlu0 %8541
      %8543 = vrot.lane.b32.xlu0 %v8534, 19
      %v8544 = vpop.permute.xlu0 %8543
      %8545 = vrot.lane.b32.xlu0 %v8535, 19
      %v8546 = vpop.permute.xlu0 %8545
      %8547 = vrot.lane.b32.xlu0 %v8536, 19
      %v8548 = vpop.permute.xlu0 %8547
      %vm8549 = vcmask 154624
      %v8550 = vsel %vm8549, %v8542, %v8544
      %v8551 = vsel %vm8549, %v8544, %v8546
      %v8552 = vsel %vm8549, %v8546, %v8548
      %8556 = vst [vmem:[#allocation3] sm:$0xff] %v8550
      %8557 = vst [vmem:[#allocation3 + $0x8] sm:$0xff] %v8551
      %vm8558 = vcmask 261120
      %8559 = vst.msk [vmem:[#allocation3 + $0x10] sm:$0xff] %vm8558, %v8552
      %v8560 = vld [vmem:[#allocation4] sm:$0xff]
      %v8561 = vld [vmem:[#allocation4 + $0x8] sm:$0xff]
      %v8562 = vld [vmem:[#allocation4 + $0x10] sm:$0xff]
      %v8563 = vld [vmem:[#allocation4 + $0x18] sm:$0xff]
      %8568 = vrot.lane.b32.xlu0 %v8560, 18
      %v8569 = vpop.permute.xlu0 %8568
      %8570 = vrot.lane.b32.xlu0 %v8561, 18
      %v8571 = vpop.permute.xlu0 %8570
      %8572 = vrot.lane.b32.xlu0 %v8562, 18
      %v8573 = vpop.permute.xlu0 %8572
      %8574 = vrot.lane.b32.xlu0 %v8563, 18
      %v8575 = vpop.permute.xlu0 %8574
      %vm8576 = vcmask 146432
      %v8577 = vsel %vm8576, %v8569, %v8571
      %v8578 = vsel %vm8576, %v8571, %v8573
      %v8579 = vsel %vm8576, %v8573, %v8575
      %8583 = vst [vmem:[#allocation3 + $0x28] sm:$0xff] %v8577
      %8584 = vst [vmem:[#allocation3 + $0x30] sm:$0xff] %v8578
      %8585 = vst.msk [vmem:[#allocation3 + $0x38] sm:$0xff] %vm8558, %v8579
      %v8586 = vld [vmem:[#allocation4] sm:$0xff]
      %v8587 = vld [vmem:[#allocation4 + $0x8] sm:$0xff]
      %v8588 = vld [vmem:[#allocation4 + $0x10] sm:$0xff]
      %v8589 = vld [vmem:[#allocation4 + $0x18] sm:$0xff]
      %8594 = vrot.lane.b32.xlu0 %v8586, 17
      %v8595 = vpop.permute.xlu0 %8594
      %8596 = vrot.lane.b32.xlu0 %v8587, 17
      %v8597 = vpop.permute.xlu0 %8596
      %8598 = vrot.lane.b32.xlu0 %v8588, 17
      %v8599 = vpop.permute.xlu0 %8598
      %8600 = vrot.lane.b32.xlu0 %v8589, 17
      %v8601 = vpop.permute.xlu0 %8600
      %vm8602 = vcmask 138240
      %v8603 = vsel %vm8602, %v8595, %v8597
      %v8604 = vsel %vm8602, %v8597, %v8599
      %v8605 = vsel %vm8602, %v8599, %v8601
      %8609 = vst [vmem:[#allocation3 + $0x50] sm:$0xff] %v8603
      %8610 = vst [vmem:[#allocation3 + $0x58] sm:$0xff] %v8604
      %8611 = vst.msk [vmem:[#allocation3 + $0x60] sm:$0xff] %vm8558, %v8605
      %v8612 = vld [vmem:[#allocation4] sm:$0xff]
      %v8613 = vld [vmem:[#allocation4 + $0x8] sm:$0xff]
      %v8614 = vld [vmem:[#allocation4 + $0x10] sm:$0xff]
      %v8615 = vld [vmem:[#allocation4 + $0x18] sm:$0xff]
      %8620 = vrot.lane.b32.xlu0 %v8612, 1
      %v8621 = vpop.permute.xlu0 %8620
      %8622 = vrot.lane.b32.xlu0 %v8613, 1
      %v8623 = vpop.permute.xlu0 %8622
      %8624 = vrot.lane.b32.xlu0 %v8614, 1
      %v8625 = vpop.permute.xlu0 %8624
      %8626 = vrot.lane.b32.xlu0 %v8615, 1
      %v8627 = vpop.permute.xlu0 %8626
      %vm8628 = vcmask 7168
      %v8629 = vsel %vm8628, %v8621, %v8623
      %v8630 = vsel %vm8628, %v8623, %v8625
      %v8631 = vsel %vm8628, %v8625, %v8627
      %8635 = vst [vmem:[#allocation3 + $0x78] sm:$0xff] %v8629
      %8636 = vst [vmem:[#allocation3 + $0x80] sm:$0xff] %v8630
      %8637 = vst.msk [vmem:[#allocation3 + $0x88] sm:$0xff] %vm8558, %v8631
      %v8638 = vld [vmem:[#allocation4 + $0x8] sm:$0xff]
      %v8639 = vld [vmem:[#allocation4 + $0x10] sm:$0xff]
      %v8640 = vld [vmem:[#allocation4 + $0x18] sm:$0xff]
      %8641 = vst [vmem:[#allocation3 + $0xa0] sm:$0xff] %v8638
      %8642 = vst [vmem:[#allocation3 + $0xa8] sm:$0xff] %v8639
      %8643 = vst.msk [vmem:[#allocation3 + $0xb0] sm:$0xff] %vm8558, %v8640
      %v8644 = vld [vmem:[#allocation4 + $0x8] sm:$0xff]
      %v8645 = vld [vmem:[#allocation4 + $0x10] sm:$0xff]
      %v8646 = vld [vmem:[#allocation4 + $0x18] sm:$0xff]
      %8650 = vrot.lane.b32.xlu0 %v8644, 127
      %v8651 = vpop.permute.xlu0 %8650
      %8652 = vrot.lane.b32.xlu0 %v8645, 127
      %v8653 = vpop.permute.xlu0 %8652
      %8654 = vrot.lane.b32.xlu0 %v8646, 127
      %v8655 = vpop.permute.xlu0 %8654
      %v8656 = vsel %vm938, %v8651, %v8653
      %v8657 = vsel %vm938, %v8653, %v8655
      %8661 = vst [vmem:[#allocation3 + $0xc8] sm:$0xff] %v8656
      %8662 = vst [vmem:[#allocation3 + $0xd0] sm:$0xff] %v8657
      %8663 = vst.msk [vmem:[#allocation3 + $0xd8] sm:$0xff] %vm8558, %v8655
      %v8664 = vld [vmem:[#allocation4 + $0x8] sm:$0xff]
      %v8665 = vld [vmem:[#allocation4 + $0x10] sm:$0xff]
      %v8666 = vld [vmem:[#allocation4 + $0x18] sm:$0xff]
      %8670 = vrot.lane.b32.xlu0 %v8664, 111
      %v8671 = vpop.permute.xlu0 %8670
      %8672 = vrot.lane.b32.xlu0 %v8665, 111
      %v8673 = vpop.permute.xlu0 %8672
      %8674 = vrot.lane.b32.xlu0 %v8666, 111
      %v8675 = vpop.permute.xlu0 %8674
      %vm8676 = vcmask 908288
      %v8677 = vsel %vm8676, %v8671, %v8673
      %v8678 = vsel %vm8676, %v8673, %v8675
      %8682 = vst [vmem:[#allocation3 + $0xf0] sm:$0xff] %v8677
      %8683 = vst [vmem:[#allocation3 + $0xf8] sm:$0xff] %v8678
      %8684 = vst.msk [vmem:[#allocation3 + $0x100] sm:$0xff] %vm8558, %v8675
      %v8685 = vld [vmem:[#allocation4 + $0x8] sm:$0xff]
      %v8686 = vld [vmem:[#allocation4 + $0x10] sm:$0xff]
      %v8687 = vld [vmem:[#allocation4 + $0x18] sm:$0xff]
      %8691 = vrot.lane.b32.xlu0 %v8685, 110
      %v8692 = vpop.permute.xlu0 %8691
      %8693 = vrot.lane.b32.xlu0 %v8686, 110
      %v8694 = vpop.permute.xlu0 %8693
      %8695 = vrot.lane.b32.xlu0 %v8687, 110
      %v8696 = vpop.permute.xlu0 %8695
      %v8697 = vsel %vm1223, %v8692, %v8694
      %v8698 = vsel %vm1223, %v8694, %v8696
      %8702 = vst [vmem:[#allocation3 + $0x118] sm:$0xff] %v8697
      %8703 = vst [vmem:[#allocation3 + $0x120] sm:$0xff] %v8698
      %8704 = vst.msk [vmem:[#allocation3 + $0x128] sm:$0xff] %vm8558, %v8696
      %v8705 = vld [vmem:[#allocation4 + $0x8] sm:$0xff]
      %v8706 = vld [vmem:[#allocation4 + $0x10] sm:$0xff]
      %v8707 = vld [vmem:[#allocation4 + $0x18] sm:$0xff]
      %8711 = vrot.lane.b32.xlu0 %v8705, 109
      %v8712 = vpop.permute.xlu0 %8711
      %8713 = vrot.lane.b32.xlu0 %v8706, 109
      %v8714 = vpop.permute.xlu0 %8713
      %8715 = vrot.lane.b32.xlu0 %v8707, 109
      %v8716 = vpop.permute.xlu0 %8715
      %v8717 = vsel %vm1364, %v8712, %v8714
      %v8718 = vsel %vm1364, %v8714, %v8716
      %8722 = vst [vmem:[#allocation3 + $0x140] sm:$0xff] %v8717
      %8723 = vst [vmem:[#allocation3 + $0x148] sm:$0xff] %v8718
      %8724 = vst.msk [vmem:[#allocation3 + $0x150] sm:$0xff] %vm8558, %v8716
      %v8725 = vld [vmem:[%s5] sm:$0xff]
      %v8726 = vld [vmem:[%s5 + $0x8] sm:$0xff]
      %v8727 = vld [vmem:[#allocation3] sm:$0xff]
      %v8728 = vld [vmem:[#allocation3 + $0x8] sm:$0xff]
      %v8729 = vld [vmem:[#allocation3 + $0x10] sm:$0xff]
      %v8730 = vld [vmem:[#allocation3 + $0x28] sm:$0xff]
      %v8731 = vld [vmem:[#allocation3 + $0x30] sm:$0xff]
      %v8732 = vld [vmem:[#allocation3 + $0x38] sm:$0xff]
      %v8733 = vld [vmem:[#allocation3 + $0x50] sm:$0xff]
      %v8734 = vld [vmem:[#allocation3 + $0x58] sm:$0xff]
      %v8735 = vld [vmem:[#allocation3 + $0x60] sm:$0xff]
      %v8736 = vld [vmem:[#allocation3 + $0x78] sm:$0xff]
      %v8737 = vld [vmem:[#allocation3 + $0x80] sm:$0xff]
      %v8738 = vld [vmem:[#allocation3 + $0x88] sm:$0xff]
      %v8739 = vld [vmem:[#allocation3 + $0xa0] sm:$0xff]
      %v8740 = vld [vmem:[#allocation3 + $0xa8] sm:$0xff]
      %v8741 = vld [vmem:[#allocation3 + $0xb0] sm:$0xff]
      %v8742 = vld [vmem:[#allocation3 + $0xc8] sm:$0xff]
      %v8743 = vld [vmem:[#allocation3 + $0xd0] sm:$0xff]
      %v8744 = vld [vmem:[#allocation3 + $0xd8] sm:$0xff]
      %v8745 = vld [vmem:[#allocation3 + $0xf0] sm:$0xff]
      %v8746 = vld [vmem:[#allocation3 + $0xf8] sm:$0xff]
      %v8747 = vld [vmem:[#allocation3 + $0x100] sm:$0xff]
      %v8748 = vld [vmem:[#allocation3 + $0x118] sm:$0xff]
      %v8749 = vld [vmem:[#allocation3 + $0x120] sm:$0xff]
      %v8750 = vld [vmem:[#allocation3 + $0x128] sm:$0xff]
      %v8751 = vld [vmem:[#allocation3 + $0x140] sm:$0xff]
      %v8752 = vld [vmem:[#allocation3 + $0x148] sm:$0xff]
      %v8753 = vld [vmem:[#allocation3 + $0x150] sm:$0xff]
      %v8754 = vld [vmem:[%s6] sm:$0xff]
      %v8755 = vld [vmem:[%s6 + $0x8] sm:$0xff]
      %8757 = vset.pattern.permute.xlu0 0
      %8758 = vperm.xlu0 %8757, %v8754
      %v8759 = vpop.permute.xlu0 %8758
      %8762 = vset.pattern.permute.xlu0 0
      %8763 = vperm.xlu0 %8762, %v8755
      %v8764 = vpop.permute.xlu0 %8763
      %v8768 = vunpack.c.l.b16 %v8725
      %v8769 = vunpack.c.h.b16 %v8725
      %v8770 = vunpack.c.l.b16 %v8726
      %v8771 = vunpack.c.h.b16 %v8726
      %v8772 = vpack.c.b16 %v8770, %v8768
      %v8773 = vpack.c.b16 %v8771, %v8769
      %vm8775 = vcmask 130048
      %v8777 = vsel %vm8775, %v8773, 0
      %8779 = vmatprep.subr.bf16.mxu0 %v8728
      %8780 = vmatpush1.bf16.msra.mxu0 %v8727
      %8781 = vmatprep.subr.bf16.mxu0 %v8731
      %8782 = vmatpush1.bf16.msra.mxu0 %v8730
      %8783 = vmatprep.subr.bf16.mxu0 %v8734
      %8784 = vmatpush1.bf16.msra.mxu0 %v8733
      %8785 = vmatprep.subr.bf16.mxu0 %v8737
      %8786 = vmatpush1.bf16.msra.mxu0 %v8736
      %8787 = vmatprep.subr.bf16.mxu0 %v8740
      %8788 = vmatpush1.bf16.msra.mxu0 %v8739
      %8789 = vmatprep.subr.bf16.mxu0 %v8743
      %8790 = vmatpush1.bf16.msra.mxu0 %v8742
      %8791 = vmatprep.subr.bf16.mxu0 %v8746
      %8792 = vmatpush1.bf16.msra.mxu0 %v8745
      %8793 = vmatprep.subr.bf16.mxu0 %v8749
      %8794 = vmatpush1.bf16.msra.mxu0 %v8748
      %8795 = vmatprep.subr.bf16.mxu0 %v8752
      %8796 = vmatpush1.bf16.msra.mxu0 %v8751
      %8797 = vmatprep.subr.bf16.mxu0 0
      %8798 = vmatpush1.bf16.msra.mxu0 0
      %8799 = vmatprep.subr.bf16.mxu0 0
      %8800 = vmatpush1.bf16.msra.mxu0 0
      %8801 = vmatprep.subr.bf16.mxu0 0
      %8802 = vmatpush1.bf16.msra.mxu0 0
      %8803 = vmatprep.subr.bf16.mxu0 0
      %8804 = vmatpush1.bf16.msra.mxu0 0
      %8805 = vmatprep.subr.bf16.mxu0 0
      %8806 = vmatpush1.bf16.msra.mxu0 0
      %8807 = vmatprep.subr.bf16.mxu0 0
      %8808 = vmatpush1.bf16.msra.mxu0 0
      %8809 = vmatprep.subr.bf16.mxu0 0
      %8810 = vmatpush1.bf16.msra.mxu0 0
      %8811 = vmatprep.mubr.bf16.mxu0 %v8777
      %8812 = vmatmul.mubr.bf16.gmra.mrb[0].mxu0 %v8772
      %v8813 = vpop.f32.mrb[0].mxu0
      %v8814 = vadd.f32 %v8759, %v8813
      %v8815 = vpop.f32.mrb[0].mxu0
      %v8816 = vadd.f32 %v8759, %v8815
      %v8817 = vpop.f32.mrb[0].mxu0
      %v8818 = vadd.f32 %v8764, %v8817
      %v8819 = vpop.f32.mrb[0].mxu0
      %v8820 = vadd.f32 %v8764, %v8819
      %8821 = vdwg.mxu0
      %8822 = vmatprep.subr.bf16.mxu0 0
      %8823 = vmatpush1.bf16.msra.mxu0 %v8729
      %8824 = vmatprep.subr.bf16.mxu0 0
      %8825 = vmatpush1.bf16.msra.mxu0 %v8732
      %8826 = vmatprep.subr.bf16.mxu0 0
      %8827 = vmatpush1.bf16.msra.mxu0 %v8735
      %8828 = vmatprep.subr.bf16.mxu0 0
      %8829 = vmatpush1.bf16.msra.mxu0 %v8738
      %8830 = vmatprep.subr.bf16.mxu0 0
      %8831 = vmatpush1.bf16.msra.mxu0 %v8741
      %8832 = vmatprep.subr.bf16.mxu0 0
      %8833 = vmatpush1.bf16.msra.mxu0 %v8744
      %8834 = vmatprep.subr.bf16.mxu0 0
      %8835 = vmatpush1.bf16.msra.mxu0 %v8747
      %8836 = vmatprep.subr.bf16.mxu0 0
      %8837 = vmatpush1.bf16.msra.mxu0 %v8750
      %8838 = vmatprep.subr.bf16.mxu0 0
      %8839 = vmatpush1.bf16.msra.mxu0 %v8753
      %8840 = vmatprep.subr.bf16.mxu0 0
      %8841 = vmatpush1.bf16.msra.mxu0 0
      %8842 = vmatprep.subr.bf16.mxu0 0
      %8843 = vmatpush1.bf16.msra.mxu0 0
      %8844 = vmatprep.subr.bf16.mxu0 0
      %8845 = vmatpush1.bf16.msra.mxu0 0
      %8846 = vmatprep.subr.bf16.mxu0 0
      %8847 = vmatpush1.bf16.msra.mxu0 0
      %8848 = vmatprep.subr.bf16.mxu0 0
      %8849 = vmatpush1.bf16.msra.mxu0 0
      %8850 = vmatprep.subr.bf16.mxu0 0
      %8851 = vmatpush1.bf16.msra.mxu0 0
      %8852 = vmatprep.subr.bf16.mxu0 0
      %8853 = vmatpush1.bf16.msra.mxu0 0
      %8854 = vmatprep.mubr.bf16.mxu0 %v8777
      %8855 = vmatmul.mubr.bf16.gmra.mrb[0].mxu0 %v8772
      %v8856 = vpop.f32.mrb[0].mxu0
      %v8857 = vadd.f32 %v8759, %v8856
      %v8858 = vpop.f32.mrb[0].mxu0
      %v8859 = vpop.f32.mrb[0].mxu0
      %v8860 = vadd.f32 %v8764, %v8859
      %v8861 = vpop.f32.mrb[0].mxu0
      %8862 = vdwg.mxu0
      %vm8863 = vcmp.ge.f32.partialorder %v8814, 0.0
      %vm8864 = vcmp.ge.f32.partialorder %v8816, 0.0
      %vm8865 = vcmp.ge.f32.partialorder %v8857, 0.0
      %vm8866 = vcmp.ge.f32.partialorder %v8818, 0.0
      %vm8867 = vcmp.ge.f32.partialorder %v8820, 0.0
      %vm8868 = vcmp.ge.f32.partialorder %v8860, 0.0
      %v8869 = vmul.f32 %v8814, 0.01
      %v8870 = vmul.f32 %v8816, 0.01
      %v8871 = vmul.f32 %v8857, 0.01
      %v8872 = vmul.f32 %v8818, 0.01
      %v8873 = vmul.f32 %v8820, 0.01
      %v8874 = vmul.f32 %v8860, 0.01
      %v8875 = vsel %vm8863, %v8814, %v8869
      %v8876 = vsel %vm8864, %v8816, %v8870
      %v8877 = vsel %vm8865, %v8857, %v8871
      %v8878 = vsel %vm8866, %v8818, %v8872
      %v8879 = vsel %vm8867, %v8820, %v8873
      %v8880 = vsel %vm8868, %v8860, %v8874
      %v8881 = vld [vmem:[%s7] sm:$0xff]
      %v8882 = vld [vmem:[%s7 + $0x8] sm:$0xff]
      %8884 = vset.pattern.permute.xlu0 0
      %8885 = vperm.xlu0 %8884, %v8881
      %v8886 = vpop.permute.xlu0 %8885
      %8889 = vset.pattern.permute.xlu0 0
      %8890 = vperm.xlu0 %8889, %v8882
      %v8891 = vpop.permute.xlu0 %8890
      %v8893 = vadd.f32 %v8875, %v8886
      %v8894 = vadd.f32 %v8876, %v8886
      %v8895 = vadd.f32 %v8877, %v8886
      %v8896 = vadd.f32 %v8878, %v8891
      %v8897 = vadd.f32 %v8879, %v8891
      %v8898 = vadd.f32 %v8880, %v8891
      %v8899 = vmul.f32 %v8893, %v8475
      %v8900 = vmul.f32 %v8894, %v8479
      %v8901 = vmul.f32 %v8895, %v8483
      %v8902 = vmul.f32 %v8896, %v8475
      %v8903 = vmul.f32 %v8897, %v8479
      %v8904 = vmul.f32 %v8898, %v8483
      %v8905 = vpack.c.bf16 %v8902, %v8899
      %v8906 = vpack.c.bf16 %v8903, %v8900
      %v8907 = vpack.c.bf16 %v8904, %v8901
      %8908 = vst [vmem:[#allocation5 + $0x8] sm:$0xff] %v8905
      %8909 = vst [vmem:[#allocation5 + $0x10] sm:$0xff] %v8906
      %8910 = vst.msk [vmem:[#allocation5 + $0x18] sm:$0xff] %vm8558, %v8907
      %v8911 = vld [vmem:[#allocation5] sm:$0xff]
      %v8912 = vld [vmem:[#allocation5 + $0x8] sm:$0xff]
      %v8913 = vld [vmem:[#allocation5 + $0x10] sm:$0xff]
      %v8914 = vld [vmem:[#allocation5 + $0x18] sm:$0xff]
      %8919 = vrot.lane.b32.xlu0 %v8911, 19
      %v8920 = vpop.permute.xlu0 %8919
      %8921 = vrot.lane.b32.xlu0 %v8912, 19
      %v8922 = vpop.permute.xlu0 %8921
      %8923 = vrot.lane.b32.xlu0 %v8913, 19
      %v8924 = vpop.permute.xlu0 %8923
      %8925 = vrot.lane.b32.xlu0 %v8914, 19
      %v8926 = vpop.permute.xlu0 %8925
      %v8927 = vsel %vm8549, %v8920, %v8922
      %v8928 = vsel %vm8549, %v8922, %v8924
      %v8929 = vsel %vm8549, %v8924, %v8926
      %8933 = vst [vmem:[#allocation3] sm:$0xff] %v8927
      %8934 = vst [vmem:[#allocation3 + $0x8] sm:$0xff] %v8928
      %8935 = vst.msk [vmem:[#allocation3 + $0x10] sm:$0xff] %vm8558, %v8929
      %v8936 = vld [vmem:[#allocation5] sm:$0xff]
      %v8937 = vld [vmem:[#allocation5 + $0x8] sm:$0xff]
      %v8938 = vld [vmem:[#allocation5 + $0x10] sm:$0xff]
      %v8939 = vld [vmem:[#allocation5 + $0x18] sm:$0xff]
      %8944 = vrot.lane.b32.xlu0 %v8936, 18
      %v8945 = vpop.permute.xlu0 %8944
      %8946 = vrot.lane.b32.xlu0 %v8937, 18
      %v8947 = vpop.permute.xlu0 %8946
      %8948 = vrot.lane.b32.xlu0 %v8938, 18
      %v8949 = vpop.permute.xlu0 %8948
      %8950 = vrot.lane.b32.xlu0 %v8939, 18
      %v8951 = vpop.permute.xlu0 %8950
      %v8952 = vsel %vm8576, %v8945, %v8947
      %v8953 = vsel %vm8576, %v8947, %v8949
      %v8954 = vsel %vm8576, %v8949, %v8951
      %8958 = vst [vmem:[#allocation3 + $0x28] sm:$0xff] %v8952
      %8959 = vst [vmem:[#allocation3 + $0x30] sm:$0xff] %v8953
      %8960 = vst.msk [vmem:[#allocation3 + $0x38] sm:$0xff] %vm8558, %v8954
      %v8961 = vld [vmem:[#allocation5] sm:$0xff]
      %v8962 = vld [vmem:[#allocation5 + $0x8] sm:$0xff]
      %v8963 = vld [vmem:[#allocation5 + $0x10] sm:$0xff]
      %v8964 = vld [vmem:[#allocation5 + $0x18] sm:$0xff]
      %8969 = vrot.lane.b32.xlu0 %v8961, 17
      %v8970 = vpop.permute.xlu0 %8969
      %8971 = vrot.lane.b32.xlu0 %v8962, 17
      %v8972 = vpop.permute.xlu0 %8971
      %8973 = vrot.lane.b32.xlu0 %v8963, 17
      %v8974 = vpop.permute.xlu0 %8973
      %8975 = vrot.lane.b32.xlu0 %v8964, 17
      %v8976 = vpop.permute.xlu0 %8975
      %v8977 = vsel %vm8602, %v8970, %v8972
      %v8978 = vsel %vm8602, %v8972, %v8974
      %v8979 = vsel %vm8602, %v8974, %v8976
      %8983 = vst [vmem:[#allocation3 + $0x50] sm:$0xff] %v8977
      %8984 = vst [vmem:[#allocation3 + $0x58] sm:$0xff] %v8978
      %8985 = vst.msk [vmem:[#allocation3 + $0x60] sm:$0xff] %vm8558, %v8979
      %v8986 = vld [vmem:[#allocation5] sm:$0xff]
      %v8987 = vld [vmem:[#allocation5 + $0x8] sm:$0xff]
      %v8988 = vld [vmem:[#allocation5 + $0x10] sm:$0xff]
      %v8989 = vld [vmem:[#allocation5 + $0x18] sm:$0xff]
      %8994 = vrot.lane.b32.xlu0 %v8986, 1
      %v8995 = vpop.permute.xlu0 %8994
      %8996 = vrot.lane.b32.xlu0 %v8987, 1
      %v8997 = vpop.permute.xlu0 %8996
      %8998 = vrot.lane.b32.xlu0 %v8988, 1
      %v8999 = vpop.permute.xlu0 %8998
      %9000 = vrot.lane.b32.xlu0 %v8989, 1
      %v9001 = vpop.permute.xlu0 %9000
      %v9002 = vsel %vm8628, %v8995, %v8997
      %v9003 = vsel %vm8628, %v8997, %v8999
      %v9004 = vsel %vm8628, %v8999, %v9001
      %9008 = vst [vmem:[#allocation3 + $0x78] sm:$0xff] %v9002
      %9009 = vst [vmem:[#allocation3 + $0x80] sm:$0xff] %v9003
      %9010 = vst.msk [vmem:[#allocation3 + $0x88] sm:$0xff] %vm8558, %v9004
      %v9011 = vld [vmem:[#allocation5 + $0x8] sm:$0xff]
      %v9012 = vld [vmem:[#allocation5 + $0x10] sm:$0xff]
      %v9013 = vld [vmem:[#allocation5 + $0x18] sm:$0xff]
      %9014 = vst [vmem:[#allocation3 + $0xa0] sm:$0xff] %v9011
      %9015 = vst [vmem:[#allocation3 + $0xa8] sm:$0xff] %v9012
      %9016 = vst.msk [vmem:[#allocation3 + $0xb0] sm:$0xff] %vm8558, %v9013
      %v9017 = vld [vmem:[#allocation5 + $0x8] sm:$0xff]
      %v9018 = vld [vmem:[#allocation5 + $0x10] sm:$0xff]
      %v9019 = vld [vmem:[#allocation5 + $0x18] sm:$0xff]
      %9023 = vrot.lane.b32.xlu0 %v9017, 127
      %v9024 = vpop.permute.xlu0 %9023
      %9025 = vrot.lane.b32.xlu0 %v9018, 127
      %v9026 = vpop.permute.xlu0 %9025
      %9027 = vrot.lane.b32.xlu0 %v9019, 127
      %v9028 = vpop.permute.xlu0 %9027
      %v9029 = vsel %vm938, %v9024, %v9026
      %v9030 = vsel %vm938, %v9026, %v9028
      %9034 = vst [vmem:[#allocation3 + $0xc8] sm:$0xff] %v9029
      %9035 = vst [vmem:[#allocation3 + $0xd0] sm:$0xff] %v9030
      %9036 = vst.msk [vmem:[#allocation3 + $0xd8] sm:$0xff] %vm8558, %v9028
      %v9037 = vld [vmem:[#allocation5 + $0x8] sm:$0xff]
      %v9038 = vld [vmem:[#allocation5 + $0x10] sm:$0xff]
      %v9039 = vld [vmem:[#allocation5 + $0x18] sm:$0xff]
      %9043 = vrot.lane.b32.xlu0 %v9037, 111
      %v9044 = vpop.permute.xlu0 %9043
      %9045 = vrot.lane.b32.xlu0 %v9038, 111
      %v9046 = vpop.permute.xlu0 %9045
      %9047 = vrot.lane.b32.xlu0 %v9039, 111
      %v9048 = vpop.permute.xlu0 %9047
      %v9049 = vsel %vm8676, %v9044, %v9046
      %v9050 = vsel %vm8676, %v9046, %v9048
      %9054 = vst [vmem:[#allocation3 + $0xf0] sm:$0xff] %v9049
      %9055 = vst [vmem:[#allocation3 + $0xf8] sm:$0xff] %v9050
      %9056 = vst.msk [vmem:[#allocation3 + $0x100] sm:$0xff] %vm8558, %v9048
      %v9057 = vld [vmem:[#allocation5 + $0x8] sm:$0xff]
      %v9058 = vld [vmem:[#allocation5 + $0x10] sm:$0xff]
      %v9059 = vld [vmem:[#allocation5 + $0x18] sm:$0xff]
      %9063 = vrot.lane.b32.xlu0 %v9057, 110
      %v9064 = vpop.permute.xlu0 %9063
      %9065 = vrot.lane.b32.xlu0 %v9058, 110
      %v9066 = vpop.permute.xlu0 %9065
      %9067 = vrot.lane.b32.xlu0 %v9059, 110
      %v9068 = vpop.permute.xlu0 %9067
      %v9069 = vsel %vm1223, %v9064, %v9066
      %v9070 = vsel %vm1223, %v9066, %v9068
      %9074 = vst [vmem:[#allocation3 + $0x118] sm:$0xff] %v9069
      %9075 = vst [vmem:[#allocation3 + $0x120] sm:$0xff] %v9070
      %9076 = vst.msk [vmem:[#allocation3 + $0x128] sm:$0xff] %vm8558, %v9068
      %v9077 = vld [vmem:[#allocation5 + $0x8] sm:$0xff]
      %v9078 = vld [vmem:[#allocation5 + $0x10] sm:$0xff]
      %v9079 = vld [vmem:[#allocation5 + $0x18] sm:$0xff]
      %9083 = vrot.lane.b32.xlu0 %v9077, 109
      %v9084 = vpop.permute.xlu0 %9083
      %9085 = vrot.lane.b32.xlu0 %v9078, 109
      %v9086 = vpop.permute.xlu0 %9085
      %9087 = vrot.lane.b32.xlu0 %v9079, 109
      %v9088 = vpop.permute.xlu0 %9087
      %v9089 = vsel %vm1364, %v9084, %v9086
      %v9090 = vsel %vm1364, %v9086, %v9088
      %9094 = vst [vmem:[#allocation3 + $0x140] sm:$0xff] %v9089
      %9095 = vst [vmem:[#allocation3 + $0x148] sm:$0xff] %v9090
      %9096 = vst.msk [vmem:[#allocation3 + $0x150] sm:$0xff] %vm8558, %v9088
      %v9097 = vld [vmem:[%s8] sm:$0xff]
      %v9098 = vld [vmem:[%s8 + $0x8] sm:$0xff]
      %v9099 = vld [vmem:[%s8 + $0x10] sm:$0xff]
      %v9100 = vld [vmem:[%s8 + $0x18] sm:$0xff]
      %v9101 = vld [vmem:[#allocation3] sm:$0xff]
      %v9102 = vld [vmem:[#allocation3 + $0x8] sm:$0xff]
      %v9103 = vld [vmem:[#allocation3 + $0x10] sm:$0xff]
      %v9104 = vld [vmem:[#allocation3 + $0x28] sm:$0xff]
      %v9105 = vld [vmem:[#allocation3 + $0x30] sm:$0xff]
      %v9106 = vld [vmem:[#allocation3 + $0x38] sm:$0xff]
      %v9107 = vld [vmem:[#allocation3 + $0x50] sm:$0xff]
      %v9108 = vld [vmem:[#allocation3 + $0x58] sm:$0xff]
      %v9109 = vld [vmem:[#allocation3 + $0x60] sm:$0xff]
      %v9110 = vld [vmem:[#allocation3 + $0x78] sm:$0xff]
      %v9111 = vld [vmem:[#allocation3 + $0x80] sm:$0xff]
      %v9112 = vld [vmem:[#allocation3 + $0x88] sm:$0xff]
      %v9113 = vld [vmem:[#allocation3 + $0xa0] sm:$0xff]
      %v9114 = vld [vmem:[#allocation3 + $0xa8] sm:$0xff]
      %v9115 = vld [vmem:[#allocation3 + $0xb0] sm:$0xff]
      %v9116 = vld [vmem:[#allocation3 + $0xc8] sm:$0xff]
      %v9117 = vld [vmem:[#allocation3 + $0xd0] sm:$0xff]
      %v9118 = vld [vmem:[#allocation3 + $0xd8] sm:$0xff]
      %v9119 = vld [vmem:[#allocation3 + $0xf0] sm:$0xff]
      %v9120 = vld [vmem:[#allocation3 + $0xf8] sm:$0xff]
      %v9121 = vld [vmem:[#allocation3 + $0x100] sm:$0xff]
      %v9122 = vld [vmem:[#allocation3 + $0x118] sm:$0xff]
      %v9123 = vld [vmem:[#allocation3 + $0x120] sm:$0xff]
      %v9124 = vld [vmem:[#allocation3 + $0x128] sm:$0xff]
      %v9125 = vld [vmem:[#allocation3 + $0x140] sm:$0xff]
      %v9126 = vld [vmem:[#allocation3 + $0x148] sm:$0xff]
      %v9127 = vld [vmem:[#allocation3 + $0x150] sm:$0xff]
      %v9128 = vld [vmem:[%s9] sm:$0xff]
      %v9129 = vld [vmem:[%s9 + $0x8] sm:$0xff]
      %v9130 = vld [vmem:[%s9 + $0x10] sm:$0xff]
      %v9131 = vld [vmem:[%s9 + $0x18] sm:$0xff]
      %9133 = vset.pattern.permute.xlu0 0
      %9134 = vperm.xlu0 %9133, %v9128
      %v9135 = vpop.permute.xlu0 %9134
      %9138 = vset.pattern.permute.xlu0 0
      %9139 = vperm.xlu0 %9138, %v9129
      %v9140 = vpop.permute.xlu0 %9139
      %9143 = vset.pattern.permute.xlu0 0
      %9144 = vperm.xlu0 %9143, %v9130
      %v9145 = vpop.permute.xlu0 %9144
      %9148 = vset.pattern.permute.xlu0 0
      %9149 = vperm.xlu0 %9148, %v9131
      %v9150 = vpop.permute.xlu0 %9149
      %v9156 = vunpack.c.l.b16 %v9097
      %v9157 = vunpack.c.h.b16 %v9097
      %v9158 = vunpack.c.l.b16 %v9098
      %v9159 = vunpack.c.h.b16 %v9098
      %v9160 = vunpack.c.l.b16 %v9099
      %v9161 = vunpack.c.h.b16 %v9099
      %v9162 = vunpack.c.l.b16 %v9100
      %v9163 = vunpack.c.h.b16 %v9100
      %v9164 = vpack.c.b16 %v9158, %v9156
      %v9165 = vpack.c.b16 %v9159, %v9157
      %v9166 = vpack.c.b16 %v9162, %v9160
      %v9167 = vpack.c.b16 %v9163, %v9161
      %v9171 = vsel %vm8775, %v9165, 0
      %v9174 = vsel %vm8775, %v9167, 0
      %9176 = vmatprep.subr.bf16.mxu0 %v9102
      %9177 = vmatpush1.bf16.msra.mxu0 %v9101
      %9178 = vmatprep.subr.bf16.mxu0 %v9105
      %9179 = vmatpush1.bf16.msra.mxu0 %v9104
      %9180 = vmatprep.subr.bf16.mxu0 %v9108
      %9181 = vmatpush1.bf16.msra.mxu0 %v9107
      %9182 = vmatprep.subr.bf16.mxu0 %v9111
      %9183 = vmatpush1.bf16.msra.mxu0 %v9110
      %9184 = vmatprep.subr.bf16.mxu0 %v9114
      %9185 = vmatpush1.bf16.msra.mxu0 %v9113
      %9186 = vmatprep.subr.bf16.mxu0 %v9117
      %9187 = vmatpush1.bf16.msra.mxu0 %v9116
      %9188 = vmatprep.subr.bf16.mxu0 %v9120
      %9189 = vmatpush1.bf16.msra.mxu0 %v9119
      %9190 = vmatprep.subr.bf16.mxu0 %v9123
      %9191 = vmatpush1.bf16.msra.mxu0 %v9122
      %9192 = vmatprep.subr.bf16.mxu0 %v9126
      %9193 = vmatpush1.bf16.msra.mxu0 %v9125
      %9194 = vmatprep.subr.bf16.mxu0 0
      %9195 = vmatpush1.bf16.msra.mxu0 0
      %9196 = vmatprep.subr.bf16.mxu0 0
      %9197 = vmatpush1.bf16.msra.mxu0 0
      %9198 = vmatprep.subr.bf16.mxu0 0
      %9199 = vmatpush1.bf16.msra.mxu0 0
      %9200 = vmatprep.subr.bf16.mxu0 0
      %9201 = vmatpush1.bf16.msra.mxu0 0
      %9202 = vmatprep.subr.bf16.mxu0 0
      %9203 = vmatpush1.bf16.msra.mxu0 0
      %9204 = vmatprep.subr.bf16.mxu0 0
      %9205 = vmatpush1.bf16.msra.mxu0 0
      %9206 = vmatprep.subr.bf16.mxu0 0
      %9207 = vmatpush1.bf16.msra.mxu0 0
      %9208 = vmatprep.mubr.bf16.mxu0 %v9171
      %9209 = vmatmul.mubr.bf16.gmra.mrb[0].mxu0 %v9164
      %v9210 = vpop.f32.mrb[0].mxu0
      %v9211 = vadd.f32 %v9135, %v9210
      %v9212 = vpop.f32.mrb[0].mxu0
      %v9213 = vadd.f32 %v9135, %v9212
      %v9214 = vpop.f32.mrb[0].mxu0
      %v9215 = vadd.f32 %v9140, %v9214
      %v9216 = vpop.f32.mrb[0].mxu0
      %v9217 = vadd.f32 %v9140, %v9216
      %9218 = vmatprep.mubr.bf16.mxu0 %v9174
      %9219 = vmatmul.mubr.bf16.gmra.mrb[0].mxu0 %v9166
      %v9220 = vpop.f32.mrb[0].mxu0
      %v9221 = vadd.f32 %v9145, %v9220
      %v9222 = vpop.f32.mrb[0].mxu0
      %v9223 = vadd.f32 %v9145, %v9222
      %v9224 = vpop.f32.mrb[0].mxu0
      %v9225 = vadd.f32 %v9150, %v9224
      %v9226 = vpop.f32.mrb[0].mxu0
      %v9227 = vadd.f32 %v9150, %v9226
      %9228 = vdwg.mxu0
      %9229 = vmatprep.subr.bf16.mxu0 0
      %9230 = vmatpush1.bf16.msra.mxu0 %v9103
      %9231 = vmatprep.subr.bf16.mxu0 0
      %9232 = vmatpush1.bf16.msra.mxu0 %v9106
      %9233 = vmatprep.subr.bf16.mxu0 0
      %9234 = vmatpush1.bf16.msra.mxu0 %v9109
      %9235 = vmatprep.subr.bf16.mxu0 0
      %9236 = vmatpush1.bf16.msra.mxu0 %v9112
      %9237 = vmatprep.subr.bf16.mxu0 0
      %9238 = vmatpush1.bf16.msra.mxu0 %v9115
      %9239 = vmatprep.subr.bf16.mxu0 0
      %9240 = vmatpush1.bf16.msra.mxu0 %v9118
      %9241 = vmatprep.subr.bf16.mxu0 0
      %9242 = vmatpush1.bf16.msra.mxu0 %v9121
      %9243 = vmatprep.subr.bf16.mxu0 0
      %9244 = vmatpush1.bf16.msra.mxu0 %v9124
      %9245 = vmatprep.subr.bf16.mxu0 0
      %9246 = vmatpush1.bf16.msra.mxu0 %v9127
      %9247 = vmatprep.subr.bf16.mxu0 0
      %9248 = vmatpush1.bf16.msra.mxu0 0
      %9249 = vmatprep.subr.bf16.mxu0 0
      %9250 = vmatpush1.bf16.msra.mxu0 0
      %9251 = vmatprep.subr.bf16.mxu0 0
      %9252 = vmatpush1.bf16.msra.mxu0 0
      %9253 = vmatprep.subr.bf16.mxu0 0
      %9254 = vmatpush1.bf16.msra.mxu0 0
      %9255 = vmatprep.subr.bf16.mxu0 0
      %9256 = vmatpush1.bf16.msra.mxu0 0
      %9257 = vmatprep.subr.bf16.mxu0 0
      %9258 = vmatpush1.bf16.msra.mxu0 0
      %9259 = vmatprep.subr.bf16.mxu0 0
      %9260 = vmatpush1.bf16.msra.mxu0 0
      %9261 = vmatprep.mubr.bf16.mxu0 %v9171
      %9262 = vmatmul.mubr.bf16.gmra.mrb[0].mxu0 %v9164
      %v9263 = vpop.f32.mrb[0].mxu0
      %v9264 = vadd.f32 %v9135, %v9263
      %v9265 = vpop.f32.mrb[0].mxu0
      %v9266 = vpop.f32.mrb[0].mxu0
      %v9267 = vadd.f32 %v9140, %v9266
      %v9268 = vpop.f32.mrb[0].mxu0
      %9269 = vmatprep.mubr.bf16.mxu0 %v9174
      %9270 = vmatmul.mubr.bf16.gmra.mrb[0].mxu0 %v9166
      %v9271 = vpop.f32.mrb[0].mxu0
      %v9272 = vadd.f32 %v9145, %v9271
      %v9273 = vpop.f32.mrb[0].mxu0
      %v9274 = vpop.f32.mrb[0].mxu0
      %v9275 = vadd.f32 %v9150, %v9274
      %v9276 = vpop.f32.mrb[0].mxu0
      %9277 = vdwg.mxu0
      %vm9278 = vcmp.ge.f32.partialorder %v9211, 0.0
      %vm9279 = vcmp.ge.f32.partialorder %v9213, 0.0
      %vm9280 = vcmp.ge.f32.partialorder %v9264, 0.0
      %vm9281 = vcmp.ge.f32.partialorder %v9215, 0.0
      %vm9282 = vcmp.ge.f32.partialorder %v9217, 0.0
      %vm9283 = vcmp.ge.f32.partialorder %v9267, 0.0
      %vm9284 = vcmp.ge.f32.partialorder %v9221, 0.0
      %vm9285 = vcmp.ge.f32.partialorder %v9223, 0.0
      %vm9286 = vcmp.ge.f32.partialorder %v9272, 0.0
      %vm9287 = vcmp.ge.f32.partialorder %v9225, 0.0
      %vm9288 = vcmp.ge.f32.partialorder %v9227, 0.0
      %vm9289 = vcmp.ge.f32.partialorder %v9275, 0.0
      %v9290 = vmul.f32 %v9211, 0.01
      %v9291 = vmul.f32 %v9213, 0.01
      %v9292 = vmul.f32 %v9264, 0.01
      %v9293 = vmul.f32 %v9215, 0.01
      %v9294 = vmul.f32 %v9217, 0.01
      %v9295 = vmul.f32 %v9267, 0.01
      %v9296 = vmul.f32 %v9221, 0.01
      %v9297 = vmul.f32 %v9223, 0.01
      %v9298 = vmul.f32 %v9272, 0.01
      %v9299 = vmul.f32 %v9225, 0.01
      %v9300 = vmul.f32 %v9227, 0.01
      %v9301 = vmul.f32 %v9275, 0.01
      %v9302 = vsel %vm9278, %v9211, %v9290
      %v9303 = vsel %vm9279, %v9213, %v9291
      %v9304 = vsel %vm9280, %v9264, %v9292
      %v9305 = vsel %vm9281, %v9215, %v9293
      %v9306 = vsel %vm9282, %v9217, %v9294
      %v9307 = vsel %vm9283, %v9267, %v9295
      %v9308 = vsel %vm9284, %v9221, %v9296
      %v9309 = vsel %vm9285, %v9223, %v9297
      %v9310 = vsel %vm9286, %v9272, %v9298
      %v9311 = vsel %vm9287, %v9225, %v9299
      %v9312 = vsel %vm9288, %v9227, %v9300
      %v9313 = vsel %vm9289, %v9275, %v9301
      %v9314 = vld [vmem:[%s10] sm:$0xff]
      %v9315 = vld [vmem:[%s10 + $0x8] sm:$0xff]
      %v9316 = vld [vmem:[%s10 + $0x10] sm:$0xff]
      %v9317 = vld [vmem:[%s10 + $0x18] sm:$0xff]
      %9319 = vset.pattern.permute.xlu0 0
      %9320 = vperm.xlu0 %9319, %v9314
      %v9321 = vpop.permute.xlu0 %9320
      %9324 = vset.pattern.permute.xlu0 0
      %9325 = vperm.xlu0 %9324, %v9315
      %v9326 = vpop.permute.xlu0 %9325
      %9329 = vset.pattern.permute.xlu0 0
      %9330 = vperm.xlu0 %9329, %v9316
      %v9331 = vpop.permute.xlu0 %9330
      %9334 = vset.pattern.permute.xlu0 0
      %9335 = vperm.xlu0 %9334, %v9317
      %v9336 = vpop.permute.xlu0 %9335
      %v9338 = vadd.f32 %v9302, %v9321
      %v9339 = vadd.f32 %v9303, %v9321
      %v9340 = vadd.f32 %v9304, %v9321
      %v9341 = vadd.f32 %v9305, %v9326
      %v9342 = vadd.f32 %v9306, %v9326
      %v9343 = vadd.f32 %v9307, %v9326
      %v9344 = vadd.f32 %v9308, %v9331
      %v9345 = vadd.f32 %v9309, %v9331
      %v9346 = vadd.f32 %v9310, %v9331
      %v9347 = vadd.f32 %v9311, %v9336
      %v9348 = vadd.f32 %v9312, %v9336
      %v9349 = vadd.f32 %v9313, %v9336
      %v9350 = vld [vmem:[%s11] sm:$0x3]
      %v9351 = vpack.c.bf16 %v9341, %v9338
      %v9352 = vpack.c.bf16 %v9342, %v9339
      %v9353 = vpack.c.bf16 %v9343, %v9340
      %v9354 = vpack.c.bf16 %v9347, %v9344
      %v9355 = vpack.c.bf16 %v9348, %v9345
      %v9356 = vpack.c.bf16 %v9349, %v9346
      %v9357 = vld [vmem:[%s12] sm:$0xf]
      %9359 = vset.pattern.permute.xlu0 0
      %9360 = vperm.xlu0 %9359, %v9357
      %v9361 = vpop.permute.xlu0 %9360
      %v9364 = vsel %vm8558, %v9350, 0
      %9366 = vmatprep.subr.bf16.mxu0 %v9352
      %9367 = vmatpush1.bf16.msra.mxu0 %v9351
      %9368 = vmatprep.subr.bf16.mxu0 %v9355
      %9369 = vmatpush1.bf16.msra.mxu0 %v9354
      %9370 = vmatprep.subr.bf16.mxu0 0
      %9371 = vmatpush1.bf16.msra.mxu0 0
      %9372 = vmatprep.subr.bf16.mxu0 0
      %9373 = vmatpush1.bf16.msra.mxu0 0
      %9374 = vmatprep.subr.bf16.mxu0 0
      %9375 = vmatpush1.bf16.msra.mxu0 0
      %9376 = vmatprep.subr.bf16.mxu0 0
      %9377 = vmatpush1.bf16.msra.mxu0 0
      %9378 = vmatprep.subr.bf16.mxu0 0
      %9379 = vmatpush1.bf16.msra.mxu0 0
      %9380 = vmatprep.subr.bf16.mxu0 0
      %9381 = vmatpush1.bf16.msra.mxu0 0
      %9382 = vmatprep.subr.bf16.mxu0 0
      %9383 = vmatpush1.bf16.msra.mxu0 0
      %9384 = vmatprep.subr.bf16.mxu0 0
      %9385 = vmatpush1.bf16.msra.mxu0 0
      %9386 = vmatprep.subr.bf16.mxu0 0
      %9387 = vmatpush1.bf16.msra.mxu0 0
      %9388 = vmatprep.subr.bf16.mxu0 0
      %9389 = vmatpush1.bf16.msra.mxu0 0
      %9390 = vmatprep.subr.bf16.mxu0 0
      %9391 = vmatpush1.bf16.msra.mxu0 0
      %9392 = vmatprep.subr.bf16.mxu0 0
      %9393 = vmatpush1.bf16.msra.mxu0 0
      %9394 = vmatprep.subr.bf16.mxu0 0
      %9395 = vmatpush1.bf16.msra.mxu0 0
      %9396 = vmatprep.subr.bf16.mxu0 0
      %9397 = vmatpush1.bf16.msra.mxu0 0
      %9398 = vmatprep.mubr.bf16.mxu0 0
      %9399 = vmatmul.mubr.bf16.gmra.mrb[0].mxu0 %v9364
      %v9400 = vpop.f32.mrb[0].mxu0
      %v9401 = vadd.f32 %v9361, %v9400
      %v9402 = vpop.f32.mrb[0].mxu0
      %v9403 = vadd.f32 %v9361, %v9402
      %v9404 = vpop.f32.mrb[0].mxu0
      %v9405 = vpop.f32.mrb[0].mxu0
      %9406 = vdwg.mxu0
      %9407 = vmatprep.subr.bf16.mxu0 0
      %9408 = vmatpush1.bf16.msra.mxu0 %v9353
      %9409 = vmatprep.subr.bf16.mxu0 0
      %9410 = vmatpush1.bf16.msra.mxu0 %v9356
      %9411 = vmatprep.subr.bf16.mxu0 0
      %9412 = vmatpush1.bf16.msra.mxu0 0
      %9413 = vmatprep.subr.bf16.mxu0 0
      %9414 = vmatpush1.bf16.msra.mxu0 0
      %9415 = vmatprep.subr.bf16.mxu0 0
      %9416 = vmatpush1.bf16.msra.mxu0 0
      %9417 = vmatprep.subr.bf16.mxu0 0
      %9418 = vmatpush1.bf16.msra.mxu0 0
      %9419 = vmatprep.subr.bf16.mxu0 0
      %9420 = vmatpush1.bf16.msra.mxu0 0
      %9421 = vmatprep.subr.bf16.mxu0 0
      %9422 = vmatpush1.bf16.msra.mxu0 0
      %9423 = vmatprep.subr.bf16.mxu0 0
      %9424 = vmatpush1.bf16.msra.mxu0 0
      %9425 = vmatprep.subr.bf16.mxu0 0
      %9426 = vmatpush1.bf16.msra.mxu0 0
      %9427 = vmatprep.subr.bf16.mxu0 0
      %9428 = vmatpush1.bf16.msra.mxu0 0
      %9429 = vmatprep.subr.bf16.mxu0 0
      %9430 = vmatpush1.bf16.msra.mxu0 0
      %9431 = vmatprep.subr.bf16.mxu0 0
      %9432 = vmatpush1.bf16.msra.mxu0 0
      %9433 = vmatprep.subr.bf16.mxu0 0
      %9434 = vmatpush1.bf16.msra.mxu0 0
      %9435 = vmatprep.subr.bf16.mxu0 0
      %9436 = vmatpush1.bf16.msra.mxu0 0
      %9437 = vmatprep.subr.bf16.mxu0 0
      %9438 = vmatpush1.bf16.msra.mxu0 0
      %9439 = vmatprep.mubr.bf16.mxu0 0
      %9440 = vmatmul.mubr.bf16.gmra.mrb[0].mxu0 %v9364
      %v9441 = vpop.f32.mrb[0].mxu0
      %v9442 = vadd.f32 %v9361, %v9441
      %v9443 = vpop.f32.mrb[0].mxu0
      %v9444 = vpop.f32.mrb[0].mxu0
      %v9445 = vpop.f32.mrb[0].mxu0
      %9446 = vdwg.mxu0
      %v9449 = vcombine.low %v9401, %v9403
      %9451 = vst [vmem:[%s440] sm:$0xff] %v9449
      %9452 = vst.msk [vmem:[%s440 + $0x8] sm:$0xf] %vm8509, %v9442
      %vm9453 = vcmask 1043712
      %9454 = vst.msk [vmem:[%s440 + $0x8] sm:$0xf] %vm9453, 0.0
      %p9455 = scmp.lt.s32.totalorder %s24, 1
      %s9456 = scalar_select %p9455, %s24, 1
      %s9457 = smul.addr %s9456, 3
      %s9458 = smul.addr %s9457, 4
      %s9459 = scalar_lea.vmem %s13, %s9458
      // Predicated region
      $region73: #{net3d2d_forward.1} parent=71 // pred_check
        %p9460 = pneg %p320
      $region74: #{net3d2d_forward.1} parent=71 // pred_check_branch
        %9462 = sbr.rel (%p9460) target = $region76
      $region75: #{net3d2d_forward.1} parent=71 // pred_region
        _
      $region76: #{net3d2d_forward.1} parent=71 // pred_fallthru
        _
    $region72: #{net3d2d_forward.1} parent=5 // pred_fallthru
      _
    %p9463 = scmp.le.s32.totalorder 2, %s19
    // Predicated region
    $region77: #{net3d2d_forward.1} parent=5 // pred_check
      %p9464 = pneg %p9463
    $region78: #{net3d2d_forward.1} parent=5 // pred_check_branch
      %9466 = sbr.rel (%p9464) target = $region80
    $region79: #{net3d2d_forward.1} parent=5 // pred_region
      %s9467 = ssub.s32 %s19, 2
      // Predicated region
      $region81: #{net3d2d_forward.1} parent=79 // pred_check
        %p9468 = pneg %p326
      $region82: #{net3d2d_forward.1} parent=79 // pred_check_branch
        %9470 = sbr.rel (%p9468) target = $region84
      $region83: #{net3d2d_forward.1} parent=79 // pred_region
        %p9471 = scmp.lt.s32.totalorder %s25, 1
        %s9472 = scalar_select %p9471, %s25, 1
        %s9473 = smul.addr %s9472, 3
        %s9474 = smul.addr %s9473, 4
        %s9475 = scalar_lea.vmem %s13, %s9474
      $region84: #{net3d2d_forward.1} parent=79 // pred_fallthru
        _
    $region80: #{net3d2d_forward.1} parent=5 // pred_fallthru
      _
  $region6: #{net3d2d_forward.1} parent=0 // loop_footer
    %s23 = sadd.s32 1, %s19
  $region7: #{net3d2d_forward.1} parent=0 // loop_footer_branch
    %18 = sbr.rel target = $region3
  $region8: #{net3d2d_forward.1} parent=0 // loop_exit
    _

</llo_original>
